<compile_context>
chip_gen: v7x
topology: tpu7x:2x2x1
jax: 0.10.0
libtpu: 0.0.40
codegen_flags: <defaults>
</compile_context>

<pallas_src>
import functools

import jax
import jax.numpy as jnp
from jax import lax
from jax.experimental import pallas as pl
from jax.experimental.pallas import tpu as pltpu

LANE = 128          # channel dims padded to a multiple of the TPU lane width
BN_EPS = 1e-5


def _round_up(x, m):
    return (x + m - 1) // m * m


# ----------------------------------------------------------------------------
# Fused kernel: cv1 (RepConvN + SiLU) -> cv2 (Conv + SiLU) [+ residual]
# ----------------------------------------------------------------------------
def _repn_bottleneck_kernel(x_ref, w1_ref, b1_ref, w2_ref, b2_ref, out_ref,
                            xf_ref, y1_ref, acc_ref, *, H, W, add):
    """Per grid step (one image):
      x_ref  : (1, H+2, W+2, Cp)  bf16  spatially pre-padded, channel-padded input
      w1_ref : (3, 3, Cp, Cm)     bf16  cv1 folded (3x3 + 1x1 + BN) weights
      b1_ref : (1, Cm)            f32   cv1 folded bias
      w2_ref : (3, 3, Cm, Co)     bf16  cv2 folded (conv + BN) weights
      b2_ref : (1, Co)            f32   cv2 folded bias
      out_ref: (1, H, W, Co)      f32
      xf_ref : (H+2, W+2, Cp)     f32   scratch: staged/upcast input
      y1_ref : (H+2, W+2, Cm)     f32   scratch: zero-padded cv1 output
      acc_ref: (H*W, max(Cm,Co))  f32   scratch: GEMM accumulator
    """
    Cm = w1_ref.shape[3]
    Co = w2_ref.shape[3]
    HW = H * W

    # Stage the bf16 input block into f32 VMEM once (single aligned load + upcast);
    # all shifted-window slices below read unpacked f32, the MXU still runs bf16.
    xf_ref[...] = x_ref[0].astype(jnp.float32)

    def conv3x3(src_ref, w_ref, cout):
        """acc[:, :cout] = sum_{dh,dw} src[dh:dh+H, dw:dw+W, :] @ w[dh, dw]  (9 taps)."""
        cin = src_ref.shape[2]
        t = 0
        for dh in range(3):                       # H-slice: outside (sublane,lane), aligned
            for dw in range(3):                   # W-shift: one relayout per tap
                patch = src_ref[dh:dh + H, dw:dw + W, :].reshape(HW, cin)
                contrib = jnp.dot(patch.astype(jnp.bfloat16), w_ref[dh, dw],
                                  preferred_element_type=jnp.float32)
                if t == 0:
                    acc_ref[:, :cout] = contrib   # overwrite: no separate zero pass
                else:
                    acc_ref[:, :cout] += contrib  # accumulate in VMEM scratch (no spills)
                t += 1

    def silu(a):
        # sigmoid = 1 / (1 + exp(-a)); exp and approx reciprocal both run on the EUP
        return a * pl.reciprocal(1.0 + jnp.exp(-a), approx=True)

    # ---- cv1: RepConvN (3x3 conv, 1x1 branch folded into center tap) + BN + SiLU ----
    conv3x3(xf_ref, w1_ref, Cm)
    y1 = silu(acc_ref[:, :Cm] + b1_ref[...])
    # y1 stays in VMEM, zero border doubles as cv2's zero padding (no HBM round trip)
    y1_ref[...] = jnp.zeros_like(y1_ref)
    y1_ref[1:1 + H, 1:1 + W, :] = y1.reshape(H, W, Cm)

    # ---- cv2: 3x3 conv + BN + SiLU (+ shortcut) ----
    conv3x3(y1_ref, w2_ref, Co)
    y2 = silu(acc_ref[:, :Co] + b2_ref[...]).reshape(H, W, Co)
    if add:
        # residual read from the already-resident staged input (Cp == Co; padded
        # channels are exactly zero on both sides)
        y2 = y2 + xf_ref[1:1 + H, 1:1 + W, :]
    out_ref[...] = y2.reshape(1, H, W, Co)


# ----------------------------------------------------------------------------
# Wrapper: padding / casting / BlockSpecs / grid
# ----------------------------------------------------------------------------
def repn_bottleneck_pallas(x_nhwc, params, add=True):
    """x_nhwc: (N, H, W, c1) f32. params: BN-folded cv1/cv2 weights & biases."""
    N, H, W, c1 = x_nhwc.shape
    cv1_w, cv1_b = params["cv1_w"], params["cv1_b"]    # (3,3,c1,c_), (1,c_)
    cv2_w, cv2_b = params["cv2_w"], params["cv2_b"]    # (3,3,c_,c2), (1,c2)
    c_ = cv1_w.shape[3]
    c2 = cv2_w.shape[3]

    Cp = _round_up(c1, LANE)      # lane-dense channel padding
    Cm = _round_up(c_, LANE)
    Co = _round_up(c2, LANE)
    if add:
        assert c1 == c2 and Cp == Co, "shortcut requires c1 == c2"

    # one fused pad (1-px spatial halo + channel pad) + bf16 cast (halves HBM bytes)
    xpad = jnp.pad(x_nhwc, ((0, 0), (1, 1), (1, 1), (0, Cp - c1))).astype(jnp.bfloat16)
    w1 = jnp.pad(cv1_w, ((0, 0), (0, 0), (0, Cp - c1), (0, Cm - c_))).astype(jnp.bfloat16)
    w2 = jnp.pad(cv2_w, ((0, 0), (0, 0), (0, Cm - c_), (0, Co - c2))).astype(jnp.bfloat16)
    b1 = jnp.pad(cv1_b, ((0, 0), (0, Cm - c_))).astype(jnp.float32)
    b2 = jnp.pad(cv2_b, ((0, 0), (0, Co - c2))).astype(jnp.float32)

    Cacc = max(Cm, Co)
    kernel = functools.partial(_repn_bottleneck_kernel, H=H, W=W, add=add)

    flops = 2 * N * H * W * 9 * (Cp * Cm + Cm * Co)
    transcendentals = N * H * W * (Cm + Co)            # exp in the two SiLUs
    bytes_accessed = (xpad.size * 2 + w1.size * 2 + w2.size * 2
                      + (b1.size + b2.size) * 4 + N * H * W * Co * 4)

    out = pl.pallas_call(
        kernel,
        out_shape=jax.ShapeDtypeStruct((N, H, W, Co), jnp.float32),
        grid_spec=pltpu.PrefetchScalarGridSpec(
            num_scalar_prefetch=0,
            grid=(N,),                                           # pipelined over images
            in_specs=[
                pl.BlockSpec((1, H + 2, W + 2, Cp), lambda n: (n, 0, 0, 0)),
                pl.BlockSpec((3, 3, Cp, Cm), lambda n: (0, 0, 0, 0)),   # resident
                pl.BlockSpec((1, Cm), lambda n: (0, 0)),                # resident
                pl.BlockSpec((3, 3, Cm, Co), lambda n: (0, 0, 0, 0)),   # resident
                pl.BlockSpec((1, Co), lambda n: (0, 0)),                # resident
            ],
            out_specs=pl.BlockSpec((1, H, W, Co), lambda n: (n, 0, 0, 0)),
            scratch_shapes=[
                pltpu.VMEM((H + 2, W + 2, Cp), jnp.float32),     # staged f32 input
                pltpu.VMEM((H + 2, W + 2, Cm), jnp.float32),     # zero-padded y1
                pltpu.VMEM((H * W, Cacc), jnp.float32),          # GEMM accumulator
            ],
        ),
        compiler_params=pltpu.CompilerParams(
            dimension_semantics=("parallel",),     # batch axis shards across v7x's 2 TCs
            vmem_limit_bytes=32 * 1024 * 1024,     # ~1.5 MiB used/step -> big headroom on v7x
        ),
        cost_estimate=pl.CostEstimate(
            flops=flops, transcendentals=transcendentals,
            bytes_accessed=bytes_accessed),
    )(xpad, w1, b1, w2, b2)

    return out[..., :c2]


# ----------------------------------------------------------------------------
# Parameter construction (deterministic, synthetic) and BN folding
# ----------------------------------------------------------------------------
def _fold_bn(w_hwio, gamma, beta, mean, var):
    """Fold eval-mode BatchNorm into conv weight (kh,kw,Cin,Cout) and bias (Cout,)."""
    scale = gamma / jnp.sqrt(var + BN_EPS)
    return w_hwio * scale, beta - mean * scale


def make_params(key, c1, c2, e=0.5):
    c_ = int(c2 * e)
    ks = jax.random.split(key, 6)

    def bn_params(k, c):
        k0, k1, k2, k3 = jax.random.split(k, 4)
        gamma = jax.random.uniform(k0, (c,), jnp.float32, 0.5, 1.5)
        beta = 0.1 * jax.random.normal(k1, (c,), jnp.float32)
        mean = 0.1 * jax.random.normal(k2, (c,), jnp.float32)
        var = jax.random.uniform(k3, (c,), jnp.float32, 0.5, 1.5)
        return gamma, beta, mean, var

    # RepConvN branch 1: 3x3 conv (c1 -> c_), no bias, + BN
    w3_raw = 0.1 * jax.random.normal(ks[0], (3, 3, c1, c_), jnp.float32)
    bn3 = bn_params(ks[1], c_)
    # RepConvN branch 2: 1x1 conv (c1 -> c_), no bias, + BN
    w1_raw = 0.1 * jax.random.normal(ks[2], (1, 1, c1, c_), jnp.float32)
    bn1 = bn_params(ks[3], c_)
    # cv2: 3x3 conv (c_ -> c2), no bias, + BN
    w2_raw = 0.1 * jax.random.normal(ks[4], (3, 3, c_, c2), jnp.float32)
    bn2 = bn_params(ks[5], c2)

    raw = dict(w3=w3_raw, bn3=bn3, w1=w1_raw, bn1=bn1, w2=w2_raw, bn2=bn2)

    # Fold BN into convs; fold 1x1 branch into center tap of the 3x3 (RepVGG fusion).
    w3f, b3f = _fold_bn(w3_raw, *bn3)
    w1f, b1f = _fold_bn(w1_raw, *bn1)
    cv1_w = w3f.at[1, 1].add(w1f[0, 0])
    cv1_b = (b3f + b1f).reshape(1, c_)
    w2f, b2f = _fold_bn(w2_raw, *bn2)
    folded = dict(cv1_w=cv1_w, cv1_b=cv1_b, cv2_w=w2f, cv2_b=b2f.reshape(1, c2))
    return raw, folded


# ----------------------------------------------------------------------------
# Pure-JAX reference (un-fused f32: explicit BN, explicit 1x1 branch)
# ----------------------------------------------------------------------------
def _ref_conv(x, w, pad):
    return lax.conv_general_dilated(
        x, w, window_strides=(1, 1), padding=pad,
        dimension_numbers=("NHWC", "HWIO", "NHWC"),
    )


def _ref_bn(x, bn):
    gamma, beta, mean, var = bn
    return (x - mean) / jnp.sqrt(var + BN_EPS) * gamma + beta


def _silu(x):
    return x * jax.nn.sigmoid(x)


def repn_bottleneck_ref(x_nhwc, raw, add=True):
    y1 = _silu(
        _ref_bn(_ref_conv(x_nhwc, raw["w3"], ((1, 1), (1, 1))), raw["bn3"])
        + _ref_bn(_ref_conv(x_nhwc, raw["w1"], ((0, 0), (0, 0))), raw["bn1"])
    )
    y2 = _silu(_ref_bn(_ref_conv(y1, raw["w2"], ((1, 1), (1, 1))), raw["bn2"]))
    return x_nhwc + y2 if add else y2


# ----------------------------------------------------------------------------
if __name__ == "__main__":
    key = jax.random.PRNGKey(0)
    kx, kp = jax.random.split(key)

    N, C1, H, W = 2, 4, 16, 16
    C2 = 4                        # shortcut active since c1 == c2
    x_nchw = jax.random.normal(kx, (N, C1, H, W), jnp.float32)   # PyTorch-style NCHW
    x_nhwc = jnp.transpose(x_nchw, (0, 2, 3, 1))                 # kernel layout NHWC

    raw, folded = make_params(kp, C1, C2, e=0.5)

    fwd = jax.jit(functools.partial(repn_bottleneck_pallas, add=True))
    out_nhwc = jax.block_until_ready(fwd(x_nhwc, folded))

    ref_nhwc = repn_bottleneck_ref(x_nhwc, raw, add=True)
    max_err = jnp.max(jnp.abs(out_nhwc - ref_nhwc))
    # bf16 matmuls + approx-reciprocal sigmoid -> slightly looser tolerance than pure f32
    if not jnp.allclose(out_nhwc, ref_nhwc, atol=3e-2, rtol=3e-2):
        raise AssertionError(f"mismatch vs reference, max abs err = {max_err}")

    # back to NCHW to match PyTorch output convention
    out_nchw = jnp.transpose(out_nhwc, (0, 3, 1, 2))
    assert out_nchw.shape == (N, C2, H, W)

    print("KERNEL_OK")
</pallas_src>

<mosaic_0001>
module attributes {stable_mosaic.version = 11 : i64} {
  func.func @_repn_bottleneck_kernel(%arg0: i32, %arg1: memref<1x18x18x128xbf16, #tpu.memory_space<vmem>>, %arg2: memref<3x3x128x128xbf16, #tpu.memory_space<vmem>>, %arg3: memref<1x128xf32, #tpu.memory_space<vmem>>, %arg4: memref<3x3x128x128xbf16, #tpu.memory_space<vmem>>, %arg5: memref<1x128xf32, #tpu.memory_space<vmem>>, %arg6: memref<1x16x16x128xf32, #tpu.memory_space<vmem>>, %arg7: memref<18x18x128xf32, #tpu.memory_space<vmem>>, %arg8: memref<18x18x128xf32, #tpu.memory_space<vmem>>, %arg9: memref<256x128xf32, #tpu.memory_space<vmem>>) attributes {dimension_semantics = [#tpu.dimension_semantics<parallel>], iteration_bounds = array<i64: 2>, scalar_prefetch = 0 : i64, scratch_operands = 3 : i64, tpu.core_type = #tpu.core_type<tc>, window_params = [{transform_indices = @transform_0, window_bounds = array<i64: 1, 18, 18, 128>}, {pipeline_mode = #tpu.pipeline_mode<synchronous>, transform_indices = @transform_1, window_bounds = array<i64: 3, 3, 128, 128>}, {pipeline_mode = #tpu.pipeline_mode<synchronous>, transform_indices = @transform_2, window_bounds = array<i64: 1, 128>}, {pipeline_mode = #tpu.pipeline_mode<synchronous>, transform_indices = @transform_3, window_bounds = array<i64: 3, 3, 128, 128>}, {pipeline_mode = #tpu.pipeline_mode<synchronous>, transform_indices = @transform_4, window_bounds = array<i64: 1, 128>}, {transform_indices = @transform_5, window_bounds = array<i64: 1, 16, 16, 128>}]} {
    %c0 = arith.constant 0 : index
    %c0_0 = arith.constant 0 : index
    %c0_1 = arith.constant 0 : index
    %c0_2 = arith.constant 0 : index
    %0 = vector.load %arg1[%c0, %c0_0, %c0_1, %c0_2] : memref<1x18x18x128xbf16, #tpu.memory_space<vmem>>, vector<1x18x18x128xbf16>
    %1 = vector.shape_cast %0 : vector<1x18x18x128xbf16> to vector<18x18x128xbf16>
    %2 = arith.extf %1 : vector<18x18x128xbf16> to vector<18x18x128xf32>
    %c0_3 = arith.constant 0 : index
    %c0_4 = arith.constant 0 : index
    %c0_5 = arith.constant 0 : index
    %3 = vector.load %arg7[%c0_3, %c0_4, %c0_5] : memref<18x18x128xf32, #tpu.memory_space<vmem>>, vector<18x18x128xf32>
    tpu.vector_store %arg7[%c0_3, %c0_4, %c0_5], %2 {strides = array<i32>} : memref<18x18x128xf32, #tpu.memory_space<vmem>>, vector<18x18x128xf32>,
    %c0_6 = arith.constant 0 : index
    %c0_7 = arith.constant 0 : index
    %c0_8 = arith.constant 0 : index
    %4 = vector.load %arg7[%c0_6, %c0_7, %c0_8] : memref<18x18x128xf32, #tpu.memory_space<vmem>>, vector<16x16x128xf32>
    %5 = vector.shape_cast %4 : vector<16x16x128xf32> to vector<256x128xf32>
    %6 = arith.truncf %5 : vector<256x128xf32> to vector<256x128xbf16>
    %c0_9 = arith.constant 0 : index
    %c0_10 = arith.constant 0 : index
    %c0_11 = arith.constant 0 : index
    %c0_12 = arith.constant 0 : index
    %7 = vector.load %arg2[%c0_9, %c0_10, %c0_11, %c0_12] : memref<3x3x128x128xbf16, #tpu.memory_space<vmem>>, vector<1x1x128x128xbf16>
    %8 = vector.shape_cast %7 : vector<1x1x128x128xbf16> to vector<128x128xbf16>
    %cst = arith.constant dense<0.000000e+00> : vector<256x128xf32>
    %9 = tpu.matmul %6, %8, %cst {dimension_numbers = #tpu.dot_dimension_numbers<[1], [0], [0], [1], [0, 0, 1, 1], [], []>} : vector<256x128xbf16>, vector<128x128xbf16>, vector<256x128xf32> -> vector<256x128xf32>
    %c0_13 = arith.constant 0 : index
    %c0_14 = arith.constant 0 : index
    %10 = vector.load %arg9[%c0_13, %c0_14] : memref<256x128xf32, #tpu.memory_space<vmem>>, vector<256x128xf32>
    tpu.vector_store %arg9[%c0_13, %c0_14], %9 {strides = array<i32>} : memref<256x128xf32, #tpu.memory_space<vmem>>, vector<256x128xf32>,
    %c0_15 = arith.constant 0 : index
    %c1 = arith.constant 1 : index
    %c0_16 = arith.constant 0 : index
    %11 = vector.load %arg7[%c0_15, %c1, %c0_16] : memref<18x18x128xf32, #tpu.memory_space<vmem>>, vector<16x16x128xf32>
    %12 = vector.shape_cast %11 : vector<16x16x128xf32> to vector<256x128xf32>
    %13 = arith.truncf %12 : vector<256x128xf32> to vector<256x128xbf16>
    %c0_17 = arith.constant 0 : index
    %c1_18 = arith.constant 1 : index
    %c0_19 = arith.constant 0 : index
    %c0_20 = arith.constant 0 : index
    %14 = vector.load %arg2[%c0_17, %c1_18, %c0_19, %c0_20] : memref<3x3x128x128xbf16, #tpu.memory_space<vmem>>, vector<1x1x128x128xbf16>
    %15 = vector.shape_cast %14 : vector<1x1x128x128xbf16> to vector<128x128xbf16>
    %cst_21 = arith.constant dense<0.000000e+00> : vector<256x128xf32>
    %16 = tpu.matmul %13, %15, %cst_21 {dimension_numbers = #tpu.dot_dimension_numbers<[1], [0], [0], [1], [0, 0, 1, 1], [], []>} : vector<256x128xbf16>, vector<128x128xbf16>, vector<256x128xf32> -> vector<256x128xf32>
    %c0_22 = arith.constant 0 : index
    %c0_23 = arith.constant 0 : index
    %17 = vector.load %arg9[%c0_22, %c0_23] : memref<256x128xf32, #tpu.memory_space<vmem>>, vector<256x128xf32>
    %18 = arith.addf %17, %16 : vector<256x128xf32>
    %c0_24 = arith.constant 0 : index
    %c0_25 = arith.constant 0 : index
    %19 = vector.load %arg9[%c0_24, %c0_25] : memref<256x128xf32, #tpu.memory_space<vmem>>, vector<256x128xf32>
    tpu.vector_store %arg9[%c0_24, %c0_25], %18 {strides = array<i32>} : memref<256x128xf32, #tpu.memory_space<vmem>>, vector<256x128xf32>,
    %c0_26 = arith.constant 0 : index
    %c2 = arith.constant 2 : index
    %c0_27 = arith.constant 0 : index
    %20 = vector.load %arg7[%c0_26, %c2, %c0_27] : memref<18x18x128xf32, #tpu.memory_space<vmem>>, vector<16x16x128xf32>
    %21 = vector.shape_cast %20 : vector<16x16x128xf32> to vector<256x128xf32>
    %22 = arith.truncf %21 : vector<256x128xf32> to vector<256x128xbf16>
    %c0_28 = arith.constant 0 : index
    %c2_29 = arith.constant 2 : index
    %c0_30 = arith.constant 0 : index
    %c0_31 = arith.constant 0 : index
    %23 = vector.load %arg2[%c0_28, %c2_29, %c0_30, %c0_31] : memref<3x3x128x128xbf16, #tpu.memory_space<vmem>>, vector<1x1x128x128xbf16>
    %24 = vector.shape_cast %23 : vector<1x1x128x128xbf16> to vector<128x128xbf16>
    %cst_32 = arith.constant dense<0.000000e+00> : vector<256x128xf32>
    %25 = tpu.matmul %22, %24, %cst_32 {dimension_numbers = #tpu.dot_dimension_numbers<[1], [0], [0], [1], [0, 0, 1, 1], [], []>} : vector<256x128xbf16>, vector<128x128xbf16>, vector<256x128xf32> -> vector<256x128xf32>
    %c0_33 = arith.constant 0 : index
    %c0_34 = arith.constant 0 : index
    %26 = vector.load %arg9[%c0_33, %c0_34] : memref<256x128xf32, #tpu.memory_space<vmem>>, vector<256x128xf32>
    %27 = arith.addf %26, %25 : vector<256x128xf32>
    %c0_35 = arith.constant 0 : index
    %c0_36 = arith.constant 0 : index
    %28 = vector.load %arg9[%c0_35, %c0_36] : memref<256x128xf32, #tpu.memory_space<vmem>>, vector<256x128xf32>
    tpu.vector_store %arg9[%c0_35, %c0_36], %27 {strides = array<i32>} : memref<256x128xf32, #tpu.memory_space<vmem>>, vector<256x128xf32>,
    %c1_37 = arith.constant 1 : index
    %c0_38 = arith.constant 0 : index
    %c0_39 = arith.constant 0 : index
    %29 = vector.load %arg7[%c1_37, %c0_38, %c0_39] : memref<18x18x128xf32, #tpu.memory_space<vmem>>, vector<16x16x128xf32>
    %30 = vector.shape_cast %29 : vector<16x16x128xf32> to vector<256x128xf32>
    %31 = arith.truncf %30 : vector<256x128xf32> to vector<256x128xbf16>
    %c1_40 = arith.constant 1 : index
    %c0_41 = arith.constant 0 : index
    %c0_42 = arith.constant 0 : index
    %c0_43 = arith.constant 0 : index
    %32 = vector.load %arg2[%c1_40, %c0_41, %c0_42, %c0_43] : memref<3x3x128x128xbf16, #tpu.memory_space<vmem>>, vector<1x1x128x128xbf16>
    %33 = vector.shape_cast %32 : vector<1x1x128x128xbf16> to vector<128x128xbf16>
    %cst_44 = arith.constant dense<0.000000e+00> : vector<256x128xf32>
    %34 = tpu.matmul %31, %33, %cst_44 {dimension_numbers = #tpu.dot_dimension_numbers<[1], [0], [0], [1], [0, 0, 1, 1], [], []>} : vector<256x128xbf16>, vector<128x128xbf16>, vector<256x128xf32> -> vector<256x128xf32>
    %c0_45 = arith.constant 0 : index
    %c0_46 = arith.constant 0 : index
    %35 = vector.load %arg9[%c0_45, %c0_46] : memref<256x128xf32, #tpu.memory_space<vmem>>, vector<256x128xf32>
    %36 = arith.addf %35, %34 : vector<256x128xf32>
    %c0_47 = arith.constant 0 : index
    %c0_48 = arith.constant 0 : index
    %37 = vector.load %arg9[%c0_47, %c0_48] : memref<256x128xf32, #tpu.memory_space<vmem>>, vector<256x128xf32>
    tpu.vector_store %arg9[%c0_47, %c0_48], %36 {strides = array<i32>} : memref<256x128xf32, #tpu.memory_space<vmem>>, vector<256x128xf32>,
    %c1_49 = arith.constant 1 : index
    %c1_50 = arith.constant 1 : index
    %c0_51 = arith.constant 0 : index
    %38 = vector.load %arg7[%c1_49, %c1_50, %c0_51] : memref<18x18x128xf32, #tpu.memory_space<vmem>>, vector<16x16x128xf32>
    %39 = vector.shape_cast %38 : vector<16x16x128xf32> to vector<256x128xf32>
    %40 = arith.truncf %39 : vector<256x128xf32> to vector<256x128xbf16>
    %c1_52 = arith.constant 1 : index
    %c1_53 = arith.constant 1 : index
    %c0_54 = arith.constant 0 : index
    %c0_55 = arith.constant 0 : index
    %41 = vector.load %arg2[%c1_52, %c1_53, %c0_54, %c0_55] : memref<3x3x128x128xbf16, #tpu.memory_space<vmem>>, vector<1x1x128x128xbf16>
    %42 = vector.shape_cast %41 : vector<1x1x128x128xbf16> to vector<128x128xbf16>
    %cst_56 = arith.constant dense<0.000000e+00> : vector<256x128xf32>
    %43 = tpu.matmul %40, %42, %cst_56 {dimension_numbers = #tpu.dot_dimension_numbers<[1], [0], [0], [1], [0, 0, 1, 1], [], []>} : vector<256x128xbf16>, vector<128x128xbf16>, vector<256x128xf32> -> vector<256x128xf32>
    %c0_57 = arith.constant 0 : index
    %c0_58 = arith.constant 0 : index
    %44 = vector.load %arg9[%c0_57, %c0_58] : memref<256x128xf32, #tpu.memory_space<vmem>>, vector<256x128xf32>
    %45 = arith.addf %44, %43 : vector<256x128xf32>
    %c0_59 = arith.constant 0 : index
    %c0_60 = arith.constant 0 : index
    %46 = vector.load %arg9[%c0_59, %c0_60] : memref<256x128xf32, #tpu.memory_space<vmem>>, vector<256x128xf32>
    tpu.vector_store %arg9[%c0_59, %c0_60], %45 {strides = array<i32>} : memref<256x128xf32, #tpu.memory_space<vmem>>, vector<256x128xf32>,
    %c1_61 = arith.constant 1 : index
    %c2_62 = arith.constant 2 : index
    %c0_63 = arith.constant 0 : index
    %47 = vector.load %arg7[%c1_61, %c2_62, %c0_63] : memref<18x18x128xf32, #tpu.memory_space<vmem>>, vector<16x16x128xf32>
    %48 = vector.shape_cast %47 : vector<16x16x128xf32> to vector<256x128xf32>
    %49 = arith.truncf %48 : vector<256x128xf32> to vector<256x128xbf16>
    %c1_64 = arith.constant 1 : index
    %c2_65 = arith.constant 2 : index
    %c0_66 = arith.constant 0 : index
    %c0_67 = arith.constant 0 : index
    %50 = vector.load %arg2[%c1_64, %c2_65, %c0_66, %c0_67] : memref<3x3x128x128xbf16, #tpu.memory_space<vmem>>, vector<1x1x128x128xbf16>
    %51 = vector.shape_cast %50 : vector<1x1x128x128xbf16> to vector<128x128xbf16>
    %cst_68 = arith.constant dense<0.000000e+00> : vector<256x128xf32>
    %52 = tpu.matmul %49, %51, %cst_68 {dimension_numbers = #tpu.dot_dimension_numbers<[1], [0], [0], [1], [0, 0, 1, 1], [], []>} : vector<256x128xbf16>, vector<128x128xbf16>, vector<256x128xf32> -> vector<256x128xf32>
    %c0_69 = arith.constant 0 : index
    %c0_70 = arith.constant 0 : index
    %53 = vector.load %arg9[%c0_69, %c0_70] : memref<256x128xf32, #tpu.memory_space<vmem>>, vector<256x128xf32>
    %54 = arith.addf %53, %52 : vector<256x128xf32>
    %c0_71 = arith.constant 0 : index
    %c0_72 = arith.constant 0 : index
    %55 = vector.load %arg9[%c0_71, %c0_72] : memref<256x128xf32, #tpu.memory_space<vmem>>, vector<256x128xf32>
    tpu.vector_store %arg9[%c0_71, %c0_72], %54 {strides = array<i32>} : memref<256x128xf32, #tpu.memory_space<vmem>>, vector<256x128xf32>,
    %c2_73 = arith.constant 2 : index
    %c0_74 = arith.constant 0 : index
    %c0_75 = arith.constant 0 : index
    %56 = vector.load %arg7[%c2_73, %c0_74, %c0_75] : memref<18x18x128xf32, #tpu.memory_space<vmem>>, vector<16x16x128xf32>
    %57 = vector.shape_cast %56 : vector<16x16x128xf32> to vector<256x128xf32>
    %58 = arith.truncf %57 : vector<256x128xf32> to vector<256x128xbf16>
    %c2_76 = arith.constant 2 : index
    %c0_77 = arith.constant 0 : index
    %c0_78 = arith.constant 0 : index
    %c0_79 = arith.constant 0 : index
    %59 = vector.load %arg2[%c2_76, %c0_77, %c0_78, %c0_79] : memref<3x3x128x128xbf16, #tpu.memory_space<vmem>>, vector<1x1x128x128xbf16>
    %60 = vector.shape_cast %59 : vector<1x1x128x128xbf16> to vector<128x128xbf16>
    %cst_80 = arith.constant dense<0.000000e+00> : vector<256x128xf32>
    %61 = tpu.matmul %58, %60, %cst_80 {dimension_numbers = #tpu.dot_dimension_numbers<[1], [0], [0], [1], [0, 0, 1, 1], [], []>} : vector<256x128xbf16>, vector<128x128xbf16>, vector<256x128xf32> -> vector<256x128xf32>
    %c0_81 = arith.constant 0 : index
    %c0_82 = arith.constant 0 : index
    %62 = vector.load %arg9[%c0_81, %c0_82] : memref<256x128xf32, #tpu.memory_space<vmem>>, vector<256x128xf32>
    %63 = arith.addf %62, %61 : vector<256x128xf32>
    %c0_83 = arith.constant 0 : index
    %c0_84 = arith.constant 0 : index
    %64 = vector.load %arg9[%c0_83, %c0_84] : memref<256x128xf32, #tpu.memory_space<vmem>>, vector<256x128xf32>
    tpu.vector_store %arg9[%c0_83, %c0_84], %63 {strides = array<i32>} : memref<256x128xf32, #tpu.memory_space<vmem>>, vector<256x128xf32>,
    %c2_85 = arith.constant 2 : index
    %c1_86 = arith.constant 1 : index
    %c0_87 = arith.constant 0 : index
    %65 = vector.load %arg7[%c2_85, %c1_86, %c0_87] : memref<18x18x128xf32, #tpu.memory_space<vmem>>, vector<16x16x128xf32>
    %66 = vector.shape_cast %65 : vector<16x16x128xf32> to vector<256x128xf32>
    %67 = arith.truncf %66 : vector<256x128xf32> to vector<256x128xbf16>
    %c2_88 = arith.constant 2 : index
    %c1_89 = arith.constant 1 : index
    %c0_90 = arith.constant 0 : index
    %c0_91 = arith.constant 0 : index
    %68 = vector.load %arg2[%c2_88, %c1_89, %c0_90, %c0_91] : memref<3x3x128x128xbf16, #tpu.memory_space<vmem>>, vector<1x1x128x128xbf16>
    %69 = vector.shape_cast %68 : vector<1x1x128x128xbf16> to vector<128x128xbf16>
    %cst_92 = arith.constant dense<0.000000e+00> : vector<256x128xf32>
    %70 = tpu.matmul %67, %69, %cst_92 {dimension_numbers = #tpu.dot_dimension_numbers<[1], [0], [0], [1], [0, 0, 1, 1], [], []>} : vector<256x128xbf16>, vector<128x128xbf16>, vector<256x128xf32> -> vector<256x128xf32>
    %c0_93 = arith.constant 0 : index
    %c0_94 = arith.constant 0 : index
    %71 = vector.load %arg9[%c0_93, %c0_94] : memref<256x128xf32, #tpu.memory_space<vmem>>, vector<256x128xf32>
    %72 = arith.addf %71, %70 : vector<256x128xf32>
    %c0_95 = arith.constant 0 : index
    %c0_96 = arith.constant 0 : index
    %73 = vector.load %arg9[%c0_95, %c0_96] : memref<256x128xf32, #tpu.memory_space<vmem>>, vector<256x128xf32>
    tpu.vector_store %arg9[%c0_95, %c0_96], %72 {strides = array<i32>} : memref<256x128xf32, #tpu.memory_space<vmem>>, vector<256x128xf32>,
    %c2_97 = arith.constant 2 : index
    %c2_98 = arith.constant 2 : index
    %c0_99 = arith.constant 0 : index
    %74 = vector.load %arg7[%c2_97, %c2_98, %c0_99] : memref<18x18x128xf32, #tpu.memory_space<vmem>>, vector<16x16x128xf32>
    %75 = vector.shape_cast %74 : vector<16x16x128xf32> to vector<256x128xf32>
    %76 = arith.truncf %75 : vector<256x128xf32> to vector<256x128xbf16>
    %c2_100 = arith.constant 2 : index
    %c2_101 = arith.constant 2 : index
    %c0_102 = arith.constant 0 : index
    %c0_103 = arith.constant 0 : index
    %77 = vector.load %arg2[%c2_100, %c2_101, %c0_102, %c0_103] : memref<3x3x128x128xbf16, #tpu.memory_space<vmem>>, vector<1x1x128x128xbf16>
    %78 = vector.shape_cast %77 : vector<1x1x128x128xbf16> to vector<128x128xbf16>
    %cst_104 = arith.constant dense<0.000000e+00> : vector<256x128xf32>
    %79 = tpu.matmul %76, %78, %cst_104 {dimension_numbers = #tpu.dot_dimension_numbers<[1], [0], [0], [1], [0, 0, 1, 1], [], []>} : vector<256x128xbf16>, vector<128x128xbf16>, vector<256x128xf32> -> vector<256x128xf32>
    %c0_105 = arith.constant 0 : index
    %c0_106 = arith.constant 0 : index
    %80 = vector.load %arg9[%c0_105, %c0_106] : memref<256x128xf32, #tpu.memory_space<vmem>>, vector<256x128xf32>
    %81 = arith.addf %80, %79 : vector<256x128xf32>
    %c0_107 = arith.constant 0 : index
    %c0_108 = arith.constant 0 : index
    %82 = vector.load %arg9[%c0_107, %c0_108] : memref<256x128xf32, #tpu.memory_space<vmem>>, vector<256x128xf32>
    tpu.vector_store %arg9[%c0_107, %c0_108], %81 {strides = array<i32>} : memref<256x128xf32, #tpu.memory_space<vmem>>, vector<256x128xf32>,
    %c0_109 = arith.constant 0 : index
    %c0_110 = arith.constant 0 : index
    %83 = vector.load %arg9[%c0_109, %c0_110] : memref<256x128xf32, #tpu.memory_space<vmem>>, vector<256x128xf32>
    %c0_111 = arith.constant 0 : index
    %c0_112 = arith.constant 0 : index
    %84 = vector.load %arg3[%c0_111, %c0_112] : memref<1x128xf32, #tpu.memory_space<vmem>>, vector<1x128xf32>
    %85 = vector.broadcast %84 : vector<1x128xf32> to vector<256x128xf32>
    %86 = arith.addf %83, %85 : vector<256x128xf32>
    %cst_113 = arith.constant 0.000000e+00 : f32
    %87 = vector.broadcast %cst_113 : f32 to vector<256x128xf32>
    %88 = arith.subf %87, %86 : vector<256x128xf32>
    %89 = math.exp %88 : vector<256x128xf32>
    %cst_114 = arith.constant 1.000000e+00 : f32
    %90 = vector.broadcast %cst_114 : f32 to vector<256x128xf32>
    %91 = arith.addf %90, %89 : vector<256x128xf32>
    %92 = tpu.reciprocal %91 {approx = true} : vector<256x128xf32> -> vector<256x128xf32>
    %93 = arith.mulf %86, %92 : vector<256x128xf32>
    %cst_115 = arith.constant 0.000000e+00 : f32
    %94 = vector.broadcast %cst_115 : f32 to vector<18x18x128xf32>
    %c0_116 = arith.constant 0 : index
    %c0_117 = arith.constant 0 : index
    %c0_118 = arith.constant 0 : index
    %95 = vector.load %arg8[%c0_116, %c0_117, %c0_118] : memref<18x18x128xf32, #tpu.memory_space<vmem>>, vector<18x18x128xf32>
    tpu.vector_store %arg8[%c0_116, %c0_117, %c0_118], %94 {strides = array<i32>} : memref<18x18x128xf32, #tpu.memory_space<vmem>>, vector<18x18x128xf32>,
    %96 = vector.shape_cast %93 : vector<256x128xf32> to vector<16x16x128xf32>
    %c1_119 = arith.constant 1 : index
    %c1_120 = arith.constant 1 : index
    %c0_121 = arith.constant 0 : index
    %97 = vector.load %arg8[%c1_119, %c1_120, %c0_121] : memref<18x18x128xf32, #tpu.memory_space<vmem>>, vector<16x16x128xf32>
    tpu.vector_store %arg8[%c1_119, %c1_120, %c0_121], %96 {strides = array<i32>} : memref<18x18x128xf32, #tpu.memory_space<vmem>>, vector<16x16x128xf32>,
    %c0_122 = arith.constant 0 : index
    %c0_123 = arith.constant 0 : index
    %c0_124 = arith.constant 0 : index
    %98 = vector.load %arg8[%c0_122, %c0_123, %c0_124] : memref<18x18x128xf32, #tpu.memory_space<vmem>>, vector<16x16x128xf32>
    %99 = vector.shape_cast %98 : vector<16x16x128xf32> to vector<256x128xf32>
    %100 = arith.truncf %99 : vector<256x128xf32> to vector<256x128xbf16>
    %c0_125 = arith.constant 0 : index
    %c0_126 = arith.constant 0 : index
    %c0_127 = arith.constant 0 : index
    %c0_128 = arith.constant 0 : index
    %101 = vector.load %arg4[%c0_125, %c0_126, %c0_127, %c0_128] : memref<3x3x128x128xbf16, #tpu.memory_space<vmem>>, vector<1x1x128x128xbf16>
    %102 = vector.shape_cast %101 : vector<1x1x128x128xbf16> to vector<128x128xbf16>
    %cst_129 = arith.constant dense<0.000000e+00> : vector<256x128xf32>
    %103 = tpu.matmul %100, %102, %cst_129 {dimension_numbers = #tpu.dot_dimension_numbers<[1], [0], [0], [1], [0, 0, 1, 1], [], []>} : vector<256x128xbf16>, vector<128x128xbf16>, vector<256x128xf32> -> vector<256x128xf32>
    %c0_130 = arith.constant 0 : index
    %c0_131 = arith.constant 0 : index
    %104 = vector.load %arg9[%c0_130, %c0_131] : memref<256x128xf32, #tpu.memory_space<vmem>>, vector<256x128xf32>
    tpu.vector_store %arg9[%c0_130, %c0_131], %103 {strides = array<i32>} : memref<256x128xf32, #tpu.memory_space<vmem>>, vector<256x128xf32>,
    %c0_132 = arith.constant 0 : index
    %c1_133 = arith.constant 1 : index
    %c0_134 = arith.constant 0 : index
    %105 = vector.load %arg8[%c0_132, %c1_133, %c0_134] : memref<18x18x128xf32, #tpu.memory_space<vmem>>, vector<16x16x128xf32>
    %106 = vector.shape_cast %105 : vector<16x16x128xf32> to vector<256x128xf32>
    %107 = arith.truncf %106 : vector<256x128xf32> to vector<256x128xbf16>
    %c0_135 = arith.constant 0 : index
    %c1_136 = arith.constant 1 : index
    %c0_137 = arith.constant 0 : index
    %c0_138 = arith.constant 0 : index
    %108 = vector.load %arg4[%c0_135, %c1_136, %c0_137, %c0_138] : memref<3x3x128x128xbf16, #tpu.memory_space<vmem>>, vector<1x1x128x128xbf16>
    %109 = vector.shape_cast %108 : vector<1x1x128x128xbf16> to vector<128x128xbf16>
    %cst_139 = arith.constant dense<0.000000e+00> : vector<256x128xf32>
    %110 = tpu.matmul %107, %109, %cst_139 {dimension_numbers = #tpu.dot_dimension_numbers<[1], [0], [0], [1], [0, 0, 1, 1], [], []>} : vector<256x128xbf16>, vector<128x128xbf16>, vector<256x128xf32> -> vector<256x128xf32>
    %c0_140 = arith.constant 0 : index
    %c0_141 = arith.constant 0 : index
    %111 = vector.load %arg9[%c0_140, %c0_141] : memref<256x128xf32, #tpu.memory_space<vmem>>, vector<256x128xf32>
    %112 = arith.addf %111, %110 : vector<256x128xf32>
    %c0_142 = arith.constant 0 : index
    %c0_143 = arith.constant 0 : index
    %113 = vector.load %arg9[%c0_142, %c0_143] : memref<256x128xf32, #tpu.memory_space<vmem>>, vector<256x128xf32>
    tpu.vector_store %arg9[%c0_142, %c0_143], %112 {strides = array<i32>} : memref<256x128xf32, #tpu.memory_space<vmem>>, vector<256x128xf32>,
    %c0_144 = arith.constant 0 : index
    %c2_145 = arith.constant 2 : index
    %c0_146 = arith.constant 0 : index
    %114 = vector.load %arg8[%c0_144, %c2_145, %c0_146] : memref<18x18x128xf32, #tpu.memory_space<vmem>>, vector<16x16x128xf32>
    %115 = vector.shape_cast %114 : vector<16x16x128xf32> to vector<256x128xf32>
    %116 = arith.truncf %115 : vector<256x128xf32> to vector<256x128xbf16>
    %c0_147 = arith.constant 0 : index
    %c2_148 = arith.constant 2 : index
    %c0_149 = arith.constant 0 : index
    %c0_150 = arith.constant 0 : index
    %117 = vector.load %arg4[%c0_147, %c2_148, %c0_149, %c0_150] : memref<3x3x128x128xbf16, #tpu.memory_space<vmem>>, vector<1x1x128x128xbf16>
    %118 = vector.shape_cast %117 : vector<1x1x128x128xbf16> to vector<128x128xbf16>
    %cst_151 = arith.constant dense<0.000000e+00> : vector<256x128xf32>
    %119 = tpu.matmul %116, %118, %cst_151 {dimension_numbers = #tpu.dot_dimension_numbers<[1], [0], [0], [1], [0, 0, 1, 1], [], []>} : vector<256x128xbf16>, vector<128x128xbf16>, vector<256x128xf32> -> vector<256x128xf32>
    %c0_152 = arith.constant 0 : index
    %c0_153 = arith.constant 0 : index
    %120 = vector.load %arg9[%c0_152, %c0_153] : memref<256x128xf32, #tpu.memory_space<vmem>>, vector<256x128xf32>
    %121 = arith.addf %120, %119 : vector<256x128xf32>
    %c0_154 = arith.constant 0 : index
    %c0_155 = arith.constant 0 : index
    %122 = vector.load %arg9[%c0_154, %c0_155] : memref<256x128xf32, #tpu.memory_space<vmem>>, vector<256x128xf32>
    tpu.vector_store %arg9[%c0_154, %c0_155], %121 {strides = array<i32>} : memref<256x128xf32, #tpu.memory_space<vmem>>, vector<256x128xf32>,
    %c1_156 = arith.constant 1 : index
    %c0_157 = arith.constant 0 : index
    %c0_158 = arith.constant 0 : index
    %123 = vector.load %arg8[%c1_156, %c0_157, %c0_158] : memref<18x18x128xf32, #tpu.memory_space<vmem>>, vector<16x16x128xf32>
    %124 = vector.shape_cast %123 : vector<16x16x128xf32> to vector<256x128xf32>
    %125 = arith.truncf %124 : vector<256x128xf32> to vector<256x128xbf16>
    %c1_159 = arith.constant 1 : index
    %c0_160 = arith.constant 0 : index
    %c0_161 = arith.constant 0 : index
    %c0_162 = arith.constant 0 : index
    %126 = vector.load %arg4[%c1_159, %c0_160, %c0_161, %c0_162] : memref<3x3x128x128xbf16, #tpu.memory_space<vmem>>, vector<1x1x128x128xbf16>
    %127 = vector.shape_cast %126 : vector<1x1x128x128xbf16> to vector<128x128xbf16>
    %cst_163 = arith.constant dense<0.000000e+00> : vector<256x128xf32>
    %128 = tpu.matmul %125, %127, %cst_163 {dimension_numbers = #tpu.dot_dimension_numbers<[1], [0], [0], [1], [0, 0, 1, 1], [], []>} : vector<256x128xbf16>, vector<128x128xbf16>, vector<256x128xf32> -> vector<256x128xf32>
    %c0_164 = arith.constant 0 : index
    %c0_165 = arith.constant 0 : index
    %129 = vector.load %arg9[%c0_164, %c0_165] : memref<256x128xf32, #tpu.memory_space<vmem>>, vector<256x128xf32>
    %130 = arith.addf %129, %128 : vector<256x128xf32>
    %c0_166 = arith.constant 0 : index
    %c0_167 = arith.constant 0 : index
    %131 = vector.load %arg9[%c0_166, %c0_167] : memref<256x128xf32, #tpu.memory_space<vmem>>, vector<256x128xf32>
    tpu.vector_store %arg9[%c0_166, %c0_167], %130 {strides = array<i32>} : memref<256x128xf32, #tpu.memory_space<vmem>>, vector<256x128xf32>,
    %c1_168 = arith.constant 1 : index
    %c1_169 = arith.constant 1 : index
    %c0_170 = arith.constant 0 : index
    %132 = vector.load %arg8[%c1_168, %c1_169, %c0_170] : memref<18x18x128xf32, #tpu.memory_space<vmem>>, vector<16x16x128xf32>
    %133 = vector.shape_cast %132 : vector<16x16x128xf32> to vector<256x128xf32>
    %134 = arith.truncf %133 : vector<256x128xf32> to vector<256x128xbf16>
    %c1_171 = arith.constant 1 : index
    %c1_172 = arith.constant 1 : index
    %c0_173 = arith.constant 0 : index
    %c0_174 = arith.constant 0 : index
    %135 = vector.load %arg4[%c1_171, %c1_172, %c0_173, %c0_174] : memref<3x3x128x128xbf16, #tpu.memory_space<vmem>>, vector<1x1x128x128xbf16>
    %136 = vector.shape_cast %135 : vector<1x1x128x128xbf16> to vector<128x128xbf16>
    %cst_175 = arith.constant dense<0.000000e+00> : vector<256x128xf32>
    %137 = tpu.matmul %134, %136, %cst_175 {dimension_numbers = #tpu.dot_dimension_numbers<[1], [0], [0], [1], [0, 0, 1, 1], [], []>} : vector<256x128xbf16>, vector<128x128xbf16>, vector<256x128xf32> -> vector<256x128xf32>
    %c0_176 = arith.constant 0 : index
    %c0_177 = arith.constant 0 : index
    %138 = vector.load %arg9[%c0_176, %c0_177] : memref<256x128xf32, #tpu.memory_space<vmem>>, vector<256x128xf32>
    %139 = arith.addf %138, %137 : vector<256x128xf32>
    %c0_178 = arith.constant 0 : index
    %c0_179 = arith.constant 0 : index
    %140 = vector.load %arg9[%c0_178, %c0_179] : memref<256x128xf32, #tpu.memory_space<vmem>>, vector<256x128xf32>
    tpu.vector_store %arg9[%c0_178, %c0_179], %139 {strides = array<i32>} : memref<256x128xf32, #tpu.memory_space<vmem>>, vector<256x128xf32>,
    %c1_180 = arith.constant 1 : index
    %c2_181 = arith.constant 2 : index
    %c0_182 = arith.constant 0 : index
    %141 = vector.load %arg8[%c1_180, %c2_181, %c0_182] : memref<18x18x128xf32, #tpu.memory_space<vmem>>, vector<16x16x128xf32>
    %142 = vector.shape_cast %141 : vector<16x16x128xf32> to vector<256x128xf32>
    %143 = arith.truncf %142 : vector<256x128xf32> to vector<256x128xbf16>
    %c1_183 = arith.constant 1 : index
    %c2_184 = arith.constant 2 : index
    %c0_185 = arith.constant 0 : index
    %c0_186 = arith.constant 0 : index
    %144 = vector.load %arg4[%c1_183, %c2_184, %c0_185, %c0_186] : memref<3x3x128x128xbf16, #tpu.memory_space<vmem>>, vector<1x1x128x128xbf16>
    %145 = vector.shape_cast %144 : vector<1x1x128x128xbf16> to vector<128x128xbf16>
    %cst_187 = arith.constant dense<0.000000e+00> : vector<256x128xf32>
    %146 = tpu.matmul %143, %145, %cst_187 {dimension_numbers = #tpu.dot_dimension_numbers<[1], [0], [0], [1], [0, 0, 1, 1], [], []>} : vector<256x128xbf16>, vector<128x128xbf16>, vector<256x128xf32> -> vector<256x128xf32>
    %c0_188 = arith.constant 0 : index
    %c0_189 = arith.constant 0 : index
    %147 = vector.load %arg9[%c0_188, %c0_189] : memref<256x128xf32, #tpu.memory_space<vmem>>, vector<256x128xf32>
    %148 = arith.addf %147, %146 : vector<256x128xf32>
    %c0_190 = arith.constant 0 : index
    %c0_191 = arith.constant 0 : index
    %149 = vector.load %arg9[%c0_190, %c0_191] : memref<256x128xf32, #tpu.memory_space<vmem>>, vector<256x128xf32>
    tpu.vector_store %arg9[%c0_190, %c0_191], %148 {strides = array<i32>} : memref<256x128xf32, #tpu.memory_space<vmem>>, vector<256x128xf32>,
    %c2_192 = arith.constant 2 : index
    %c0_193 = arith.constant 0 : index
    %c0_194 = arith.constant 0 : index
    %150 = vector.load %arg8[%c2_192, %c0_193, %c0_194] : memref<18x18x128xf32, #tpu.memory_space<vmem>>, vector<16x16x128xf32>
    %151 = vector.shape_cast %150 : vector<16x16x128xf32> to vector<256x128xf32>
    %152 = arith.truncf %151 : vector<256x128xf32> to vector<256x128xbf16>
    %c2_195 = arith.constant 2 : index
    %c0_196 = arith.constant 0 : index
    %c0_197 = arith.constant 0 : index
    %c0_198 = arith.constant 0 : index
    %153 = vector.load %arg4[%c2_195, %c0_196, %c0_197, %c0_198] : memref<3x3x128x128xbf16, #tpu.memory_space<vmem>>, vector<1x1x128x128xbf16>
    %154 = vector.shape_cast %153 : vector<1x1x128x128xbf16> to vector<128x128xbf16>
    %cst_199 = arith.constant dense<0.000000e+00> : vector<256x128xf32>
    %155 = tpu.matmul %152, %154, %cst_199 {dimension_numbers = #tpu.dot_dimension_numbers<[1], [0], [0], [1], [0, 0, 1, 1], [], []>} : vector<256x128xbf16>, vector<128x128xbf16>, vector<256x128xf32> -> vector<256x128xf32>
    %c0_200 = arith.constant 0 : index
    %c0_201 = arith.constant 0 : index
    %156 = vector.load %arg9[%c0_200, %c0_201] : memref<256x128xf32, #tpu.memory_space<vmem>>, vector<256x128xf32>
    %157 = arith.addf %156, %155 : vector<256x128xf32>
    %c0_202 = arith.constant 0 : index
    %c0_203 = arith.constant 0 : index
    %158 = vector.load %arg9[%c0_202, %c0_203] : memref<256x128xf32, #tpu.memory_space<vmem>>, vector<256x128xf32>
    tpu.vector_store %arg9[%c0_202, %c0_203], %157 {strides = array<i32>} : memref<256x128xf32, #tpu.memory_space<vmem>>, vector<256x128xf32>,
    %c2_204 = arith.constant 2 : index
    %c1_205 = arith.constant 1 : index
    %c0_206 = arith.constant 0 : index
    %159 = vector.load %arg8[%c2_204, %c1_205, %c0_206] : memref<18x18x128xf32, #tpu.memory_space<vmem>>, vector<16x16x128xf32>
    %160 = vector.shape_cast %159 : vector<16x16x128xf32> to vector<256x128xf32>
    %161 = arith.truncf %160 : vector<256x128xf32> to vector<256x128xbf16>
    %c2_207 = arith.constant 2 : index
    %c1_208 = arith.constant 1 : index
    %c0_209 = arith.constant 0 : index
    %c0_210 = arith.constant 0 : index
    %162 = vector.load %arg4[%c2_207, %c1_208, %c0_209, %c0_210] : memref<3x3x128x128xbf16, #tpu.memory_space<vmem>>, vector<1x1x128x128xbf16>
    %163 = vector.shape_cast %162 : vector<1x1x128x128xbf16> to vector<128x128xbf16>
    %cst_211 = arith.constant dense<0.000000e+00> : vector<256x128xf32>
    %164 = tpu.matmul %161, %163, %cst_211 {dimension_numbers = #tpu.dot_dimension_numbers<[1], [0], [0], [1], [0, 0, 1, 1], [], []>} : vector<256x128xbf16>, vector<128x128xbf16>, vector<256x128xf32> -> vector<256x128xf32>
    %c0_212 = arith.constant 0 : index
    %c0_213 = arith.constant 0 : index
    %165 = vector.load %arg9[%c0_212, %c0_213] : memref<256x128xf32, #tpu.memory_space<vmem>>, vector<256x128xf32>
    %166 = arith.addf %165, %164 : vector<256x128xf32>
    %c0_214 = arith.constant 0 : index
    %c0_215 = arith.constant 0 : index
    %167 = vector.load %arg9[%c0_214, %c0_215] : memref<256x128xf32, #tpu.memory_space<vmem>>, vector<256x128xf32>
    tpu.vector_store %arg9[%c0_214, %c0_215], %166 {strides = array<i32>} : memref<256x128xf32, #tpu.memory_space<vmem>>, vector<256x128xf32>,
    %c2_216 = arith.constant 2 : index
    %c2_217 = arith.constant 2 : index
    %c0_218 = arith.constant 0 : index
    %168 = vector.load %arg8[%c2_216, %c2_217, %c0_218] : memref<18x18x128xf32, #tpu.memory_space<vmem>>, vector<16x16x128xf32>
    %169 = vector.shape_cast %168 : vector<16x16x128xf32> to vector<256x128xf32>
    %170 = arith.truncf %169 : vector<256x128xf32> to vector<256x128xbf16>
    %c2_219 = arith.constant 2 : index
    %c2_220 = arith.constant 2 : index
    %c0_221 = arith.constant 0 : index
    %c0_222 = arith.constant 0 : index
    %171 = vector.load %arg4[%c2_219, %c2_220, %c0_221, %c0_222] : memref<3x3x128x128xbf16, #tpu.memory_space<vmem>>, vector<1x1x128x128xbf16>
    %172 = vector.shape_cast %171 : vector<1x1x128x128xbf16> to vector<128x128xbf16>
    %cst_223 = arith.constant dense<0.000000e+00> : vector<256x128xf32>
    %173 = tpu.matmul %170, %172, %cst_223 {dimension_numbers = #tpu.dot_dimension_numbers<[1], [0], [0], [1], [0, 0, 1, 1], [], []>} : vector<256x128xbf16>, vector<128x128xbf16>, vector<256x128xf32> -> vector<256x128xf32>
    %c0_224 = arith.constant 0 : index
    %c0_225 = arith.constant 0 : index
    %174 = vector.load %arg9[%c0_224, %c0_225] : memref<256x128xf32, #tpu.memory_space<vmem>>, vector<256x128xf32>
    %175 = arith.addf %174, %173 : vector<256x128xf32>
    %c0_226 = arith.constant 0 : index
    %c0_227 = arith.constant 0 : index
    %176 = vector.load %arg9[%c0_226, %c0_227] : memref<256x128xf32, #tpu.memory_space<vmem>>, vector<256x128xf32>
    tpu.vector_store %arg9[%c0_226, %c0_227], %175 {strides = array<i32>} : memref<256x128xf32, #tpu.memory_space<vmem>>, vector<256x128xf32>,
    %c0_228 = arith.constant 0 : index
    %c0_229 = arith.constant 0 : index
    %177 = vector.load %arg9[%c0_228, %c0_229] : memref<256x128xf32, #tpu.memory_space<vmem>>, vector<256x128xf32>
    %c0_230 = arith.constant 0 : index
    %c0_231 = arith.constant 0 : index
    %178 = vector.load %arg5[%c0_230, %c0_231] : memref<1x128xf32, #tpu.memory_space<vmem>>, vector<1x128xf32>
    %179 = vector.broadcast %178 : vector<1x128xf32> to vector<256x128xf32>
    %180 = arith.addf %177, %179 : vector<256x128xf32>
    %cst_232 = arith.constant 0.000000e+00 : f32
    %181 = vector.broadcast %cst_232 : f32 to vector<256x128xf32>
    %182 = arith.subf %181, %180 : vector<256x128xf32>
    %183 = math.exp %182 : vector<256x128xf32>
    %cst_233 = arith.constant 1.000000e+00 : f32
    %184 = vector.broadcast %cst_233 : f32 to vector<256x128xf32>
    %185 = arith.addf %184, %183 : vector<256x128xf32>
    %186 = tpu.reciprocal %185 {approx = true} : vector<256x128xf32> -> vector<256x128xf32>
    %187 = arith.mulf %180, %186 : vector<256x128xf32>
    %188 = vector.shape_cast %187 : vector<256x128xf32> to vector<16x16x128xf32>
    %c1_234 = arith.constant 1 : index
    %c1_235 = arith.constant 1 : index
    %c0_236 = arith.constant 0 : index
    %189 = vector.load %arg7[%c1_234, %c1_235, %c0_236] : memref<18x18x128xf32, #tpu.memory_space<vmem>>, vector<16x16x128xf32>
    %190 = arith.addf %188, %189 : vector<16x16x128xf32>
    %191 = vector.shape_cast %190 : vector<16x16x128xf32> to vector<1x16x16x128xf32>
    %c0_237 = arith.constant 0 : index
    %c0_238 = arith.constant 0 : index
    %c0_239 = arith.constant 0 : index
    %c0_240 = arith.constant 0 : index
    %192 = vector.load %arg6[%c0_237, %c0_238, %c0_239, %c0_240] : memref<1x16x16x128xf32, #tpu.memory_space<vmem>>, vector<1x16x16x128xf32>
    tpu.vector_store %arg6[%c0_237, %c0_238, %c0_239, %c0_240], %191 {strides = array<i32>} : memref<1x16x16x128xf32, #tpu.memory_space<vmem>>, vector<1x16x16x128xf32>,
    return
  }
  func.func @transform_0(%arg0: i32) -> (i32, i32, i32, i32) {
    %c0_i32 = arith.constant 0 : i32
    %c0_i32_0 = arith.constant 0 : i32
    %c0_i32_1 = arith.constant 0 : i32
    %c0_i32_2 = arith.constant 0 : i32
    return %arg0, %c0_i32, %c0_i32_0, %c0_i32_1 : i32, i32, i32, i32
  }
  func.func @transform_1(%arg0: i32) -> (i32, i32, i32, i32) {
    %c0_i32 = arith.constant 0 : i32
    %c0_i32_0 = arith.constant 0 : i32
    %c0_i32_1 = arith.constant 0 : i32
    %c0_i32_2 = arith.constant 0 : i32
    %c0_i32_3 = arith.constant 0 : i32
    return %c0_i32, %c0_i32_0, %c0_i32_1, %c0_i32_2 : i32, i32, i32, i32
  }
  func.func @transform_2(%arg0: i32) -> (i32, i32) {
    %c0_i32 = arith.constant 0 : i32
    %c0_i32_0 = arith.constant 0 : i32
    %c0_i32_1 = arith.constant 0 : i32
    return %c0_i32, %c0_i32_0 : i32, i32
  }
  func.func @transform_3(%arg0: i32) -> (i32, i32, i32, i32) {
    %c0_i32 = arith.constant 0 : i32
    %c0_i32_0 = arith.constant 0 : i32
    %c0_i32_1 = arith.constant 0 : i32
    %c0_i32_2 = arith.constant 0 : i32
    %c0_i32_3 = arith.constant 0 : i32
    return %c0_i32, %c0_i32_0, %c0_i32_1, %c0_i32_2 : i32, i32, i32, i32
  }
  func.func @transform_4(%arg0: i32) -> (i32, i32) {
    %c0_i32 = arith.constant 0 : i32
    %c0_i32_0 = arith.constant 0 : i32
    %c0_i32_1 = arith.constant 0 : i32
    return %c0_i32, %c0_i32_0 : i32, i32
  }
  func.func @transform_5(%arg0: i32) -> (i32, i32, i32, i32) {
    %c0_i32 = arith.constant 0 : i32
    %c0_i32_0 = arith.constant 0 : i32
    %c0_i32_1 = arith.constant 0 : i32
    %c0_i32_2 = arith.constant 0 : i32
    return %arg0, %c0_i32, %c0_i32_0, %c0_i32_1 : i32, i32, i32, i32
  }
}

</mosaic_0001>

<llo_original>
// kernel: repn_bottleneck_pallas.1
$region0: #{repn_bottleneck_pallas.1}
  #allocation0 [shape = 'u32[]', space=smem, size = 0x4, offset = 0x4, fixed_abs, tag = 'smem constant byte address 0x4 - core index']
  #allocation1 [shape = 'u32[144,128]{1,0:T(1,128)}', space=vmem, size = 0x12000, scoped, tag = 'internal scratch']
  #allocation2 [shape = 'f32[18,18,128]{2,1,0:T(8,128)}', space=vmem, size = 0x36000, scoped, tag = 'scratch operand']
  #allocation3 [shape = 'f32[18,18,128]{2,1,0:T(8,128)}', space=vmem, size = 0x36000, scoped, tag = 'scratch operand']
  #allocation4 [shape = 'f32[256,128]{1,0:T(8,128)}', space=vmem, size = 0x20000, scoped, tag = 'scratch operand']
  %s0 = inlined_call_operand.vmem [shape: bf16[2,18,18,128], index: 0, kind: input, shape index: {}]
  %s1 = inlined_call_operand.vmem [shape: bf16[3,3,128,128], index: 1, kind: input, shape index: {}]
  %s2 = inlined_call_operand.vmem [shape: f32[1,128], index: 2, kind: input, shape index: {}]
  %s3 = inlined_call_operand.vmem [shape: bf16[3,3,128,128], index: 3, kind: input, shape index: {}]
  %s4 = inlined_call_operand.vmem [shape: f32[1,128], index: 4, kind: input, shape index: {}]
  %s5 = inlined_call_operand.vmem [shape: f32[2,16,16,128], index: 5, kind: output, shape index: {}]
  %s6 = sld [smem:[#allocation0]]
  $region53: #{repn_bottleneck_pallas.1} parent=0
    _
  %s8 = ssub.s32 1, %s6
  %s9 = scalar_select 0, %s8, %s6
  loop: start=0, step=1, limit=4
  $region2: #{repn_bottleneck_pallas.1} parent=0 // loop_pre_header
    _
  $region3: #{repn_bottleneck_pallas.1} parent=0 // loop_header
    %s11 = sphi 0, %s15
    %p12 = scmp.ge.s32.totalorder %s11, 4
    %s21 = sphi 0, %s23
    %s24 = sphi 0, %s21
    %s25 = sphi 0, %s24
    %s41 = sphi 0, %s25
    %s45 = sphi 0, %s45
    %s47 = sphi 0, %s45
    %s48 = sphi 0, %s47
    %s62 = sphi 0, %s48
    %s66 = sphi 0, %s66
    %s68 = sphi 0, %s66
    %s69 = sphi 0, %s68
    %s83 = sphi 0, %s69
    %s87 = sphi 0, %s87
    %s89 = sphi 0, %s87
    %s90 = sphi 0, %s89
    %s104 = sphi 0, %s90
    %s108 = sphi 0, %s108
    %s110 = sphi 0, %s108
    %s111 = sphi 0, %s110
    %s125 = sphi 0, %s111
    %s131 = sphi 0, %s133
    %s134 = sphi 0, %s131
    %s135 = sphi 0, %s134
    %s151 = sphi 0, %s135
  $region4: #{repn_bottleneck_pallas.1} parent=0 // loop_header_branch
    %14 = sbr.rel (%p12) target = $region8
  $region5: #{repn_bottleneck_pallas.1} parent=0 // loop_body
    %s16 = ssub.s32 %s11, 1
    %s17 = ssub.s32 %s11, 2
    %s18 = sadd.s32 %s11, 1
    %s19 = ssub.s32 %s11, %s18
    %p20 = scmp.eq.s32.totalorder %s19, 0
    %s22 = sadd.s32 %s21, 1
    %s23 = scalar_select %p20, %s21, %s22
    %p26 = pneg %p20
    %p27 = scmp.eq.s32.totalorder %s11, 1
    %p28 = por %p26, %p27
    %p29 = scmp.ne.s32.totalorder %s21, %s24
    %p30 = scmp.eq.s32.totalorder %s11, 0
    %p31 = por %p29, %p30
    %p32 = scmp.ne.s32.totalorder %s21, %s24
    %p33 = scmp.eq.s32.totalorder %s16, 1
    %p34 = por %p32, %p33
    %p35 = scmp.ne.s32.totalorder %s24, %s25
    %p36 = scmp.eq.s32.totalorder %s16, 0
    %p37 = por %p35, %p36
    %p38 = scmp.ne.s32.totalorder %s24, %s25
    %p39 = scmp.eq.s32.totalorder %s17, 1
    %p40 = por %p38, %p39
    %p42 = scmp.ne.s32.totalorder %s25, %s41
    %p43 = scmp.eq.s32.totalorder %s17, 0
    %p44 = por %p42, %p43
    %s46 = sadd.s32 %s45, 1
    %p49 = scmp.eq.s32.totalorder %s11, 1
    %p50 = scmp.ne.s32.totalorder %s45, %s47
    %p51 = scmp.eq.s32.totalorder %s11, 0
    %p52 = por %p50, %p51
    %p53 = scmp.ne.s32.totalorder %s45, %s47
    %p54 = scmp.eq.s32.totalorder %s16, 1
    %p55 = por %p53, %p54
    %p56 = scmp.ne.s32.totalorder %s47, %s48
    %p57 = scmp.eq.s32.totalorder %s16, 0
    %p58 = por %p56, %p57
    %p59 = scmp.ne.s32.totalorder %s47, %s48
    %p60 = scmp.eq.s32.totalorder %s17, 1
    %p61 = por %p59, %p60
    %p63 = scmp.ne.s32.totalorder %s48, %s62
    %p64 = scmp.eq.s32.totalorder %s17, 0
    %p65 = por %p63, %p64
    %s67 = sadd.s32 %s66, 1
    %p70 = scmp.eq.s32.totalorder %s11, 1
    %p71 = scmp.ne.s32.totalorder %s66, %s68
    %p72 = scmp.eq.s32.totalorder %s11, 0
    %p73 = por %p71, %p72
    %p74 = scmp.ne.s32.totalorder %s66, %s68
    %p75 = scmp.eq.s32.totalorder %s16, 1
    %p76 = por %p74, %p75
    %p77 = scmp.ne.s32.totalorder %s68, %s69
    %p78 = scmp.eq.s32.totalorder %s16, 0
    %p79 = por %p77, %p78
    %p80 = scmp.ne.s32.totalorder %s68, %s69
    %p81 = scmp.eq.s32.totalorder %s17, 1
    %p82 = por %p80, %p81
    %p84 = scmp.ne.s32.totalorder %s69, %s83
    %p85 = scmp.eq.s32.totalorder %s17, 0
    %p86 = por %p84, %p85
    %s88 = sadd.s32 %s87, 1
    %p91 = scmp.eq.s32.totalorder %s11, 1
    %p92 = scmp.ne.s32.totalorder %s87, %s89
    %p93 = scmp.eq.s32.totalorder %s11, 0
    %p94 = por %p92, %p93
    %p95 = scmp.ne.s32.totalorder %s87, %s89
    %p96 = scmp.eq.s32.totalorder %s16, 1
    %p97 = por %p95, %p96
    %p98 = scmp.ne.s32.totalorder %s89, %s90
    %p99 = scmp.eq.s32.totalorder %s16, 0
    %p100 = por %p98, %p99
    %p101 = scmp.ne.s32.totalorder %s89, %s90
    %p102 = scmp.eq.s32.totalorder %s17, 1
    %p103 = por %p101, %p102
    %p105 = scmp.ne.s32.totalorder %s90, %s104
    %p106 = scmp.eq.s32.totalorder %s17, 0
    %p107 = por %p105, %p106
    %s109 = sadd.s32 %s108, 1
    %p112 = scmp.eq.s32.totalorder %s11, 1
    %p113 = scmp.ne.s32.totalorder %s108, %s110
    %p114 = scmp.eq.s32.totalorder %s11, 0
    %p115 = por %p113, %p114
    %p116 = scmp.ne.s32.totalorder %s108, %s110
    %p117 = scmp.eq.s32.totalorder %s16, 1
    %p118 = por %p116, %p117
    %p119 = scmp.ne.s32.totalorder %s110, %s111
    %p120 = scmp.eq.s32.totalorder %s16, 0
    %p121 = por %p119, %p120
    %p122 = scmp.ne.s32.totalorder %s110, %s111
    %p123 = scmp.eq.s32.totalorder %s17, 1
    %p124 = por %p122, %p123
    %p126 = scmp.ne.s32.totalorder %s111, %s125
    %p127 = scmp.eq.s32.totalorder %s17, 0
    %p128 = por %p126, %p127
    %s129 = ssub.s32 %s11, %s18
    %p130 = scmp.eq.s32.totalorder %s129, 0
    %s132 = sadd.s32 %s131, 1
    %s133 = scalar_select %p130, %s131, %s132
    %p136 = pneg %p130
    %p137 = scmp.eq.s32.totalorder %s11, 1
    %p138 = por %p136, %p137
    %p139 = scmp.ne.s32.totalorder %s131, %s134
    %p140 = scmp.eq.s32.totalorder %s11, 0
    %p141 = por %p139, %p140
    %p142 = scmp.ne.s32.totalorder %s131, %s134
    %p143 = scmp.eq.s32.totalorder %s16, 1
    %p144 = por %p142, %p143
    %p145 = scmp.ne.s32.totalorder %s134, %s135
    %p146 = scmp.eq.s32.totalorder %s16, 0
    %p147 = por %p145, %p146
    %p148 = scmp.ne.s32.totalorder %s134, %s135
    %p149 = scmp.eq.s32.totalorder %s17, 1
    %p150 = por %p148, %p149
    %p152 = scmp.ne.s32.totalorder %s135, %s151
    %p153 = scmp.eq.s32.totalorder %s17, 0
    %p154 = por %p152, %p153
    %p155 = scmp.le.s32.totalorder 1, %s11
    %p156 = scmp.lt.s32.totalorder %s11, 3
    %p157 = pnand %p155, %p156
    %p158 = pneg %p157
    // Predicated region
    $region9: #{repn_bottleneck_pallas.1} parent=5 // pred_check
      _
    $region10: #{repn_bottleneck_pallas.1} parent=5 // pred_check_branch
      %160 = sbr.rel (%p157) target = $region12
    $region11: #{repn_bottleneck_pallas.1} parent=5 // pred_region
      %s161 = ssub.s32 %s11, 1
      // Predicated region
      $region13: #{repn_bottleneck_pallas.1} parent=11 // pred_check
        %p162 = pneg %p58
      $region14: #{repn_bottleneck_pallas.1} parent=11 // pred_check_branch
        %164 = sbr.rel (%p162) target = $region16
      $region15: #{repn_bottleneck_pallas.1} parent=11 // pred_region
        _
      $region16: #{repn_bottleneck_pallas.1} parent=11 // pred_fallthru
        _
      // Predicated region
      $region17: #{repn_bottleneck_pallas.1} parent=11 // pred_check
        %p165 = pneg %p79
      $region18: #{repn_bottleneck_pallas.1} parent=11 // pred_check_branch
        %167 = sbr.rel (%p165) target = $region20
      $region19: #{repn_bottleneck_pallas.1} parent=11 // pred_region
        _
      $region20: #{repn_bottleneck_pallas.1} parent=11 // pred_fallthru
        _
      // Predicated region
      $region21: #{repn_bottleneck_pallas.1} parent=11 // pred_check
        %p168 = pneg %p100
      $region22: #{repn_bottleneck_pallas.1} parent=11 // pred_check_branch
        %170 = sbr.rel (%p168) target = $region24
      $region23: #{repn_bottleneck_pallas.1} parent=11 // pred_region
        _
      $region24: #{repn_bottleneck_pallas.1} parent=11 // pred_fallthru
        _
      // Predicated region
      $region25: #{repn_bottleneck_pallas.1} parent=11 // pred_check
        %p171 = pneg %p121
      $region26: #{repn_bottleneck_pallas.1} parent=11 // pred_check_branch
        %173 = sbr.rel (%p171) target = $region28
      $region27: #{repn_bottleneck_pallas.1} parent=11 // pred_region
        _
      $region28: #{repn_bottleneck_pallas.1} parent=11 // pred_fallthru
        _
    $region12: #{repn_bottleneck_pallas.1} parent=5 // pred_fallthru
      _
    %p174 = scmp.lt.s32.totalorder %s11, 2
    // Predicated region
    $region29: #{repn_bottleneck_pallas.1} parent=5 // pred_check
      %p175 = pneg %p174
    $region30: #{repn_bottleneck_pallas.1} parent=5 // pred_check_branch
      %177 = sbr.rel (%p175) target = $region32
    $region31: #{repn_bottleneck_pallas.1} parent=5 // pred_region
      // Predicated region
      $region33: #{repn_bottleneck_pallas.1} parent=31 // pred_check
        %p178 = pneg %p31
      $region34: #{repn_bottleneck_pallas.1} parent=31 // pred_check_branch
        %180 = sbr.rel (%p178) target = $region36
      $region35: #{repn_bottleneck_pallas.1} parent=31 // pred_region
        %p181 = scmp.lt.s32.totalorder %s11, 1
        %s182 = scalar_select %p181, %s11, 1
        %s183 = smul.addr %s182, 54
        %s184 = smul.addr %s183, 4
        %s185 = scalar_lea.vmem %s0, %s184
      $region36: #{repn_bottleneck_pallas.1} parent=31 // pred_fallthru
        _
    $region32: #{repn_bottleneck_pallas.1} parent=5 // pred_fallthru
      _
    %p186 = scmp.le.s32.totalorder 1, %s11
    %p187 = scmp.lt.s32.totalorder %s11, 3
    %p188 = pnand %p186, %p187
    %p189 = pneg %p188
    // Predicated region
    $region37: #{repn_bottleneck_pallas.1} parent=5 // pred_check
      _
    $region38: #{repn_bottleneck_pallas.1} parent=5 // pred_check_branch
      %191 = sbr.rel (%p188) target = $region40
    $region39: #{repn_bottleneck_pallas.1} parent=5 // pred_region
      %s192 = ssub.s32 %s11, 1
      %p193 = scmp.lt.s32.totalorder %s16, 1
      %s194 = scalar_select %p193, %s16, 1
      %s195 = smul.addr %s194, 54
      %s196 = smul.addr %s195, 4
      %s197 = scalar_lea.vmem %s0, %s196
      %p198 = pneg %p37
      %p199 = pneg %p34
      %p200 = pneg %p58
      %p201 = pneg %p55
      %p202 = pneg %p79
      %p203 = pneg %p76
      %p204 = pneg %p100
      %p205 = pneg %p97
      %p206 = pneg %p121
      %p207 = pneg %p118
      %p208 = pneg %p147
      %p209 = pneg %p144
      %p210 = scmp.lt.s32.totalorder %s16, 1
      %s211 = scalar_select %p210, %s16, 1
      %s212 = smul.addr %s211, 32
      %s213 = smul.addr %s212, 8
      %s214 = scalar_lea.vmem %s5, %s213
      %p215 = scmp.lt.s32.totalorder %s16, 1
      %s216 = scalar_select %p215, %s16, 1
      %s217 = smul.addr %s216, 54
      %s218 = smul.addr %s217, 4
      %s219 = scalar_lea.vmem %s0, %s218
      %p220 = scmp.lt.s32.totalorder %s16, 1
      %s221 = scalar_select %p220, %s16, 1
      %s222 = smul.addr %s221, 32
      %s223 = smul.addr %s222, 8
      %s224 = scalar_lea.vmem %s5, %s223
      %v226 = vld [vmem:[%s219] sm:$0xf]
      %v227 = vld [vmem:[%s219 + $0x4] sm:$0xf]
      %v228 = vld [vmem:[%s219 + $0x8] sm:$0x1]
      %v229 = vld [vmem:[%s219 + $0xc] sm:$0xf]
      %v230 = vld [vmem:[%s219 + $0x10] sm:$0xf]
      %v231 = vld [vmem:[%s219 + $0x14] sm:$0x1]
      %v232 = vld [vmem:[%s219 + $0x18] sm:$0xf]
      %v233 = vld [vmem:[%s219 + $0x1c] sm:$0xf]
      %v234 = vld [vmem:[%s219 + $0x20] sm:$0x1]
      %v235 = vld [vmem:[%s219 + $0x24] sm:$0xf]
      %v236 = vld [vmem:[%s219 + $0x28] sm:$0xf]
      %v237 = vld [vmem:[%s219 + $0x2c] sm:$0x1]
      %v238 = vld [vmem:[%s219 + $0x30] sm:$0xf]
      %v239 = vld [vmem:[%s219 + $0x34] sm:$0xf]
      %v240 = vld [vmem:[%s219 + $0x38] sm:$0x1]
      %v241 = vld [vmem:[%s219 + $0x3c] sm:$0xf]
      %v242 = vld [vmem:[%s219 + $0x40] sm:$0xf]
      %v243 = vld [vmem:[%s219 + $0x44] sm:$0x1]
      %v244 = vld [vmem:[%s219 + $0x48] sm:$0xf]
      %v245 = vld [vmem:[%s219 + $0x4c] sm:$0xf]
      %v246 = vld [vmem:[%s219 + $0x50] sm:$0x1]
      %v247 = vld [vmem:[%s219 + $0x54] sm:$0xf]
      %v248 = vld [vmem:[%s219 + $0x58] sm:$0xf]
      %v249 = vld [vmem:[%s219 + $0x5c] sm:$0x1]
      %v250 = vld [vmem:[%s219 + $0x60] sm:$0xf]
      %v251 = vld [vmem:[%s219 + $0x64] sm:$0xf]
      %v252 = vld [vmem:[%s219 + $0x68] sm:$0x1]
      %v253 = vld [vmem:[%s219 + $0x6c] sm:$0xf]
      %v254 = vld [vmem:[%s219 + $0x70] sm:$0xf]
      %v255 = vld [vmem:[%s219 + $0x74] sm:$0x1]
      %v256 = vld [vmem:[%s219 + $0x78] sm:$0xf]
      %v257 = vld [vmem:[%s219 + $0x7c] sm:$0xf]
      %v258 = vld [vmem:[%s219 + $0x80] sm:$0x1]
      %v259 = vld [vmem:[%s219 + $0x84] sm:$0xf]
      %v260 = vld [vmem:[%s219 + $0x88] sm:$0xf]
      %v261 = vld [vmem:[%s219 + $0x8c] sm:$0x1]
      %v262 = vld [vmem:[%s219 + $0x90] sm:$0xf]
      %v263 = vld [vmem:[%s219 + $0x94] sm:$0xf]
      %v264 = vld [vmem:[%s219 + $0x98] sm:$0x1]
      %v265 = vld [vmem:[%s219 + $0x9c] sm:$0xf]
      %v266 = vld [vmem:[%s219 + $0xa0] sm:$0xf]
      %v267 = vld [vmem:[%s219 + $0xa4] sm:$0x1]
      %v268 = vld [vmem:[%s219 + $0xa8] sm:$0xf]
      %v269 = vld [vmem:[%s219 + $0xac] sm:$0xf]
      %v270 = vld [vmem:[%s219 + $0xb0] sm:$0x1]
      %v271 = vld [vmem:[%s219 + $0xb4] sm:$0xf]
      %v272 = vld [vmem:[%s219 + $0xb8] sm:$0xf]
      %v273 = vld [vmem:[%s219 + $0xbc] sm:$0x1]
      %v274 = vld [vmem:[%s219 + $0xc0] sm:$0xf]
      %v275 = vld [vmem:[%s219 + $0xc4] sm:$0xf]
      %v276 = vld [vmem:[%s219 + $0xc8] sm:$0x1]
      %v277 = vld [vmem:[%s219 + $0xcc] sm:$0xf]
      %v278 = vld [vmem:[%s219 + $0xd0] sm:$0xf]
      %v279 = vld [vmem:[%s219 + $0xd4] sm:$0x1]
      %v280 = vunpack.c.l.bf16 %v226
      %v281 = vunpack.c.l.bf16 %v227
      %v282 = vunpack.c.l.bf16 %v228
      %v283 = vunpack.c.l.bf16 %v229
      %v284 = vunpack.c.l.bf16 %v230
      %v285 = vunpack.c.l.bf16 %v231
      %v286 = vunpack.c.l.bf16 %v232
      %v287 = vunpack.c.l.bf16 %v233
      %v288 = vunpack.c.l.bf16 %v234
      %v289 = vunpack.c.l.bf16 %v235
      %v290 = vunpack.c.l.bf16 %v236
      %v291 = vunpack.c.l.bf16 %v237
      %v292 = vunpack.c.l.bf16 %v238
      %v293 = vunpack.c.l.bf16 %v239
      %v294 = vunpack.c.l.bf16 %v240
      %v295 = vunpack.c.l.bf16 %v241
      %v296 = vunpack.c.l.bf16 %v242
      %v297 = vunpack.c.l.bf16 %v243
      %v298 = vunpack.c.l.bf16 %v244
      %v299 = vunpack.c.l.bf16 %v245
      %v300 = vunpack.c.l.bf16 %v246
      %v301 = vunpack.c.l.bf16 %v247
      %v302 = vunpack.c.l.bf16 %v248
      %v303 = vunpack.c.l.bf16 %v249
      %v304 = vunpack.c.l.bf16 %v250
      %v305 = vunpack.c.l.bf16 %v251
      %v306 = vunpack.c.l.bf16 %v252
      %v307 = vunpack.c.l.bf16 %v253
      %v308 = vunpack.c.l.bf16 %v254
      %v309 = vunpack.c.l.bf16 %v255
      %v310 = vunpack.c.l.bf16 %v256
      %v311 = vunpack.c.l.bf16 %v257
      %v312 = vunpack.c.l.bf16 %v258
      %v313 = vunpack.c.l.bf16 %v259
      %v314 = vunpack.c.l.bf16 %v260
      %v315 = vunpack.c.l.bf16 %v261
      %v316 = vunpack.c.l.bf16 %v262
      %v317 = vunpack.c.l.bf16 %v263
      %v318 = vunpack.c.l.bf16 %v264
      %v319 = vunpack.c.l.bf16 %v265
      %v320 = vunpack.c.l.bf16 %v266
      %v321 = vunpack.c.l.bf16 %v267
      %v322 = vunpack.c.l.bf16 %v268
      %v323 = vunpack.c.l.bf16 %v269
      %v324 = vunpack.c.l.bf16 %v270
      %v325 = vunpack.c.l.bf16 %v271
      %v326 = vunpack.c.l.bf16 %v272
      %v327 = vunpack.c.l.bf16 %v273
      %v328 = vunpack.c.l.bf16 %v274
      %v329 = vunpack.c.l.bf16 %v275
      %v330 = vunpack.c.l.bf16 %v276
      %v331 = vunpack.c.l.bf16 %v277
      %v332 = vunpack.c.l.bf16 %v278
      %v333 = vunpack.c.l.bf16 %v279
      %334 = vst [vmem:[#allocation2] sm:$0xff] %v280
      %335 = vst [vmem:[#allocation2 + $0x8] sm:$0xff] %v281
      %336 = vst [vmem:[#allocation2 + $0x10] sm:$0x3] %v282
      %337 = vst [vmem:[#allocation2 + $0x18] sm:$0xff] %v283
      %338 = vst [vmem:[#allocation2 + $0x20] sm:$0xff] %v284
      %339 = vst [vmem:[#allocation2 + $0x28] sm:$0x3] %v285
      %340 = vst [vmem:[#allocation2 + $0x30] sm:$0xff] %v286
      %341 = vst [vmem:[#allocation2 + $0x38] sm:$0xff] %v287
      %342 = vst [vmem:[#allocation2 + $0x40] sm:$0x3] %v288
      %343 = vst [vmem:[#allocation2 + $0x48] sm:$0xff] %v289
      %344 = vst [vmem:[#allocation2 + $0x50] sm:$0xff] %v290
      %345 = vst [vmem:[#allocation2 + $0x58] sm:$0x3] %v291
      %346 = vst [vmem:[#allocation2 + $0x60] sm:$0xff] %v292
      %347 = vst [vmem:[#allocation2 + $0x68] sm:$0xff] %v293
      %348 = vst [vmem:[#allocation2 + $0x70] sm:$0x3] %v294
      %349 = vst [vmem:[#allocation2 + $0x78] sm:$0xff] %v295
      %350 = vst [vmem:[#allocation2 + $0x80] sm:$0xff] %v296
      %351 = vst [vmem:[#allocation2 + $0x88] sm:$0x3] %v297
      %352 = vst [vmem:[#allocation2 + $0x90] sm:$0xff] %v298
      %353 = vst [vmem:[#allocation2 + $0x98] sm:$0xff] %v299
      %354 = vst [vmem:[#allocation2 + $0xa0] sm:$0x3] %v300
      %355 = vst [vmem:[#allocation2 + $0xa8] sm:$0xff] %v301
      %356 = vst [vmem:[#allocation2 + $0xb0] sm:$0xff] %v302
      %357 = vst [vmem:[#allocation2 + $0xb8] sm:$0x3] %v303
      %358 = vst [vmem:[#allocation2 + $0xc0] sm:$0xff] %v304
      %359 = vst [vmem:[#allocation2 + $0xc8] sm:$0xff] %v305
      %360 = vst [vmem:[#allocation2 + $0xd0] sm:$0x3] %v306
      %361 = vst [vmem:[#allocation2 + $0xd8] sm:$0xff] %v307
      %362 = vst [vmem:[#allocation2 + $0xe0] sm:$0xff] %v308
      %363 = vst [vmem:[#allocation2 + $0xe8] sm:$0x3] %v309
      %364 = vst [vmem:[#allocation2 + $0xf0] sm:$0xff] %v310
      %365 = vst [vmem:[#allocation2 + $0xf8] sm:$0xff] %v311
      %366 = vst [vmem:[#allocation2 + $0x100] sm:$0x3] %v312
      %367 = vst [vmem:[#allocation2 + $0x108] sm:$0xff] %v313
      %368 = vst [vmem:[#allocation2 + $0x110] sm:$0xff] %v314
      %369 = vst [vmem:[#allocation2 + $0x118] sm:$0x3] %v315
      %370 = vst [vmem:[#allocation2 + $0x120] sm:$0xff] %v316
      %371 = vst [vmem:[#allocation2 + $0x128] sm:$0xff] %v317
      %372 = vst [vmem:[#allocation2 + $0x130] sm:$0x3] %v318
      %373 = vst [vmem:[#allocation2 + $0x138] sm:$0xff] %v319
      %374 = vst [vmem:[#allocation2 + $0x140] sm:$0xff] %v320
      %375 = vst [vmem:[#allocation2 + $0x148] sm:$0x3] %v321
      %376 = vst [vmem:[#allocation2 + $0x150] sm:$0xff] %v322
      %377 = vst [vmem:[#allocation2 + $0x158] sm:$0xff] %v323
      %378 = vst [vmem:[#allocation2 + $0x160] sm:$0x3] %v324
      %379 = vst [vmem:[#allocation2 + $0x168] sm:$0xff] %v325
      %380 = vst [vmem:[#allocation2 + $0x170] sm:$0xff] %v326
      %381 = vst [vmem:[#allocation2 + $0x178] sm:$0x3] %v327
      %382 = vst [vmem:[#allocation2 + $0x180] sm:$0xff] %v328
      %383 = vst [vmem:[#allocation2 + $0x188] sm:$0xff] %v329
      %384 = vst [vmem:[#allocation2 + $0x190] sm:$0x3] %v330
      %385 = vst [vmem:[#allocation2 + $0x198] sm:$0xff] %v331
      %386 = vst [vmem:[#allocation2 + $0x1a0] sm:$0xff] %v332
      %387 = vst [vmem:[#allocation2 + $0x1a8] sm:$0x3] %v333
      %v388 = vld [vmem:[#allocation2] sm:$0xff]
      %v389 = vld [vmem:[#allocation2 + $0x8] sm:$0xff]
      %v390 = vld [vmem:[#allocation2 + $0x18] sm:$0xff]
      %v391 = vld [vmem:[#allocation2 + $0x20] sm:$0xff]
      %v392 = vld [vmem:[#allocation2 + $0x30] sm:$0xff]
      %v393 = vld [vmem:[#allocation2 + $0x38] sm:$0xff]
      %v394 = vld [vmem:[#allocation2 + $0x48] sm:$0xff]
      %v395 = vld [vmem:[#allocation2 + $0x50] sm:$0xff]
      %v396 = vld [vmem:[#allocation2 + $0x60] sm:$0xff]
      %v397 = vld [vmem:[#allocation2 + $0x68] sm:$0xff]
      %v398 = vld [vmem:[#allocation2 + $0x78] sm:$0xff]
      %v399 = vld [vmem:[#allocation2 + $0x80] sm:$0xff]
      %v400 = vld [vmem:[#allocation2 + $0x90] sm:$0xff]
      %v401 = vld [vmem:[#allocation2 + $0x98] sm:$0xff]
      %v402 = vld [vmem:[#allocation2 + $0xa8] sm:$0xff]
      %v403 = vld [vmem:[#allocation2 + $0xb0] sm:$0xff]
      %v404 = vld [vmem:[#allocation2 + $0xc0] sm:$0xff]
      %v405 = vld [vmem:[#allocation2 + $0xc8] sm:$0xff]
      %v406 = vld [vmem:[#allocation2 + $0xd8] sm:$0xff]
      %v407 = vld [vmem:[#allocation2 + $0xe0] sm:$0xff]
      %v408 = vld [vmem:[#allocation2 + $0xf0] sm:$0xff]
      %v409 = vld [vmem:[#allocation2 + $0xf8] sm:$0xff]
      %v410 = vld [vmem:[#allocation2 + $0x108] sm:$0xff]
      %v411 = vld [vmem:[#allocation2 + $0x110] sm:$0xff]
      %v412 = vld [vmem:[#allocation2 + $0x120] sm:$0xff]
      %v413 = vld [vmem:[#allocation2 + $0x128] sm:$0xff]
      %v414 = vld [vmem:[#allocation2 + $0x138] sm:$0xff]
      %v415 = vld [vmem:[#allocation2 + $0x140] sm:$0xff]
      %v416 = vld [vmem:[#allocation2 + $0x150] sm:$0xff]
      %v417 = vld [vmem:[#allocation2 + $0x158] sm:$0xff]
      %v418 = vld [vmem:[#allocation2 + $0x168] sm:$0xff]
      %v419 = vld [vmem:[#allocation2 + $0x170] sm:$0xff]
      %v420 = vpack.c.bf16 %v389, %v388
      %v421 = vpack.c.bf16 %v391, %v390
      %v422 = vpack.c.bf16 %v393, %v392
      %v423 = vpack.c.bf16 %v395, %v394
      %v424 = vpack.c.bf16 %v397, %v396
      %v425 = vpack.c.bf16 %v399, %v398
      %v426 = vpack.c.bf16 %v401, %v400
      %v427 = vpack.c.bf16 %v403, %v402
      %v428 = vpack.c.bf16 %v405, %v404
      %v429 = vpack.c.bf16 %v407, %v406
      %v430 = vpack.c.bf16 %v409, %v408
      %v431 = vpack.c.bf16 %v411, %v410
      %v432 = vpack.c.bf16 %v413, %v412
      %v433 = vpack.c.bf16 %v415, %v414
      %v434 = vpack.c.bf16 %v417, %v416
      %v435 = vpack.c.bf16 %v419, %v418
      %v436 = vld [vmem:[%s1] sm:$0xf]
      %v437 = vld [vmem:[%s1 + $0x4] sm:$0xf]
      %v438 = vld [vmem:[%s1 + $0x8] sm:$0xf]
      %v439 = vld [vmem:[%s1 + $0xc] sm:$0xf]
      %v440 = vld [vmem:[%s1 + $0x10] sm:$0xf]
      %v441 = vld [vmem:[%s1 + $0x14] sm:$0xf]
      %v442 = vld [vmem:[%s1 + $0x18] sm:$0xf]
      %v443 = vld [vmem:[%s1 + $0x1c] sm:$0xf]
      %v444 = vld [vmem:[%s1 + $0x20] sm:$0xf]
      %v445 = vld [vmem:[%s1 + $0x24] sm:$0xf]
      %v446 = vld [vmem:[%s1 + $0x28] sm:$0xf]
      %v447 = vld [vmem:[%s1 + $0x2c] sm:$0xf]
      %v448 = vld [vmem:[%s1 + $0x30] sm:$0xf]
      %v449 = vld [vmem:[%s1 + $0x34] sm:$0xf]
      %v450 = vld [vmem:[%s1 + $0x38] sm:$0xf]
      %v451 = vld [vmem:[%s1 + $0x3c] sm:$0xf]
      %v468 = vunpack.c.l.b16 %v436
      %v469 = vunpack.c.l.b16 %v437
      %v470 = vunpack.c.l.b16 %v438
      %v471 = vunpack.c.l.b16 %v439
      %v472 = vunpack.c.l.b16 %v440
      %v473 = vunpack.c.l.b16 %v441
      %v474 = vunpack.c.l.b16 %v442
      %v475 = vunpack.c.l.b16 %v443
      %v476 = vunpack.c.l.b16 %v444
      %v477 = vunpack.c.l.b16 %v445
      %v478 = vunpack.c.l.b16 %v446
      %v479 = vunpack.c.l.b16 %v447
      %v480 = vunpack.c.l.b16 %v448
      %v481 = vunpack.c.l.b16 %v449
      %v482 = vunpack.c.l.b16 %v450
      %v483 = vunpack.c.l.b16 %v451
      %v484 = vpack.c.b16 %v469, %v468
      %v485 = vpack.c.b16 %v471, %v470
      %v486 = vpack.c.b16 %v473, %v472
      %v487 = vpack.c.b16 %v475, %v474
      %v488 = vpack.c.b16 %v477, %v476
      %v489 = vpack.c.b16 %v479, %v478
      %v490 = vpack.c.b16 %v481, %v480
      %v491 = vpack.c.b16 %v483, %v482
      %500 = vmatprep.subr.bf16.mxu0 0
      %501 = vmatpush1.bf16.msra.mxu0 %v484
      %502 = vmatprep.subr.bf16.mxu0 0
      %503 = vmatpush1.bf16.msra.mxu0 %v485
      %504 = vmatprep.subr.bf16.mxu0 0
      %505 = vmatpush1.bf16.msra.mxu0 %v486
      %506 = vmatprep.subr.bf16.mxu0 0
      %507 = vmatpush1.bf16.msra.mxu0 %v487
      %508 = vmatprep.subr.bf16.mxu0 0
      %509 = vmatpush1.bf16.msra.mxu0 %v488
      %510 = vmatprep.subr.bf16.mxu0 0
      %511 = vmatpush1.bf16.msra.mxu0 %v489
      %512 = vmatprep.subr.bf16.mxu0 0
      %513 = vmatpush1.bf16.msra.mxu0 %v490
      %514 = vmatprep.subr.bf16.mxu0 0
      %515 = vmatpush1.bf16.msra.mxu0 %v491
      %516 = vmatprep.subr.bf16.mxu0 0
      %517 = vmatpush1.bf16.msra.mxu0 0
      %518 = vmatprep.subr.bf16.mxu0 0
      %519 = vmatpush1.bf16.msra.mxu0 0
      %520 = vmatprep.subr.bf16.mxu0 0
      %521 = vmatpush1.bf16.msra.mxu0 0
      %522 = vmatprep.subr.bf16.mxu0 0
      %523 = vmatpush1.bf16.msra.mxu0 0
      %524 = vmatprep.subr.bf16.mxu0 0
      %525 = vmatpush1.bf16.msra.mxu0 0
      %526 = vmatprep.subr.bf16.mxu0 0
      %527 = vmatpush1.bf16.msra.mxu0 0
      %528 = vmatprep.subr.bf16.mxu0 0
      %529 = vmatpush1.bf16.msra.mxu0 0
      %530 = vmatprep.subr.bf16.mxu0 0
      %531 = vmatpush1.bf16.msra.mxu0 0
      %532 = vmatprep.mubr.bf16.mxu0 0
      %533 = vmatmul.mubr.bf16.gmra.mrb[0].mxu0 %v420
      %v534 = vpop.f32.mrb[0].mxu0
      %v535 = vadd.f32 0.0, %v534
      %v536 = vpop.f32.mrb[0].mxu0
      %v537 = vpop.f32.mrb[0].mxu0
      %v538 = vadd.f32 0.0, %v537
      %v539 = vpop.f32.mrb[0].mxu0
      %540 = vmatprep.mubr.bf16.mxu0 0
      %541 = vmatmul.mubr.bf16.gmra.mrb[0].mxu0 %v421
      %v542 = vpop.f32.mrb[0].mxu0
      %v543 = vadd.f32 0.0, %v542
      %v544 = vpop.f32.mrb[0].mxu0
      %v545 = vpop.f32.mrb[0].mxu0
      %v546 = vadd.f32 0.0, %v545
      %v547 = vpop.f32.mrb[0].mxu0
      %548 = vmatprep.mubr.bf16.mxu0 0
      %549 = vmatmul.mubr.bf16.gmra.mrb[0].mxu0 %v422
      %v550 = vpop.f32.mrb[0].mxu0
      %v551 = vadd.f32 0.0, %v550
      %v552 = vpop.f32.mrb[0].mxu0
      %v553 = vpop.f32.mrb[0].mxu0
      %v554 = vadd.f32 0.0, %v553
      %v555 = vpop.f32.mrb[0].mxu0
      %556 = vmatprep.mubr.bf16.mxu0 0
      %557 = vmatmul.mubr.bf16.gmra.mrb[0].mxu0 %v423
      %v558 = vpop.f32.mrb[0].mxu0
      %v559 = vadd.f32 0.0, %v558
      %v560 = vpop.f32.mrb[0].mxu0
      %v561 = vpop.f32.mrb[0].mxu0
      %v562 = vadd.f32 0.0, %v561
      %v563 = vpop.f32.mrb[0].mxu0
      %564 = vmatprep.mubr.bf16.mxu0 0
      %565 = vmatmul.mubr.bf16.gmra.mrb[0].mxu0 %v424
      %v566 = vpop.f32.mrb[0].mxu0
      %v567 = vadd.f32 0.0, %v566
      %v568 = vpop.f32.mrb[0].mxu0
      %v569 = vpop.f32.mrb[0].mxu0
      %v570 = vadd.f32 0.0, %v569
      %v571 = vpop.f32.mrb[0].mxu0
      %572 = vmatprep.mubr.bf16.mxu0 0
      %573 = vmatmul.mubr.bf16.gmra.mrb[0].mxu0 %v425
      %v574 = vpop.f32.mrb[0].mxu0
      %v575 = vadd.f32 0.0, %v574
      %v576 = vpop.f32.mrb[0].mxu0
      %v577 = vpop.f32.mrb[0].mxu0
      %v578 = vadd.f32 0.0, %v577
      %v579 = vpop.f32.mrb[0].mxu0
      %580 = vmatprep.mubr.bf16.mxu0 0
      %581 = vmatmul.mubr.bf16.gmra.mrb[0].mxu0 %v426
      %v582 = vpop.f32.mrb[0].mxu0
      %v583 = vadd.f32 0.0, %v582
      %v584 = vpop.f32.mrb[0].mxu0
      %v585 = vpop.f32.mrb[0].mxu0
      %v586 = vadd.f32 0.0, %v585
      %v587 = vpop.f32.mrb[0].mxu0
      %588 = vmatprep.mubr.bf16.mxu0 0
      %589 = vmatmul.mubr.bf16.gmra.mrb[0].mxu0 %v427
      %v590 = vpop.f32.mrb[0].mxu0
      %v591 = vadd.f32 0.0, %v590
      %v592 = vpop.f32.mrb[0].mxu0
      %v593 = vpop.f32.mrb[0].mxu0
      %v594 = vadd.f32 0.0, %v593
      %v595 = vpop.f32.mrb[0].mxu0
      %596 = vmatprep.mubr.bf16.mxu0 0
      %597 = vmatmul.mubr.bf16.gmra.mrb[0].mxu0 %v428
      %v598 = vpop.f32.mrb[0].mxu0
      %v599 = vadd.f32 0.0, %v598
      %v600 = vpop.f32.mrb[0].mxu0
      %v601 = vpop.f32.mrb[0].mxu0
      %v602 = vadd.f32 0.0, %v601
      %v603 = vpop.f32.mrb[0].mxu0
      %604 = vmatprep.mubr.bf16.mxu0 0
      %605 = vmatmul.mubr.bf16.gmra.mrb[0].mxu0 %v429
      %v606 = vpop.f32.mrb[0].mxu0
      %v607 = vadd.f32 0.0, %v606
      %v608 = vpop.f32.mrb[0].mxu0
      %v609 = vpop.f32.mrb[0].mxu0
      %v610 = vadd.f32 0.0, %v609
      %v611 = vpop.f32.mrb[0].mxu0
      %612 = vmatprep.mubr.bf16.mxu0 0
      %613 = vmatmul.mubr.bf16.gmra.mrb[0].mxu0 %v430
      %v614 = vpop.f32.mrb[0].mxu0
      %v615 = vadd.f32 0.0, %v614
      %v616 = vpop.f32.mrb[0].mxu0
      %v617 = vpop.f32.mrb[0].mxu0
      %v618 = vadd.f32 0.0, %v617
      %v619 = vpop.f32.mrb[0].mxu0
      %620 = vmatprep.mubr.bf16.mxu0 0
      %621 = vmatmul.mubr.bf16.gmra.mrb[0].mxu0 %v431
      %v622 = vpop.f32.mrb[0].mxu0
      %v623 = vadd.f32 0.0, %v622
      %v624 = vpop.f32.mrb[0].mxu0
      %v625 = vpop.f32.mrb[0].mxu0
      %v626 = vadd.f32 0.0, %v625
      %v627 = vpop.f32.mrb[0].mxu0
      %628 = vmatprep.mubr.bf16.mxu0 0
      %629 = vmatmul.mubr.bf16.gmra.mrb[0].mxu0 %v432
      %v630 = vpop.f32.mrb[0].mxu0
      %v631 = vadd.f32 0.0, %v630
      %v632 = vpop.f32.mrb[0].mxu0
      %v633 = vpop.f32.mrb[0].mxu0
      %v634 = vadd.f32 0.0, %v633
      %v635 = vpop.f32.mrb[0].mxu0
      %636 = vmatprep.mubr.bf16.mxu0 0
      %637 = vmatmul.mubr.bf16.gmra.mrb[0].mxu0 %v433
      %v638 = vpop.f32.mrb[0].mxu0
      %v639 = vadd.f32 0.0, %v638
      %v640 = vpop.f32.mrb[0].mxu0
      %v641 = vpop.f32.mrb[0].mxu0
      %v642 = vadd.f32 0.0, %v641
      %v643 = vpop.f32.mrb[0].mxu0
      %644 = vmatprep.mubr.bf16.mxu0 0
      %645 = vmatmul.mubr.bf16.gmra.mrb[0].mxu0 %v434
      %v646 = vpop.f32.mrb[0].mxu0
      %v647 = vadd.f32 0.0, %v646
      %v648 = vpop.f32.mrb[0].mxu0
      %v649 = vpop.f32.mrb[0].mxu0
      %v650 = vadd.f32 0.0, %v649
      %v651 = vpop.f32.mrb[0].mxu0
      %652 = vmatprep.mubr.bf16.mxu0 0
      %653 = vmatmul.mubr.bf16.gmra.mrb[0].mxu0 %v435
      %v654 = vpop.f32.mrb[0].mxu0
      %v655 = vadd.f32 0.0, %v654
      %v656 = vpop.f32.mrb[0].mxu0
      %v657 = vpop.f32.mrb[0].mxu0
      %v658 = vadd.f32 0.0, %v657
      %v659 = vpop.f32.mrb[0].mxu0
      %660 = vdwg.mxu0
      %661 = vst [vmem:[#allocation4] sm:$0xff] %v535
      %662 = vst [vmem:[#allocation4 + $0x8] sm:$0xff] %v538
      %663 = vst [vmem:[#allocation4 + $0x10] sm:$0xff] %v543
      %664 = vst [vmem:[#allocation4 + $0x18] sm:$0xff] %v546
      %665 = vst [vmem:[#allocation4 + $0x20] sm:$0xff] %v551
      %666 = vst [vmem:[#allocation4 + $0x28] sm:$0xff] %v554
      %667 = vst [vmem:[#allocation4 + $0x30] sm:$0xff] %v559
      %668 = vst [vmem:[#allocation4 + $0x38] sm:$0xff] %v562
      %669 = vst [vmem:[#allocation4 + $0x40] sm:$0xff] %v567
      %670 = vst [vmem:[#allocation4 + $0x48] sm:$0xff] %v570
      %671 = vst [vmem:[#allocation4 + $0x50] sm:$0xff] %v575
      %672 = vst [vmem:[#allocation4 + $0x58] sm:$0xff] %v578
      %673 = vst [vmem:[#allocation4 + $0x60] sm:$0xff] %v583
      %674 = vst [vmem:[#allocation4 + $0x68] sm:$0xff] %v586
      %675 = vst [vmem:[#allocation4 + $0x70] sm:$0xff] %v591
      %676 = vst [vmem:[#allocation4 + $0x78] sm:$0xff] %v594
      %677 = vst [vmem:[#allocation4 + $0x80] sm:$0xff] %v599
      %678 = vst [vmem:[#allocation4 + $0x88] sm:$0xff] %v602
      %679 = vst [vmem:[#allocation4 + $0x90] sm:$0xff] %v607
      %680 = vst [vmem:[#allocation4 + $0x98] sm:$0xff] %v610
      %681 = vst [vmem:[#allocation4 + $0xa0] sm:$0xff] %v615
      %682 = vst [vmem:[#allocation4 + $0xa8] sm:$0xff] %v618
      %683 = vst [vmem:[#allocation4 + $0xb0] sm:$0xff] %v623
      %684 = vst [vmem:[#allocation4 + $0xb8] sm:$0xff] %v626
      %685 = vst [vmem:[#allocation4 + $0xc0] sm:$0xff] %v631
      %686 = vst [vmem:[#allocation4 + $0xc8] sm:$0xff] %v634
      %687 = vst [vmem:[#allocation4 + $0xd0] sm:$0xff] %v639
      %688 = vst [vmem:[#allocation4 + $0xd8] sm:$0xff] %v642
      %689 = vst [vmem:[#allocation4 + $0xe0] sm:$0xff] %v647
      %690 = vst [vmem:[#allocation4 + $0xe8] sm:$0xff] %v650
      %691 = vst [vmem:[#allocation4 + $0xf0] sm:$0xff] %v655
      %692 = vst [vmem:[#allocation4 + $0xf8] sm:$0xff] %v658
      %v693 = vld [vmem:[#allocation2 + $0x1] sm:$0xff]
      %v694 = vld [vmem:[#allocation2 + $0x9] sm:$0xff]
      %v695 = vld [vmem:[#allocation2 + $0x19] sm:$0xff]
      %v696 = vld [vmem:[#allocation2 + $0x21] sm:$0xff]
      %v697 = vld [vmem:[#allocation2 + $0x31] sm:$0xff]
      %v698 = vld [vmem:[#allocation2 + $0x39] sm:$0xff]
      %v699 = vld [vmem:[#allocation2 + $0x49] sm:$0xff]
      %v700 = vld [vmem:[#allocation2 + $0x51] sm:$0xff]
      %v701 = vld [vmem:[#allocation2 + $0x61] sm:$0xff]
      %v702 = vld [vmem:[#allocation2 + $0x69] sm:$0xff]
      %v703 = vld [vmem:[#allocation2 + $0x79] sm:$0xff]
      %v704 = vld [vmem:[#allocation2 + $0x81] sm:$0xff]
      %v705 = vld [vmem:[#allocation2 + $0x91] sm:$0xff]
      %v706 = vld [vmem:[#allocation2 + $0x99] sm:$0xff]
      %v707 = vld [vmem:[#allocation2 + $0xa9] sm:$0xff]
      %v708 = vld [vmem:[#allocation2 + $0xb1] sm:$0xff]
      %v709 = vld [vmem:[#allocation2 + $0xc1] sm:$0xff]
      %v710 = vld [vmem:[#allocation2 + $0xc9] sm:$0xff]
      %v711 = vld [vmem:[#allocation2 + $0xd9] sm:$0xff]
      %v712 = vld [vmem:[#allocation2 + $0xe1] sm:$0xff]
      %v713 = vld [vmem:[#allocation2 + $0xf1] sm:$0xff]
      %v714 = vld [vmem:[#allocation2 + $0xf9] sm:$0xff]
      %v715 = vld [vmem:[#allocation2 + $0x109] sm:$0xff]
      %v716 = vld [vmem:[#allocation2 + $0x111] sm:$0xff]
      %v717 = vld [vmem:[#allocation2 + $0x121] sm:$0xff]
      %v718 = vld [vmem:[#allocation2 + $0x129] sm:$0xff]
      %v719 = vld [vmem:[#allocation2 + $0x139] sm:$0xff]
      %v720 = vld [vmem:[#allocation2 + $0x141] sm:$0xff]
      %v721 = vld [vmem:[#allocation2 + $0x151] sm:$0xff]
      %v722 = vld [vmem:[#allocation2 + $0x159] sm:$0xff]
      %v723 = vld [vmem:[#allocation2 + $0x169] sm:$0xff]
      %v724 = vld [vmem:[#allocation2 + $0x171] sm:$0xff]
      %v725 = vpack.c.bf16 %v694, %v693
      %v726 = vpack.c.bf16 %v696, %v695
      %v727 = vpack.c.bf16 %v698, %v697
      %v728 = vpack.c.bf16 %v700, %v699
      %v729 = vpack.c.bf16 %v702, %v701
      %v730 = vpack.c.bf16 %v704, %v703
      %v731 = vpack.c.bf16 %v706, %v705
      %v732 = vpack.c.bf16 %v708, %v707
      %v733 = vpack.c.bf16 %v710, %v709
      %v734 = vpack.c.bf16 %v712, %v711
      %v735 = vpack.c.bf16 %v714, %v713
      %v736 = vpack.c.bf16 %v716, %v715
      %v737 = vpack.c.bf16 %v718, %v717
      %v738 = vpack.c.bf16 %v720, %v719
      %v739 = vpack.c.bf16 %v722, %v721
      %v740 = vpack.c.bf16 %v724, %v723
      %s741 = scalar_lea.vmem %s1, 64
      %v742 = vld [vmem:[%s741] sm:$0xf]
      %v743 = vld [vmem:[%s741 + $0x4] sm:$0xf]
      %v744 = vld [vmem:[%s741 + $0x8] sm:$0xf]
      %v745 = vld [vmem:[%s741 + $0xc] sm:$0xf]
      %v746 = vld [vmem:[%s741 + $0x10] sm:$0xf]
      %v747 = vld [vmem:[%s741 + $0x14] sm:$0xf]
      %v748 = vld [vmem:[%s741 + $0x18] sm:$0xf]
      %v749 = vld [vmem:[%s741 + $0x1c] sm:$0xf]
      %v750 = vld [vmem:[%s741 + $0x20] sm:$0xf]
      %v751 = vld [vmem:[%s741 + $0x24] sm:$0xf]
      %v752 = vld [vmem:[%s741 + $0x28] sm:$0xf]
      %v753 = vld [vmem:[%s741 + $0x2c] sm:$0xf]
      %v754 = vld [vmem:[%s741 + $0x30] sm:$0xf]
      %v755 = vld [vmem:[%s741 + $0x34] sm:$0xf]
      %v756 = vld [vmem:[%s741 + $0x38] sm:$0xf]
      %v757 = vld [vmem:[%s741 + $0x3c] sm:$0xf]
      %v774 = vunpack.c.l.b16 %v742
      %v775 = vunpack.c.l.b16 %v743
      %v776 = vunpack.c.l.b16 %v744
      %v777 = vunpack.c.l.b16 %v745
      %v778 = vunpack.c.l.b16 %v746
      %v779 = vunpack.c.l.b16 %v747
      %v780 = vunpack.c.l.b16 %v748
      %v781 = vunpack.c.l.b16 %v749
      %v782 = vunpack.c.l.b16 %v750
      %v783 = vunpack.c.l.b16 %v751
      %v784 = vunpack.c.l.b16 %v752
      %v785 = vunpack.c.l.b16 %v753
      %v786 = vunpack.c.l.b16 %v754
      %v787 = vunpack.c.l.b16 %v755
      %v788 = vunpack.c.l.b16 %v756
      %v789 = vunpack.c.l.b16 %v757
      %v790 = vpack.c.b16 %v775, %v774
      %v791 = vpack.c.b16 %v777, %v776
      %v792 = vpack.c.b16 %v779, %v778
      %v793 = vpack.c.b16 %v781, %v780
      %v794 = vpack.c.b16 %v783, %v782
      %v795 = vpack.c.b16 %v785, %v784
      %v796 = vpack.c.b16 %v787, %v786
      %v797 = vpack.c.b16 %v789, %v788
      %806 = vmatprep.subr.bf16.mxu0 0
      %807 = vmatpush1.bf16.msra.mxu0 %v790
      %808 = vmatprep.subr.bf16.mxu0 0
      %809 = vmatpush1.bf16.msra.mxu0 %v791
      %810 = vmatprep.subr.bf16.mxu0 0
      %811 = vmatpush1.bf16.msra.mxu0 %v792
      %812 = vmatprep.subr.bf16.mxu0 0
      %813 = vmatpush1.bf16.msra.mxu0 %v793
      %814 = vmatprep.subr.bf16.mxu0 0
      %815 = vmatpush1.bf16.msra.mxu0 %v794
      %816 = vmatprep.subr.bf16.mxu0 0
      %817 = vmatpush1.bf16.msra.mxu0 %v795
      %818 = vmatprep.subr.bf16.mxu0 0
      %819 = vmatpush1.bf16.msra.mxu0 %v796
      %820 = vmatprep.subr.bf16.mxu0 0
      %821 = vmatpush1.bf16.msra.mxu0 %v797
      %822 = vmatprep.subr.bf16.mxu0 0
      %823 = vmatpush1.bf16.msra.mxu0 0
      %824 = vmatprep.subr.bf16.mxu0 0
      %825 = vmatpush1.bf16.msra.mxu0 0
      %826 = vmatprep.subr.bf16.mxu0 0
      %827 = vmatpush1.bf16.msra.mxu0 0
      %828 = vmatprep.subr.bf16.mxu0 0
      %829 = vmatpush1.bf16.msra.mxu0 0
      %830 = vmatprep.subr.bf16.mxu0 0
      %831 = vmatpush1.bf16.msra.mxu0 0
      %832 = vmatprep.subr.bf16.mxu0 0
      %833 = vmatpush1.bf16.msra.mxu0 0
      %834 = vmatprep.subr.bf16.mxu0 0
      %835 = vmatpush1.bf16.msra.mxu0 0
      %836 = vmatprep.subr.bf16.mxu0 0
      %837 = vmatpush1.bf16.msra.mxu0 0
      %838 = vmatprep.mubr.bf16.mxu0 0
      %839 = vmatmul.mubr.bf16.gmra.mrb[0].mxu0 %v725
      %v840 = vpop.f32.mrb[0].mxu0
      %v841 = vadd.f32 0.0, %v840
      %v842 = vpop.f32.mrb[0].mxu0
      %v843 = vpop.f32.mrb[0].mxu0
      %v844 = vadd.f32 0.0, %v843
      %v845 = vpop.f32.mrb[0].mxu0
      %846 = vmatprep.mubr.bf16.mxu0 0
      %847 = vmatmul.mubr.bf16.gmra.mrb[0].mxu0 %v726
      %v848 = vpop.f32.mrb[0].mxu0
      %v849 = vadd.f32 0.0, %v848
      %v850 = vpop.f32.mrb[0].mxu0
      %v851 = vpop.f32.mrb[0].mxu0
      %v852 = vadd.f32 0.0, %v851
      %v853 = vpop.f32.mrb[0].mxu0
      %854 = vmatprep.mubr.bf16.mxu0 0
      %855 = vmatmul.mubr.bf16.gmra.mrb[0].mxu0 %v727
      %v856 = vpop.f32.mrb[0].mxu0
      %v857 = vadd.f32 0.0, %v856
      %v858 = vpop.f32.mrb[0].mxu0
      %v859 = vpop.f32.mrb[0].mxu0
      %v860 = vadd.f32 0.0, %v859
      %v861 = vpop.f32.mrb[0].mxu0
      %862 = vmatprep.mubr.bf16.mxu0 0
      %863 = vmatmul.mubr.bf16.gmra.mrb[0].mxu0 %v728
      %v864 = vpop.f32.mrb[0].mxu0
      %v865 = vadd.f32 0.0, %v864
      %v866 = vpop.f32.mrb[0].mxu0
      %v867 = vpop.f32.mrb[0].mxu0
      %v868 = vadd.f32 0.0, %v867
      %v869 = vpop.f32.mrb[0].mxu0
      %870 = vmatprep.mubr.bf16.mxu0 0
      %871 = vmatmul.mubr.bf16.gmra.mrb[0].mxu0 %v729
      %v872 = vpop.f32.mrb[0].mxu0
      %v873 = vadd.f32 0.0, %v872
      %v874 = vpop.f32.mrb[0].mxu0
      %v875 = vpop.f32.mrb[0].mxu0
      %v876 = vadd.f32 0.0, %v875
      %v877 = vpop.f32.mrb[0].mxu0
      %878 = vmatprep.mubr.bf16.mxu0 0
      %879 = vmatmul.mubr.bf16.gmra.mrb[0].mxu0 %v730
      %v880 = vpop.f32.mrb[0].mxu0
      %v881 = vadd.f32 0.0, %v880
      %v882 = vpop.f32.mrb[0].mxu0
      %v883 = vpop.f32.mrb[0].mxu0
      %v884 = vadd.f32 0.0, %v883
      %v885 = vpop.f32.mrb[0].mxu0
      %886 = vmatprep.mubr.bf16.mxu0 0
      %887 = vmatmul.mubr.bf16.gmra.mrb[0].mxu0 %v731
      %v888 = vpop.f32.mrb[0].mxu0
      %v889 = vadd.f32 0.0, %v888
      %v890 = vpop.f32.mrb[0].mxu0
      %v891 = vpop.f32.mrb[0].mxu0
      %v892 = vadd.f32 0.0, %v891
      %v893 = vpop.f32.mrb[0].mxu0
      %894 = vmatprep.mubr.bf16.mxu0 0
      %895 = vmatmul.mubr.bf16.gmra.mrb[0].mxu0 %v732
      %v896 = vpop.f32.mrb[0].mxu0
      %v897 = vadd.f32 0.0, %v896
      %v898 = vpop.f32.mrb[0].mxu0
      %v899 = vpop.f32.mrb[0].mxu0
      %v900 = vadd.f32 0.0, %v899
      %v901 = vpop.f32.mrb[0].mxu0
      %902 = vmatprep.mubr.bf16.mxu0 0
      %903 = vmatmul.mubr.bf16.gmra.mrb[0].mxu0 %v733
      %v904 = vpop.f32.mrb[0].mxu0
      %v905 = vadd.f32 0.0, %v904
      %v906 = vpop.f32.mrb[0].mxu0
      %v907 = vpop.f32.mrb[0].mxu0
      %v908 = vadd.f32 0.0, %v907
      %v909 = vpop.f32.mrb[0].mxu0
      %910 = vmatprep.mubr.bf16.mxu0 0
      %911 = vmatmul.mubr.bf16.gmra.mrb[0].mxu0 %v734
      %v912 = vpop.f32.mrb[0].mxu0
      %v913 = vadd.f32 0.0, %v912
      %v914 = vpop.f32.mrb[0].mxu0
      %v915 = vpop.f32.mrb[0].mxu0
      %v916 = vadd.f32 0.0, %v915
      %v917 = vpop.f32.mrb[0].mxu0
      %918 = vmatprep.mubr.bf16.mxu0 0
      %919 = vmatmul.mubr.bf16.gmra.mrb[0].mxu0 %v735
      %v920 = vpop.f32.mrb[0].mxu0
      %v921 = vadd.f32 0.0, %v920
      %v922 = vpop.f32.mrb[0].mxu0
      %v923 = vpop.f32.mrb[0].mxu0
      %v924 = vadd.f32 0.0, %v923
      %v925 = vpop.f32.mrb[0].mxu0
      %926 = vmatprep.mubr.bf16.mxu0 0
      %927 = vmatmul.mubr.bf16.gmra.mrb[0].mxu0 %v736
      %v928 = vpop.f32.mrb[0].mxu0
      %v929 = vadd.f32 0.0, %v928
      %v930 = vpop.f32.mrb[0].mxu0
      %v931 = vpop.f32.mrb[0].mxu0
      %v932 = vadd.f32 0.0, %v931
      %v933 = vpop.f32.mrb[0].mxu0
      %934 = vmatprep.mubr.bf16.mxu0 0
      %935 = vmatmul.mubr.bf16.gmra.mrb[0].mxu0 %v737
      %v936 = vpop.f32.mrb[0].mxu0
      %v937 = vadd.f32 0.0, %v936
      %v938 = vpop.f32.mrb[0].mxu0
      %v939 = vpop.f32.mrb[0].mxu0
      %v940 = vadd.f32 0.0, %v939
      %v941 = vpop.f32.mrb[0].mxu0
      %942 = vmatprep.mubr.bf16.mxu0 0
      %943 = vmatmul.mubr.bf16.gmra.mrb[0].mxu0 %v738
      %v944 = vpop.f32.mrb[0].mxu0
      %v945 = vadd.f32 0.0, %v944
      %v946 = vpop.f32.mrb[0].mxu0
      %v947 = vpop.f32.mrb[0].mxu0
      %v948 = vadd.f32 0.0, %v947
      %v949 = vpop.f32.mrb[0].mxu0
      %950 = vmatprep.mubr.bf16.mxu0 0
      %951 = vmatmul.mubr.bf16.gmra.mrb[0].mxu0 %v739
      %v952 = vpop.f32.mrb[0].mxu0
      %v953 = vadd.f32 0.0, %v952
      %v954 = vpop.f32.mrb[0].mxu0
      %v955 = vpop.f32.mrb[0].mxu0
      %v956 = vadd.f32 0.0, %v955
      %v957 = vpop.f32.mrb[0].mxu0
      %958 = vmatprep.mubr.bf16.mxu0 0
      %959 = vmatmul.mubr.bf16.gmra.mrb[0].mxu0 %v740
      %v960 = vpop.f32.mrb[0].mxu0
      %v961 = vadd.f32 0.0, %v960
      %v962 = vpop.f32.mrb[0].mxu0
      %v963 = vpop.f32.mrb[0].mxu0
      %v964 = vadd.f32 0.0, %v963
      %v965 = vpop.f32.mrb[0].mxu0
      %966 = vdwg.mxu0
      %v967 = vld [vmem:[#allocation4] sm:$0xff]
      %v968 = vld [vmem:[#allocation4 + $0x8] sm:$0xff]
      %v969 = vld [vmem:[#allocation4 + $0x10] sm:$0xff]
      %v970 = vld [vmem:[#allocation4 + $0x18] sm:$0xff]
      %v971 = vld [vmem:[#allocation4 + $0x20] sm:$0xff]
      %v972 = vld [vmem:[#allocation4 + $0x28] sm:$0xff]
      %v973 = vld [vmem:[#allocation4 + $0x30] sm:$0xff]
      %v974 = vld [vmem:[#allocation4 + $0x38] sm:$0xff]
      %v975 = vld [vmem:[#allocation4 + $0x40] sm:$0xff]
      %v976 = vld [vmem:[#allocation4 + $0x48] sm:$0xff]
      %v977 = vld [vmem:[#allocation4 + $0x50] sm:$0xff]
      %v978 = vld [vmem:[#allocation4 + $0x58] sm:$0xff]
      %v979 = vld [vmem:[#allocation4 + $0x60] sm:$0xff]
      %v980 = vld [vmem:[#allocation4 + $0x68] sm:$0xff]
      %v981 = vld [vmem:[#allocation4 + $0x70] sm:$0xff]
      %v982 = vld [vmem:[#allocation4 + $0x78] sm:$0xff]
      %v983 = vld [vmem:[#allocation4 + $0x80] sm:$0xff]
      %v984 = vld [vmem:[#allocation4 + $0x88] sm:$0xff]
      %v985 = vld [vmem:[#allocation4 + $0x90] sm:$0xff]
      %v986 = vld [vmem:[#allocation4 + $0x98] sm:$0xff]
      %v987 = vld [vmem:[#allocation4 + $0xa0] sm:$0xff]
      %v988 = vld [vmem:[#allocation4 + $0xa8] sm:$0xff]
      %v989 = vld [vmem:[#allocation4 + $0xb0] sm:$0xff]
      %v990 = vld [vmem:[#allocation4 + $0xb8] sm:$0xff]
      %v991 = vld [vmem:[#allocation4 + $0xc0] sm:$0xff]
      %v992 = vld [vmem:[#allocation4 + $0xc8] sm:$0xff]
      %v993 = vld [vmem:[#allocation4 + $0xd0] sm:$0xff]
      %v994 = vld [vmem:[#allocation4 + $0xd8] sm:$0xff]
      %v995 = vld [vmem:[#allocation4 + $0xe0] sm:$0xff]
      %v996 = vld [vmem:[#allocation4 + $0xe8] sm:$0xff]
      %v997 = vld [vmem:[#allocation4 + $0xf0] sm:$0xff]
      %v998 = vld [vmem:[#allocation4 + $0xf8] sm:$0xff]
      %v999 = vadd.f32 %v967, %v841
      %v1000 = vadd.f32 %v968, %v844
      %v1001 = vadd.f32 %v969, %v849
      %v1002 = vadd.f32 %v970, %v852
      %v1003 = vadd.f32 %v971, %v857
      %v1004 = vadd.f32 %v972, %v860
      %v1005 = vadd.f32 %v973, %v865
      %v1006 = vadd.f32 %v974, %v868
      %v1007 = vadd.f32 %v975, %v873
      %v1008 = vadd.f32 %v976, %v876
      %v1009 = vadd.f32 %v977, %v881
      %v1010 = vadd.f32 %v978, %v884
      %v1011 = vadd.f32 %v979, %v889
      %v1012 = vadd.f32 %v980, %v892
      %v1013 = vadd.f32 %v981, %v897
      %v1014 = vadd.f32 %v982, %v900
      %v1015 = vadd.f32 %v983, %v905
      %v1016 = vadd.f32 %v984, %v908
      %v1017 = vadd.f32 %v985, %v913
      %v1018 = vadd.f32 %v986, %v916
      %v1019 = vadd.f32 %v987, %v921
      %v1020 = vadd.f32 %v988, %v924
      %v1021 = vadd.f32 %v989, %v929
      %v1022 = vadd.f32 %v990, %v932
      %v1023 = vadd.f32 %v991, %v937
      %v1024 = vadd.f32 %v992, %v940
      %v1025 = vadd.f32 %v993, %v945
      %v1026 = vadd.f32 %v994, %v948
      %v1027 = vadd.f32 %v995, %v953
      %v1028 = vadd.f32 %v996, %v956
      %v1029 = vadd.f32 %v997, %v961
      %v1030 = vadd.f32 %v998, %v964
      %1031 = vst [vmem:[#allocation4] sm:$0xff] %v999
      %1032 = vst [vmem:[#allocation4 + $0x8] sm:$0xff] %v1000
      %1033 = vst [vmem:[#allocation4 + $0x10] sm:$0xff] %v1001
      %1034 = vst [vmem:[#allocation4 + $0x18] sm:$0xff] %v1002
      %1035 = vst [vmem:[#allocation4 + $0x20] sm:$0xff] %v1003
      %1036 = vst [vmem:[#allocation4 + $0x28] sm:$0xff] %v1004
      %1037 = vst [vmem:[#allocation4 + $0x30] sm:$0xff] %v1005
      %1038 = vst [vmem:[#allocation4 + $0x38] sm:$0xff] %v1006
      %1039 = vst [vmem:[#allocation4 + $0x40] sm:$0xff] %v1007
      %1040 = vst [vmem:[#allocation4 + $0x48] sm:$0xff] %v1008
      %1041 = vst [vmem:[#allocation4 + $0x50] sm:$0xff] %v1009
      %1042 = vst [vmem:[#allocation4 + $0x58] sm:$0xff] %v1010
      %1043 = vst [vmem:[#allocation4 + $0x60] sm:$0xff] %v1011
      %1044 = vst [vmem:[#allocation4 + $0x68] sm:$0xff] %v1012
      %1045 = vst [vmem:[#allocation4 + $0x70] sm:$0xff] %v1013
      %1046 = vst [vmem:[#allocation4 + $0x78] sm:$0xff] %v1014
      %1047 = vst [vmem:[#allocation4 + $0x80] sm:$0xff] %v1015
      %1048 = vst [vmem:[#allocation4 + $0x88] sm:$0xff] %v1016
      %1049 = vst [vmem:[#allocation4 + $0x90] sm:$0xff] %v1017
      %1050 = vst [vmem:[#allocation4 + $0x98] sm:$0xff] %v1018
      %1051 = vst [vmem:[#allocation4 + $0xa0] sm:$0xff] %v1019
      %1052 = vst [vmem:[#allocation4 + $0xa8] sm:$0xff] %v1020
      %1053 = vst [vmem:[#allocation4 + $0xb0] sm:$0xff] %v1021
      %1054 = vst [vmem:[#allocation4 + $0xb8] sm:$0xff] %v1022
      %1055 = vst [vmem:[#allocation4 + $0xc0] sm:$0xff] %v1023
      %1056 = vst [vmem:[#allocation4 + $0xc8] sm:$0xff] %v1024
      %1057 = vst [vmem:[#allocation4 + $0xd0] sm:$0xff] %v1025
      %1058 = vst [vmem:[#allocation4 + $0xd8] sm:$0xff] %v1026
      %1059 = vst [vmem:[#allocation4 + $0xe0] sm:$0xff] %v1027
      %1060 = vst [vmem:[#allocation4 + $0xe8] sm:$0xff] %v1028
      %1061 = vst [vmem:[#allocation4 + $0xf0] sm:$0xff] %v1029
      %1062 = vst [vmem:[#allocation4 + $0xf8] sm:$0xff] %v1030
      %v1063 = vld [vmem:[#allocation2 + $0x2] sm:$0xff]
      %v1064 = vld [vmem:[#allocation2 + $0xa] sm:$0xff]
      %v1065 = vld [vmem:[#allocation2 + $0x1a] sm:$0xff]
      %v1066 = vld [vmem:[#allocation2 + $0x22] sm:$0xff]
      %v1067 = vld [vmem:[#allocation2 + $0x32] sm:$0xff]
      %v1068 = vld [vmem:[#allocation2 + $0x3a] sm:$0xff]
      %v1069 = vld [vmem:[#allocation2 + $0x4a] sm:$0xff]
      %v1070 = vld [vmem:[#allocation2 + $0x52] sm:$0xff]
      %v1071 = vld [vmem:[#allocation2 + $0x62] sm:$0xff]
      %v1072 = vld [vmem:[#allocation2 + $0x6a] sm:$0xff]
      %v1073 = vld [vmem:[#allocation2 + $0x7a] sm:$0xff]
      %v1074 = vld [vmem:[#allocation2 + $0x82] sm:$0xff]
      %v1075 = vld [vmem:[#allocation2 + $0x92] sm:$0xff]
      %v1076 = vld [vmem:[#allocation2 + $0x9a] sm:$0xff]
      %v1077 = vld [vmem:[#allocation2 + $0xaa] sm:$0xff]
      %v1078 = vld [vmem:[#allocation2 + $0xb2] sm:$0xff]
      %v1079 = vld [vmem:[#allocation2 + $0xc2] sm:$0xff]
      %v1080 = vld [vmem:[#allocation2 + $0xca] sm:$0xff]
      %v1081 = vld [vmem:[#allocation2 + $0xda] sm:$0xff]
      %v1082 = vld [vmem:[#allocation2 + $0xe2] sm:$0xff]
      %v1083 = vld [vmem:[#allocation2 + $0xf2] sm:$0xff]
      %v1084 = vld [vmem:[#allocation2 + $0xfa] sm:$0xff]
      %v1085 = vld [vmem:[#allocation2 + $0x10a] sm:$0xff]
      %v1086 = vld [vmem:[#allocation2 + $0x112] sm:$0xff]
      %v1087 = vld [vmem:[#allocation2 + $0x122] sm:$0xff]
      %v1088 = vld [vmem:[#allocation2 + $0x12a] sm:$0xff]
      %v1089 = vld [vmem:[#allocation2 + $0x13a] sm:$0xff]
      %v1090 = vld [vmem:[#allocation2 + $0x142] sm:$0xff]
      %v1091 = vld [vmem:[#allocation2 + $0x152] sm:$0xff]
      %v1092 = vld [vmem:[#allocation2 + $0x15a] sm:$0xff]
      %v1093 = vld [vmem:[#allocation2 + $0x16a] sm:$0xff]
      %v1094 = vld [vmem:[#allocation2 + $0x172] sm:$0xff]
      %v1095 = vpack.c.bf16 %v1064, %v1063
      %v1096 = vpack.c.bf16 %v1066, %v1065
      %v1097 = vpack.c.bf16 %v1068, %v1067
      %v1098 = vpack.c.bf16 %v1070, %v1069
      %v1099 = vpack.c.bf16 %v1072, %v1071
      %v1100 = vpack.c.bf16 %v1074, %v1073
      %v1101 = vpack.c.bf16 %v1076, %v1075
      %v1102 = vpack.c.bf16 %v1078, %v1077
      %v1103 = vpack.c.bf16 %v1080, %v1079
      %v1104 = vpack.c.bf16 %v1082, %v1081
      %v1105 = vpack.c.bf16 %v1084, %v1083
      %v1106 = vpack.c.bf16 %v1086, %v1085
      %v1107 = vpack.c.bf16 %v1088, %v1087
      %v1108 = vpack.c.bf16 %v1090, %v1089
      %v1109 = vpack.c.bf16 %v1092, %v1091
      %v1110 = vpack.c.bf16 %v1094, %v1093
      %s1111 = scalar_lea.vmem %s1, 128
      %v1112 = vld [vmem:[%s1111] sm:$0xf]
      %v1113 = vld [vmem:[%s1111 + $0x4] sm:$0xf]
      %v1114 = vld [vmem:[%s1111 + $0x8] sm:$0xf]
      %v1115 = vld [vmem:[%s1111 + $0xc] sm:$0xf]
      %v1116 = vld [vmem:[%s1111 + $0x10] sm:$0xf]
      %v1117 = vld [vmem:[%s1111 + $0x14] sm:$0xf]
      %v1118 = vld [vmem:[%s1111 + $0x18] sm:$0xf]
      %v1119 = vld [vmem:[%s1111 + $0x1c] sm:$0xf]
      %v1120 = vld [vmem:[%s1111 + $0x20] sm:$0xf]
      %v1121 = vld [vmem:[%s1111 + $0x24] sm:$0xf]
      %v1122 = vld [vmem:[%s1111 + $0x28] sm:$0xf]
      %v1123 = vld [vmem:[%s1111 + $0x2c] sm:$0xf]
      %v1124 = vld [vmem:[%s1111 + $0x30] sm:$0xf]
      %v1125 = vld [vmem:[%s1111 + $0x34] sm:$0xf]
      %v1126 = vld [vmem:[%s1111 + $0x38] sm:$0xf]
      %v1127 = vld [vmem:[%s1111 + $0x3c] sm:$0xf]
      %v1144 = vunpack.c.l.b16 %v1112
      %v1145 = vunpack.c.l.b16 %v1113
      %v1146 = vunpack.c.l.b16 %v1114
      %v1147 = vunpack.c.l.b16 %v1115
      %v1148 = vunpack.c.l.b16 %v1116
      %v1149 = vunpack.c.l.b16 %v1117
      %v1150 = vunpack.c.l.b16 %v1118
      %v1151 = vunpack.c.l.b16 %v1119
      %v1152 = vunpack.c.l.b16 %v1120
      %v1153 = vunpack.c.l.b16 %v1121
      %v1154 = vunpack.c.l.b16 %v1122
      %v1155 = vunpack.c.l.b16 %v1123
      %v1156 = vunpack.c.l.b16 %v1124
      %v1157 = vunpack.c.l.b16 %v1125
      %v1158 = vunpack.c.l.b16 %v1126
      %v1159 = vunpack.c.l.b16 %v1127
      %v1160 = vpack.c.b16 %v1145, %v1144
      %v1161 = vpack.c.b16 %v1147, %v1146
      %v1162 = vpack.c.b16 %v1149, %v1148
      %v1163 = vpack.c.b16 %v1151, %v1150
      %v1164 = vpack.c.b16 %v1153, %v1152
      %v1165 = vpack.c.b16 %v1155, %v1154
      %v1166 = vpack.c.b16 %v1157, %v1156
      %v1167 = vpack.c.b16 %v1159, %v1158
      %1176 = vmatprep.subr.bf16.mxu0 0
      %1177 = vmatpush1.bf16.msra.mxu0 %v1160
      %1178 = vmatprep.subr.bf16.mxu0 0
      %1179 = vmatpush1.bf16.msra.mxu0 %v1161
      %1180 = vmatprep.subr.bf16.mxu0 0
      %1181 = vmatpush1.bf16.msra.mxu0 %v1162
      %1182 = vmatprep.subr.bf16.mxu0 0
      %1183 = vmatpush1.bf16.msra.mxu0 %v1163
      %1184 = vmatprep.subr.bf16.mxu0 0
      %1185 = vmatpush1.bf16.msra.mxu0 %v1164
      %1186 = vmatprep.subr.bf16.mxu0 0
      %1187 = vmatpush1.bf16.msra.mxu0 %v1165
      %1188 = vmatprep.subr.bf16.mxu0 0
      %1189 = vmatpush1.bf16.msra.mxu0 %v1166
      %1190 = vmatprep.subr.bf16.mxu0 0
      %1191 = vmatpush1.bf16.msra.mxu0 %v1167
      %1192 = vmatprep.subr.bf16.mxu0 0
      %1193 = vmatpush1.bf16.msra.mxu0 0
      %1194 = vmatprep.subr.bf16.mxu0 0
      %1195 = vmatpush1.bf16.msra.mxu0 0
      %1196 = vmatprep.subr.bf16.mxu0 0
      %1197 = vmatpush1.bf16.msra.mxu0 0
      %1198 = vmatprep.subr.bf16.mxu0 0
      %1199 = vmatpush1.bf16.msra.mxu0 0
      %1200 = vmatprep.subr.bf16.mxu0 0
      %1201 = vmatpush1.bf16.msra.mxu0 0
      %1202 = vmatprep.subr.bf16.mxu0 0
      %1203 = vmatpush1.bf16.msra.mxu0 0
      %1204 = vmatprep.subr.bf16.mxu0 0
      %1205 = vmatpush1.bf16.msra.mxu0 0
      %1206 = vmatprep.subr.bf16.mxu0 0
      %1207 = vmatpush1.bf16.msra.mxu0 0
      %1208 = vmatprep.mubr.bf16.mxu0 0
      %1209 = vmatmul.mubr.bf16.gmra.mrb[0].mxu0 %v1095
      %v1210 = vpop.f32.mrb[0].mxu0
      %v1211 = vadd.f32 0.0, %v1210
      %v1212 = vpop.f32.mrb[0].mxu0
      %v1213 = vpop.f32.mrb[0].mxu0
      %v1214 = vadd.f32 0.0, %v1213
      %v1215 = vpop.f32.mrb[0].mxu0
      %1216 = vmatprep.mubr.bf16.mxu0 0
      %1217 = vmatmul.mubr.bf16.gmra.mrb[0].mxu0 %v1096
      %v1218 = vpop.f32.mrb[0].mxu0
      %v1219 = vadd.f32 0.0, %v1218
      %v1220 = vpop.f32.mrb[0].mxu0
      %v1221 = vpop.f32.mrb[0].mxu0
      %v1222 = vadd.f32 0.0, %v1221
      %v1223 = vpop.f32.mrb[0].mxu0
      %1224 = vmatprep.mubr.bf16.mxu0 0
      %1225 = vmatmul.mubr.bf16.gmra.mrb[0].mxu0 %v1097
      %v1226 = vpop.f32.mrb[0].mxu0
      %v1227 = vadd.f32 0.0, %v1226
      %v1228 = vpop.f32.mrb[0].mxu0
      %v1229 = vpop.f32.mrb[0].mxu0
      %v1230 = vadd.f32 0.0, %v1229
      %v1231 = vpop.f32.mrb[0].mxu0
      %1232 = vmatprep.mubr.bf16.mxu0 0
      %1233 = vmatmul.mubr.bf16.gmra.mrb[0].mxu0 %v1098
      %v1234 = vpop.f32.mrb[0].mxu0
      %v1235 = vadd.f32 0.0, %v1234
      %v1236 = vpop.f32.mrb[0].mxu0
      %v1237 = vpop.f32.mrb[0].mxu0
      %v1238 = vadd.f32 0.0, %v1237
      %v1239 = vpop.f32.mrb[0].mxu0
      %1240 = vmatprep.mubr.bf16.mxu0 0
      %1241 = vmatmul.mubr.bf16.gmra.mrb[0].mxu0 %v1099
      %v1242 = vpop.f32.mrb[0].mxu0
      %v1243 = vadd.f32 0.0, %v1242
      %v1244 = vpop.f32.mrb[0].mxu0
      %v1245 = vpop.f32.mrb[0].mxu0
      %v1246 = vadd.f32 0.0, %v1245
      %v1247 = vpop.f32.mrb[0].mxu0
      %1248 = vmatprep.mubr.bf16.mxu0 0
      %1249 = vmatmul.mubr.bf16.gmra.mrb[0].mxu0 %v1100
      %v1250 = vpop.f32.mrb[0].mxu0
      %v1251 = vadd.f32 0.0, %v1250
      %v1252 = vpop.f32.mrb[0].mxu0
      %v1253 = vpop.f32.mrb[0].mxu0
      %v1254 = vadd.f32 0.0, %v1253
      %v1255 = vpop.f32.mrb[0].mxu0
      %1256 = vmatprep.mubr.bf16.mxu0 0
      %1257 = vmatmul.mubr.bf16.gmra.mrb[0].mxu0 %v1101
      %v1258 = vpop.f32.mrb[0].mxu0
      %v1259 = vadd.f32 0.0, %v1258
      %v1260 = vpop.f32.mrb[0].mxu0
      %v1261 = vpop.f32.mrb[0].mxu0
      %v1262 = vadd.f32 0.0, %v1261
      %v1263 = vpop.f32.mrb[0].mxu0
      %1264 = vmatprep.mubr.bf16.mxu0 0
      %1265 = vmatmul.mubr.bf16.gmra.mrb[0].mxu0 %v1102
      %v1266 = vpop.f32.mrb[0].mxu0
      %v1267 = vadd.f32 0.0, %v1266
      %v1268 = vpop.f32.mrb[0].mxu0
      %v1269 = vpop.f32.mrb[0].mxu0
      %v1270 = vadd.f32 0.0, %v1269
      %v1271 = vpop.f32.mrb[0].mxu0
      %1272 = vmatprep.mubr.bf16.mxu0 0
      %1273 = vmatmul.mubr.bf16.gmra.mrb[0].mxu0 %v1103
      %v1274 = vpop.f32.mrb[0].mxu0
      %v1275 = vadd.f32 0.0, %v1274
      %v1276 = vpop.f32.mrb[0].mxu0
      %v1277 = vpop.f32.mrb[0].mxu0
      %v1278 = vadd.f32 0.0, %v1277
      %v1279 = vpop.f32.mrb[0].mxu0
      %1280 = vmatprep.mubr.bf16.mxu0 0
      %1281 = vmatmul.mubr.bf16.gmra.mrb[0].mxu0 %v1104
      %v1282 = vpop.f32.mrb[0].mxu0
      %v1283 = vadd.f32 0.0, %v1282
      %v1284 = vpop.f32.mrb[0].mxu0
      %v1285 = vpop.f32.mrb[0].mxu0
      %v1286 = vadd.f32 0.0, %v1285
      %v1287 = vpop.f32.mrb[0].mxu0
      %1288 = vmatprep.mubr.bf16.mxu0 0
      %1289 = vmatmul.mubr.bf16.gmra.mrb[0].mxu0 %v1105
      %v1290 = vpop.f32.mrb[0].mxu0
      %v1291 = vadd.f32 0.0, %v1290
      %v1292 = vpop.f32.mrb[0].mxu0
      %v1293 = vpop.f32.mrb[0].mxu0
      %v1294 = vadd.f32 0.0, %v1293
      %v1295 = vpop.f32.mrb[0].mxu0
      %1296 = vmatprep.mubr.bf16.mxu0 0
      %1297 = vmatmul.mubr.bf16.gmra.mrb[0].mxu0 %v1106
      %v1298 = vpop.f32.mrb[0].mxu0
      %v1299 = vadd.f32 0.0, %v1298
      %v1300 = vpop.f32.mrb[0].mxu0
      %v1301 = vpop.f32.mrb[0].mxu0
      %v1302 = vadd.f32 0.0, %v1301
      %v1303 = vpop.f32.mrb[0].mxu0
      %1304 = vmatprep.mubr.bf16.mxu0 0
      %1305 = vmatmul.mubr.bf16.gmra.mrb[0].mxu0 %v1107
      %v1306 = vpop.f32.mrb[0].mxu0
      %v1307 = vadd.f32 0.0, %v1306
      %v1308 = vpop.f32.mrb[0].mxu0
      %v1309 = vpop.f32.mrb[0].mxu0
      %v1310 = vadd.f32 0.0, %v1309
      %v1311 = vpop.f32.mrb[0].mxu0
      %1312 = vmatprep.mubr.bf16.mxu0 0
      %1313 = vmatmul.mubr.bf16.gmra.mrb[0].mxu0 %v1108
      %v1314 = vpop.f32.mrb[0].mxu0
      %v1315 = vadd.f32 0.0, %v1314
      %v1316 = vpop.f32.mrb[0].mxu0
      %v1317 = vpop.f32.mrb[0].mxu0
      %v1318 = vadd.f32 0.0, %v1317
      %v1319 = vpop.f32.mrb[0].mxu0
      %1320 = vmatprep.mubr.bf16.mxu0 0
      %1321 = vmatmul.mubr.bf16.gmra.mrb[0].mxu0 %v1109
      %v1322 = vpop.f32.mrb[0].mxu0
      %v1323 = vadd.f32 0.0, %v1322
      %v1324 = vpop.f32.mrb[0].mxu0
      %v1325 = vpop.f32.mrb[0].mxu0
      %v1326 = vadd.f32 0.0, %v1325
      %v1327 = vpop.f32.mrb[0].mxu0
      %1328 = vmatprep.mubr.bf16.mxu0 0
      %1329 = vmatmul.mubr.bf16.gmra.mrb[0].mxu0 %v1110
      %v1330 = vpop.f32.mrb[0].mxu0
      %v1331 = vadd.f32 0.0, %v1330
      %v1332 = vpop.f32.mrb[0].mxu0
      %v1333 = vpop.f32.mrb[0].mxu0
      %v1334 = vadd.f32 0.0, %v1333
      %v1335 = vpop.f32.mrb[0].mxu0
      %1336 = vdwg.mxu0
      %v1337 = vld [vmem:[#allocation4] sm:$0xff]
      %v1338 = vld [vmem:[#allocation4 + $0x8] sm:$0xff]
      %v1339 = vld [vmem:[#allocation4 + $0x10] sm:$0xff]
      %v1340 = vld [vmem:[#allocation4 + $0x18] sm:$0xff]
      %v1341 = vld [vmem:[#allocation4 + $0x20] sm:$0xff]
      %v1342 = vld [vmem:[#allocation4 + $0x28] sm:$0xff]
      %v1343 = vld [vmem:[#allocation4 + $0x30] sm:$0xff]
      %v1344 = vld [vmem:[#allocation4 + $0x38] sm:$0xff]
      %v1345 = vld [vmem:[#allocation4 + $0x40] sm:$0xff]
      %v1346 = vld [vmem:[#allocation4 + $0x48] sm:$0xff]
      %v1347 = vld [vmem:[#allocation4 + $0x50] sm:$0xff]
      %v1348 = vld [vmem:[#allocation4 + $0x58] sm:$0xff]
      %v1349 = vld [vmem:[#allocation4 + $0x60] sm:$0xff]
      %v1350 = vld [vmem:[#allocation4 + $0x68] sm:$0xff]
      %v1351 = vld [vmem:[#allocation4 + $0x70] sm:$0xff]
      %v1352 = vld [vmem:[#allocation4 + $0x78] sm:$0xff]
      %v1353 = vld [vmem:[#allocation4 + $0x80] sm:$0xff]
      %v1354 = vld [vmem:[#allocation4 + $0x88] sm:$0xff]
      %v1355 = vld [vmem:[#allocation4 + $0x90] sm:$0xff]
      %v1356 = vld [vmem:[#allocation4 + $0x98] sm:$0xff]
      %v1357 = vld [vmem:[#allocation4 + $0xa0] sm:$0xff]
      %v1358 = vld [vmem:[#allocation4 + $0xa8] sm:$0xff]
      %v1359 = vld [vmem:[#allocation4 + $0xb0] sm:$0xff]
      %v1360 = vld [vmem:[#allocation4 + $0xb8] sm:$0xff]
      %v1361 = vld [vmem:[#allocation4 + $0xc0] sm:$0xff]
      %v1362 = vld [vmem:[#allocation4 + $0xc8] sm:$0xff]
      %v1363 = vld [vmem:[#allocation4 + $0xd0] sm:$0xff]
      %v1364 = vld [vmem:[#allocation4 + $0xd8] sm:$0xff]
      %v1365 = vld [vmem:[#allocation4 + $0xe0] sm:$0xff]
      %v1366 = vld [vmem:[#allocation4 + $0xe8] sm:$0xff]
      %v1367 = vld [vmem:[#allocation4 + $0xf0] sm:$0xff]
      %v1368 = vld [vmem:[#allocation4 + $0xf8] sm:$0xff]
      %v1369 = vadd.f32 %v1337, %v1211
      %v1370 = vadd.f32 %v1338, %v1214
      %v1371 = vadd.f32 %v1339, %v1219
      %v1372 = vadd.f32 %v1340, %v1222
      %v1373 = vadd.f32 %v1341, %v1227
      %v1374 = vadd.f32 %v1342, %v1230
      %v1375 = vadd.f32 %v1343, %v1235
      %v1376 = vadd.f32 %v1344, %v1238
      %v1377 = vadd.f32 %v1345, %v1243
      %v1378 = vadd.f32 %v1346, %v1246
      %v1379 = vadd.f32 %v1347, %v1251
      %v1380 = vadd.f32 %v1348, %v1254
      %v1381 = vadd.f32 %v1349, %v1259
      %v1382 = vadd.f32 %v1350, %v1262
      %v1383 = vadd.f32 %v1351, %v1267
      %v1384 = vadd.f32 %v1352, %v1270
      %v1385 = vadd.f32 %v1353, %v1275
      %v1386 = vadd.f32 %v1354, %v1278
      %v1387 = vadd.f32 %v1355, %v1283
      %v1388 = vadd.f32 %v1356, %v1286
      %v1389 = vadd.f32 %v1357, %v1291
      %v1390 = vadd.f32 %v1358, %v1294
      %v1391 = vadd.f32 %v1359, %v1299
      %v1392 = vadd.f32 %v1360, %v1302
      %v1393 = vadd.f32 %v1361, %v1307
      %v1394 = vadd.f32 %v1362, %v1310
      %v1395 = vadd.f32 %v1363, %v1315
      %v1396 = vadd.f32 %v1364, %v1318
      %v1397 = vadd.f32 %v1365, %v1323
      %v1398 = vadd.f32 %v1366, %v1326
      %v1399 = vadd.f32 %v1367, %v1331
      %v1400 = vadd.f32 %v1368, %v1334
      %1401 = vst [vmem:[#allocation4] sm:$0xff] %v1369
      %1402 = vst [vmem:[#allocation4 + $0x8] sm:$0xff] %v1370
      %1403 = vst [vmem:[#allocation4 + $0x10] sm:$0xff] %v1371
      %1404 = vst [vmem:[#allocation4 + $0x18] sm:$0xff] %v1372
      %1405 = vst [vmem:[#allocation4 + $0x20] sm:$0xff] %v1373
      %1406 = vst [vmem:[#allocation4 + $0x28] sm:$0xff] %v1374
      %1407 = vst [vmem:[#allocation4 + $0x30] sm:$0xff] %v1375
      %1408 = vst [vmem:[#allocation4 + $0x38] sm:$0xff] %v1376
      %1409 = vst [vmem:[#allocation4 + $0x40] sm:$0xff] %v1377
      %1410 = vst [vmem:[#allocation4 + $0x48] sm:$0xff] %v1378
      %1411 = vst [vmem:[#allocation4 + $0x50] sm:$0xff] %v1379
      %1412 = vst [vmem:[#allocation4 + $0x58] sm:$0xff] %v1380
      %1413 = vst [vmem:[#allocation4 + $0x60] sm:$0xff] %v1381
      %1414 = vst [vmem:[#allocation4 + $0x68] sm:$0xff] %v1382
      %1415 = vst [vmem:[#allocation4 + $0x70] sm:$0xff] %v1383
      %1416 = vst [vmem:[#allocation4 + $0x78] sm:$0xff] %v1384
      %1417 = vst [vmem:[#allocation4 + $0x80] sm:$0xff] %v1385
      %1418 = vst [vmem:[#allocation4 + $0x88] sm:$0xff] %v1386
      %1419 = vst [vmem:[#allocation4 + $0x90] sm:$0xff] %v1387
      %1420 = vst [vmem:[#allocation4 + $0x98] sm:$0xff] %v1388
      %1421 = vst [vmem:[#allocation4 + $0xa0] sm:$0xff] %v1389
      %1422 = vst [vmem:[#allocation4 + $0xa8] sm:$0xff] %v1390
      %1423 = vst [vmem:[#allocation4 + $0xb0] sm:$0xff] %v1391
      %1424 = vst [vmem:[#allocation4 + $0xb8] sm:$0xff] %v1392
      %1425 = vst [vmem:[#allocation4 + $0xc0] sm:$0xff] %v1393
      %1426 = vst [vmem:[#allocation4 + $0xc8] sm:$0xff] %v1394
      %1427 = vst [vmem:[#allocation4 + $0xd0] sm:$0xff] %v1395
      %1428 = vst [vmem:[#allocation4 + $0xd8] sm:$0xff] %v1396
      %1429 = vst [vmem:[#allocation4 + $0xe0] sm:$0xff] %v1397
      %1430 = vst [vmem:[#allocation4 + $0xe8] sm:$0xff] %v1398
      %1431 = vst [vmem:[#allocation4 + $0xf0] sm:$0xff] %v1399
      %1432 = vst [vmem:[#allocation4 + $0xf8] sm:$0xff] %v1400
      %s1433 = scalar_lea.vmem [#allocation2], 24
      %v1434 = vld [vmem:[%s1433] sm:$0xff]
      %v1435 = vld [vmem:[%s1433 + $0x8] sm:$0xff]
      %v1436 = vld [vmem:[%s1433 + $0x18] sm:$0xff]
      %v1437 = vld [vmem:[%s1433 + $0x20] sm:$0xff]
      %v1438 = vld [vmem:[%s1433 + $0x30] sm:$0xff]
      %v1439 = vld [vmem:[%s1433 + $0x38] sm:$0xff]
      %v1440 = vld [vmem:[%s1433 + $0x48] sm:$0xff]
      %v1441 = vld [vmem:[%s1433 + $0x50] sm:$0xff]
      %v1442 = vld [vmem:[%s1433 + $0x60] sm:$0xff]
      %v1443 = vld [vmem:[%s1433 + $0x68] sm:$0xff]
      %v1444 = vld [vmem:[%s1433 + $0x78] sm:$0xff]
      %v1445 = vld [vmem:[%s1433 + $0x80] sm:$0xff]
      %v1446 = vld [vmem:[%s1433 + $0x90] sm:$0xff]
      %v1447 = vld [vmem:[%s1433 + $0x98] sm:$0xff]
      %v1448 = vld [vmem:[%s1433 + $0xa8] sm:$0xff]
      %v1449 = vld [vmem:[%s1433 + $0xb0] sm:$0xff]
      %v1450 = vld [vmem:[%s1433 + $0xc0] sm:$0xff]
      %v1451 = vld [vmem:[%s1433 + $0xc8] sm:$0xff]
      %v1452 = vld [vmem:[%s1433 + $0xd8] sm:$0xff]
      %v1453 = vld [vmem:[%s1433 + $0xe0] sm:$0xff]
      %v1454 = vld [vmem:[%s1433 + $0xf0] sm:$0xff]
      %v1455 = vld [vmem:[%s1433 + $0xf8] sm:$0xff]
      %v1456 = vld [vmem:[%s1433 + $0x108] sm:$0xff]
      %v1457 = vld [vmem:[%s1433 + $0x110] sm:$0xff]
      %v1458 = vld [vmem:[%s1433 + $0x120] sm:$0xff]
      %v1459 = vld [vmem:[%s1433 + $0x128] sm:$0xff]
      %v1460 = vld [vmem:[%s1433 + $0x138] sm:$0xff]
      %v1461 = vld [vmem:[%s1433 + $0x140] sm:$0xff]
      %v1462 = vld [vmem:[%s1433 + $0x150] sm:$0xff]
      %v1463 = vld [vmem:[%s1433 + $0x158] sm:$0xff]
      %v1464 = vld [vmem:[%s1433 + $0x168] sm:$0xff]
      %v1465 = vld [vmem:[%s1433 + $0x170] sm:$0xff]
      %v1466 = vpack.c.bf16 %v1435, %v1434
      %v1467 = vpack.c.bf16 %v1437, %v1436
      %v1468 = vpack.c.bf16 %v1439, %v1438
      %v1469 = vpack.c.bf16 %v1441, %v1440
      %v1470 = vpack.c.bf16 %v1443, %v1442
      %v1471 = vpack.c.bf16 %v1445, %v1444
      %v1472 = vpack.c.bf16 %v1447, %v1446
      %v1473 = vpack.c.bf16 %v1449, %v1448
      %v1474 = vpack.c.bf16 %v1451, %v1450
      %v1475 = vpack.c.bf16 %v1453, %v1452
      %v1476 = vpack.c.bf16 %v1455, %v1454
      %v1477 = vpack.c.bf16 %v1457, %v1456
      %v1478 = vpack.c.bf16 %v1459, %v1458
      %v1479 = vpack.c.bf16 %v1461, %v1460
      %v1480 = vpack.c.bf16 %v1463, %v1462
      %v1481 = vpack.c.bf16 %v1465, %v1464
      %s1482 = scalar_lea.vmem %s1, 192
      %v1483 = vld [vmem:[%s1482] sm:$0xf]
      %v1484 = vld [vmem:[%s1482 + $0x4] sm:$0xf]
      %v1485 = vld [vmem:[%s1482 + $0x8] sm:$0xf]
      %v1486 = vld [vmem:[%s1482 + $0xc] sm:$0xf]
      %v1487 = vld [vmem:[%s1482 + $0x10] sm:$0xf]
      %v1488 = vld [vmem:[%s1482 + $0x14] sm:$0xf]
      %v1489 = vld [vmem:[%s1482 + $0x18] sm:$0xf]
      %v1490 = vld [vmem:[%s1482 + $0x1c] sm:$0xf]
      %v1491 = vld [vmem:[%s1482 + $0x20] sm:$0xf]
      %v1492 = vld [vmem:[%s1482 + $0x24] sm:$0xf]
      %v1493 = vld [vmem:[%s1482 + $0x28] sm:$0xf]
      %v1494 = vld [vmem:[%s1482 + $0x2c] sm:$0xf]
      %v1495 = vld [vmem:[%s1482 + $0x30] sm:$0xf]
      %v1496 = vld [vmem:[%s1482 + $0x34] sm:$0xf]
      %v1497 = vld [vmem:[%s1482 + $0x38] sm:$0xf]
      %v1498 = vld [vmem:[%s1482 + $0x3c] sm:$0xf]
      %v1515 = vunpack.c.l.b16 %v1483
      %v1516 = vunpack.c.l.b16 %v1484
      %v1517 = vunpack.c.l.b16 %v1485
      %v1518 = vunpack.c.l.b16 %v1486
      %v1519 = vunpack.c.l.b16 %v1487
      %v1520 = vunpack.c.l.b16 %v1488
      %v1521 = vunpack.c.l.b16 %v1489
      %v1522 = vunpack.c.l.b16 %v1490
      %v1523 = vunpack.c.l.b16 %v1491
      %v1524 = vunpack.c.l.b16 %v1492
      %v1525 = vunpack.c.l.b16 %v1493
      %v1526 = vunpack.c.l.b16 %v1494
      %v1527 = vunpack.c.l.b16 %v1495
      %v1528 = vunpack.c.l.b16 %v1496
      %v1529 = vunpack.c.l.b16 %v1497
      %v1530 = vunpack.c.l.b16 %v1498
      %v1531 = vpack.c.b16 %v1516, %v1515
      %v1532 = vpack.c.b16 %v1518, %v1517
      %v1533 = vpack.c.b16 %v1520, %v1519
      %v1534 = vpack.c.b16 %v1522, %v1521
      %v1535 = vpack.c.b16 %v1524, %v1523
      %v1536 = vpack.c.b16 %v1526, %v1525
      %v1537 = vpack.c.b16 %v1528, %v1527
      %v1538 = vpack.c.b16 %v1530, %v1529
      %1547 = vmatprep.subr.bf16.mxu0 0
      %1548 = vmatpush1.bf16.msra.mxu0 %v1531
      %1549 = vmatprep.subr.bf16.mxu0 0
      %1550 = vmatpush1.bf16.msra.mxu0 %v1532
      %1551 = vmatprep.subr.bf16.mxu0 0
      %1552 = vmatpush1.bf16.msra.mxu0 %v1533
      %1553 = vmatprep.subr.bf16.mxu0 0
      %1554 = vmatpush1.bf16.msra.mxu0 %v1534
      %1555 = vmatprep.subr.bf16.mxu0 0
      %1556 = vmatpush1.bf16.msra.mxu0 %v1535
      %1557 = vmatprep.subr.bf16.mxu0 0
      %1558 = vmatpush1.bf16.msra.mxu0 %v1536
      %1559 = vmatprep.subr.bf16.mxu0 0
      %1560 = vmatpush1.bf16.msra.mxu0 %v1537
      %1561 = vmatprep.subr.bf16.mxu0 0
      %1562 = vmatpush1.bf16.msra.mxu0 %v1538
      %1563 = vmatprep.subr.bf16.mxu0 0
      %1564 = vmatpush1.bf16.msra.mxu0 0
      %1565 = vmatprep.subr.bf16.mxu0 0
      %1566 = vmatpush1.bf16.msra.mxu0 0
      %1567 = vmatprep.subr.bf16.mxu0 0
      %1568 = vmatpush1.bf16.msra.mxu0 0
      %1569 = vmatprep.subr.bf16.mxu0 0
      %1570 = vmatpush1.bf16.msra.mxu0 0
      %1571 = vmatprep.subr.bf16.mxu0 0
      %1572 = vmatpush1.bf16.msra.mxu0 0
      %1573 = vmatprep.subr.bf16.mxu0 0
      %1574 = vmatpush1.bf16.msra.mxu0 0
      %1575 = vmatprep.subr.bf16.mxu0 0
      %1576 = vmatpush1.bf16.msra.mxu0 0
      %1577 = vmatprep.subr.bf16.mxu0 0
      %1578 = vmatpush1.bf16.msra.mxu0 0
      %1579 = vmatprep.mubr.bf16.mxu0 0
      %1580 = vmatmul.mubr.bf16.gmra.mrb[0].mxu0 %v1466
      %v1581 = vpop.f32.mrb[0].mxu0
      %v1582 = vadd.f32 0.0, %v1581
      %v1583 = vpop.f32.mrb[0].mxu0
      %v1584 = vpop.f32.mrb[0].mxu0
      %v1585 = vadd.f32 0.0, %v1584
      %v1586 = vpop.f32.mrb[0].mxu0
      %1587 = vmatprep.mubr.bf16.mxu0 0
      %1588 = vmatmul.mubr.bf16.gmra.mrb[0].mxu0 %v1467
      %v1589 = vpop.f32.mrb[0].mxu0
      %v1590 = vadd.f32 0.0, %v1589
      %v1591 = vpop.f32.mrb[0].mxu0
      %v1592 = vpop.f32.mrb[0].mxu0
      %v1593 = vadd.f32 0.0, %v1592
      %v1594 = vpop.f32.mrb[0].mxu0
      %1595 = vmatprep.mubr.bf16.mxu0 0
      %1596 = vmatmul.mubr.bf16.gmra.mrb[0].mxu0 %v1468
      %v1597 = vpop.f32.mrb[0].mxu0
      %v1598 = vadd.f32 0.0, %v1597
      %v1599 = vpop.f32.mrb[0].mxu0
      %v1600 = vpop.f32.mrb[0].mxu0
      %v1601 = vadd.f32 0.0, %v1600
      %v1602 = vpop.f32.mrb[0].mxu0
      %1603 = vmatprep.mubr.bf16.mxu0 0
      %1604 = vmatmul.mubr.bf16.gmra.mrb[0].mxu0 %v1469
      %v1605 = vpop.f32.mrb[0].mxu0
      %v1606 = vadd.f32 0.0, %v1605
      %v1607 = vpop.f32.mrb[0].mxu0
      %v1608 = vpop.f32.mrb[0].mxu0
      %v1609 = vadd.f32 0.0, %v1608
      %v1610 = vpop.f32.mrb[0].mxu0
      %1611 = vmatprep.mubr.bf16.mxu0 0
      %1612 = vmatmul.mubr.bf16.gmra.mrb[0].mxu0 %v1470
      %v1613 = vpop.f32.mrb[0].mxu0
      %v1614 = vadd.f32 0.0, %v1613
      %v1615 = vpop.f32.mrb[0].mxu0
      %v1616 = vpop.f32.mrb[0].mxu0
      %v1617 = vadd.f32 0.0, %v1616
      %v1618 = vpop.f32.mrb[0].mxu0
      %1619 = vmatprep.mubr.bf16.mxu0 0
      %1620 = vmatmul.mubr.bf16.gmra.mrb[0].mxu0 %v1471
      %v1621 = vpop.f32.mrb[0].mxu0
      %v1622 = vadd.f32 0.0, %v1621
      %v1623 = vpop.f32.mrb[0].mxu0
      %v1624 = vpop.f32.mrb[0].mxu0
      %v1625 = vadd.f32 0.0, %v1624
      %v1626 = vpop.f32.mrb[0].mxu0
      %1627 = vmatprep.mubr.bf16.mxu0 0
      %1628 = vmatmul.mubr.bf16.gmra.mrb[0].mxu0 %v1472
      %v1629 = vpop.f32.mrb[0].mxu0
      %v1630 = vadd.f32 0.0, %v1629
      %v1631 = vpop.f32.mrb[0].mxu0
      %v1632 = vpop.f32.mrb[0].mxu0
      %v1633 = vadd.f32 0.0, %v1632
      %v1634 = vpop.f32.mrb[0].mxu0
      %1635 = vmatprep.mubr.bf16.mxu0 0
      %1636 = vmatmul.mubr.bf16.gmra.mrb[0].mxu0 %v1473
      %v1637 = vpop.f32.mrb[0].mxu0
      %v1638 = vadd.f32 0.0, %v1637
      %v1639 = vpop.f32.mrb[0].mxu0
      %v1640 = vpop.f32.mrb[0].mxu0
      %v1641 = vadd.f32 0.0, %v1640
      %v1642 = vpop.f32.mrb[0].mxu0
      %1643 = vmatprep.mubr.bf16.mxu0 0
      %1644 = vmatmul.mubr.bf16.gmra.mrb[0].mxu0 %v1474
      %v1645 = vpop.f32.mrb[0].mxu0
      %v1646 = vadd.f32 0.0, %v1645
      %v1647 = vpop.f32.mrb[0].mxu0
      %v1648 = vpop.f32.mrb[0].mxu0
      %v1649 = vadd.f32 0.0, %v1648
      %v1650 = vpop.f32.mrb[0].mxu0
      %1651 = vmatprep.mubr.bf16.mxu0 0
      %1652 = vmatmul.mubr.bf16.gmra.mrb[0].mxu0 %v1475
      %v1653 = vpop.f32.mrb[0].mxu0
      %v1654 = vadd.f32 0.0, %v1653
      %v1655 = vpop.f32.mrb[0].mxu0
      %v1656 = vpop.f32.mrb[0].mxu0
      %v1657 = vadd.f32 0.0, %v1656
      %v1658 = vpop.f32.mrb[0].mxu0
      %1659 = vmatprep.mubr.bf16.mxu0 0
      %1660 = vmatmul.mubr.bf16.gmra.mrb[0].mxu0 %v1476
      %v1661 = vpop.f32.mrb[0].mxu0
      %v1662 = vadd.f32 0.0, %v1661
      %v1663 = vpop.f32.mrb[0].mxu0
      %v1664 = vpop.f32.mrb[0].mxu0
      %v1665 = vadd.f32 0.0, %v1664
      %v1666 = vpop.f32.mrb[0].mxu0
      %1667 = vmatprep.mubr.bf16.mxu0 0
      %1668 = vmatmul.mubr.bf16.gmra.mrb[0].mxu0 %v1477
      %v1669 = vpop.f32.mrb[0].mxu0
      %v1670 = vadd.f32 0.0, %v1669
      %v1671 = vpop.f32.mrb[0].mxu0
      %v1672 = vpop.f32.mrb[0].mxu0
      %v1673 = vadd.f32 0.0, %v1672
      %v1674 = vpop.f32.mrb[0].mxu0
      %1675 = vmatprep.mubr.bf16.mxu0 0
      %1676 = vmatmul.mubr.bf16.gmra.mrb[0].mxu0 %v1478
      %v1677 = vpop.f32.mrb[0].mxu0
      %v1678 = vadd.f32 0.0, %v1677
      %v1679 = vpop.f32.mrb[0].mxu0
      %v1680 = vpop.f32.mrb[0].mxu0
      %v1681 = vadd.f32 0.0, %v1680
      %v1682 = vpop.f32.mrb[0].mxu0
      %1683 = vmatprep.mubr.bf16.mxu0 0
      %1684 = vmatmul.mubr.bf16.gmra.mrb[0].mxu0 %v1479
      %v1685 = vpop.f32.mrb[0].mxu0
      %v1686 = vadd.f32 0.0, %v1685
      %v1687 = vpop.f32.mrb[0].mxu0
      %v1688 = vpop.f32.mrb[0].mxu0
      %v1689 = vadd.f32 0.0, %v1688
      %v1690 = vpop.f32.mrb[0].mxu0
      %1691 = vmatprep.mubr.bf16.mxu0 0
      %1692 = vmatmul.mubr.bf16.gmra.mrb[0].mxu0 %v1480
      %v1693 = vpop.f32.mrb[0].mxu0
      %v1694 = vadd.f32 0.0, %v1693
      %v1695 = vpop.f32.mrb[0].mxu0
      %v1696 = vpop.f32.mrb[0].mxu0
      %v1697 = vadd.f32 0.0, %v1696
      %v1698 = vpop.f32.mrb[0].mxu0
      %1699 = vmatprep.mubr.bf16.mxu0 0
      %1700 = vmatmul.mubr.bf16.gmra.mrb[0].mxu0 %v1481
      %v1701 = vpop.f32.mrb[0].mxu0
      %v1702 = vadd.f32 0.0, %v1701
      %v1703 = vpop.f32.mrb[0].mxu0
      %v1704 = vpop.f32.mrb[0].mxu0
      %v1705 = vadd.f32 0.0, %v1704
      %v1706 = vpop.f32.mrb[0].mxu0
      %1707 = vdwg.mxu0
      %v1708 = vld [vmem:[#allocation4] sm:$0xff]
      %v1709 = vld [vmem:[#allocation4 + $0x8] sm:$0xff]
      %v1710 = vld [vmem:[#allocation4 + $0x10] sm:$0xff]
      %v1711 = vld [vmem:[#allocation4 + $0x18] sm:$0xff]
      %v1712 = vld [vmem:[#allocation4 + $0x20] sm:$0xff]
      %v1713 = vld [vmem:[#allocation4 + $0x28] sm:$0xff]
      %v1714 = vld [vmem:[#allocation4 + $0x30] sm:$0xff]
      %v1715 = vld [vmem:[#allocation4 + $0x38] sm:$0xff]
      %v1716 = vld [vmem:[#allocation4 + $0x40] sm:$0xff]
      %v1717 = vld [vmem:[#allocation4 + $0x48] sm:$0xff]
      %v1718 = vld [vmem:[#allocation4 + $0x50] sm:$0xff]
      %v1719 = vld [vmem:[#allocation4 + $0x58] sm:$0xff]
      %v1720 = vld [vmem:[#allocation4 + $0x60] sm:$0xff]
      %v1721 = vld [vmem:[#allocation4 + $0x68] sm:$0xff]
      %v1722 = vld [vmem:[#allocation4 + $0x70] sm:$0xff]
      %v1723 = vld [vmem:[#allocation4 + $0x78] sm:$0xff]
      %v1724 = vld [vmem:[#allocation4 + $0x80] sm:$0xff]
      %v1725 = vld [vmem:[#allocation4 + $0x88] sm:$0xff]
      %v1726 = vld [vmem:[#allocation4 + $0x90] sm:$0xff]
      %v1727 = vld [vmem:[#allocation4 + $0x98] sm:$0xff]
      %v1728 = vld [vmem:[#allocation4 + $0xa0] sm:$0xff]
      %v1729 = vld [vmem:[#allocation4 + $0xa8] sm:$0xff]
      %v1730 = vld [vmem:[#allocation4 + $0xb0] sm:$0xff]
      %v1731 = vld [vmem:[#allocation4 + $0xb8] sm:$0xff]
      %v1732 = vld [vmem:[#allocation4 + $0xc0] sm:$0xff]
      %v1733 = vld [vmem:[#allocation4 + $0xc8] sm:$0xff]
      %v1734 = vld [vmem:[#allocation4 + $0xd0] sm:$0xff]
      %v1735 = vld [vmem:[#allocation4 + $0xd8] sm:$0xff]
      %v1736 = vld [vmem:[#allocation4 + $0xe0] sm:$0xff]
      %v1737 = vld [vmem:[#allocation4 + $0xe8] sm:$0xff]
      %v1738 = vld [vmem:[#allocation4 + $0xf0] sm:$0xff]
      %v1739 = vld [vmem:[#allocation4 + $0xf8] sm:$0xff]
      %v1740 = vadd.f32 %v1708, %v1582
      %v1741 = vadd.f32 %v1709, %v1585
      %v1742 = vadd.f32 %v1710, %v1590
      %v1743 = vadd.f32 %v1711, %v1593
      %v1744 = vadd.f32 %v1712, %v1598
      %v1745 = vadd.f32 %v1713, %v1601
      %v1746 = vadd.f32 %v1714, %v1606
      %v1747 = vadd.f32 %v1715, %v1609
      %v1748 = vadd.f32 %v1716, %v1614
      %v1749 = vadd.f32 %v1717, %v1617
      %v1750 = vadd.f32 %v1718, %v1622
      %v1751 = vadd.f32 %v1719, %v1625
      %v1752 = vadd.f32 %v1720, %v1630
      %v1753 = vadd.f32 %v1721, %v1633
      %v1754 = vadd.f32 %v1722, %v1638
      %v1755 = vadd.f32 %v1723, %v1641
      %v1756 = vadd.f32 %v1724, %v1646
      %v1757 = vadd.f32 %v1725, %v1649
      %v1758 = vadd.f32 %v1726, %v1654
      %v1759 = vadd.f32 %v1727, %v1657
      %v1760 = vadd.f32 %v1728, %v1662
      %v1761 = vadd.f32 %v1729, %v1665
      %v1762 = vadd.f32 %v1730, %v1670
      %v1763 = vadd.f32 %v1731, %v1673
      %v1764 = vadd.f32 %v1732, %v1678
      %v1765 = vadd.f32 %v1733, %v1681
      %v1766 = vadd.f32 %v1734, %v1686
      %v1767 = vadd.f32 %v1735, %v1689
      %v1768 = vadd.f32 %v1736, %v1694
      %v1769 = vadd.f32 %v1737, %v1697
      %v1770 = vadd.f32 %v1738, %v1702
      %v1771 = vadd.f32 %v1739, %v1705
      %1772 = vst [vmem:[#allocation4] sm:$0xff] %v1740
      %1773 = vst [vmem:[#allocation4 + $0x8] sm:$0xff] %v1741
      %1774 = vst [vmem:[#allocation4 + $0x10] sm:$0xff] %v1742
      %1775 = vst [vmem:[#allocation4 + $0x18] sm:$0xff] %v1743
      %1776 = vst [vmem:[#allocation4 + $0x20] sm:$0xff] %v1744
      %1777 = vst [vmem:[#allocation4 + $0x28] sm:$0xff] %v1745
      %1778 = vst [vmem:[#allocation4 + $0x30] sm:$0xff] %v1746
      %1779 = vst [vmem:[#allocation4 + $0x38] sm:$0xff] %v1747
      %1780 = vst [vmem:[#allocation4 + $0x40] sm:$0xff] %v1748
      %1781 = vst [vmem:[#allocation4 + $0x48] sm:$0xff] %v1749
      %1782 = vst [vmem:[#allocation4 + $0x50] sm:$0xff] %v1750
      %1783 = vst [vmem:[#allocation4 + $0x58] sm:$0xff] %v1751
      %1784 = vst [vmem:[#allocation4 + $0x60] sm:$0xff] %v1752
      %1785 = vst [vmem:[#allocation4 + $0x68] sm:$0xff] %v1753
      %1786 = vst [vmem:[#allocation4 + $0x70] sm:$0xff] %v1754
      %1787 = vst [vmem:[#allocation4 + $0x78] sm:$0xff] %v1755
      %1788 = vst [vmem:[#allocation4 + $0x80] sm:$0xff] %v1756
      %1789 = vst [vmem:[#allocation4 + $0x88] sm:$0xff] %v1757
      %1790 = vst [vmem:[#allocation4 + $0x90] sm:$0xff] %v1758
      %1791 = vst [vmem:[#allocation4 + $0x98] sm:$0xff] %v1759
      %1792 = vst [vmem:[#allocation4 + $0xa0] sm:$0xff] %v1760
      %1793 = vst [vmem:[#allocation4 + $0xa8] sm:$0xff] %v1761
      %1794 = vst [vmem:[#allocation4 + $0xb0] sm:$0xff] %v1762
      %1795 = vst [vmem:[#allocation4 + $0xb8] sm:$0xff] %v1763
      %1796 = vst [vmem:[#allocation4 + $0xc0] sm:$0xff] %v1764
      %1797 = vst [vmem:[#allocation4 + $0xc8] sm:$0xff] %v1765
      %1798 = vst [vmem:[#allocation4 + $0xd0] sm:$0xff] %v1766
      %1799 = vst [vmem:[#allocation4 + $0xd8] sm:$0xff] %v1767
      %1800 = vst [vmem:[#allocation4 + $0xe0] sm:$0xff] %v1768
      %1801 = vst [vmem:[#allocation4 + $0xe8] sm:$0xff] %v1769
      %1802 = vst [vmem:[#allocation4 + $0xf0] sm:$0xff] %v1770
      %1803 = vst [vmem:[#allocation4 + $0xf8] sm:$0xff] %v1771
      %v1804 = vld [vmem:[%s1433 + $0x1] sm:$0xff]
      %v1805 = vld [vmem:[%s1433 + $0x9] sm:$0xff]
      %v1806 = vld [vmem:[%s1433 + $0x19] sm:$0xff]
      %v1807 = vld [vmem:[%s1433 + $0x21] sm:$0xff]
      %v1808 = vld [vmem:[%s1433 + $0x31] sm:$0xff]
      %v1809 = vld [vmem:[%s1433 + $0x39] sm:$0xff]
      %v1810 = vld [vmem:[%s1433 + $0x49] sm:$0xff]
      %v1811 = vld [vmem:[%s1433 + $0x51] sm:$0xff]
      %v1812 = vld [vmem:[%s1433 + $0x61] sm:$0xff]
      %v1813 = vld [vmem:[%s1433 + $0x69] sm:$0xff]
      %v1814 = vld [vmem:[%s1433 + $0x79] sm:$0xff]
      %v1815 = vld [vmem:[%s1433 + $0x81] sm:$0xff]
      %v1816 = vld [vmem:[%s1433 + $0x91] sm:$0xff]
      %v1817 = vld [vmem:[%s1433 + $0x99] sm:$0xff]
      %v1818 = vld [vmem:[%s1433 + $0xa9] sm:$0xff]
      %v1819 = vld [vmem:[%s1433 + $0xb1] sm:$0xff]
      %v1820 = vld [vmem:[%s1433 + $0xc1] sm:$0xff]
      %v1821 = vld [vmem:[%s1433 + $0xc9] sm:$0xff]
      %v1822 = vld [vmem:[%s1433 + $0xd9] sm:$0xff]
      %v1823 = vld [vmem:[%s1433 + $0xe1] sm:$0xff]
      %v1824 = vld [vmem:[%s1433 + $0xf1] sm:$0xff]
      %v1825 = vld [vmem:[%s1433 + $0xf9] sm:$0xff]
      %v1826 = vld [vmem:[%s1433 + $0x109] sm:$0xff]
      %v1827 = vld [vmem:[%s1433 + $0x111] sm:$0xff]
      %v1828 = vld [vmem:[%s1433 + $0x121] sm:$0xff]
      %v1829 = vld [vmem:[%s1433 + $0x129] sm:$0xff]
      %v1830 = vld [vmem:[%s1433 + $0x139] sm:$0xff]
      %v1831 = vld [vmem:[%s1433 + $0x141] sm:$0xff]
      %v1832 = vld [vmem:[%s1433 + $0x151] sm:$0xff]
      %v1833 = vld [vmem:[%s1433 + $0x159] sm:$0xff]
      %v1834 = vld [vmem:[%s1433 + $0x169] sm:$0xff]
      %v1835 = vld [vmem:[%s1433 + $0x171] sm:$0xff]
      %v1836 = vpack.c.bf16 %v1805, %v1804
      %v1837 = vpack.c.bf16 %v1807, %v1806
      %v1838 = vpack.c.bf16 %v1809, %v1808
      %v1839 = vpack.c.bf16 %v1811, %v1810
      %v1840 = vpack.c.bf16 %v1813, %v1812
      %v1841 = vpack.c.bf16 %v1815, %v1814
      %v1842 = vpack.c.bf16 %v1817, %v1816
      %v1843 = vpack.c.bf16 %v1819, %v1818
      %v1844 = vpack.c.bf16 %v1821, %v1820
      %v1845 = vpack.c.bf16 %v1823, %v1822
      %v1846 = vpack.c.bf16 %v1825, %v1824
      %v1847 = vpack.c.bf16 %v1827, %v1826
      %v1848 = vpack.c.bf16 %v1829, %v1828
      %v1849 = vpack.c.bf16 %v1831, %v1830
      %v1850 = vpack.c.bf16 %v1833, %v1832
      %v1851 = vpack.c.bf16 %v1835, %v1834
      %s1852 = scalar_lea.vmem %s1, 256
      %v1853 = vld [vmem:[%s1852] sm:$0xf]
      %v1854 = vld [vmem:[%s1852 + $0x4] sm:$0xf]
      %v1855 = vld [vmem:[%s1852 + $0x8] sm:$0xf]
      %v1856 = vld [vmem:[%s1852 + $0xc] sm:$0xf]
      %v1857 = vld [vmem:[%s1852 + $0x10] sm:$0xf]
      %v1858 = vld [vmem:[%s1852 + $0x14] sm:$0xf]
      %v1859 = vld [vmem:[%s1852 + $0x18] sm:$0xf]
      %v1860 = vld [vmem:[%s1852 + $0x1c] sm:$0xf]
      %v1861 = vld [vmem:[%s1852 + $0x20] sm:$0xf]
      %v1862 = vld [vmem:[%s1852 + $0x24] sm:$0xf]
      %v1863 = vld [vmem:[%s1852 + $0x28] sm:$0xf]
      %v1864 = vld [vmem:[%s1852 + $0x2c] sm:$0xf]
      %v1865 = vld [vmem:[%s1852 + $0x30] sm:$0xf]
      %v1866 = vld [vmem:[%s1852 + $0x34] sm:$0xf]
      %v1867 = vld [vmem:[%s1852 + $0x38] sm:$0xf]
      %v1868 = vld [vmem:[%s1852 + $0x3c] sm:$0xf]
      %v1885 = vunpack.c.l.b16 %v1853
      %v1886 = vunpack.c.l.b16 %v1854
      %v1887 = vunpack.c.l.b16 %v1855
      %v1888 = vunpack.c.l.b16 %v1856
      %v1889 = vunpack.c.l.b16 %v1857
      %v1890 = vunpack.c.l.b16 %v1858
      %v1891 = vunpack.c.l.b16 %v1859
      %v1892 = vunpack.c.l.b16 %v1860
      %v1893 = vunpack.c.l.b16 %v1861
      %v1894 = vunpack.c.l.b16 %v1862
      %v1895 = vunpack.c.l.b16 %v1863
      %v1896 = vunpack.c.l.b16 %v1864
      %v1897 = vunpack.c.l.b16 %v1865
      %v1898 = vunpack.c.l.b16 %v1866
      %v1899 = vunpack.c.l.b16 %v1867
      %v1900 = vunpack.c.l.b16 %v1868
      %v1901 = vpack.c.b16 %v1886, %v1885
      %v1902 = vpack.c.b16 %v1888, %v1887
      %v1903 = vpack.c.b16 %v1890, %v1889
      %v1904 = vpack.c.b16 %v1892, %v1891
      %v1905 = vpack.c.b16 %v1894, %v1893
      %v1906 = vpack.c.b16 %v1896, %v1895
      %v1907 = vpack.c.b16 %v1898, %v1897
      %v1908 = vpack.c.b16 %v1900, %v1899
      %1917 = vmatprep.subr.bf16.mxu0 0
      %1918 = vmatpush1.bf16.msra.mxu0 %v1901
      %1919 = vmatprep.subr.bf16.mxu0 0
      %1920 = vmatpush1.bf16.msra.mxu0 %v1902
      %1921 = vmatprep.subr.bf16.mxu0 0
      %1922 = vmatpush1.bf16.msra.mxu0 %v1903
      %1923 = vmatprep.subr.bf16.mxu0 0
      %1924 = vmatpush1.bf16.msra.mxu0 %v1904
      %1925 = vmatprep.subr.bf16.mxu0 0
      %1926 = vmatpush1.bf16.msra.mxu0 %v1905
      %1927 = vmatprep.subr.bf16.mxu0 0
      %1928 = vmatpush1.bf16.msra.mxu0 %v1906
      %1929 = vmatprep.subr.bf16.mxu0 0
      %1930 = vmatpush1.bf16.msra.mxu0 %v1907
      %1931 = vmatprep.subr.bf16.mxu0 0
      %1932 = vmatpush1.bf16.msra.mxu0 %v1908
      %1933 = vmatprep.subr.bf16.mxu0 0
      %1934 = vmatpush1.bf16.msra.mxu0 0
      %1935 = vmatprep.subr.bf16.mxu0 0
      %1936 = vmatpush1.bf16.msra.mxu0 0
      %1937 = vmatprep.subr.bf16.mxu0 0
      %1938 = vmatpush1.bf16.msra.mxu0 0
      %1939 = vmatprep.subr.bf16.mxu0 0
      %1940 = vmatpush1.bf16.msra.mxu0 0
      %1941 = vmatprep.subr.bf16.mxu0 0
      %1942 = vmatpush1.bf16.msra.mxu0 0
      %1943 = vmatprep.subr.bf16.mxu0 0
      %1944 = vmatpush1.bf16.msra.mxu0 0
      %1945 = vmatprep.subr.bf16.mxu0 0
      %1946 = vmatpush1.bf16.msra.mxu0 0
      %1947 = vmatprep.subr.bf16.mxu0 0
      %1948 = vmatpush1.bf16.msra.mxu0 0
      %1949 = vmatprep.mubr.bf16.mxu0 0
      %1950 = vmatmul.mubr.bf16.gmra.mrb[0].mxu0 %v1836
      %v1951 = vpop.f32.mrb[0].mxu0
      %v1952 = vadd.f32 0.0, %v1951
      %v1953 = vpop.f32.mrb[0].mxu0
      %v1954 = vpop.f32.mrb[0].mxu0
      %v1955 = vadd.f32 0.0, %v1954
      %v1956 = vpop.f32.mrb[0].mxu0
      %1957 = vmatprep.mubr.bf16.mxu0 0
      %1958 = vmatmul.mubr.bf16.gmra.mrb[0].mxu0 %v1837
      %v1959 = vpop.f32.mrb[0].mxu0
      %v1960 = vadd.f32 0.0, %v1959
      %v1961 = vpop.f32.mrb[0].mxu0
      %v1962 = vpop.f32.mrb[0].mxu0
      %v1963 = vadd.f32 0.0, %v1962
      %v1964 = vpop.f32.mrb[0].mxu0
      %1965 = vmatprep.mubr.bf16.mxu0 0
      %1966 = vmatmul.mubr.bf16.gmra.mrb[0].mxu0 %v1838
      %v1967 = vpop.f32.mrb[0].mxu0
      %v1968 = vadd.f32 0.0, %v1967
      %v1969 = vpop.f32.mrb[0].mxu0
      %v1970 = vpop.f32.mrb[0].mxu0
      %v1971 = vadd.f32 0.0, %v1970
      %v1972 = vpop.f32.mrb[0].mxu0
      %1973 = vmatprep.mubr.bf16.mxu0 0
      %1974 = vmatmul.mubr.bf16.gmra.mrb[0].mxu0 %v1839
      %v1975 = vpop.f32.mrb[0].mxu0
      %v1976 = vadd.f32 0.0, %v1975
      %v1977 = vpop.f32.mrb[0].mxu0
      %v1978 = vpop.f32.mrb[0].mxu0
      %v1979 = vadd.f32 0.0, %v1978
      %v1980 = vpop.f32.mrb[0].mxu0
      %1981 = vmatprep.mubr.bf16.mxu0 0
      %1982 = vmatmul.mubr.bf16.gmra.mrb[0].mxu0 %v1840
      %v1983 = vpop.f32.mrb[0].mxu0
      %v1984 = vadd.f32 0.0, %v1983
      %v1985 = vpop.f32.mrb[0].mxu0
      %v1986 = vpop.f32.mrb[0].mxu0
      %v1987 = vadd.f32 0.0, %v1986
      %v1988 = vpop.f32.mrb[0].mxu0
      %1989 = vmatprep.mubr.bf16.mxu0 0
      %1990 = vmatmul.mubr.bf16.gmra.mrb[0].mxu0 %v1841
      %v1991 = vpop.f32.mrb[0].mxu0
      %v1992 = vadd.f32 0.0, %v1991
      %v1993 = vpop.f32.mrb[0].mxu0
      %v1994 = vpop.f32.mrb[0].mxu0
      %v1995 = vadd.f32 0.0, %v1994
      %v1996 = vpop.f32.mrb[0].mxu0
      %1997 = vmatprep.mubr.bf16.mxu0 0
      %1998 = vmatmul.mubr.bf16.gmra.mrb[0].mxu0 %v1842
      %v1999 = vpop.f32.mrb[0].mxu0
      %v2000 = vadd.f32 0.0, %v1999
      %v2001 = vpop.f32.mrb[0].mxu0
      %v2002 = vpop.f32.mrb[0].mxu0
      %v2003 = vadd.f32 0.0, %v2002
      %v2004 = vpop.f32.mrb[0].mxu0
      %2005 = vmatprep.mubr.bf16.mxu0 0
      %2006 = vmatmul.mubr.bf16.gmra.mrb[0].mxu0 %v1843
      %v2007 = vpop.f32.mrb[0].mxu0
      %v2008 = vadd.f32 0.0, %v2007
      %v2009 = vpop.f32.mrb[0].mxu0
      %v2010 = vpop.f32.mrb[0].mxu0
      %v2011 = vadd.f32 0.0, %v2010
      %v2012 = vpop.f32.mrb[0].mxu0
      %2013 = vmatprep.mubr.bf16.mxu0 0
      %2014 = vmatmul.mubr.bf16.gmra.mrb[0].mxu0 %v1844
      %v2015 = vpop.f32.mrb[0].mxu0
      %v2016 = vadd.f32 0.0, %v2015
      %v2017 = vpop.f32.mrb[0].mxu0
      %v2018 = vpop.f32.mrb[0].mxu0
      %v2019 = vadd.f32 0.0, %v2018
      %v2020 = vpop.f32.mrb[0].mxu0
      %2021 = vmatprep.mubr.bf16.mxu0 0
      %2022 = vmatmul.mubr.bf16.gmra.mrb[0].mxu0 %v1845
      %v2023 = vpop.f32.mrb[0].mxu0
      %v2024 = vadd.f32 0.0, %v2023
      %v2025 = vpop.f32.mrb[0].mxu0
      %v2026 = vpop.f32.mrb[0].mxu0
      %v2027 = vadd.f32 0.0, %v2026
      %v2028 = vpop.f32.mrb[0].mxu0
      %2029 = vmatprep.mubr.bf16.mxu0 0
      %2030 = vmatmul.mubr.bf16.gmra.mrb[0].mxu0 %v1846
      %v2031 = vpop.f32.mrb[0].mxu0
      %v2032 = vadd.f32 0.0, %v2031
      %v2033 = vpop.f32.mrb[0].mxu0
      %v2034 = vpop.f32.mrb[0].mxu0
      %v2035 = vadd.f32 0.0, %v2034
      %v2036 = vpop.f32.mrb[0].mxu0
      %2037 = vmatprep.mubr.bf16.mxu0 0
      %2038 = vmatmul.mubr.bf16.gmra.mrb[0].mxu0 %v1847
      %v2039 = vpop.f32.mrb[0].mxu0
      %v2040 = vadd.f32 0.0, %v2039
      %v2041 = vpop.f32.mrb[0].mxu0
      %v2042 = vpop.f32.mrb[0].mxu0
      %v2043 = vadd.f32 0.0, %v2042
      %v2044 = vpop.f32.mrb[0].mxu0
      %2045 = vmatprep.mubr.bf16.mxu0 0
      %2046 = vmatmul.mubr.bf16.gmra.mrb[0].mxu0 %v1848
      %v2047 = vpop.f32.mrb[0].mxu0
      %v2048 = vadd.f32 0.0, %v2047
      %v2049 = vpop.f32.mrb[0].mxu0
      %v2050 = vpop.f32.mrb[0].mxu0
      %v2051 = vadd.f32 0.0, %v2050
      %v2052 = vpop.f32.mrb[0].mxu0
      %2053 = vmatprep.mubr.bf16.mxu0 0
      %2054 = vmatmul.mubr.bf16.gmra.mrb[0].mxu0 %v1849
      %v2055 = vpop.f32.mrb[0].mxu0
      %v2056 = vadd.f32 0.0, %v2055
      %v2057 = vpop.f32.mrb[0].mxu0
      %v2058 = vpop.f32.mrb[0].mxu0
      %v2059 = vadd.f32 0.0, %v2058
      %v2060 = vpop.f32.mrb[0].mxu0
      %2061 = vmatprep.mubr.bf16.mxu0 0
      %2062 = vmatmul.mubr.bf16.gmra.mrb[0].mxu0 %v1850
      %v2063 = vpop.f32.mrb[0].mxu0
      %v2064 = vadd.f32 0.0, %v2063
      %v2065 = vpop.f32.mrb[0].mxu0
      %v2066 = vpop.f32.mrb[0].mxu0
      %v2067 = vadd.f32 0.0, %v2066
      %v2068 = vpop.f32.mrb[0].mxu0
      %2069 = vmatprep.mubr.bf16.mxu0 0
      %2070 = vmatmul.mubr.bf16.gmra.mrb[0].mxu0 %v1851
      %v2071 = vpop.f32.mrb[0].mxu0
      %v2072 = vadd.f32 0.0, %v2071
      %v2073 = vpop.f32.mrb[0].mxu0
      %v2074 = vpop.f32.mrb[0].mxu0
      %v2075 = vadd.f32 0.0, %v2074
      %v2076 = vpop.f32.mrb[0].mxu0
      %2077 = vdwg.mxu0
      %v2078 = vld [vmem:[#allocation4] sm:$0xff]
      %v2079 = vld [vmem:[#allocation4 + $0x8] sm:$0xff]
      %v2080 = vld [vmem:[#allocation4 + $0x10] sm:$0xff]
      %v2081 = vld [vmem:[#allocation4 + $0x18] sm:$0xff]
      %v2082 = vld [vmem:[#allocation4 + $0x20] sm:$0xff]
      %v2083 = vld [vmem:[#allocation4 + $0x28] sm:$0xff]
      %v2084 = vld [vmem:[#allocation4 + $0x30] sm:$0xff]
      %v2085 = vld [vmem:[#allocation4 + $0x38] sm:$0xff]
      %v2086 = vld [vmem:[#allocation4 + $0x40] sm:$0xff]
      %v2087 = vld [vmem:[#allocation4 + $0x48] sm:$0xff]
      %v2088 = vld [vmem:[#allocation4 + $0x50] sm:$0xff]
      %v2089 = vld [vmem:[#allocation4 + $0x58] sm:$0xff]
      %v2090 = vld [vmem:[#allocation4 + $0x60] sm:$0xff]
      %v2091 = vld [vmem:[#allocation4 + $0x68] sm:$0xff]
      %v2092 = vld [vmem:[#allocation4 + $0x70] sm:$0xff]
      %v2093 = vld [vmem:[#allocation4 + $0x78] sm:$0xff]
      %v2094 = vld [vmem:[#allocation4 + $0x80] sm:$0xff]
      %v2095 = vld [vmem:[#allocation4 + $0x88] sm:$0xff]
      %v2096 = vld [vmem:[#allocation4 + $0x90] sm:$0xff]
      %v2097 = vld [vmem:[#allocation4 + $0x98] sm:$0xff]
      %v2098 = vld [vmem:[#allocation4 + $0xa0] sm:$0xff]
      %v2099 = vld [vmem:[#allocation4 + $0xa8] sm:$0xff]
      %v2100 = vld [vmem:[#allocation4 + $0xb0] sm:$0xff]
      %v2101 = vld [vmem:[#allocation4 + $0xb8] sm:$0xff]
      %v2102 = vld [vmem:[#allocation4 + $0xc0] sm:$0xff]
      %v2103 = vld [vmem:[#allocation4 + $0xc8] sm:$0xff]
      %v2104 = vld [vmem:[#allocation4 + $0xd0] sm:$0xff]
      %v2105 = vld [vmem:[#allocation4 + $0xd8] sm:$0xff]
      %v2106 = vld [vmem:[#allocation4 + $0xe0] sm:$0xff]
      %v2107 = vld [vmem:[#allocation4 + $0xe8] sm:$0xff]
      %v2108 = vld [vmem:[#allocation4 + $0xf0] sm:$0xff]
      %v2109 = vld [vmem:[#allocation4 + $0xf8] sm:$0xff]
      %v2110 = vadd.f32 %v2078, %v1952
      %v2111 = vadd.f32 %v2079, %v1955
      %v2112 = vadd.f32 %v2080, %v1960
      %v2113 = vadd.f32 %v2081, %v1963
      %v2114 = vadd.f32 %v2082, %v1968
      %v2115 = vadd.f32 %v2083, %v1971
      %v2116 = vadd.f32 %v2084, %v1976
      %v2117 = vadd.f32 %v2085, %v1979
      %v2118 = vadd.f32 %v2086, %v1984
      %v2119 = vadd.f32 %v2087, %v1987
      %v2120 = vadd.f32 %v2088, %v1992
      %v2121 = vadd.f32 %v2089, %v1995
      %v2122 = vadd.f32 %v2090, %v2000
      %v2123 = vadd.f32 %v2091, %v2003
      %v2124 = vadd.f32 %v2092, %v2008
      %v2125 = vadd.f32 %v2093, %v2011
      %v2126 = vadd.f32 %v2094, %v2016
      %v2127 = vadd.f32 %v2095, %v2019
      %v2128 = vadd.f32 %v2096, %v2024
      %v2129 = vadd.f32 %v2097, %v2027
      %v2130 = vadd.f32 %v2098, %v2032
      %v2131 = vadd.f32 %v2099, %v2035
      %v2132 = vadd.f32 %v2100, %v2040
      %v2133 = vadd.f32 %v2101, %v2043
      %v2134 = vadd.f32 %v2102, %v2048
      %v2135 = vadd.f32 %v2103, %v2051
      %v2136 = vadd.f32 %v2104, %v2056
      %v2137 = vadd.f32 %v2105, %v2059
      %v2138 = vadd.f32 %v2106, %v2064
      %v2139 = vadd.f32 %v2107, %v2067
      %v2140 = vadd.f32 %v2108, %v2072
      %v2141 = vadd.f32 %v2109, %v2075
      %2142 = vst [vmem:[#allocation4] sm:$0xff] %v2110
      %2143 = vst [vmem:[#allocation4 + $0x8] sm:$0xff] %v2111
      %2144 = vst [vmem:[#allocation4 + $0x10] sm:$0xff] %v2112
      %2145 = vst [vmem:[#allocation4 + $0x18] sm:$0xff] %v2113
      %2146 = vst [vmem:[#allocation4 + $0x20] sm:$0xff] %v2114
      %2147 = vst [vmem:[#allocation4 + $0x28] sm:$0xff] %v2115
      %2148 = vst [vmem:[#allocation4 + $0x30] sm:$0xff] %v2116
      %2149 = vst [vmem:[#allocation4 + $0x38] sm:$0xff] %v2117
      %2150 = vst [vmem:[#allocation4 + $0x40] sm:$0xff] %v2118
      %2151 = vst [vmem:[#allocation4 + $0x48] sm:$0xff] %v2119
      %2152 = vst [vmem:[#allocation4 + $0x50] sm:$0xff] %v2120
      %2153 = vst [vmem:[#allocation4 + $0x58] sm:$0xff] %v2121
      %2154 = vst [vmem:[#allocation4 + $0x60] sm:$0xff] %v2122
      %2155 = vst [vmem:[#allocation4 + $0x68] sm:$0xff] %v2123
      %2156 = vst [vmem:[#allocation4 + $0x70] sm:$0xff] %v2124
      %2157 = vst [vmem:[#allocation4 + $0x78] sm:$0xff] %v2125
      %2158 = vst [vmem:[#allocation4 + $0x80] sm:$0xff] %v2126
      %2159 = vst [vmem:[#allocation4 + $0x88] sm:$0xff] %v2127
      %2160 = vst [vmem:[#allocation4 + $0x90] sm:$0xff] %v2128
      %2161 = vst [vmem:[#allocation4 + $0x98] sm:$0xff] %v2129
      %2162 = vst [vmem:[#allocation4 + $0xa0] sm:$0xff] %v2130
      %2163 = vst [vmem:[#allocation4 + $0xa8] sm:$0xff] %v2131
      %2164 = vst [vmem:[#allocation4 + $0xb0] sm:$0xff] %v2132
      %2165 = vst [vmem:[#allocation4 + $0xb8] sm:$0xff] %v2133
      %2166 = vst [vmem:[#allocation4 + $0xc0] sm:$0xff] %v2134
      %2167 = vst [vmem:[#allocation4 + $0xc8] sm:$0xff] %v2135
      %2168 = vst [vmem:[#allocation4 + $0xd0] sm:$0xff] %v2136
      %2169 = vst [vmem:[#allocation4 + $0xd8] sm:$0xff] %v2137
      %2170 = vst [vmem:[#allocation4 + $0xe0] sm:$0xff] %v2138
      %2171 = vst [vmem:[#allocation4 + $0xe8] sm:$0xff] %v2139
      %2172 = vst [vmem:[#allocation4 + $0xf0] sm:$0xff] %v2140
      %2173 = vst [vmem:[#allocation4 + $0xf8] sm:$0xff] %v2141
      %v2174 = vld [vmem:[%s1433 + $0x2] sm:$0xff]
      %v2175 = vld [vmem:[%s1433 + $0xa] sm:$0xff]
      %v2176 = vld [vmem:[%s1433 + $0x1a] sm:$0xff]
      %v2177 = vld [vmem:[%s1433 + $0x22] sm:$0xff]
      %v2178 = vld [vmem:[%s1433 + $0x32] sm:$0xff]
      %v2179 = vld [vmem:[%s1433 + $0x3a] sm:$0xff]
      %v2180 = vld [vmem:[%s1433 + $0x4a] sm:$0xff]
      %v2181 = vld [vmem:[%s1433 + $0x52] sm:$0xff]
      %v2182 = vld [vmem:[%s1433 + $0x62] sm:$0xff]
      %v2183 = vld [vmem:[%s1433 + $0x6a] sm:$0xff]
      %v2184 = vld [vmem:[%s1433 + $0x7a] sm:$0xff]
      %v2185 = vld [vmem:[%s1433 + $0x82] sm:$0xff]
      %v2186 = vld [vmem:[%s1433 + $0x92] sm:$0xff]
      %v2187 = vld [vmem:[%s1433 + $0x9a] sm:$0xff]
      %v2188 = vld [vmem:[%s1433 + $0xaa] sm:$0xff]
      %v2189 = vld [vmem:[%s1433 + $0xb2] sm:$0xff]
      %v2190 = vld [vmem:[%s1433 + $0xc2] sm:$0xff]
      %v2191 = vld [vmem:[%s1433 + $0xca] sm:$0xff]
      %v2192 = vld [vmem:[%s1433 + $0xda] sm:$0xff]
      %v2193 = vld [vmem:[%s1433 + $0xe2] sm:$0xff]
      %v2194 = vld [vmem:[%s1433 + $0xf2] sm:$0xff]
      %v2195 = vld [vmem:[%s1433 + $0xfa] sm:$0xff]
      %v2196 = vld [vmem:[%s1433 + $0x10a] sm:$0xff]
      %v2197 = vld [vmem:[%s1433 + $0x112] sm:$0xff]
      %v2198 = vld [vmem:[%s1433 + $0x122] sm:$0xff]
      %v2199 = vld [vmem:[%s1433 + $0x12a] sm:$0xff]
      %v2200 = vld [vmem:[%s1433 + $0x13a] sm:$0xff]
      %v2201 = vld [vmem:[%s1433 + $0x142] sm:$0xff]
      %v2202 = vld [vmem:[%s1433 + $0x152] sm:$0xff]
      %v2203 = vld [vmem:[%s1433 + $0x15a] sm:$0xff]
      %v2204 = vld [vmem:[%s1433 + $0x16a] sm:$0xff]
      %v2205 = vld [vmem:[%s1433 + $0x172] sm:$0xff]
      %v2206 = vpack.c.bf16 %v2175, %v2174
      %v2207 = vpack.c.bf16 %v2177, %v2176
      %v2208 = vpack.c.bf16 %v2179, %v2178
      %v2209 = vpack.c.bf16 %v2181, %v2180
      %v2210 = vpack.c.bf16 %v2183, %v2182
      %v2211 = vpack.c.bf16 %v2185, %v2184
      %v2212 = vpack.c.bf16 %v2187, %v2186
      %v2213 = vpack.c.bf16 %v2189, %v2188
      %v2214 = vpack.c.bf16 %v2191, %v2190
      %v2215 = vpack.c.bf16 %v2193, %v2192
      %v2216 = vpack.c.bf16 %v2195, %v2194
      %v2217 = vpack.c.bf16 %v2197, %v2196
      %v2218 = vpack.c.bf16 %v2199, %v2198
      %v2219 = vpack.c.bf16 %v2201, %v2200
      %v2220 = vpack.c.bf16 %v2203, %v2202
      %v2221 = vpack.c.bf16 %v2205, %v2204
      %s2222 = scalar_lea.vmem %s1, 320
      %v2223 = vld [vmem:[%s2222] sm:$0xf]
      %v2224 = vld [vmem:[%s2222 + $0x4] sm:$0xf]
      %v2225 = vld [vmem:[%s2222 + $0x8] sm:$0xf]
      %v2226 = vld [vmem:[%s2222 + $0xc] sm:$0xf]
      %v2227 = vld [vmem:[%s2222 + $0x10] sm:$0xf]
      %v2228 = vld [vmem:[%s2222 + $0x14] sm:$0xf]
      %v2229 = vld [vmem:[%s2222 + $0x18] sm:$0xf]
      %v2230 = vld [vmem:[%s2222 + $0x1c] sm:$0xf]
      %v2231 = vld [vmem:[%s2222 + $0x20] sm:$0xf]
      %v2232 = vld [vmem:[%s2222 + $0x24] sm:$0xf]
      %v2233 = vld [vmem:[%s2222 + $0x28] sm:$0xf]
      %v2234 = vld [vmem:[%s2222 + $0x2c] sm:$0xf]
      %v2235 = vld [vmem:[%s2222 + $0x30] sm:$0xf]
      %v2236 = vld [vmem:[%s2222 + $0x34] sm:$0xf]
      %v2237 = vld [vmem:[%s2222 + $0x38] sm:$0xf]
      %v2238 = vld [vmem:[%s2222 + $0x3c] sm:$0xf]
      %v2255 = vunpack.c.l.b16 %v2223
      %v2256 = vunpack.c.l.b16 %v2224
      %v2257 = vunpack.c.l.b16 %v2225
      %v2258 = vunpack.c.l.b16 %v2226
      %v2259 = vunpack.c.l.b16 %v2227
      %v2260 = vunpack.c.l.b16 %v2228
      %v2261 = vunpack.c.l.b16 %v2229
      %v2262 = vunpack.c.l.b16 %v2230
      %v2263 = vunpack.c.l.b16 %v2231
      %v2264 = vunpack.c.l.b16 %v2232
      %v2265 = vunpack.c.l.b16 %v2233
      %v2266 = vunpack.c.l.b16 %v2234
      %v2267 = vunpack.c.l.b16 %v2235
      %v2268 = vunpack.c.l.b16 %v2236
      %v2269 = vunpack.c.l.b16 %v2237
      %v2270 = vunpack.c.l.b16 %v2238
      %v2271 = vpack.c.b16 %v2256, %v2255
      %v2272 = vpack.c.b16 %v2258, %v2257
      %v2273 = vpack.c.b16 %v2260, %v2259
      %v2274 = vpack.c.b16 %v2262, %v2261
      %v2275 = vpack.c.b16 %v2264, %v2263
      %v2276 = vpack.c.b16 %v2266, %v2265
      %v2277 = vpack.c.b16 %v2268, %v2267
      %v2278 = vpack.c.b16 %v2270, %v2269
      %2287 = vmatprep.subr.bf16.mxu0 0
      %2288 = vmatpush1.bf16.msra.mxu0 %v2271
      %2289 = vmatprep.subr.bf16.mxu0 0
      %2290 = vmatpush1.bf16.msra.mxu0 %v2272
      %2291 = vmatprep.subr.bf16.mxu0 0
      %2292 = vmatpush1.bf16.msra.mxu0 %v2273
      %2293 = vmatprep.subr.bf16.mxu0 0
      %2294 = vmatpush1.bf16.msra.mxu0 %v2274
      %2295 = vmatprep.subr.bf16.mxu0 0
      %2296 = vmatpush1.bf16.msra.mxu0 %v2275
      %2297 = vmatprep.subr.bf16.mxu0 0
      %2298 = vmatpush1.bf16.msra.mxu0 %v2276
      %2299 = vmatprep.subr.bf16.mxu0 0
      %2300 = vmatpush1.bf16.msra.mxu0 %v2277
      %2301 = vmatprep.subr.bf16.mxu0 0
      %2302 = vmatpush1.bf16.msra.mxu0 %v2278
      %2303 = vmatprep.subr.bf16.mxu0 0
      %2304 = vmatpush1.bf16.msra.mxu0 0
      %2305 = vmatprep.subr.bf16.mxu0 0
      %2306 = vmatpush1.bf16.msra.mxu0 0
      %2307 = vmatprep.subr.bf16.mxu0 0
      %2308 = vmatpush1.bf16.msra.mxu0 0
      %2309 = vmatprep.subr.bf16.mxu0 0
      %2310 = vmatpush1.bf16.msra.mxu0 0
      %2311 = vmatprep.subr.bf16.mxu0 0
      %2312 = vmatpush1.bf16.msra.mxu0 0
      %2313 = vmatprep.subr.bf16.mxu0 0
      %2314 = vmatpush1.bf16.msra.mxu0 0
      %2315 = vmatprep.subr.bf16.mxu0 0
      %2316 = vmatpush1.bf16.msra.mxu0 0
      %2317 = vmatprep.subr.bf16.mxu0 0
      %2318 = vmatpush1.bf16.msra.mxu0 0
      %2319 = vmatprep.mubr.bf16.mxu0 0
      %2320 = vmatmul.mubr.bf16.gmra.mrb[0].mxu0 %v2206
      %v2321 = vpop.f32.mrb[0].mxu0
      %v2322 = vadd.f32 0.0, %v2321
      %v2323 = vpop.f32.mrb[0].mxu0
      %v2324 = vpop.f32.mrb[0].mxu0
      %v2325 = vadd.f32 0.0, %v2324
      %v2326 = vpop.f32.mrb[0].mxu0
      %2327 = vmatprep.mubr.bf16.mxu0 0
      %2328 = vmatmul.mubr.bf16.gmra.mrb[0].mxu0 %v2207
      %v2329 = vpop.f32.mrb[0].mxu0
      %v2330 = vadd.f32 0.0, %v2329
      %v2331 = vpop.f32.mrb[0].mxu0
      %v2332 = vpop.f32.mrb[0].mxu0
      %v2333 = vadd.f32 0.0, %v2332
      %v2334 = vpop.f32.mrb[0].mxu0
      %2335 = vmatprep.mubr.bf16.mxu0 0
      %2336 = vmatmul.mubr.bf16.gmra.mrb[0].mxu0 %v2208
      %v2337 = vpop.f32.mrb[0].mxu0
      %v2338 = vadd.f32 0.0, %v2337
      %v2339 = vpop.f32.mrb[0].mxu0
      %v2340 = vpop.f32.mrb[0].mxu0
      %v2341 = vadd.f32 0.0, %v2340
      %v2342 = vpop.f32.mrb[0].mxu0
      %2343 = vmatprep.mubr.bf16.mxu0 0
      %2344 = vmatmul.mubr.bf16.gmra.mrb[0].mxu0 %v2209
      %v2345 = vpop.f32.mrb[0].mxu0
      %v2346 = vadd.f32 0.0, %v2345
      %v2347 = vpop.f32.mrb[0].mxu0
      %v2348 = vpop.f32.mrb[0].mxu0
      %v2349 = vadd.f32 0.0, %v2348
      %v2350 = vpop.f32.mrb[0].mxu0
      %2351 = vmatprep.mubr.bf16.mxu0 0
      %2352 = vmatmul.mubr.bf16.gmra.mrb[0].mxu0 %v2210
      %v2353 = vpop.f32.mrb[0].mxu0
      %v2354 = vadd.f32 0.0, %v2353
      %v2355 = vpop.f32.mrb[0].mxu0
      %v2356 = vpop.f32.mrb[0].mxu0
      %v2357 = vadd.f32 0.0, %v2356
      %v2358 = vpop.f32.mrb[0].mxu0
      %2359 = vmatprep.mubr.bf16.mxu0 0
      %2360 = vmatmul.mubr.bf16.gmra.mrb[0].mxu0 %v2211
      %v2361 = vpop.f32.mrb[0].mxu0
      %v2362 = vadd.f32 0.0, %v2361
      %v2363 = vpop.f32.mrb[0].mxu0
      %v2364 = vpop.f32.mrb[0].mxu0
      %v2365 = vadd.f32 0.0, %v2364
      %v2366 = vpop.f32.mrb[0].mxu0
      %2367 = vmatprep.mubr.bf16.mxu0 0
      %2368 = vmatmul.mubr.bf16.gmra.mrb[0].mxu0 %v2212
      %v2369 = vpop.f32.mrb[0].mxu0
      %v2370 = vadd.f32 0.0, %v2369
      %v2371 = vpop.f32.mrb[0].mxu0
      %v2372 = vpop.f32.mrb[0].mxu0
      %v2373 = vadd.f32 0.0, %v2372
      %v2374 = vpop.f32.mrb[0].mxu0
      %2375 = vmatprep.mubr.bf16.mxu0 0
      %2376 = vmatmul.mubr.bf16.gmra.mrb[0].mxu0 %v2213
      %v2377 = vpop.f32.mrb[0].mxu0
      %v2378 = vadd.f32 0.0, %v2377
      %v2379 = vpop.f32.mrb[0].mxu0
      %v2380 = vpop.f32.mrb[0].mxu0
      %v2381 = vadd.f32 0.0, %v2380
      %v2382 = vpop.f32.mrb[0].mxu0
      %2383 = vmatprep.mubr.bf16.mxu0 0
      %2384 = vmatmul.mubr.bf16.gmra.mrb[0].mxu0 %v2214
      %v2385 = vpop.f32.mrb[0].mxu0
      %v2386 = vadd.f32 0.0, %v2385
      %v2387 = vpop.f32.mrb[0].mxu0
      %v2388 = vpop.f32.mrb[0].mxu0
      %v2389 = vadd.f32 0.0, %v2388
      %v2390 = vpop.f32.mrb[0].mxu0
      %2391 = vmatprep.mubr.bf16.mxu0 0
      %2392 = vmatmul.mubr.bf16.gmra.mrb[0].mxu0 %v2215
      %v2393 = vpop.f32.mrb[0].mxu0
      %v2394 = vadd.f32 0.0, %v2393
      %v2395 = vpop.f32.mrb[0].mxu0
      %v2396 = vpop.f32.mrb[0].mxu0
      %v2397 = vadd.f32 0.0, %v2396
      %v2398 = vpop.f32.mrb[0].mxu0
      %2399 = vmatprep.mubr.bf16.mxu0 0
      %2400 = vmatmul.mubr.bf16.gmra.mrb[0].mxu0 %v2216
      %v2401 = vpop.f32.mrb[0].mxu0
      %v2402 = vadd.f32 0.0, %v2401
      %v2403 = vpop.f32.mrb[0].mxu0
      %v2404 = vpop.f32.mrb[0].mxu0
      %v2405 = vadd.f32 0.0, %v2404
      %v2406 = vpop.f32.mrb[0].mxu0
      %2407 = vmatprep.mubr.bf16.mxu0 0
      %2408 = vmatmul.mubr.bf16.gmra.mrb[0].mxu0 %v2217
      %v2409 = vpop.f32.mrb[0].mxu0
      %v2410 = vadd.f32 0.0, %v2409
      %v2411 = vpop.f32.mrb[0].mxu0
      %v2412 = vpop.f32.mrb[0].mxu0
      %v2413 = vadd.f32 0.0, %v2412
      %v2414 = vpop.f32.mrb[0].mxu0
      %2415 = vmatprep.mubr.bf16.mxu0 0
      %2416 = vmatmul.mubr.bf16.gmra.mrb[0].mxu0 %v2218
      %v2417 = vpop.f32.mrb[0].mxu0
      %v2418 = vadd.f32 0.0, %v2417
      %v2419 = vpop.f32.mrb[0].mxu0
      %v2420 = vpop.f32.mrb[0].mxu0
      %v2421 = vadd.f32 0.0, %v2420
      %v2422 = vpop.f32.mrb[0].mxu0
      %2423 = vmatprep.mubr.bf16.mxu0 0
      %2424 = vmatmul.mubr.bf16.gmra.mrb[0].mxu0 %v2219
      %v2425 = vpop.f32.mrb[0].mxu0
      %v2426 = vadd.f32 0.0, %v2425
      %v2427 = vpop.f32.mrb[0].mxu0
      %v2428 = vpop.f32.mrb[0].mxu0
      %v2429 = vadd.f32 0.0, %v2428
      %v2430 = vpop.f32.mrb[0].mxu0
      %2431 = vmatprep.mubr.bf16.mxu0 0
      %2432 = vmatmul.mubr.bf16.gmra.mrb[0].mxu0 %v2220
      %v2433 = vpop.f32.mrb[0].mxu0
      %v2434 = vadd.f32 0.0, %v2433
      %v2435 = vpop.f32.mrb[0].mxu0
      %v2436 = vpop.f32.mrb[0].mxu0
      %v2437 = vadd.f32 0.0, %v2436
      %v2438 = vpop.f32.mrb[0].mxu0
      %2439 = vmatprep.mubr.bf16.mxu0 0
      %2440 = vmatmul.mubr.bf16.gmra.mrb[0].mxu0 %v2221
      %v2441 = vpop.f32.mrb[0].mxu0
      %v2442 = vadd.f32 0.0, %v2441
      %v2443 = vpop.f32.mrb[0].mxu0
      %v2444 = vpop.f32.mrb[0].mxu0
      %v2445 = vadd.f32 0.0, %v2444
      %v2446 = vpop.f32.mrb[0].mxu0
      %2447 = vdwg.mxu0
      %v2448 = vld [vmem:[#allocation4] sm:$0xff]
      %v2449 = vld [vmem:[#allocation4 + $0x8] sm:$0xff]
      %v2450 = vld [vmem:[#allocation4 + $0x10] sm:$0xff]
      %v2451 = vld [vmem:[#allocation4 + $0x18] sm:$0xff]
      %v2452 = vld [vmem:[#allocation4 + $0x20] sm:$0xff]
      %v2453 = vld [vmem:[#allocation4 + $0x28] sm:$0xff]
      %v2454 = vld [vmem:[#allocation4 + $0x30] sm:$0xff]
      %v2455 = vld [vmem:[#allocation4 + $0x38] sm:$0xff]
      %v2456 = vld [vmem:[#allocation4 + $0x40] sm:$0xff]
      %v2457 = vld [vmem:[#allocation4 + $0x48] sm:$0xff]
      %v2458 = vld [vmem:[#allocation4 + $0x50] sm:$0xff]
      %v2459 = vld [vmem:[#allocation4 + $0x58] sm:$0xff]
      %v2460 = vld [vmem:[#allocation4 + $0x60] sm:$0xff]
      %v2461 = vld [vmem:[#allocation4 + $0x68] sm:$0xff]
      %v2462 = vld [vmem:[#allocation4 + $0x70] sm:$0xff]
      %v2463 = vld [vmem:[#allocation4 + $0x78] sm:$0xff]
      %v2464 = vld [vmem:[#allocation4 + $0x80] sm:$0xff]
      %v2465 = vld [vmem:[#allocation4 + $0x88] sm:$0xff]
      %v2466 = vld [vmem:[#allocation4 + $0x90] sm:$0xff]
      %v2467 = vld [vmem:[#allocation4 + $0x98] sm:$0xff]
      %v2468 = vld [vmem:[#allocation4 + $0xa0] sm:$0xff]
      %v2469 = vld [vmem:[#allocation4 + $0xa8] sm:$0xff]
      %v2470 = vld [vmem:[#allocation4 + $0xb0] sm:$0xff]
      %v2471 = vld [vmem:[#allocation4 + $0xb8] sm:$0xff]
      %v2472 = vld [vmem:[#allocation4 + $0xc0] sm:$0xff]
      %v2473 = vld [vmem:[#allocation4 + $0xc8] sm:$0xff]
      %v2474 = vld [vmem:[#allocation4 + $0xd0] sm:$0xff]
      %v2475 = vld [vmem:[#allocation4 + $0xd8] sm:$0xff]
      %v2476 = vld [vmem:[#allocation4 + $0xe0] sm:$0xff]
      %v2477 = vld [vmem:[#allocation4 + $0xe8] sm:$0xff]
      %v2478 = vld [vmem:[#allocation4 + $0xf0] sm:$0xff]
      %v2479 = vld [vmem:[#allocation4 + $0xf8] sm:$0xff]
      %v2480 = vadd.f32 %v2448, %v2322
      %v2481 = vadd.f32 %v2449, %v2325
      %v2482 = vadd.f32 %v2450, %v2330
      %v2483 = vadd.f32 %v2451, %v2333
      %v2484 = vadd.f32 %v2452, %v2338
      %v2485 = vadd.f32 %v2453, %v2341
      %v2486 = vadd.f32 %v2454, %v2346
      %v2487 = vadd.f32 %v2455, %v2349
      %v2488 = vadd.f32 %v2456, %v2354
      %v2489 = vadd.f32 %v2457, %v2357
      %v2490 = vadd.f32 %v2458, %v2362
      %v2491 = vadd.f32 %v2459, %v2365
      %v2492 = vadd.f32 %v2460, %v2370
      %v2493 = vadd.f32 %v2461, %v2373
      %v2494 = vadd.f32 %v2462, %v2378
      %v2495 = vadd.f32 %v2463, %v2381
      %v2496 = vadd.f32 %v2464, %v2386
      %v2497 = vadd.f32 %v2465, %v2389
      %v2498 = vadd.f32 %v2466, %v2394
      %v2499 = vadd.f32 %v2467, %v2397
      %v2500 = vadd.f32 %v2468, %v2402
      %v2501 = vadd.f32 %v2469, %v2405
      %v2502 = vadd.f32 %v2470, %v2410
      %v2503 = vadd.f32 %v2471, %v2413
      %v2504 = vadd.f32 %v2472, %v2418
      %v2505 = vadd.f32 %v2473, %v2421
      %v2506 = vadd.f32 %v2474, %v2426
      %v2507 = vadd.f32 %v2475, %v2429
      %v2508 = vadd.f32 %v2476, %v2434
      %v2509 = vadd.f32 %v2477, %v2437
      %v2510 = vadd.f32 %v2478, %v2442
      %v2511 = vadd.f32 %v2479, %v2445
      %2512 = vst [vmem:[#allocation4] sm:$0xff] %v2480
      %2513 = vst [vmem:[#allocation4 + $0x8] sm:$0xff] %v2481
      %2514 = vst [vmem:[#allocation4 + $0x10] sm:$0xff] %v2482
      %2515 = vst [vmem:[#allocation4 + $0x18] sm:$0xff] %v2483
      %2516 = vst [vmem:[#allocation4 + $0x20] sm:$0xff] %v2484
      %2517 = vst [vmem:[#allocation4 + $0x28] sm:$0xff] %v2485
      %2518 = vst [vmem:[#allocation4 + $0x30] sm:$0xff] %v2486
      %2519 = vst [vmem:[#allocation4 + $0x38] sm:$0xff] %v2487
      %2520 = vst [vmem:[#allocation4 + $0x40] sm:$0xff] %v2488
      %2521 = vst [vmem:[#allocation4 + $0x48] sm:$0xff] %v2489
      %2522 = vst [vmem:[#allocation4 + $0x50] sm:$0xff] %v2490
      %2523 = vst [vmem:[#allocation4 + $0x58] sm:$0xff] %v2491
      %2524 = vst [vmem:[#allocation4 + $0x60] sm:$0xff] %v2492
      %2525 = vst [vmem:[#allocation4 + $0x68] sm:$0xff] %v2493
      %2526 = vst [vmem:[#allocation4 + $0x70] sm:$0xff] %v2494
      %2527 = vst [vmem:[#allocation4 + $0x78] sm:$0xff] %v2495
      %2528 = vst [vmem:[#allocation4 + $0x80] sm:$0xff] %v2496
      %2529 = vst [vmem:[#allocation4 + $0x88] sm:$0xff] %v2497
      %2530 = vst [vmem:[#allocation4 + $0x90] sm:$0xff] %v2498
      %2531 = vst [vmem:[#allocation4 + $0x98] sm:$0xff] %v2499
      %2532 = vst [vmem:[#allocation4 + $0xa0] sm:$0xff] %v2500
      %2533 = vst [vmem:[#allocation4 + $0xa8] sm:$0xff] %v2501
      %2534 = vst [vmem:[#allocation4 + $0xb0] sm:$0xff] %v2502
      %2535 = vst [vmem:[#allocation4 + $0xb8] sm:$0xff] %v2503
      %2536 = vst [vmem:[#allocation4 + $0xc0] sm:$0xff] %v2504
      %2537 = vst [vmem:[#allocation4 + $0xc8] sm:$0xff] %v2505
      %2538 = vst [vmem:[#allocation4 + $0xd0] sm:$0xff] %v2506
      %2539 = vst [vmem:[#allocation4 + $0xd8] sm:$0xff] %v2507
      %2540 = vst [vmem:[#allocation4 + $0xe0] sm:$0xff] %v2508
      %2541 = vst [vmem:[#allocation4 + $0xe8] sm:$0xff] %v2509
      %2542 = vst [vmem:[#allocation4 + $0xf0] sm:$0xff] %v2510
      %2543 = vst [vmem:[#allocation4 + $0xf8] sm:$0xff] %v2511
      %s2544 = scalar_lea.vmem [#allocation2], 48
      %v2545 = vld [vmem:[%s2544] sm:$0xff]
      %v2546 = vld [vmem:[%s2544 + $0x8] sm:$0xff]
      %v2547 = vld [vmem:[%s2544 + $0x18] sm:$0xff]
      %v2548 = vld [vmem:[%s2544 + $0x20] sm:$0xff]
      %v2549 = vld [vmem:[%s2544 + $0x30] sm:$0xff]
      %v2550 = vld [vmem:[%s2544 + $0x38] sm:$0xff]
      %v2551 = vld [vmem:[%s2544 + $0x48] sm:$0xff]
      %v2552 = vld [vmem:[%s2544 + $0x50] sm:$0xff]
      %v2553 = vld [vmem:[%s2544 + $0x60] sm:$0xff]
      %v2554 = vld [vmem:[%s2544 + $0x68] sm:$0xff]
      %v2555 = vld [vmem:[%s2544 + $0x78] sm:$0xff]
      %v2556 = vld [vmem:[%s2544 + $0x80] sm:$0xff]
      %v2557 = vld [vmem:[%s2544 + $0x90] sm:$0xff]
      %v2558 = vld [vmem:[%s2544 + $0x98] sm:$0xff]
      %v2559 = vld [vmem:[%s2544 + $0xa8] sm:$0xff]
      %v2560 = vld [vmem:[%s2544 + $0xb0] sm:$0xff]
      %v2561 = vld [vmem:[%s2544 + $0xc0] sm:$0xff]
      %v2562 = vld [vmem:[%s2544 + $0xc8] sm:$0xff]
      %v2563 = vld [vmem:[%s2544 + $0xd8] sm:$0xff]
      %v2564 = vld [vmem:[%s2544 + $0xe0] sm:$0xff]
      %v2565 = vld [vmem:[%s2544 + $0xf0] sm:$0xff]
      %v2566 = vld [vmem:[%s2544 + $0xf8] sm:$0xff]
      %v2567 = vld [vmem:[%s2544 + $0x108] sm:$0xff]
      %v2568 = vld [vmem:[%s2544 + $0x110] sm:$0xff]
      %v2569 = vld [vmem:[%s2544 + $0x120] sm:$0xff]
      %v2570 = vld [vmem:[%s2544 + $0x128] sm:$0xff]
      %v2571 = vld [vmem:[%s2544 + $0x138] sm:$0xff]
      %v2572 = vld [vmem:[%s2544 + $0x140] sm:$0xff]
      %v2573 = vld [vmem:[%s2544 + $0x150] sm:$0xff]
      %v2574 = vld [vmem:[%s2544 + $0x158] sm:$0xff]
      %v2575 = vld [vmem:[%s2544 + $0x168] sm:$0xff]
      %v2576 = vld [vmem:[%s2544 + $0x170] sm:$0xff]
      %v2577 = vpack.c.bf16 %v2546, %v2545
      %v2578 = vpack.c.bf16 %v2548, %v2547
      %v2579 = vpack.c.bf16 %v2550, %v2549
      %v2580 = vpack.c.bf16 %v2552, %v2551
      %v2581 = vpack.c.bf16 %v2554, %v2553
      %v2582 = vpack.c.bf16 %v2556, %v2555
      %v2583 = vpack.c.bf16 %v2558, %v2557
      %v2584 = vpack.c.bf16 %v2560, %v2559
      %v2585 = vpack.c.bf16 %v2562, %v2561
      %v2586 = vpack.c.bf16 %v2564, %v2563
      %v2587 = vpack.c.bf16 %v2566, %v2565
      %v2588 = vpack.c.bf16 %v2568, %v2567
      %v2589 = vpack.c.bf16 %v2570, %v2569
      %v2590 = vpack.c.bf16 %v2572, %v2571
      %v2591 = vpack.c.bf16 %v2574, %v2573
      %v2592 = vpack.c.bf16 %v2576, %v2575
      %s2593 = scalar_lea.vmem %s1, 384
      %v2594 = vld [vmem:[%s2593] sm:$0xf]
      %v2595 = vld [vmem:[%s2593 + $0x4] sm:$0xf]
      %v2596 = vld [vmem:[%s2593 + $0x8] sm:$0xf]
      %v2597 = vld [vmem:[%s2593 + $0xc] sm:$0xf]
      %v2598 = vld [vmem:[%s2593 + $0x10] sm:$0xf]
      %v2599 = vld [vmem:[%s2593 + $0x14] sm:$0xf]
      %v2600 = vld [vmem:[%s2593 + $0x18] sm:$0xf]
      %v2601 = vld [vmem:[%s2593 + $0x1c] sm:$0xf]
      %v2602 = vld [vmem:[%s2593 + $0x20] sm:$0xf]
      %v2603 = vld [vmem:[%s2593 + $0x24] sm:$0xf]
      %v2604 = vld [vmem:[%s2593 + $0x28] sm:$0xf]
      %v2605 = vld [vmem:[%s2593 + $0x2c] sm:$0xf]
      %v2606 = vld [vmem:[%s2593 + $0x30] sm:$0xf]
      %v2607 = vld [vmem:[%s2593 + $0x34] sm:$0xf]
      %v2608 = vld [vmem:[%s2593 + $0x38] sm:$0xf]
      %v2609 = vld [vmem:[%s2593 + $0x3c] sm:$0xf]
      %v2626 = vunpack.c.l.b16 %v2594
      %v2627 = vunpack.c.l.b16 %v2595
      %v2628 = vunpack.c.l.b16 %v2596
      %v2629 = vunpack.c.l.b16 %v2597
      %v2630 = vunpack.c.l.b16 %v2598
      %v2631 = vunpack.c.l.b16 %v2599
      %v2632 = vunpack.c.l.b16 %v2600
      %v2633 = vunpack.c.l.b16 %v2601
      %v2634 = vunpack.c.l.b16 %v2602
      %v2635 = vunpack.c.l.b16 %v2603
      %v2636 = vunpack.c.l.b16 %v2604
      %v2637 = vunpack.c.l.b16 %v2605
      %v2638 = vunpack.c.l.b16 %v2606
      %v2639 = vunpack.c.l.b16 %v2607
      %v2640 = vunpack.c.l.b16 %v2608
      %v2641 = vunpack.c.l.b16 %v2609
      %v2642 = vpack.c.b16 %v2627, %v2626
      %v2643 = vpack.c.b16 %v2629, %v2628
      %v2644 = vpack.c.b16 %v2631, %v2630
      %v2645 = vpack.c.b16 %v2633, %v2632
      %v2646 = vpack.c.b16 %v2635, %v2634
      %v2647 = vpack.c.b16 %v2637, %v2636
      %v2648 = vpack.c.b16 %v2639, %v2638
      %v2649 = vpack.c.b16 %v2641, %v2640
      %2658 = vmatprep.subr.bf16.mxu0 0
      %2659 = vmatpush1.bf16.msra.mxu0 %v2642
      %2660 = vmatprep.subr.bf16.mxu0 0
      %2661 = vmatpush1.bf16.msra.mxu0 %v2643
      %2662 = vmatprep.subr.bf16.mxu0 0
      %2663 = vmatpush1.bf16.msra.mxu0 %v2644
      %2664 = vmatprep.subr.bf16.mxu0 0
      %2665 = vmatpush1.bf16.msra.mxu0 %v2645
      %2666 = vmatprep.subr.bf16.mxu0 0
      %2667 = vmatpush1.bf16.msra.mxu0 %v2646
      %2668 = vmatprep.subr.bf16.mxu0 0
      %2669 = vmatpush1.bf16.msra.mxu0 %v2647
      %2670 = vmatprep.subr.bf16.mxu0 0
      %2671 = vmatpush1.bf16.msra.mxu0 %v2648
      %2672 = vmatprep.subr.bf16.mxu0 0
      %2673 = vmatpush1.bf16.msra.mxu0 %v2649
      %2674 = vmatprep.subr.bf16.mxu0 0
      %2675 = vmatpush1.bf16.msra.mxu0 0
      %2676 = vmatprep.subr.bf16.mxu0 0
      %2677 = vmatpush1.bf16.msra.mxu0 0
      %2678 = vmatprep.subr.bf16.mxu0 0
      %2679 = vmatpush1.bf16.msra.mxu0 0
      %2680 = vmatprep.subr.bf16.mxu0 0
      %2681 = vmatpush1.bf16.msra.mxu0 0
      %2682 = vmatprep.subr.bf16.mxu0 0
      %2683 = vmatpush1.bf16.msra.mxu0 0
      %2684 = vmatprep.subr.bf16.mxu0 0
      %2685 = vmatpush1.bf16.msra.mxu0 0
      %2686 = vmatprep.subr.bf16.mxu0 0
      %2687 = vmatpush1.bf16.msra.mxu0 0
      %2688 = vmatprep.subr.bf16.mxu0 0
      %2689 = vmatpush1.bf16.msra.mxu0 0
      %2690 = vmatprep.mubr.bf16.mxu0 0
      %2691 = vmatmul.mubr.bf16.gmra.mrb[0].mxu0 %v2577
      %v2692 = vpop.f32.mrb[0].mxu0
      %v2693 = vadd.f32 0.0, %v2692
      %v2694 = vpop.f32.mrb[0].mxu0
      %v2695 = vpop.f32.mrb[0].mxu0
      %v2696 = vadd.f32 0.0, %v2695
      %v2697 = vpop.f32.mrb[0].mxu0
      %2698 = vmatprep.mubr.bf16.mxu0 0
      %2699 = vmatmul.mubr.bf16.gmra.mrb[0].mxu0 %v2578
      %v2700 = vpop.f32.mrb[0].mxu0
      %v2701 = vadd.f32 0.0, %v2700
      %v2702 = vpop.f32.mrb[0].mxu0
      %v2703 = vpop.f32.mrb[0].mxu0
      %v2704 = vadd.f32 0.0, %v2703
      %v2705 = vpop.f32.mrb[0].mxu0
      %2706 = vmatprep.mubr.bf16.mxu0 0
      %2707 = vmatmul.mubr.bf16.gmra.mrb[0].mxu0 %v2579
      %v2708 = vpop.f32.mrb[0].mxu0
      %v2709 = vadd.f32 0.0, %v2708
      %v2710 = vpop.f32.mrb[0].mxu0
      %v2711 = vpop.f32.mrb[0].mxu0
      %v2712 = vadd.f32 0.0, %v2711
      %v2713 = vpop.f32.mrb[0].mxu0
      %2714 = vmatprep.mubr.bf16.mxu0 0
      %2715 = vmatmul.mubr.bf16.gmra.mrb[0].mxu0 %v2580
      %v2716 = vpop.f32.mrb[0].mxu0
      %v2717 = vadd.f32 0.0, %v2716
      %v2718 = vpop.f32.mrb[0].mxu0
      %v2719 = vpop.f32.mrb[0].mxu0
      %v2720 = vadd.f32 0.0, %v2719
      %v2721 = vpop.f32.mrb[0].mxu0
      %2722 = vmatprep.mubr.bf16.mxu0 0
      %2723 = vmatmul.mubr.bf16.gmra.mrb[0].mxu0 %v2581
      %v2724 = vpop.f32.mrb[0].mxu0
      %v2725 = vadd.f32 0.0, %v2724
      %v2726 = vpop.f32.mrb[0].mxu0
      %v2727 = vpop.f32.mrb[0].mxu0
      %v2728 = vadd.f32 0.0, %v2727
      %v2729 = vpop.f32.mrb[0].mxu0
      %2730 = vmatprep.mubr.bf16.mxu0 0
      %2731 = vmatmul.mubr.bf16.gmra.mrb[0].mxu0 %v2582
      %v2732 = vpop.f32.mrb[0].mxu0
      %v2733 = vadd.f32 0.0, %v2732
      %v2734 = vpop.f32.mrb[0].mxu0
      %v2735 = vpop.f32.mrb[0].mxu0
      %v2736 = vadd.f32 0.0, %v2735
      %v2737 = vpop.f32.mrb[0].mxu0
      %2738 = vmatprep.mubr.bf16.mxu0 0
      %2739 = vmatmul.mubr.bf16.gmra.mrb[0].mxu0 %v2583
      %v2740 = vpop.f32.mrb[0].mxu0
      %v2741 = vadd.f32 0.0, %v2740
      %v2742 = vpop.f32.mrb[0].mxu0
      %v2743 = vpop.f32.mrb[0].mxu0
      %v2744 = vadd.f32 0.0, %v2743
      %v2745 = vpop.f32.mrb[0].mxu0
      %2746 = vmatprep.mubr.bf16.mxu0 0
      %2747 = vmatmul.mubr.bf16.gmra.mrb[0].mxu0 %v2584
      %v2748 = vpop.f32.mrb[0].mxu0
      %v2749 = vadd.f32 0.0, %v2748
      %v2750 = vpop.f32.mrb[0].mxu0
      %v2751 = vpop.f32.mrb[0].mxu0
      %v2752 = vadd.f32 0.0, %v2751
      %v2753 = vpop.f32.mrb[0].mxu0
      %2754 = vmatprep.mubr.bf16.mxu0 0
      %2755 = vmatmul.mubr.bf16.gmra.mrb[0].mxu0 %v2585
      %v2756 = vpop.f32.mrb[0].mxu0
      %v2757 = vadd.f32 0.0, %v2756
      %v2758 = vpop.f32.mrb[0].mxu0
      %v2759 = vpop.f32.mrb[0].mxu0
      %v2760 = vadd.f32 0.0, %v2759
      %v2761 = vpop.f32.mrb[0].mxu0
      %2762 = vmatprep.mubr.bf16.mxu0 0
      %2763 = vmatmul.mubr.bf16.gmra.mrb[0].mxu0 %v2586
      %v2764 = vpop.f32.mrb[0].mxu0
      %v2765 = vadd.f32 0.0, %v2764
      %v2766 = vpop.f32.mrb[0].mxu0
      %v2767 = vpop.f32.mrb[0].mxu0
      %v2768 = vadd.f32 0.0, %v2767
      %v2769 = vpop.f32.mrb[0].mxu0
      %2770 = vmatprep.mubr.bf16.mxu0 0
      %2771 = vmatmul.mubr.bf16.gmra.mrb[0].mxu0 %v2587
      %v2772 = vpop.f32.mrb[0].mxu0
      %v2773 = vadd.f32 0.0, %v2772
      %v2774 = vpop.f32.mrb[0].mxu0
      %v2775 = vpop.f32.mrb[0].mxu0
      %v2776 = vadd.f32 0.0, %v2775
      %v2777 = vpop.f32.mrb[0].mxu0
      %2778 = vmatprep.mubr.bf16.mxu0 0
      %2779 = vmatmul.mubr.bf16.gmra.mrb[0].mxu0 %v2588
      %v2780 = vpop.f32.mrb[0].mxu0
      %v2781 = vadd.f32 0.0, %v2780
      %v2782 = vpop.f32.mrb[0].mxu0
      %v2783 = vpop.f32.mrb[0].mxu0
      %v2784 = vadd.f32 0.0, %v2783
      %v2785 = vpop.f32.mrb[0].mxu0
      %2786 = vmatprep.mubr.bf16.mxu0 0
      %2787 = vmatmul.mubr.bf16.gmra.mrb[0].mxu0 %v2589
      %v2788 = vpop.f32.mrb[0].mxu0
      %v2789 = vadd.f32 0.0, %v2788
      %v2790 = vpop.f32.mrb[0].mxu0
      %v2791 = vpop.f32.mrb[0].mxu0
      %v2792 = vadd.f32 0.0, %v2791
      %v2793 = vpop.f32.mrb[0].mxu0
      %2794 = vmatprep.mubr.bf16.mxu0 0
      %2795 = vmatmul.mubr.bf16.gmra.mrb[0].mxu0 %v2590
      %v2796 = vpop.f32.mrb[0].mxu0
      %v2797 = vadd.f32 0.0, %v2796
      %v2798 = vpop.f32.mrb[0].mxu0
      %v2799 = vpop.f32.mrb[0].mxu0
      %v2800 = vadd.f32 0.0, %v2799
      %v2801 = vpop.f32.mrb[0].mxu0
      %2802 = vmatprep.mubr.bf16.mxu0 0
      %2803 = vmatmul.mubr.bf16.gmra.mrb[0].mxu0 %v2591
      %v2804 = vpop.f32.mrb[0].mxu0
      %v2805 = vadd.f32 0.0, %v2804
      %v2806 = vpop.f32.mrb[0].mxu0
      %v2807 = vpop.f32.mrb[0].mxu0
      %v2808 = vadd.f32 0.0, %v2807
      %v2809 = vpop.f32.mrb[0].mxu0
      %2810 = vmatprep.mubr.bf16.mxu0 0
      %2811 = vmatmul.mubr.bf16.gmra.mrb[0].mxu0 %v2592
      %v2812 = vpop.f32.mrb[0].mxu0
      %v2813 = vadd.f32 0.0, %v2812
      %v2814 = vpop.f32.mrb[0].mxu0
      %v2815 = vpop.f32.mrb[0].mxu0
      %v2816 = vadd.f32 0.0, %v2815
      %v2817 = vpop.f32.mrb[0].mxu0
      %2818 = vdwg.mxu0
      %v2819 = vld [vmem:[#allocation4] sm:$0xff]
      %v2820 = vld [vmem:[#allocation4 + $0x8] sm:$0xff]
      %v2821 = vld [vmem:[#allocation4 + $0x10] sm:$0xff]
      %v2822 = vld [vmem:[#allocation4 + $0x18] sm:$0xff]
      %v2823 = vld [vmem:[#allocation4 + $0x20] sm:$0xff]
      %v2824 = vld [vmem:[#allocation4 + $0x28] sm:$0xff]
      %v2825 = vld [vmem:[#allocation4 + $0x30] sm:$0xff]
      %v2826 = vld [vmem:[#allocation4 + $0x38] sm:$0xff]
      %v2827 = vld [vmem:[#allocation4 + $0x40] sm:$0xff]
      %v2828 = vld [vmem:[#allocation4 + $0x48] sm:$0xff]
      %v2829 = vld [vmem:[#allocation4 + $0x50] sm:$0xff]
      %v2830 = vld [vmem:[#allocation4 + $0x58] sm:$0xff]
      %v2831 = vld [vmem:[#allocation4 + $0x60] sm:$0xff]
      %v2832 = vld [vmem:[#allocation4 + $0x68] sm:$0xff]
      %v2833 = vld [vmem:[#allocation4 + $0x70] sm:$0xff]
      %v2834 = vld [vmem:[#allocation4 + $0x78] sm:$0xff]
      %v2835 = vld [vmem:[#allocation4 + $0x80] sm:$0xff]
      %v2836 = vld [vmem:[#allocation4 + $0x88] sm:$0xff]
      %v2837 = vld [vmem:[#allocation4 + $0x90] sm:$0xff]
      %v2838 = vld [vmem:[#allocation4 + $0x98] sm:$0xff]
      %v2839 = vld [vmem:[#allocation4 + $0xa0] sm:$0xff]
      %v2840 = vld [vmem:[#allocation4 + $0xa8] sm:$0xff]
      %v2841 = vld [vmem:[#allocation4 + $0xb0] sm:$0xff]
      %v2842 = vld [vmem:[#allocation4 + $0xb8] sm:$0xff]
      %v2843 = vld [vmem:[#allocation4 + $0xc0] sm:$0xff]
      %v2844 = vld [vmem:[#allocation4 + $0xc8] sm:$0xff]
      %v2845 = vld [vmem:[#allocation4 + $0xd0] sm:$0xff]
      %v2846 = vld [vmem:[#allocation4 + $0xd8] sm:$0xff]
      %v2847 = vld [vmem:[#allocation4 + $0xe0] sm:$0xff]
      %v2848 = vld [vmem:[#allocation4 + $0xe8] sm:$0xff]
      %v2849 = vld [vmem:[#allocation4 + $0xf0] sm:$0xff]
      %v2850 = vld [vmem:[#allocation4 + $0xf8] sm:$0xff]
      %v2851 = vadd.f32 %v2819, %v2693
      %v2852 = vadd.f32 %v2820, %v2696
      %v2853 = vadd.f32 %v2821, %v2701
      %v2854 = vadd.f32 %v2822, %v2704
      %v2855 = vadd.f32 %v2823, %v2709
      %v2856 = vadd.f32 %v2824, %v2712
      %v2857 = vadd.f32 %v2825, %v2717
      %v2858 = vadd.f32 %v2826, %v2720
      %v2859 = vadd.f32 %v2827, %v2725
      %v2860 = vadd.f32 %v2828, %v2728
      %v2861 = vadd.f32 %v2829, %v2733
      %v2862 = vadd.f32 %v2830, %v2736
      %v2863 = vadd.f32 %v2831, %v2741
      %v2864 = vadd.f32 %v2832, %v2744
      %v2865 = vadd.f32 %v2833, %v2749
      %v2866 = vadd.f32 %v2834, %v2752
      %v2867 = vadd.f32 %v2835, %v2757
      %v2868 = vadd.f32 %v2836, %v2760
      %v2869 = vadd.f32 %v2837, %v2765
      %v2870 = vadd.f32 %v2838, %v2768
      %v2871 = vadd.f32 %v2839, %v2773
      %v2872 = vadd.f32 %v2840, %v2776
      %v2873 = vadd.f32 %v2841, %v2781
      %v2874 = vadd.f32 %v2842, %v2784
      %v2875 = vadd.f32 %v2843, %v2789
      %v2876 = vadd.f32 %v2844, %v2792
      %v2877 = vadd.f32 %v2845, %v2797
      %v2878 = vadd.f32 %v2846, %v2800
      %v2879 = vadd.f32 %v2847, %v2805
      %v2880 = vadd.f32 %v2848, %v2808
      %v2881 = vadd.f32 %v2849, %v2813
      %v2882 = vadd.f32 %v2850, %v2816
      %2883 = vst [vmem:[#allocation4] sm:$0xff] %v2851
      %2884 = vst [vmem:[#allocation4 + $0x8] sm:$0xff] %v2852
      %2885 = vst [vmem:[#allocation4 + $0x10] sm:$0xff] %v2853
      %2886 = vst [vmem:[#allocation4 + $0x18] sm:$0xff] %v2854
      %2887 = vst [vmem:[#allocation4 + $0x20] sm:$0xff] %v2855
      %2888 = vst [vmem:[#allocation4 + $0x28] sm:$0xff] %v2856
      %2889 = vst [vmem:[#allocation4 + $0x30] sm:$0xff] %v2857
      %2890 = vst [vmem:[#allocation4 + $0x38] sm:$0xff] %v2858
      %2891 = vst [vmem:[#allocation4 + $0x40] sm:$0xff] %v2859
      %2892 = vst [vmem:[#allocation4 + $0x48] sm:$0xff] %v2860
      %2893 = vst [vmem:[#allocation4 + $0x50] sm:$0xff] %v2861
      %2894 = vst [vmem:[#allocation4 + $0x58] sm:$0xff] %v2862
      %2895 = vst [vmem:[#allocation4 + $0x60] sm:$0xff] %v2863
      %2896 = vst [vmem:[#allocation4 + $0x68] sm:$0xff] %v2864
      %2897 = vst [vmem:[#allocation4 + $0x70] sm:$0xff] %v2865
      %2898 = vst [vmem:[#allocation4 + $0x78] sm:$0xff] %v2866
      %2899 = vst [vmem:[#allocation4 + $0x80] sm:$0xff] %v2867
      %2900 = vst [vmem:[#allocation4 + $0x88] sm:$0xff] %v2868
      %2901 = vst [vmem:[#allocation4 + $0x90] sm:$0xff] %v2869
      %2902 = vst [vmem:[#allocation4 + $0x98] sm:$0xff] %v2870
      %2903 = vst [vmem:[#allocation4 + $0xa0] sm:$0xff] %v2871
      %2904 = vst [vmem:[#allocation4 + $0xa8] sm:$0xff] %v2872
      %2905 = vst [vmem:[#allocation4 + $0xb0] sm:$0xff] %v2873
      %2906 = vst [vmem:[#allocation4 + $0xb8] sm:$0xff] %v2874
      %2907 = vst [vmem:[#allocation4 + $0xc0] sm:$0xff] %v2875
      %2908 = vst [vmem:[#allocation4 + $0xc8] sm:$0xff] %v2876
      %2909 = vst [vmem:[#allocation4 + $0xd0] sm:$0xff] %v2877
      %2910 = vst [vmem:[#allocation4 + $0xd8] sm:$0xff] %v2878
      %2911 = vst [vmem:[#allocation4 + $0xe0] sm:$0xff] %v2879
      %2912 = vst [vmem:[#allocation4 + $0xe8] sm:$0xff] %v2880
      %2913 = vst [vmem:[#allocation4 + $0xf0] sm:$0xff] %v2881
      %2914 = vst [vmem:[#allocation4 + $0xf8] sm:$0xff] %v2882
      %v2915 = vld [vmem:[%s2544 + $0x1] sm:$0xff]
      %v2916 = vld [vmem:[%s2544 + $0x9] sm:$0xff]
      %v2917 = vld [vmem:[%s2544 + $0x19] sm:$0xff]
      %v2918 = vld [vmem:[%s2544 + $0x21] sm:$0xff]
      %v2919 = vld [vmem:[%s2544 + $0x31] sm:$0xff]
      %v2920 = vld [vmem:[%s2544 + $0x39] sm:$0xff]
      %v2921 = vld [vmem:[%s2544 + $0x49] sm:$0xff]
      %v2922 = vld [vmem:[%s2544 + $0x51] sm:$0xff]
      %v2923 = vld [vmem:[%s2544 + $0x61] sm:$0xff]
      %v2924 = vld [vmem:[%s2544 + $0x69] sm:$0xff]
      %v2925 = vld [vmem:[%s2544 + $0x79] sm:$0xff]
      %v2926 = vld [vmem:[%s2544 + $0x81] sm:$0xff]
      %v2927 = vld [vmem:[%s2544 + $0x91] sm:$0xff]
      %v2928 = vld [vmem:[%s2544 + $0x99] sm:$0xff]
      %v2929 = vld [vmem:[%s2544 + $0xa9] sm:$0xff]
      %v2930 = vld [vmem:[%s2544 + $0xb1] sm:$0xff]
      %v2931 = vld [vmem:[%s2544 + $0xc1] sm:$0xff]
      %v2932 = vld [vmem:[%s2544 + $0xc9] sm:$0xff]
      %v2933 = vld [vmem:[%s2544 + $0xd9] sm:$0xff]
      %v2934 = vld [vmem:[%s2544 + $0xe1] sm:$0xff]
      %v2935 = vld [vmem:[%s2544 + $0xf1] sm:$0xff]
      %v2936 = vld [vmem:[%s2544 + $0xf9] sm:$0xff]
      %v2937 = vld [vmem:[%s2544 + $0x109] sm:$0xff]
      %v2938 = vld [vmem:[%s2544 + $0x111] sm:$0xff]
      %v2939 = vld [vmem:[%s2544 + $0x121] sm:$0xff]
      %v2940 = vld [vmem:[%s2544 + $0x129] sm:$0xff]
      %v2941 = vld [vmem:[%s2544 + $0x139] sm:$0xff]
      %v2942 = vld [vmem:[%s2544 + $0x141] sm:$0xff]
      %v2943 = vld [vmem:[%s2544 + $0x151] sm:$0xff]
      %v2944 = vld [vmem:[%s2544 + $0x159] sm:$0xff]
      %v2945 = vld [vmem:[%s2544 + $0x169] sm:$0xff]
      %v2946 = vld [vmem:[%s2544 + $0x171] sm:$0xff]
      %v2947 = vpack.c.bf16 %v2916, %v2915
      %v2948 = vpack.c.bf16 %v2918, %v2917
      %v2949 = vpack.c.bf16 %v2920, %v2919
      %v2950 = vpack.c.bf16 %v2922, %v2921
      %v2951 = vpack.c.bf16 %v2924, %v2923
      %v2952 = vpack.c.bf16 %v2926, %v2925
      %v2953 = vpack.c.bf16 %v2928, %v2927
      %v2954 = vpack.c.bf16 %v2930, %v2929
      %v2955 = vpack.c.bf16 %v2932, %v2931
      %v2956 = vpack.c.bf16 %v2934, %v2933
      %v2957 = vpack.c.bf16 %v2936, %v2935
      %v2958 = vpack.c.bf16 %v2938, %v2937
      %v2959 = vpack.c.bf16 %v2940, %v2939
      %v2960 = vpack.c.bf16 %v2942, %v2941
      %v2961 = vpack.c.bf16 %v2944, %v2943
      %v2962 = vpack.c.bf16 %v2946, %v2945
      %s2963 = scalar_lea.vmem %s1, 448
      %v2964 = vld [vmem:[%s2963] sm:$0xf]
      %v2965 = vld [vmem:[%s2963 + $0x4] sm:$0xf]
      %v2966 = vld [vmem:[%s2963 + $0x8] sm:$0xf]
      %v2967 = vld [vmem:[%s2963 + $0xc] sm:$0xf]
      %v2968 = vld [vmem:[%s2963 + $0x10] sm:$0xf]
      %v2969 = vld [vmem:[%s2963 + $0x14] sm:$0xf]
      %v2970 = vld [vmem:[%s2963 + $0x18] sm:$0xf]
      %v2971 = vld [vmem:[%s2963 + $0x1c] sm:$0xf]
      %v2972 = vld [vmem:[%s2963 + $0x20] sm:$0xf]
      %v2973 = vld [vmem:[%s2963 + $0x24] sm:$0xf]
      %v2974 = vld [vmem:[%s2963 + $0x28] sm:$0xf]
      %v2975 = vld [vmem:[%s2963 + $0x2c] sm:$0xf]
      %v2976 = vld [vmem:[%s2963 + $0x30] sm:$0xf]
      %v2977 = vld [vmem:[%s2963 + $0x34] sm:$0xf]
      %v2978 = vld [vmem:[%s2963 + $0x38] sm:$0xf]
      %v2979 = vld [vmem:[%s2963 + $0x3c] sm:$0xf]
      %v2996 = vunpack.c.l.b16 %v2964
      %v2997 = vunpack.c.l.b16 %v2965
      %v2998 = vunpack.c.l.b16 %v2966
      %v2999 = vunpack.c.l.b16 %v2967
      %v3000 = vunpack.c.l.b16 %v2968
      %v3001 = vunpack.c.l.b16 %v2969
      %v3002 = vunpack.c.l.b16 %v2970
      %v3003 = vunpack.c.l.b16 %v2971
      %v3004 = vunpack.c.l.b16 %v2972
      %v3005 = vunpack.c.l.b16 %v2973
      %v3006 = vunpack.c.l.b16 %v2974
      %v3007 = vunpack.c.l.b16 %v2975
      %v3008 = vunpack.c.l.b16 %v2976
      %v3009 = vunpack.c.l.b16 %v2977
      %v3010 = vunpack.c.l.b16 %v2978
      %v3011 = vunpack.c.l.b16 %v2979
      %v3012 = vpack.c.b16 %v2997, %v2996
      %v3013 = vpack.c.b16 %v2999, %v2998
      %v3014 = vpack.c.b16 %v3001, %v3000
      %v3015 = vpack.c.b16 %v3003, %v3002
      %v3016 = vpack.c.b16 %v3005, %v3004
      %v3017 = vpack.c.b16 %v3007, %v3006
      %v3018 = vpack.c.b16 %v3009, %v3008
      %v3019 = vpack.c.b16 %v3011, %v3010
      %3028 = vmatprep.subr.bf16.mxu0 0
      %3029 = vmatpush1.bf16.msra.mxu0 %v3012
      %3030 = vmatprep.subr.bf16.mxu0 0
      %3031 = vmatpush1.bf16.msra.mxu0 %v3013
      %3032 = vmatprep.subr.bf16.mxu0 0
      %3033 = vmatpush1.bf16.msra.mxu0 %v3014
      %3034 = vmatprep.subr.bf16.mxu0 0
      %3035 = vmatpush1.bf16.msra.mxu0 %v3015
      %3036 = vmatprep.subr.bf16.mxu0 0
      %3037 = vmatpush1.bf16.msra.mxu0 %v3016
      %3038 = vmatprep.subr.bf16.mxu0 0
      %3039 = vmatpush1.bf16.msra.mxu0 %v3017
      %3040 = vmatprep.subr.bf16.mxu0 0
      %3041 = vmatpush1.bf16.msra.mxu0 %v3018
      %3042 = vmatprep.subr.bf16.mxu0 0
      %3043 = vmatpush1.bf16.msra.mxu0 %v3019
      %3044 = vmatprep.subr.bf16.mxu0 0
      %3045 = vmatpush1.bf16.msra.mxu0 0
      %3046 = vmatprep.subr.bf16.mxu0 0
      %3047 = vmatpush1.bf16.msra.mxu0 0
      %3048 = vmatprep.subr.bf16.mxu0 0
      %3049 = vmatpush1.bf16.msra.mxu0 0
      %3050 = vmatprep.subr.bf16.mxu0 0
      %3051 = vmatpush1.bf16.msra.mxu0 0
      %3052 = vmatprep.subr.bf16.mxu0 0
      %3053 = vmatpush1.bf16.msra.mxu0 0
      %3054 = vmatprep.subr.bf16.mxu0 0
      %3055 = vmatpush1.bf16.msra.mxu0 0
      %3056 = vmatprep.subr.bf16.mxu0 0
      %3057 = vmatpush1.bf16.msra.mxu0 0
      %3058 = vmatprep.subr.bf16.mxu0 0
      %3059 = vmatpush1.bf16.msra.mxu0 0
      %3060 = vmatprep.mubr.bf16.mxu0 0
      %3061 = vmatmul.mubr.bf16.gmra.mrb[0].mxu0 %v2947
      %v3062 = vpop.f32.mrb[0].mxu0
      %v3063 = vadd.f32 0.0, %v3062
      %v3064 = vpop.f32.mrb[0].mxu0
      %v3065 = vpop.f32.mrb[0].mxu0
      %v3066 = vadd.f32 0.0, %v3065
      %v3067 = vpop.f32.mrb[0].mxu0
      %3068 = vmatprep.mubr.bf16.mxu0 0
      %3069 = vmatmul.mubr.bf16.gmra.mrb[0].mxu0 %v2948
      %v3070 = vpop.f32.mrb[0].mxu0
      %v3071 = vadd.f32 0.0, %v3070
      %v3072 = vpop.f32.mrb[0].mxu0
      %v3073 = vpop.f32.mrb[0].mxu0
      %v3074 = vadd.f32 0.0, %v3073
      %v3075 = vpop.f32.mrb[0].mxu0
      %3076 = vmatprep.mubr.bf16.mxu0 0
      %3077 = vmatmul.mubr.bf16.gmra.mrb[0].mxu0 %v2949
      %v3078 = vpop.f32.mrb[0].mxu0
      %v3079 = vadd.f32 0.0, %v3078
      %v3080 = vpop.f32.mrb[0].mxu0
      %v3081 = vpop.f32.mrb[0].mxu0
      %v3082 = vadd.f32 0.0, %v3081
      %v3083 = vpop.f32.mrb[0].mxu0
      %3084 = vmatprep.mubr.bf16.mxu0 0
      %3085 = vmatmul.mubr.bf16.gmra.mrb[0].mxu0 %v2950
      %v3086 = vpop.f32.mrb[0].mxu0
      %v3087 = vadd.f32 0.0, %v3086
      %v3088 = vpop.f32.mrb[0].mxu0
      %v3089 = vpop.f32.mrb[0].mxu0
      %v3090 = vadd.f32 0.0, %v3089
      %v3091 = vpop.f32.mrb[0].mxu0
      %3092 = vmatprep.mubr.bf16.mxu0 0
      %3093 = vmatmul.mubr.bf16.gmra.mrb[0].mxu0 %v2951
      %v3094 = vpop.f32.mrb[0].mxu0
      %v3095 = vadd.f32 0.0, %v3094
      %v3096 = vpop.f32.mrb[0].mxu0
      %v3097 = vpop.f32.mrb[0].mxu0
      %v3098 = vadd.f32 0.0, %v3097
      %v3099 = vpop.f32.mrb[0].mxu0
      %3100 = vmatprep.mubr.bf16.mxu0 0
      %3101 = vmatmul.mubr.bf16.gmra.mrb[0].mxu0 %v2952
      %v3102 = vpop.f32.mrb[0].mxu0
      %v3103 = vadd.f32 0.0, %v3102
      %v3104 = vpop.f32.mrb[0].mxu0
      %v3105 = vpop.f32.mrb[0].mxu0
      %v3106 = vadd.f32 0.0, %v3105
      %v3107 = vpop.f32.mrb[0].mxu0
      %3108 = vmatprep.mubr.bf16.mxu0 0
      %3109 = vmatmul.mubr.bf16.gmra.mrb[0].mxu0 %v2953
      %v3110 = vpop.f32.mrb[0].mxu0
      %v3111 = vadd.f32 0.0, %v3110
      %v3112 = vpop.f32.mrb[0].mxu0
      %v3113 = vpop.f32.mrb[0].mxu0
      %v3114 = vadd.f32 0.0, %v3113
      %v3115 = vpop.f32.mrb[0].mxu0
      %3116 = vmatprep.mubr.bf16.mxu0 0
      %3117 = vmatmul.mubr.bf16.gmra.mrb[0].mxu0 %v2954
      %v3118 = vpop.f32.mrb[0].mxu0
      %v3119 = vadd.f32 0.0, %v3118
      %v3120 = vpop.f32.mrb[0].mxu0
      %v3121 = vpop.f32.mrb[0].mxu0
      %v3122 = vadd.f32 0.0, %v3121
      %v3123 = vpop.f32.mrb[0].mxu0
      %3124 = vmatprep.mubr.bf16.mxu0 0
      %3125 = vmatmul.mubr.bf16.gmra.mrb[0].mxu0 %v2955
      %v3126 = vpop.f32.mrb[0].mxu0
      %v3127 = vadd.f32 0.0, %v3126
      %v3128 = vpop.f32.mrb[0].mxu0
      %v3129 = vpop.f32.mrb[0].mxu0
      %v3130 = vadd.f32 0.0, %v3129
      %v3131 = vpop.f32.mrb[0].mxu0
      %3132 = vmatprep.mubr.bf16.mxu0 0
      %3133 = vmatmul.mubr.bf16.gmra.mrb[0].mxu0 %v2956
      %v3134 = vpop.f32.mrb[0].mxu0
      %v3135 = vadd.f32 0.0, %v3134
      %v3136 = vpop.f32.mrb[0].mxu0
      %v3137 = vpop.f32.mrb[0].mxu0
      %v3138 = vadd.f32 0.0, %v3137
      %v3139 = vpop.f32.mrb[0].mxu0
      %3140 = vmatprep.mubr.bf16.mxu0 0
      %3141 = vmatmul.mubr.bf16.gmra.mrb[0].mxu0 %v2957
      %v3142 = vpop.f32.mrb[0].mxu0
      %v3143 = vadd.f32 0.0, %v3142
      %v3144 = vpop.f32.mrb[0].mxu0
      %v3145 = vpop.f32.mrb[0].mxu0
      %v3146 = vadd.f32 0.0, %v3145
      %v3147 = vpop.f32.mrb[0].mxu0
      %3148 = vmatprep.mubr.bf16.mxu0 0
      %3149 = vmatmul.mubr.bf16.gmra.mrb[0].mxu0 %v2958
      %v3150 = vpop.f32.mrb[0].mxu0
      %v3151 = vadd.f32 0.0, %v3150
      %v3152 = vpop.f32.mrb[0].mxu0
      %v3153 = vpop.f32.mrb[0].mxu0
      %v3154 = vadd.f32 0.0, %v3153
      %v3155 = vpop.f32.mrb[0].mxu0
      %3156 = vmatprep.mubr.bf16.mxu0 0
      %3157 = vmatmul.mubr.bf16.gmra.mrb[0].mxu0 %v2959
      %v3158 = vpop.f32.mrb[0].mxu0
      %v3159 = vadd.f32 0.0, %v3158
      %v3160 = vpop.f32.mrb[0].mxu0
      %v3161 = vpop.f32.mrb[0].mxu0
      %v3162 = vadd.f32 0.0, %v3161
      %v3163 = vpop.f32.mrb[0].mxu0
      %3164 = vmatprep.mubr.bf16.mxu0 0
      %3165 = vmatmul.mubr.bf16.gmra.mrb[0].mxu0 %v2960
      %v3166 = vpop.f32.mrb[0].mxu0
      %v3167 = vadd.f32 0.0, %v3166
      %v3168 = vpop.f32.mrb[0].mxu0
      %v3169 = vpop.f32.mrb[0].mxu0
      %v3170 = vadd.f32 0.0, %v3169
      %v3171 = vpop.f32.mrb[0].mxu0
      %3172 = vmatprep.mubr.bf16.mxu0 0
      %3173 = vmatmul.mubr.bf16.gmra.mrb[0].mxu0 %v2961
      %v3174 = vpop.f32.mrb[0].mxu0
      %v3175 = vadd.f32 0.0, %v3174
      %v3176 = vpop.f32.mrb[0].mxu0
      %v3177 = vpop.f32.mrb[0].mxu0
      %v3178 = vadd.f32 0.0, %v3177
      %v3179 = vpop.f32.mrb[0].mxu0
      %3180 = vmatprep.mubr.bf16.mxu0 0
      %3181 = vmatmul.mubr.bf16.gmra.mrb[0].mxu0 %v2962
      %v3182 = vpop.f32.mrb[0].mxu0
      %v3183 = vadd.f32 0.0, %v3182
      %v3184 = vpop.f32.mrb[0].mxu0
      %v3185 = vpop.f32.mrb[0].mxu0
      %v3186 = vadd.f32 0.0, %v3185
      %v3187 = vpop.f32.mrb[0].mxu0
      %3188 = vdwg.mxu0
      %v3189 = vld [vmem:[#allocation4] sm:$0xff]
      %v3190 = vld [vmem:[#allocation4 + $0x8] sm:$0xff]
      %v3191 = vld [vmem:[#allocation4 + $0x10] sm:$0xff]
      %v3192 = vld [vmem:[#allocation4 + $0x18] sm:$0xff]
      %v3193 = vld [vmem:[#allocation4 + $0x20] sm:$0xff]
      %v3194 = vld [vmem:[#allocation4 + $0x28] sm:$0xff]
      %v3195 = vld [vmem:[#allocation4 + $0x30] sm:$0xff]
      %v3196 = vld [vmem:[#allocation4 + $0x38] sm:$0xff]
      %v3197 = vld [vmem:[#allocation4 + $0x40] sm:$0xff]
      %v3198 = vld [vmem:[#allocation4 + $0x48] sm:$0xff]
      %v3199 = vld [vmem:[#allocation4 + $0x50] sm:$0xff]
      %v3200 = vld [vmem:[#allocation4 + $0x58] sm:$0xff]
      %v3201 = vld [vmem:[#allocation4 + $0x60] sm:$0xff]
      %v3202 = vld [vmem:[#allocation4 + $0x68] sm:$0xff]
      %v3203 = vld [vmem:[#allocation4 + $0x70] sm:$0xff]
      %v3204 = vld [vmem:[#allocation4 + $0x78] sm:$0xff]
      %v3205 = vld [vmem:[#allocation4 + $0x80] sm:$0xff]
      %v3206 = vld [vmem:[#allocation4 + $0x88] sm:$0xff]
      %v3207 = vld [vmem:[#allocation4 + $0x90] sm:$0xff]
      %v3208 = vld [vmem:[#allocation4 + $0x98] sm:$0xff]
      %v3209 = vld [vmem:[#allocation4 + $0xa0] sm:$0xff]
      %v3210 = vld [vmem:[#allocation4 + $0xa8] sm:$0xff]
      %v3211 = vld [vmem:[#allocation4 + $0xb0] sm:$0xff]
      %v3212 = vld [vmem:[#allocation4 + $0xb8] sm:$0xff]
      %v3213 = vld [vmem:[#allocation4 + $0xc0] sm:$0xff]
      %v3214 = vld [vmem:[#allocation4 + $0xc8] sm:$0xff]
      %v3215 = vld [vmem:[#allocation4 + $0xd0] sm:$0xff]
      %v3216 = vld [vmem:[#allocation4 + $0xd8] sm:$0xff]
      %v3217 = vld [vmem:[#allocation4 + $0xe0] sm:$0xff]
      %v3218 = vld [vmem:[#allocation4 + $0xe8] sm:$0xff]
      %v3219 = vld [vmem:[#allocation4 + $0xf0] sm:$0xff]
      %v3220 = vld [vmem:[#allocation4 + $0xf8] sm:$0xff]
      %v3221 = vadd.f32 %v3189, %v3063
      %v3222 = vadd.f32 %v3190, %v3066
      %v3223 = vadd.f32 %v3191, %v3071
      %v3224 = vadd.f32 %v3192, %v3074
      %v3225 = vadd.f32 %v3193, %v3079
      %v3226 = vadd.f32 %v3194, %v3082
      %v3227 = vadd.f32 %v3195, %v3087
      %v3228 = vadd.f32 %v3196, %v3090
      %v3229 = vadd.f32 %v3197, %v3095
      %v3230 = vadd.f32 %v3198, %v3098
      %v3231 = vadd.f32 %v3199, %v3103
      %v3232 = vadd.f32 %v3200, %v3106
      %v3233 = vadd.f32 %v3201, %v3111
      %v3234 = vadd.f32 %v3202, %v3114
      %v3235 = vadd.f32 %v3203, %v3119
      %v3236 = vadd.f32 %v3204, %v3122
      %v3237 = vadd.f32 %v3205, %v3127
      %v3238 = vadd.f32 %v3206, %v3130
      %v3239 = vadd.f32 %v3207, %v3135
      %v3240 = vadd.f32 %v3208, %v3138
      %v3241 = vadd.f32 %v3209, %v3143
      %v3242 = vadd.f32 %v3210, %v3146
      %v3243 = vadd.f32 %v3211, %v3151
      %v3244 = vadd.f32 %v3212, %v3154
      %v3245 = vadd.f32 %v3213, %v3159
      %v3246 = vadd.f32 %v3214, %v3162
      %v3247 = vadd.f32 %v3215, %v3167
      %v3248 = vadd.f32 %v3216, %v3170
      %v3249 = vadd.f32 %v3217, %v3175
      %v3250 = vadd.f32 %v3218, %v3178
      %v3251 = vadd.f32 %v3219, %v3183
      %v3252 = vadd.f32 %v3220, %v3186
      %3253 = vst [vmem:[#allocation4] sm:$0xff] %v3221
      %3254 = vst [vmem:[#allocation4 + $0x8] sm:$0xff] %v3222
      %3255 = vst [vmem:[#allocation4 + $0x10] sm:$0xff] %v3223
      %3256 = vst [vmem:[#allocation4 + $0x18] sm:$0xff] %v3224
      %3257 = vst [vmem:[#allocation4 + $0x20] sm:$0xff] %v3225
      %3258 = vst [vmem:[#allocation4 + $0x28] sm:$0xff] %v3226
      %3259 = vst [vmem:[#allocation4 + $0x30] sm:$0xff] %v3227
      %3260 = vst [vmem:[#allocation4 + $0x38] sm:$0xff] %v3228
      %3261 = vst [vmem:[#allocation4 + $0x40] sm:$0xff] %v3229
      %3262 = vst [vmem:[#allocation4 + $0x48] sm:$0xff] %v3230
      %3263 = vst [vmem:[#allocation4 + $0x50] sm:$0xff] %v3231
      %3264 = vst [vmem:[#allocation4 + $0x58] sm:$0xff] %v3232
      %3265 = vst [vmem:[#allocation4 + $0x60] sm:$0xff] %v3233
      %3266 = vst [vmem:[#allocation4 + $0x68] sm:$0xff] %v3234
      %3267 = vst [vmem:[#allocation4 + $0x70] sm:$0xff] %v3235
      %3268 = vst [vmem:[#allocation4 + $0x78] sm:$0xff] %v3236
      %3269 = vst [vmem:[#allocation4 + $0x80] sm:$0xff] %v3237
      %3270 = vst [vmem:[#allocation4 + $0x88] sm:$0xff] %v3238
      %3271 = vst [vmem:[#allocation4 + $0x90] sm:$0xff] %v3239
      %3272 = vst [vmem:[#allocation4 + $0x98] sm:$0xff] %v3240
      %3273 = vst [vmem:[#allocation4 + $0xa0] sm:$0xff] %v3241
      %3274 = vst [vmem:[#allocation4 + $0xa8] sm:$0xff] %v3242
      %3275 = vst [vmem:[#allocation4 + $0xb0] sm:$0xff] %v3243
      %3276 = vst [vmem:[#allocation4 + $0xb8] sm:$0xff] %v3244
      %3277 = vst [vmem:[#allocation4 + $0xc0] sm:$0xff] %v3245
      %3278 = vst [vmem:[#allocation4 + $0xc8] sm:$0xff] %v3246
      %3279 = vst [vmem:[#allocation4 + $0xd0] sm:$0xff] %v3247
      %3280 = vst [vmem:[#allocation4 + $0xd8] sm:$0xff] %v3248
      %3281 = vst [vmem:[#allocation4 + $0xe0] sm:$0xff] %v3249
      %3282 = vst [vmem:[#allocation4 + $0xe8] sm:$0xff] %v3250
      %3283 = vst [vmem:[#allocation4 + $0xf0] sm:$0xff] %v3251
      %3284 = vst [vmem:[#allocation4 + $0xf8] sm:$0xff] %v3252
      %v3285 = vld [vmem:[%s2544 + $0x2] sm:$0xff]
      %v3286 = vld [vmem:[%s2544 + $0xa] sm:$0xff]
      %v3287 = vld [vmem:[%s2544 + $0x1a] sm:$0xff]
      %v3288 = vld [vmem:[%s2544 + $0x22] sm:$0xff]
      %v3289 = vld [vmem:[%s2544 + $0x32] sm:$0xff]
      %v3290 = vld [vmem:[%s2544 + $0x3a] sm:$0xff]
      %v3291 = vld [vmem:[%s2544 + $0x4a] sm:$0xff]
      %v3292 = vld [vmem:[%s2544 + $0x52] sm:$0xff]
      %v3293 = vld [vmem:[%s2544 + $0x62] sm:$0xff]
      %v3294 = vld [vmem:[%s2544 + $0x6a] sm:$0xff]
      %v3295 = vld [vmem:[%s2544 + $0x7a] sm:$0xff]
      %v3296 = vld [vmem:[%s2544 + $0x82] sm:$0xff]
      %v3297 = vld [vmem:[%s2544 + $0x92] sm:$0xff]
      %v3298 = vld [vmem:[%s2544 + $0x9a] sm:$0xff]
      %v3299 = vld [vmem:[%s2544 + $0xaa] sm:$0xff]
      %v3300 = vld [vmem:[%s2544 + $0xb2] sm:$0xff]
      %v3301 = vld [vmem:[%s2544 + $0xc2] sm:$0xff]
      %v3302 = vld [vmem:[%s2544 + $0xca] sm:$0xff]
      %v3303 = vld [vmem:[%s2544 + $0xda] sm:$0xff]
      %v3304 = vld [vmem:[%s2544 + $0xe2] sm:$0xff]
      %v3305 = vld [vmem:[%s2544 + $0xf2] sm:$0xff]
      %v3306 = vld [vmem:[%s2544 + $0xfa] sm:$0xff]
      %v3307 = vld [vmem:[%s2544 + $0x10a] sm:$0xff]
      %v3308 = vld [vmem:[%s2544 + $0x112] sm:$0xff]
      %v3309 = vld [vmem:[%s2544 + $0x122] sm:$0xff]
      %v3310 = vld [vmem:[%s2544 + $0x12a] sm:$0xff]
      %v3311 = vld [vmem:[%s2544 + $0x13a] sm:$0xff]
      %v3312 = vld [vmem:[%s2544 + $0x142] sm:$0xff]
      %v3313 = vld [vmem:[%s2544 + $0x152] sm:$0xff]
      %v3314 = vld [vmem:[%s2544 + $0x15a] sm:$0xff]
      %v3315 = vld [vmem:[%s2544 + $0x16a] sm:$0xff]
      %v3316 = vld [vmem:[%s2544 + $0x172] sm:$0xff]
      %v3317 = vpack.c.bf16 %v3286, %v3285
      %v3318 = vpack.c.bf16 %v3288, %v3287
      %v3319 = vpack.c.bf16 %v3290, %v3289
      %v3320 = vpack.c.bf16 %v3292, %v3291
      %v3321 = vpack.c.bf16 %v3294, %v3293
      %v3322 = vpack.c.bf16 %v3296, %v3295
      %v3323 = vpack.c.bf16 %v3298, %v3297
      %v3324 = vpack.c.bf16 %v3300, %v3299
      %v3325 = vpack.c.bf16 %v3302, %v3301
      %v3326 = vpack.c.bf16 %v3304, %v3303
      %v3327 = vpack.c.bf16 %v3306, %v3305
      %v3328 = vpack.c.bf16 %v3308, %v3307
      %v3329 = vpack.c.bf16 %v3310, %v3309
      %v3330 = vpack.c.bf16 %v3312, %v3311
      %v3331 = vpack.c.bf16 %v3314, %v3313
      %v3332 = vpack.c.bf16 %v3316, %v3315
      %s3333 = scalar_lea.vmem %s1, 512
      %v3334 = vld [vmem:[%s3333] sm:$0xf]
      %v3335 = vld [vmem:[%s3333 + $0x4] sm:$0xf]
      %v3336 = vld [vmem:[%s3333 + $0x8] sm:$0xf]
      %v3337 = vld [vmem:[%s3333 + $0xc] sm:$0xf]
      %v3338 = vld [vmem:[%s3333 + $0x10] sm:$0xf]
      %v3339 = vld [vmem:[%s3333 + $0x14] sm:$0xf]
      %v3340 = vld [vmem:[%s3333 + $0x18] sm:$0xf]
      %v3341 = vld [vmem:[%s3333 + $0x1c] sm:$0xf]
      %v3342 = vld [vmem:[%s3333 + $0x20] sm:$0xf]
      %v3343 = vld [vmem:[%s3333 + $0x24] sm:$0xf]
      %v3344 = vld [vmem:[%s3333 + $0x28] sm:$0xf]
      %v3345 = vld [vmem:[%s3333 + $0x2c] sm:$0xf]
      %v3346 = vld [vmem:[%s3333 + $0x30] sm:$0xf]
      %v3347 = vld [vmem:[%s3333 + $0x34] sm:$0xf]
      %v3348 = vld [vmem:[%s3333 + $0x38] sm:$0xf]
      %v3349 = vld [vmem:[%s3333 + $0x3c] sm:$0xf]
      %v3366 = vunpack.c.l.b16 %v3334
      %v3367 = vunpack.c.l.b16 %v3335
      %v3368 = vunpack.c.l.b16 %v3336
      %v3369 = vunpack.c.l.b16 %v3337
      %v3370 = vunpack.c.l.b16 %v3338
      %v3371 = vunpack.c.l.b16 %v3339
      %v3372 = vunpack.c.l.b16 %v3340
      %v3373 = vunpack.c.l.b16 %v3341
      %v3374 = vunpack.c.l.b16 %v3342
      %v3375 = vunpack.c.l.b16 %v3343
      %v3376 = vunpack.c.l.b16 %v3344
      %v3377 = vunpack.c.l.b16 %v3345
      %v3378 = vunpack.c.l.b16 %v3346
      %v3379 = vunpack.c.l.b16 %v3347
      %v3380 = vunpack.c.l.b16 %v3348
      %v3381 = vunpack.c.l.b16 %v3349
      %v3382 = vpack.c.b16 %v3367, %v3366
      %v3383 = vpack.c.b16 %v3369, %v3368
      %v3384 = vpack.c.b16 %v3371, %v3370
      %v3385 = vpack.c.b16 %v3373, %v3372
      %v3386 = vpack.c.b16 %v3375, %v3374
      %v3387 = vpack.c.b16 %v3377, %v3376
      %v3388 = vpack.c.b16 %v3379, %v3378
      %v3389 = vpack.c.b16 %v3381, %v3380
      %3398 = vmatprep.subr.bf16.mxu0 0
      %3399 = vmatpush1.bf16.msra.mxu0 %v3382
      %3400 = vmatprep.subr.bf16.mxu0 0
      %3401 = vmatpush1.bf16.msra.mxu0 %v3383
      %3402 = vmatprep.subr.bf16.mxu0 0
      %3403 = vmatpush1.bf16.msra.mxu0 %v3384
      %3404 = vmatprep.subr.bf16.mxu0 0
      %3405 = vmatpush1.bf16.msra.mxu0 %v3385
      %3406 = vmatprep.subr.bf16.mxu0 0
      %3407 = vmatpush1.bf16.msra.mxu0 %v3386
      %3408 = vmatprep.subr.bf16.mxu0 0
      %3409 = vmatpush1.bf16.msra.mxu0 %v3387
      %3410 = vmatprep.subr.bf16.mxu0 0
      %3411 = vmatpush1.bf16.msra.mxu0 %v3388
      %3412 = vmatprep.subr.bf16.mxu0 0
      %3413 = vmatpush1.bf16.msra.mxu0 %v3389
      %3414 = vmatprep.subr.bf16.mxu0 0
      %3415 = vmatpush1.bf16.msra.mxu0 0
      %3416 = vmatprep.subr.bf16.mxu0 0
      %3417 = vmatpush1.bf16.msra.mxu0 0
      %3418 = vmatprep.subr.bf16.mxu0 0
      %3419 = vmatpush1.bf16.msra.mxu0 0
      %3420 = vmatprep.subr.bf16.mxu0 0
      %3421 = vmatpush1.bf16.msra.mxu0 0
      %3422 = vmatprep.subr.bf16.mxu0 0
      %3423 = vmatpush1.bf16.msra.mxu0 0
      %3424 = vmatprep.subr.bf16.mxu0 0
      %3425 = vmatpush1.bf16.msra.mxu0 0
      %3426 = vmatprep.subr.bf16.mxu0 0
      %3427 = vmatpush1.bf16.msra.mxu0 0
      %3428 = vmatprep.subr.bf16.mxu0 0
      %3429 = vmatpush1.bf16.msra.mxu0 0
      %3430 = vmatprep.mubr.bf16.mxu0 0
      %3431 = vmatmul.mubr.bf16.gmra.mrb[0].mxu0 %v3317
      %v3432 = vpop.f32.mrb[0].mxu0
      %v3433 = vadd.f32 0.0, %v3432
      %v3434 = vpop.f32.mrb[0].mxu0
      %v3435 = vpop.f32.mrb[0].mxu0
      %v3436 = vadd.f32 0.0, %v3435
      %v3437 = vpop.f32.mrb[0].mxu0
      %3438 = vmatprep.mubr.bf16.mxu0 0
      %3439 = vmatmul.mubr.bf16.gmra.mrb[0].mxu0 %v3318
      %v3440 = vpop.f32.mrb[0].mxu0
      %v3441 = vadd.f32 0.0, %v3440
      %v3442 = vpop.f32.mrb[0].mxu0
      %v3443 = vpop.f32.mrb[0].mxu0
      %v3444 = vadd.f32 0.0, %v3443
      %v3445 = vpop.f32.mrb[0].mxu0
      %3446 = vmatprep.mubr.bf16.mxu0 0
      %3447 = vmatmul.mubr.bf16.gmra.mrb[0].mxu0 %v3319
      %v3448 = vpop.f32.mrb[0].mxu0
      %v3449 = vadd.f32 0.0, %v3448
      %v3450 = vpop.f32.mrb[0].mxu0
      %v3451 = vpop.f32.mrb[0].mxu0
      %v3452 = vadd.f32 0.0, %v3451
      %v3453 = vpop.f32.mrb[0].mxu0
      %3454 = vmatprep.mubr.bf16.mxu0 0
      %3455 = vmatmul.mubr.bf16.gmra.mrb[0].mxu0 %v3320
      %v3456 = vpop.f32.mrb[0].mxu0
      %v3457 = vadd.f32 0.0, %v3456
      %v3458 = vpop.f32.mrb[0].mxu0
      %v3459 = vpop.f32.mrb[0].mxu0
      %v3460 = vadd.f32 0.0, %v3459
      %v3461 = vpop.f32.mrb[0].mxu0
      %3462 = vmatprep.mubr.bf16.mxu0 0
      %3463 = vmatmul.mubr.bf16.gmra.mrb[0].mxu0 %v3321
      %v3464 = vpop.f32.mrb[0].mxu0
      %v3465 = vadd.f32 0.0, %v3464
      %v3466 = vpop.f32.mrb[0].mxu0
      %v3467 = vpop.f32.mrb[0].mxu0
      %v3468 = vadd.f32 0.0, %v3467
      %v3469 = vpop.f32.mrb[0].mxu0
      %3470 = vmatprep.mubr.bf16.mxu0 0
      %3471 = vmatmul.mubr.bf16.gmra.mrb[0].mxu0 %v3322
      %v3472 = vpop.f32.mrb[0].mxu0
      %v3473 = vadd.f32 0.0, %v3472
      %v3474 = vpop.f32.mrb[0].mxu0
      %v3475 = vpop.f32.mrb[0].mxu0
      %v3476 = vadd.f32 0.0, %v3475
      %v3477 = vpop.f32.mrb[0].mxu0
      %3478 = vmatprep.mubr.bf16.mxu0 0
      %3479 = vmatmul.mubr.bf16.gmra.mrb[0].mxu0 %v3323
      %v3480 = vpop.f32.mrb[0].mxu0
      %v3481 = vadd.f32 0.0, %v3480
      %v3482 = vpop.f32.mrb[0].mxu0
      %v3483 = vpop.f32.mrb[0].mxu0
      %v3484 = vadd.f32 0.0, %v3483
      %v3485 = vpop.f32.mrb[0].mxu0
      %3486 = vmatprep.mubr.bf16.mxu0 0
      %3487 = vmatmul.mubr.bf16.gmra.mrb[0].mxu0 %v3324
      %v3488 = vpop.f32.mrb[0].mxu0
      %v3489 = vadd.f32 0.0, %v3488
      %v3490 = vpop.f32.mrb[0].mxu0
      %v3491 = vpop.f32.mrb[0].mxu0
      %v3492 = vadd.f32 0.0, %v3491
      %v3493 = vpop.f32.mrb[0].mxu0
      %3494 = vmatprep.mubr.bf16.mxu0 0
      %3495 = vmatmul.mubr.bf16.gmra.mrb[0].mxu0 %v3325
      %v3496 = vpop.f32.mrb[0].mxu0
      %v3497 = vadd.f32 0.0, %v3496
      %v3498 = vpop.f32.mrb[0].mxu0
      %v3499 = vpop.f32.mrb[0].mxu0
      %v3500 = vadd.f32 0.0, %v3499
      %v3501 = vpop.f32.mrb[0].mxu0
      %3502 = vmatprep.mubr.bf16.mxu0 0
      %3503 = vmatmul.mubr.bf16.gmra.mrb[0].mxu0 %v3326
      %v3504 = vpop.f32.mrb[0].mxu0
      %v3505 = vadd.f32 0.0, %v3504
      %v3506 = vpop.f32.mrb[0].mxu0
      %v3507 = vpop.f32.mrb[0].mxu0
      %v3508 = vadd.f32 0.0, %v3507
      %v3509 = vpop.f32.mrb[0].mxu0
      %3510 = vmatprep.mubr.bf16.mxu0 0
      %3511 = vmatmul.mubr.bf16.gmra.mrb[0].mxu0 %v3327
      %v3512 = vpop.f32.mrb[0].mxu0
      %v3513 = vadd.f32 0.0, %v3512
      %v3514 = vpop.f32.mrb[0].mxu0
      %v3515 = vpop.f32.mrb[0].mxu0
      %v3516 = vadd.f32 0.0, %v3515
      %v3517 = vpop.f32.mrb[0].mxu0
      %3518 = vmatprep.mubr.bf16.mxu0 0
      %3519 = vmatmul.mubr.bf16.gmra.mrb[0].mxu0 %v3328
      %v3520 = vpop.f32.mrb[0].mxu0
      %v3521 = vadd.f32 0.0, %v3520
      %v3522 = vpop.f32.mrb[0].mxu0
      %v3523 = vpop.f32.mrb[0].mxu0
      %v3524 = vadd.f32 0.0, %v3523
      %v3525 = vpop.f32.mrb[0].mxu0
      %3526 = vmatprep.mubr.bf16.mxu0 0
      %3527 = vmatmul.mubr.bf16.gmra.mrb[0].mxu0 %v3329
      %v3528 = vpop.f32.mrb[0].mxu0
      %v3529 = vadd.f32 0.0, %v3528
      %v3530 = vpop.f32.mrb[0].mxu0
      %v3531 = vpop.f32.mrb[0].mxu0
      %v3532 = vadd.f32 0.0, %v3531
      %v3533 = vpop.f32.mrb[0].mxu0
      %3534 = vmatprep.mubr.bf16.mxu0 0
      %3535 = vmatmul.mubr.bf16.gmra.mrb[0].mxu0 %v3330
      %v3536 = vpop.f32.mrb[0].mxu0
      %v3537 = vadd.f32 0.0, %v3536
      %v3538 = vpop.f32.mrb[0].mxu0
      %v3539 = vpop.f32.mrb[0].mxu0
      %v3540 = vadd.f32 0.0, %v3539
      %v3541 = vpop.f32.mrb[0].mxu0
      %3542 = vmatprep.mubr.bf16.mxu0 0
      %3543 = vmatmul.mubr.bf16.gmra.mrb[0].mxu0 %v3331
      %v3544 = vpop.f32.mrb[0].mxu0
      %v3545 = vadd.f32 0.0, %v3544
      %v3546 = vpop.f32.mrb[0].mxu0
      %v3547 = vpop.f32.mrb[0].mxu0
      %v3548 = vadd.f32 0.0, %v3547
      %v3549 = vpop.f32.mrb[0].mxu0
      %3550 = vmatprep.mubr.bf16.mxu0 0
      %3551 = vmatmul.mubr.bf16.gmra.mrb[0].mxu0 %v3332
      %v3552 = vpop.f32.mrb[0].mxu0
      %v3553 = vadd.f32 0.0, %v3552
      %v3554 = vpop.f32.mrb[0].mxu0
      %v3555 = vpop.f32.mrb[0].mxu0
      %v3556 = vadd.f32 0.0, %v3555
      %v3557 = vpop.f32.mrb[0].mxu0
      %3558 = vdwg.mxu0
      %v3559 = vld [vmem:[#allocation4] sm:$0xff]
      %v3560 = vld [vmem:[#allocation4 + $0x8] sm:$0xff]
      %v3561 = vld [vmem:[#allocation4 + $0x10] sm:$0xff]
      %v3562 = vld [vmem:[#allocation4 + $0x18] sm:$0xff]
      %v3563 = vld [vmem:[#allocation4 + $0x20] sm:$0xff]
      %v3564 = vld [vmem:[#allocation4 + $0x28] sm:$0xff]
      %v3565 = vld [vmem:[#allocation4 + $0x30] sm:$0xff]
      %v3566 = vld [vmem:[#allocation4 + $0x38] sm:$0xff]
      %v3567 = vld [vmem:[#allocation4 + $0x40] sm:$0xff]
      %v3568 = vld [vmem:[#allocation4 + $0x48] sm:$0xff]
      %v3569 = vld [vmem:[#allocation4 + $0x50] sm:$0xff]
      %v3570 = vld [vmem:[#allocation4 + $0x58] sm:$0xff]
      %v3571 = vld [vmem:[#allocation4 + $0x60] sm:$0xff]
      %v3572 = vld [vmem:[#allocation4 + $0x68] sm:$0xff]
      %v3573 = vld [vmem:[#allocation4 + $0x70] sm:$0xff]
      %v3574 = vld [vmem:[#allocation4 + $0x78] sm:$0xff]
      %v3575 = vld [vmem:[#allocation4 + $0x80] sm:$0xff]
      %v3576 = vld [vmem:[#allocation4 + $0x88] sm:$0xff]
      %v3577 = vld [vmem:[#allocation4 + $0x90] sm:$0xff]
      %v3578 = vld [vmem:[#allocation4 + $0x98] sm:$0xff]
      %v3579 = vld [vmem:[#allocation4 + $0xa0] sm:$0xff]
      %v3580 = vld [vmem:[#allocation4 + $0xa8] sm:$0xff]
      %v3581 = vld [vmem:[#allocation4 + $0xb0] sm:$0xff]
      %v3582 = vld [vmem:[#allocation4 + $0xb8] sm:$0xff]
      %v3583 = vld [vmem:[#allocation4 + $0xc0] sm:$0xff]
      %v3584 = vld [vmem:[#allocation4 + $0xc8] sm:$0xff]
      %v3585 = vld [vmem:[#allocation4 + $0xd0] sm:$0xff]
      %v3586 = vld [vmem:[#allocation4 + $0xd8] sm:$0xff]
      %v3587 = vld [vmem:[#allocation4 + $0xe0] sm:$0xff]
      %v3588 = vld [vmem:[#allocation4 + $0xe8] sm:$0xff]
      %v3589 = vld [vmem:[#allocation4 + $0xf0] sm:$0xff]
      %v3590 = vld [vmem:[#allocation4 + $0xf8] sm:$0xff]
      %v3591 = vadd.f32 %v3559, %v3433
      %v3592 = vadd.f32 %v3560, %v3436
      %v3593 = vadd.f32 %v3561, %v3441
      %v3594 = vadd.f32 %v3562, %v3444
      %v3595 = vadd.f32 %v3563, %v3449
      %v3596 = vadd.f32 %v3564, %v3452
      %v3597 = vadd.f32 %v3565, %v3457
      %v3598 = vadd.f32 %v3566, %v3460
      %v3599 = vadd.f32 %v3567, %v3465
      %v3600 = vadd.f32 %v3568, %v3468
      %v3601 = vadd.f32 %v3569, %v3473
      %v3602 = vadd.f32 %v3570, %v3476
      %v3603 = vadd.f32 %v3571, %v3481
      %v3604 = vadd.f32 %v3572, %v3484
      %v3605 = vadd.f32 %v3573, %v3489
      %v3606 = vadd.f32 %v3574, %v3492
      %v3607 = vadd.f32 %v3575, %v3497
      %v3608 = vadd.f32 %v3576, %v3500
      %v3609 = vadd.f32 %v3577, %v3505
      %v3610 = vadd.f32 %v3578, %v3508
      %v3611 = vadd.f32 %v3579, %v3513
      %v3612 = vadd.f32 %v3580, %v3516
      %v3613 = vadd.f32 %v3581, %v3521
      %v3614 = vadd.f32 %v3582, %v3524
      %v3615 = vadd.f32 %v3583, %v3529
      %v3616 = vadd.f32 %v3584, %v3532
      %v3617 = vadd.f32 %v3585, %v3537
      %v3618 = vadd.f32 %v3586, %v3540
      %v3619 = vadd.f32 %v3587, %v3545
      %v3620 = vadd.f32 %v3588, %v3548
      %v3621 = vadd.f32 %v3589, %v3553
      %v3622 = vadd.f32 %v3590, %v3556
      %3623 = vst [vmem:[#allocation4] sm:$0xff] %v3591
      %3624 = vst [vmem:[#allocation4 + $0x8] sm:$0xff] %v3592
      %3625 = vst [vmem:[#allocation4 + $0x10] sm:$0xff] %v3593
      %3626 = vst [vmem:[#allocation4 + $0x18] sm:$0xff] %v3594
      %3627 = vst [vmem:[#allocation4 + $0x20] sm:$0xff] %v3595
      %3628 = vst [vmem:[#allocation4 + $0x28] sm:$0xff] %v3596
      %3629 = vst [vmem:[#allocation4 + $0x30] sm:$0xff] %v3597
      %3630 = vst [vmem:[#allocation4 + $0x38] sm:$0xff] %v3598
      %3631 = vst [vmem:[#allocation4 + $0x40] sm:$0xff] %v3599
      %3632 = vst [vmem:[#allocation4 + $0x48] sm:$0xff] %v3600
      %3633 = vst [vmem:[#allocation4 + $0x50] sm:$0xff] %v3601
      %3634 = vst [vmem:[#allocation4 + $0x58] sm:$0xff] %v3602
      %3635 = vst [vmem:[#allocation4 + $0x60] sm:$0xff] %v3603
      %3636 = vst [vmem:[#allocation4 + $0x68] sm:$0xff] %v3604
      %3637 = vst [vmem:[#allocation4 + $0x70] sm:$0xff] %v3605
      %3638 = vst [vmem:[#allocation4 + $0x78] sm:$0xff] %v3606
      %3639 = vst [vmem:[#allocation4 + $0x80] sm:$0xff] %v3607
      %3640 = vst [vmem:[#allocation4 + $0x88] sm:$0xff] %v3608
      %3641 = vst [vmem:[#allocation4 + $0x90] sm:$0xff] %v3609
      %3642 = vst [vmem:[#allocation4 + $0x98] sm:$0xff] %v3610
      %3643 = vst [vmem:[#allocation4 + $0xa0] sm:$0xff] %v3611
      %3644 = vst [vmem:[#allocation4 + $0xa8] sm:$0xff] %v3612
      %3645 = vst [vmem:[#allocation4 + $0xb0] sm:$0xff] %v3613
      %3646 = vst [vmem:[#allocation4 + $0xb8] sm:$0xff] %v3614
      %3647 = vst [vmem:[#allocation4 + $0xc0] sm:$0xff] %v3615
      %3648 = vst [vmem:[#allocation4 + $0xc8] sm:$0xff] %v3616
      %3649 = vst [vmem:[#allocation4 + $0xd0] sm:$0xff] %v3617
      %3650 = vst [vmem:[#allocation4 + $0xd8] sm:$0xff] %v3618
      %3651 = vst [vmem:[#allocation4 + $0xe0] sm:$0xff] %v3619
      %3652 = vst [vmem:[#allocation4 + $0xe8] sm:$0xff] %v3620
      %3653 = vst [vmem:[#allocation4 + $0xf0] sm:$0xff] %v3621
      %3654 = vst [vmem:[#allocation4 + $0xf8] sm:$0xff] %v3622
      %v3655 = vld [vmem:[#allocation4] sm:$0xff]
      %v3656 = vld [vmem:[#allocation4 + $0x8] sm:$0xff]
      %v3657 = vld [vmem:[#allocation4 + $0x10] sm:$0xff]
      %v3658 = vld [vmem:[#allocation4 + $0x18] sm:$0xff]
      %v3659 = vld [vmem:[#allocation4 + $0x20] sm:$0xff]
      %v3660 = vld [vmem:[#allocation4 + $0x28] sm:$0xff]
      %v3661 = vld [vmem:[#allocation4 + $0x30] sm:$0xff]
      %v3662 = vld [vmem:[#allocation4 + $0x38] sm:$0xff]
      %v3663 = vld [vmem:[#allocation4 + $0x40] sm:$0xff]
      %v3664 = vld [vmem:[#allocation4 + $0x48] sm:$0xff]
      %v3665 = vld [vmem:[#allocation4 + $0x50] sm:$0xff]
      %v3666 = vld [vmem:[#allocation4 + $0x58] sm:$0xff]
      %v3667 = vld [vmem:[#allocation4 + $0x60] sm:$0xff]
      %v3668 = vld [vmem:[#allocation4 + $0x68] sm:$0xff]
      %v3669 = vld [vmem:[#allocation4 + $0x70] sm:$0xff]
      %v3670 = vld [vmem:[#allocation4 + $0x78] sm:$0xff]
      %v3671 = vld [vmem:[#allocation4 + $0x80] sm:$0xff]
      %v3672 = vld [vmem:[#allocation4 + $0x88] sm:$0xff]
      %v3673 = vld [vmem:[#allocation4 + $0x90] sm:$0xff]
      %v3674 = vld [vmem:[#allocation4 + $0x98] sm:$0xff]
      %v3675 = vld [vmem:[#allocation4 + $0xa0] sm:$0xff]
      %v3676 = vld [vmem:[#allocation4 + $0xa8] sm:$0xff]
      %v3677 = vld [vmem:[#allocation4 + $0xb0] sm:$0xff]
      %v3678 = vld [vmem:[#allocation4 + $0xb8] sm:$0xff]
      %v3679 = vld [vmem:[#allocation4 + $0xc0] sm:$0xff]
      %v3680 = vld [vmem:[#allocation4 + $0xc8] sm:$0xff]
      %v3681 = vld [vmem:[#allocation4 + $0xd0] sm:$0xff]
      %v3682 = vld [vmem:[#allocation4 + $0xd8] sm:$0xff]
      %v3683 = vld [vmem:[#allocation4 + $0xe0] sm:$0xff]
      %v3684 = vld [vmem:[#allocation4 + $0xe8] sm:$0xff]
      %v3685 = vld [vmem:[#allocation4 + $0xf0] sm:$0xff]
      %v3686 = vld [vmem:[#allocation4 + $0xf8] sm:$0xff]
      %v3687 = vld [vmem:[%s2] sm:$0x1]
      %v3689 = vlaneseq
      %v3690 = vshrl.u32 %v3689, 7
      %v3691 = vsub.s32 0, %v3690
      %v3692 = vrot.slane %v3687, %v3691
      %v3694 = vadd.f32 %v3655, %v3692
      %v3695 = vadd.f32 %v3656, %v3692
      %v3696 = vadd.f32 %v3657, %v3692
      %v3697 = vadd.f32 %v3658, %v3692
      %v3698 = vadd.f32 %v3659, %v3692
      %v3699 = vadd.f32 %v3660, %v3692
      %v3700 = vadd.f32 %v3661, %v3692
      %v3701 = vadd.f32 %v3662, %v3692
      %v3702 = vadd.f32 %v3663, %v3692
      %v3703 = vadd.f32 %v3664, %v3692
      %v3704 = vadd.f32 %v3665, %v3692
      %v3705 = vadd.f32 %v3666, %v3692
      %v3706 = vadd.f32 %v3667, %v3692
      %v3707 = vadd.f32 %v3668, %v3692
      %v3708 = vadd.f32 %v3669, %v3692
      %v3709 = vadd.f32 %v3670, %v3692
      %v3710 = vadd.f32 %v3671, %v3692
      %v3711 = vadd.f32 %v3672, %v3692
      %v3712 = vadd.f32 %v3673, %v3692
      %v3713 = vadd.f32 %v3674, %v3692
      %v3714 = vadd.f32 %v3675, %v3692
      %v3715 = vadd.f32 %v3676, %v3692
      %v3716 = vadd.f32 %v3677, %v3692
      %v3717 = vadd.f32 %v3678, %v3692
      %v3718 = vadd.f32 %v3679, %v3692
      %v3719 = vadd.f32 %v3680, %v3692
      %v3720 = vadd.f32 %v3681, %v3692
      %v3721 = vadd.f32 %v3682, %v3692
      %v3722 = vadd.f32 %v3683, %v3692
      %v3723 = vadd.f32 %v3684, %v3692
      %v3724 = vadd.f32 %v3685, %v3692
      %v3725 = vadd.f32 %v3686, %v3692
      %v3726 = vsub.f32 0.0, %v3694
      %v3727 = vsub.f32 0.0, %v3695
      %v3728 = vsub.f32 0.0, %v3696
      %v3729 = vsub.f32 0.0, %v3697
      %v3730 = vsub.f32 0.0, %v3698
      %v3731 = vsub.f32 0.0, %v3699
      %v3732 = vsub.f32 0.0, %v3700
      %v3733 = vsub.f32 0.0, %v3701
      %v3734 = vsub.f32 0.0, %v3702
      %v3735 = vsub.f32 0.0, %v3703
      %v3736 = vsub.f32 0.0, %v3704
      %v3737 = vsub.f32 0.0, %v3705
      %v3738 = vsub.f32 0.0, %v3706
      %v3739 = vsub.f32 0.0, %v3707
      %v3740 = vsub.f32 0.0, %v3708
      %v3741 = vsub.f32 0.0, %v3709
      %v3742 = vsub.f32 0.0, %v3710
      %v3743 = vsub.f32 0.0, %v3711
      %v3744 = vsub.f32 0.0, %v3712
      %v3745 = vsub.f32 0.0, %v3713
      %v3746 = vsub.f32 0.0, %v3714
      %v3747 = vsub.f32 0.0, %v3715
      %v3748 = vsub.f32 0.0, %v3716
      %v3749 = vsub.f32 0.0, %v3717
      %v3750 = vsub.f32 0.0, %v3718
      %v3751 = vsub.f32 0.0, %v3719
      %v3752 = vsub.f32 0.0, %v3720
      %v3753 = vsub.f32 0.0, %v3721
      %v3754 = vsub.f32 0.0, %v3722
      %v3755 = vsub.f32 0.0, %v3723
      %v3756 = vsub.f32 0.0, %v3724
      %v3757 = vsub.f32 0.0, %v3725
      %v3758 = vmul.f32 %v3726, 1.442695
      %v3759 = vpow.pop %v3758
      %v3760 = vmul.f32 %v3727, 1.442695
      %v3761 = vpow.pop %v3760
      %v3762 = vmul.f32 %v3728, 1.442695
      %v3763 = vpow.pop %v3762
      %v3764 = vmul.f32 %v3729, 1.442695
      %v3765 = vpow.pop %v3764
      %v3766 = vmul.f32 %v3730, 1.442695
      %v3767 = vpow.pop %v3766
      %v3768 = vmul.f32 %v3731, 1.442695
      %v3769 = vpow.pop %v3768
      %v3770 = vmul.f32 %v3732, 1.442695
      %v3771 = vpow.pop %v3770
      %v3772 = vmul.f32 %v3733, 1.442695
      %v3773 = vpow.pop %v3772
      %v3774 = vmul.f32 %v3734, 1.442695
      %v3775 = vpow.pop %v3774
      %v3776 = vmul.f32 %v3735, 1.442695
      %v3777 = vpow.pop %v3776
      %v3778 = vmul.f32 %v3736, 1.442695
      %v3779 = vpow.pop %v3778
      %v3780 = vmul.f32 %v3737, 1.442695
      %v3781 = vpow.pop %v3780
      %v3782 = vmul.f32 %v3738, 1.442695
      %v3783 = vpow.pop %v3782
      %v3784 = vmul.f32 %v3739, 1.442695
      %v3785 = vpow.pop %v3784
      %v3786 = vmul.f32 %v3740, 1.442695
      %v3787 = vpow.pop %v3786
      %v3788 = vmul.f32 %v3741, 1.442695
      %v3789 = vpow.pop %v3788
      %v3790 = vmul.f32 %v3742, 1.442695
      %v3791 = vpow.pop %v3790
      %v3792 = vmul.f32 %v3743, 1.442695
      %v3793 = vpow.pop %v3792
      %v3794 = vmul.f32 %v3744, 1.442695
      %v3795 = vpow.pop %v3794
      %v3796 = vmul.f32 %v3745, 1.442695
      %v3797 = vpow.pop %v3796
      %v3798 = vmul.f32 %v3746, 1.442695
      %v3799 = vpow.pop %v3798
      %v3800 = vmul.f32 %v3747, 1.442695
      %v3801 = vpow.pop %v3800
      %v3802 = vmul.f32 %v3748, 1.442695
      %v3803 = vpow.pop %v3802
      %v3804 = vmul.f32 %v3749, 1.442695
      %v3805 = vpow.pop %v3804
      %v3806 = vmul.f32 %v3750, 1.442695
      %v3807 = vpow.pop %v3806
      %v3808 = vmul.f32 %v3751, 1.442695
      %v3809 = vpow.pop %v3808
      %v3810 = vmul.f32 %v3752, 1.442695
      %v3811 = vpow.pop %v3810
      %v3812 = vmul.f32 %v3753, 1.442695
      %v3813 = vpow.pop %v3812
      %v3814 = vmul.f32 %v3754, 1.442695
      %v3815 = vpow.pop %v3814
      %v3816 = vmul.f32 %v3755, 1.442695
      %v3817 = vpow.pop %v3816
      %v3818 = vmul.f32 %v3756, 1.442695
      %v3819 = vpow.pop %v3818
      %v3820 = vmul.f32 %v3757, 1.442695
      %v3821 = vpow.pop %v3820
      %v3822 = vadd.f32 %v3759, 1.0
      %v3823 = vadd.f32 %v3761, 1.0
      %v3824 = vadd.f32 %v3763, 1.0
      %v3825 = vadd.f32 %v3765, 1.0
      %v3826 = vadd.f32 %v3767, 1.0
      %v3827 = vadd.f32 %v3769, 1.0
      %v3828 = vadd.f32 %v3771, 1.0
      %v3829 = vadd.f32 %v3773, 1.0
      %v3830 = vadd.f32 %v3775, 1.0
      %v3831 = vadd.f32 %v3777, 1.0
      %v3832 = vadd.f32 %v3779, 1.0
      %v3833 = vadd.f32 %v3781, 1.0
      %v3834 = vadd.f32 %v3783, 1.0
      %v3835 = vadd.f32 %v3785, 1.0
      %v3836 = vadd.f32 %v3787, 1.0
      %v3837 = vadd.f32 %v3789, 1.0
      %v3838 = vadd.f32 %v3791, 1.0
      %v3839 = vadd.f32 %v3793, 1.0
      %v3840 = vadd.f32 %v3795, 1.0
      %v3841 = vadd.f32 %v3797, 1.0
      %v3842 = vadd.f32 %v3799, 1.0
      %v3843 = vadd.f32 %v3801, 1.0
      %v3844 = vadd.f32 %v3803, 1.0
      %v3845 = vadd.f32 %v3805, 1.0
      %v3846 = vadd.f32 %v3807, 1.0
      %v3847 = vadd.f32 %v3809, 1.0
      %v3848 = vadd.f32 %v3811, 1.0
      %v3849 = vadd.f32 %v3813, 1.0
      %v3850 = vadd.f32 %v3815, 1.0
      %v3851 = vadd.f32 %v3817, 1.0
      %v3852 = vadd.f32 %v3819, 1.0
      %v3853 = vadd.f32 %v3821, 1.0
      %v3854 = vrcp.pop %v3822
      %v3855 = vrcp.pop %v3823
      %v3856 = vrcp.pop %v3824
      %v3857 = vrcp.pop %v3825
      %v3858 = vrcp.pop %v3826
      %v3859 = vrcp.pop %v3827
      %v3860 = vrcp.pop %v3828
      %v3861 = vrcp.pop %v3829
      %v3862 = vrcp.pop %v3830
      %v3863 = vrcp.pop %v3831
      %v3864 = vrcp.pop %v3832
      %v3865 = vrcp.pop %v3833
      %v3866 = vrcp.pop %v3834
      %v3867 = vrcp.pop %v3835
      %v3868 = vrcp.pop %v3836
      %v3869 = vrcp.pop %v3837
      %v3870 = vrcp.pop %v3838
      %v3871 = vrcp.pop %v3839
      %v3872 = vrcp.pop %v3840
      %v3873 = vrcp.pop %v3841
      %v3874 = vrcp.pop %v3842
      %v3875 = vrcp.pop %v3843
      %v3876 = vrcp.pop %v3844
      %v3877 = vrcp.pop %v3845
      %v3878 = vrcp.pop %v3846
      %v3879 = vrcp.pop %v3847
      %v3880 = vrcp.pop %v3848
      %v3881 = vrcp.pop %v3849
      %v3882 = vrcp.pop %v3850
      %v3883 = vrcp.pop %v3851
      %v3884 = vrcp.pop %v3852
      %v3885 = vrcp.pop %v3853
      %v3886 = vmul.f32 %v3694, %v3854
      %v3887 = vmul.f32 %v3695, %v3855
      %v3888 = vmul.f32 %v3696, %v3856
      %v3889 = vmul.f32 %v3697, %v3857
      %v3890 = vmul.f32 %v3698, %v3858
      %v3891 = vmul.f32 %v3699, %v3859
      %v3892 = vmul.f32 %v3700, %v3860
      %v3893 = vmul.f32 %v3701, %v3861
      %v3894 = vmul.f32 %v3702, %v3862
      %v3895 = vmul.f32 %v3703, %v3863
      %v3896 = vmul.f32 %v3704, %v3864
      %v3897 = vmul.f32 %v3705, %v3865
      %v3898 = vmul.f32 %v3706, %v3866
      %v3899 = vmul.f32 %v3707, %v3867
      %v3900 = vmul.f32 %v3708, %v3868
      %v3901 = vmul.f32 %v3709, %v3869
      %v3902 = vmul.f32 %v3710, %v3870
      %v3903 = vmul.f32 %v3711, %v3871
      %v3904 = vmul.f32 %v3712, %v3872
      %v3905 = vmul.f32 %v3713, %v3873
      %v3906 = vmul.f32 %v3714, %v3874
      %v3907 = vmul.f32 %v3715, %v3875
      %v3908 = vmul.f32 %v3716, %v3876
      %v3909 = vmul.f32 %v3717, %v3877
      %v3910 = vmul.f32 %v3718, %v3878
      %v3911 = vmul.f32 %v3719, %v3879
      %v3912 = vmul.f32 %v3720, %v3880
      %v3913 = vmul.f32 %v3721, %v3881
      %v3914 = vmul.f32 %v3722, %v3882
      %v3915 = vmul.f32 %v3723, %v3883
      %v3916 = vmul.f32 %v3724, %v3884
      %v3917 = vmul.f32 %v3725, %v3885
      %3918 = vst [vmem:[#allocation3] sm:$0xff] 0.0
      %3919 = vst [vmem:[#allocation3 + $0x8] sm:$0xff] 0.0
      %3920 = vst [vmem:[#allocation3 + $0x10] sm:$0x3] 0.0
      %3921 = vst [vmem:[#allocation3 + $0x18] sm:$0xff] 0.0
      %3922 = vst [vmem:[#allocation3 + $0x20] sm:$0xff] 0.0
      %3923 = vst [vmem:[#allocation3 + $0x28] sm:$0x3] 0.0
      %3924 = vst [vmem:[#allocation3 + $0x30] sm:$0xff] 0.0
      %3925 = vst [vmem:[#allocation3 + $0x38] sm:$0xff] 0.0
      %3926 = vst [vmem:[#allocation3 + $0x40] sm:$0x3] 0.0
      %3927 = vst [vmem:[#allocation3 + $0x48] sm:$0xff] 0.0
      %3928 = vst [vmem:[#allocation3 + $0x50] sm:$0xff] 0.0
      %3929 = vst [vmem:[#allocation3 + $0x58] sm:$0x3] 0.0
      %3930 = vst [vmem:[#allocation3 + $0x60] sm:$0xff] 0.0
      %3931 = vst [vmem:[#allocation3 + $0x68] sm:$0xff] 0.0
      %3932 = vst [vmem:[#allocation3 + $0x70] sm:$0x3] 0.0
      %3933 = vst [vmem:[#allocation3 + $0x78] sm:$0xff] 0.0
      %3934 = vst [vmem:[#allocation3 + $0x80] sm:$0xff] 0.0
      %3935 = vst [vmem:[#allocation3 + $0x88] sm:$0x3] 0.0
      %3936 = vst [vmem:[#allocation3 + $0x90] sm:$0xff] 0.0
      %3937 = vst [vmem:[#allocation3 + $0x98] sm:$0xff] 0.0
      %3938 = vst [vmem:[#allocation3 + $0xa0] sm:$0x3] 0.0
      %3939 = vst [vmem:[#allocation3 + $0xa8] sm:$0xff] 0.0
      %3940 = vst [vmem:[#allocation3 + $0xb0] sm:$0xff] 0.0
      %3941 = vst [vmem:[#allocation3 + $0xb8] sm:$0x3] 0.0
      %3942 = vst [vmem:[#allocation3 + $0xc0] sm:$0xff] 0.0
      %3943 = vst [vmem:[#allocation3 + $0xc8] sm:$0xff] 0.0
      %3944 = vst [vmem:[#allocation3 + $0xd0] sm:$0x3] 0.0
      %3945 = vst [vmem:[#allocation3 + $0xd8] sm:$0xff] 0.0
      %3946 = vst [vmem:[#allocation3 + $0xe0] sm:$0xff] 0.0
      %3947 = vst [vmem:[#allocation3 + $0xe8] sm:$0x3] 0.0
      %3948 = vst [vmem:[#allocation3 + $0xf0] sm:$0xff] 0.0
      %3949 = vst [vmem:[#allocation3 + $0xf8] sm:$0xff] 0.0
      %3950 = vst [vmem:[#allocation3 + $0x100] sm:$0x3] 0.0
      %3951 = vst [vmem:[#allocation3 + $0x108] sm:$0xff] 0.0
      %3952 = vst [vmem:[#allocation3 + $0x110] sm:$0xff] 0.0
      %3953 = vst [vmem:[#allocation3 + $0x118] sm:$0x3] 0.0
      %3954 = vst [vmem:[#allocation3 + $0x120] sm:$0xff] 0.0
      %3955 = vst [vmem:[#allocation3 + $0x128] sm:$0xff] 0.0
      %3956 = vst [vmem:[#allocation3 + $0x130] sm:$0x3] 0.0
      %3957 = vst [vmem:[#allocation3 + $0x138] sm:$0xff] 0.0
      %3958 = vst [vmem:[#allocation3 + $0x140] sm:$0xff] 0.0
      %3959 = vst [vmem:[#allocation3 + $0x148] sm:$0x3] 0.0
      %3960 = vst [vmem:[#allocation3 + $0x150] sm:$0xff] 0.0
      %3961 = vst [vmem:[#allocation3 + $0x158] sm:$0xff] 0.0
      %3962 = vst [vmem:[#allocation3 + $0x160] sm:$0x3] 0.0
      %3963 = vst [vmem:[#allocation3 + $0x168] sm:$0xff] 0.0
      %3964 = vst [vmem:[#allocation3 + $0x170] sm:$0xff] 0.0
      %3965 = vst [vmem:[#allocation3 + $0x178] sm:$0x3] 0.0
      %3966 = vst [vmem:[#allocation3 + $0x180] sm:$0xff] 0.0
      %3967 = vst [vmem:[#allocation3 + $0x188] sm:$0xff] 0.0
      %3968 = vst [vmem:[#allocation3 + $0x190] sm:$0x3] 0.0
      %3969 = vst [vmem:[#allocation3 + $0x198] sm:$0xff] 0.0
      %3970 = vst [vmem:[#allocation3 + $0x1a0] sm:$0xff] 0.0
      %3971 = vst [vmem:[#allocation3 + $0x1a8] sm:$0x3] 0.0
      %s3972 = scalar_lea.vmem [#allocation3], 24
      %3973 = vst [vmem:[%s3972 + $0x1] sm:$0xff] %v3886
      %3974 = vst [vmem:[%s3972 + $0x9] sm:$0xff] %v3887
      %3975 = vst [vmem:[%s3972 + $0x19] sm:$0xff] %v3888
      %3976 = vst [vmem:[%s3972 + $0x21] sm:$0xff] %v3889
      %3977 = vst [vmem:[%s3972 + $0x31] sm:$0xff] %v3890
      %3978 = vst [vmem:[%s3972 + $0x39] sm:$0xff] %v3891
      %3979 = vst [vmem:[%s3972 + $0x49] sm:$0xff] %v3892
      %3980 = vst [vmem:[%s3972 + $0x51] sm:$0xff] %v3893
      %3981 = vst [vmem:[%s3972 + $0x61] sm:$0xff] %v3894
      %3982 = vst [vmem:[%s3972 + $0x69] sm:$0xff] %v3895
      %3983 = vst [vmem:[%s3972 + $0x79] sm:$0xff] %v3896
      %3984 = vst [vmem:[%s3972 + $0x81] sm:$0xff] %v3897
      %3985 = vst [vmem:[%s3972 + $0x91] sm:$0xff] %v3898
      %3986 = vst [vmem:[%s3972 + $0x99] sm:$0xff] %v3899
      %3987 = vst [vmem:[%s3972 + $0xa9] sm:$0xff] %v3900
      %3988 = vst [vmem:[%s3972 + $0xb1] sm:$0xff] %v3901
      %3989 = vst [vmem:[%s3972 + $0xc1] sm:$0xff] %v3902
      %3990 = vst [vmem:[%s3972 + $0xc9] sm:$0xff] %v3903
      %3991 = vst [vmem:[%s3972 + $0xd9] sm:$0xff] %v3904
      %3992 = vst [vmem:[%s3972 + $0xe1] sm:$0xff] %v3905
      %3993 = vst [vmem:[%s3972 + $0xf1] sm:$0xff] %v3906
      %3994 = vst [vmem:[%s3972 + $0xf9] sm:$0xff] %v3907
      %3995 = vst [vmem:[%s3972 + $0x109] sm:$0xff] %v3908
      %3996 = vst [vmem:[%s3972 + $0x111] sm:$0xff] %v3909
      %3997 = vst [vmem:[%s3972 + $0x121] sm:$0xff] %v3910
      %3998 = vst [vmem:[%s3972 + $0x129] sm:$0xff] %v3911
      %3999 = vst [vmem:[%s3972 + $0x139] sm:$0xff] %v3912
      %4000 = vst [vmem:[%s3972 + $0x141] sm:$0xff] %v3913
      %4001 = vst [vmem:[%s3972 + $0x151] sm:$0xff] %v3914
      %4002 = vst [vmem:[%s3972 + $0x159] sm:$0xff] %v3915
      %4003 = vst [vmem:[%s3972 + $0x169] sm:$0xff] %v3916
      %4004 = vst [vmem:[%s3972 + $0x171] sm:$0xff] %v3917
      %v4005 = vld [vmem:[#allocation3] sm:$0xff]
      %v4006 = vld [vmem:[#allocation3 + $0x8] sm:$0xff]
      %v4007 = vld [vmem:[#allocation3 + $0x18] sm:$0xff]
      %v4008 = vld [vmem:[#allocation3 + $0x20] sm:$0xff]
      %v4009 = vld [vmem:[#allocation3 + $0x30] sm:$0xff]
      %v4010 = vld [vmem:[#allocation3 + $0x38] sm:$0xff]
      %v4011 = vld [vmem:[#allocation3 + $0x48] sm:$0xff]
      %v4012 = vld [vmem:[#allocation3 + $0x50] sm:$0xff]
      %v4013 = vld [vmem:[#allocation3 + $0x60] sm:$0xff]
      %v4014 = vld [vmem:[#allocation3 + $0x68] sm:$0xff]
      %v4015 = vld [vmem:[#allocation3 + $0x78] sm:$0xff]
      %v4016 = vld [vmem:[#allocation3 + $0x80] sm:$0xff]
      %v4017 = vld [vmem:[#allocation3 + $0x90] sm:$0xff]
      %v4018 = vld [vmem:[#allocation3 + $0x98] sm:$0xff]
      %v4019 = vld [vmem:[#allocation3 + $0xa8] sm:$0xff]
      %v4020 = vld [vmem:[#allocation3 + $0xb0] sm:$0xff]
      %v4021 = vld [vmem:[#allocation3 + $0xc0] sm:$0xff]
      %v4022 = vld [vmem:[#allocation3 + $0xc8] sm:$0xff]
      %v4023 = vld [vmem:[#allocation3 + $0xd8] sm:$0xff]
      %v4024 = vld [vmem:[#allocation3 + $0xe0] sm:$0xff]
      %v4025 = vld [vmem:[#allocation3 + $0xf0] sm:$0xff]
      %v4026 = vld [vmem:[#allocation3 + $0xf8] sm:$0xff]
      %v4027 = vld [vmem:[#allocation3 + $0x108] sm:$0xff]
      %v4028 = vld [vmem:[#allocation3 + $0x110] sm:$0xff]
      %v4029 = vld [vmem:[#allocation3 + $0x120] sm:$0xff]
      %v4030 = vld [vmem:[#allocation3 + $0x128] sm:$0xff]
      %v4031 = vld [vmem:[#allocation3 + $0x138] sm:$0xff]
      %v4032 = vld [vmem:[#allocation3 + $0x140] sm:$0xff]
      %v4033 = vld [vmem:[#allocation3 + $0x150] sm:$0xff]
      %v4034 = vld [vmem:[#allocation3 + $0x158] sm:$0xff]
      %v4035 = vld [vmem:[#allocation3 + $0x168] sm:$0xff]
      %v4036 = vld [vmem:[#allocation3 + $0x170] sm:$0xff]
      %v4037 = vpack.c.bf16 %v4006, %v4005
      %v4038 = vpack.c.bf16 %v4008, %v4007
      %v4039 = vpack.c.bf16 %v4010, %v4009
      %v4040 = vpack.c.bf16 %v4012, %v4011
      %v4041 = vpack.c.bf16 %v4014, %v4013
      %v4042 = vpack.c.bf16 %v4016, %v4015
      %v4043 = vpack.c.bf16 %v4018, %v4017
      %v4044 = vpack.c.bf16 %v4020, %v4019
      %v4045 = vpack.c.bf16 %v4022, %v4021
      %v4046 = vpack.c.bf16 %v4024, %v4023
      %v4047 = vpack.c.bf16 %v4026, %v4025
      %v4048 = vpack.c.bf16 %v4028, %v4027
      %v4049 = vpack.c.bf16 %v4030, %v4029
      %v4050 = vpack.c.bf16 %v4032, %v4031
      %v4051 = vpack.c.bf16 %v4034, %v4033
      %v4052 = vpack.c.bf16 %v4036, %v4035
      %v4053 = vld [vmem:[%s3] sm:$0xf]
      %v4054 = vld [vmem:[%s3 + $0x4] sm:$0xf]
      %v4055 = vld [vmem:[%s3 + $0x8] sm:$0xf]
      %v4056 = vld [vmem:[%s3 + $0xc] sm:$0xf]
      %v4057 = vld [vmem:[%s3 + $0x10] sm:$0xf]
      %v4058 = vld [vmem:[%s3 + $0x14] sm:$0xf]
      %v4059 = vld [vmem:[%s3 + $0x18] sm:$0xf]
      %v4060 = vld [vmem:[%s3 + $0x1c] sm:$0xf]
      %v4061 = vld [vmem:[%s3 + $0x20] sm:$0xf]
      %v4062 = vld [vmem:[%s3 + $0x24] sm:$0xf]
      %v4063 = vld [vmem:[%s3 + $0x28] sm:$0xf]
      %v4064 = vld [vmem:[%s3 + $0x2c] sm:$0xf]
      %v4065 = vld [vmem:[%s3 + $0x30] sm:$0xf]
      %v4066 = vld [vmem:[%s3 + $0x34] sm:$0xf]
      %v4067 = vld [vmem:[%s3 + $0x38] sm:$0xf]
      %v4068 = vld [vmem:[%s3 + $0x3c] sm:$0xf]
      %v4085 = vunpack.c.l.b16 %v4053
      %v4086 = vunpack.c.l.b16 %v4054
      %v4087 = vunpack.c.l.b16 %v4055
      %v4088 = vunpack.c.l.b16 %v4056
      %v4089 = vunpack.c.l.b16 %v4057
      %v4090 = vunpack.c.l.b16 %v4058
      %v4091 = vunpack.c.l.b16 %v4059
      %v4092 = vunpack.c.l.b16 %v4060
      %v4093 = vunpack.c.l.b16 %v4061
      %v4094 = vunpack.c.l.b16 %v4062
      %v4095 = vunpack.c.l.b16 %v4063
      %v4096 = vunpack.c.l.b16 %v4064
      %v4097 = vunpack.c.l.b16 %v4065
      %v4098 = vunpack.c.l.b16 %v4066
      %v4099 = vunpack.c.l.b16 %v4067
      %v4100 = vunpack.c.l.b16 %v4068
      %v4101 = vpack.c.b16 %v4086, %v4085
      %v4102 = vpack.c.b16 %v4088, %v4087
      %v4103 = vpack.c.b16 %v4090, %v4089
      %v4104 = vpack.c.b16 %v4092, %v4091
      %v4105 = vpack.c.b16 %v4094, %v4093
      %v4106 = vpack.c.b16 %v4096, %v4095
      %v4107 = vpack.c.b16 %v4098, %v4097
      %v4108 = vpack.c.b16 %v4100, %v4099
      %4117 = vmatprep.subr.bf16.mxu0 0
      %4118 = vmatpush1.bf16.msra.mxu0 %v4101
      %4119 = vmatprep.subr.bf16.mxu0 0
      %4120 = vmatpush1.bf16.msra.mxu0 %v4102
      %4121 = vmatprep.subr.bf16.mxu0 0
      %4122 = vmatpush1.bf16.msra.mxu0 %v4103
      %4123 = vmatprep.subr.bf16.mxu0 0
      %4124 = vmatpush1.bf16.msra.mxu0 %v4104
      %4125 = vmatprep.subr.bf16.mxu0 0
      %4126 = vmatpush1.bf16.msra.mxu0 %v4105
      %4127 = vmatprep.subr.bf16.mxu0 0
      %4128 = vmatpush1.bf16.msra.mxu0 %v4106
      %4129 = vmatprep.subr.bf16.mxu0 0
      %4130 = vmatpush1.bf16.msra.mxu0 %v4107
      %4131 = vmatprep.subr.bf16.mxu0 0
      %4132 = vmatpush1.bf16.msra.mxu0 %v4108
      %4133 = vmatprep.subr.bf16.mxu0 0
      %4134 = vmatpush1.bf16.msra.mxu0 0
      %4135 = vmatprep.subr.bf16.mxu0 0
      %4136 = vmatpush1.bf16.msra.mxu0 0
      %4137 = vmatprep.subr.bf16.mxu0 0
      %4138 = vmatpush1.bf16.msra.mxu0 0
      %4139 = vmatprep.subr.bf16.mxu0 0
      %4140 = vmatpush1.bf16.msra.mxu0 0
      %4141 = vmatprep.subr.bf16.mxu0 0
      %4142 = vmatpush1.bf16.msra.mxu0 0
      %4143 = vmatprep.subr.bf16.mxu0 0
      %4144 = vmatpush1.bf16.msra.mxu0 0
      %4145 = vmatprep.subr.bf16.mxu0 0
      %4146 = vmatpush1.bf16.msra.mxu0 0
      %4147 = vmatprep.subr.bf16.mxu0 0
      %4148 = vmatpush1.bf16.msra.mxu0 0
      %4149 = vmatprep.mubr.bf16.mxu0 0
      %4150 = vmatmul.mubr.bf16.gmra.mrb[0].mxu0 %v4037
      %v4151 = vpop.f32.mrb[0].mxu0
      %v4152 = vadd.f32 0.0, %v4151
      %v4153 = vpop.f32.mrb[0].mxu0
      %v4154 = vpop.f32.mrb[0].mxu0
      %v4155 = vadd.f32 0.0, %v4154
      %v4156 = vpop.f32.mrb[0].mxu0
      %4157 = vmatprep.mubr.bf16.mxu0 0
      %4158 = vmatmul.mubr.bf16.gmra.mrb[0].mxu0 %v4038
      %v4159 = vpop.f32.mrb[0].mxu0
      %v4160 = vadd.f32 0.0, %v4159
      %v4161 = vpop.f32.mrb[0].mxu0
      %v4162 = vpop.f32.mrb[0].mxu0
      %v4163 = vadd.f32 0.0, %v4162
      %v4164 = vpop.f32.mrb[0].mxu0
      %4165 = vmatprep.mubr.bf16.mxu0 0
      %4166 = vmatmul.mubr.bf16.gmra.mrb[0].mxu0 %v4039
      %v4167 = vpop.f32.mrb[0].mxu0
      %v4168 = vadd.f32 0.0, %v4167
      %v4169 = vpop.f32.mrb[0].mxu0
      %v4170 = vpop.f32.mrb[0].mxu0
      %v4171 = vadd.f32 0.0, %v4170
      %v4172 = vpop.f32.mrb[0].mxu0
      %4173 = vmatprep.mubr.bf16.mxu0 0
      %4174 = vmatmul.mubr.bf16.gmra.mrb[0].mxu0 %v4040
      %v4175 = vpop.f32.mrb[0].mxu0
      %v4176 = vadd.f32 0.0, %v4175
      %v4177 = vpop.f32.mrb[0].mxu0
      %v4178 = vpop.f32.mrb[0].mxu0
      %v4179 = vadd.f32 0.0, %v4178
      %v4180 = vpop.f32.mrb[0].mxu0
      %4181 = vmatprep.mubr.bf16.mxu0 0
      %4182 = vmatmul.mubr.bf16.gmra.mrb[0].mxu0 %v4041
      %v4183 = vpop.f32.mrb[0].mxu0
      %v4184 = vadd.f32 0.0, %v4183
      %v4185 = vpop.f32.mrb[0].mxu0
      %v4186 = vpop.f32.mrb[0].mxu0
      %v4187 = vadd.f32 0.0, %v4186
      %v4188 = vpop.f32.mrb[0].mxu0
      %4189 = vmatprep.mubr.bf16.mxu0 0
      %4190 = vmatmul.mubr.bf16.gmra.mrb[0].mxu0 %v4042
      %v4191 = vpop.f32.mrb[0].mxu0
      %v4192 = vadd.f32 0.0, %v4191
      %v4193 = vpop.f32.mrb[0].mxu0
      %v4194 = vpop.f32.mrb[0].mxu0
      %v4195 = vadd.f32 0.0, %v4194
      %v4196 = vpop.f32.mrb[0].mxu0
      %4197 = vmatprep.mubr.bf16.mxu0 0
      %4198 = vmatmul.mubr.bf16.gmra.mrb[0].mxu0 %v4043
      %v4199 = vpop.f32.mrb[0].mxu0
      %v4200 = vadd.f32 0.0, %v4199
      %v4201 = vpop.f32.mrb[0].mxu0
      %v4202 = vpop.f32.mrb[0].mxu0
      %v4203 = vadd.f32 0.0, %v4202
      %v4204 = vpop.f32.mrb[0].mxu0
      %4205 = vmatprep.mubr.bf16.mxu0 0
      %4206 = vmatmul.mubr.bf16.gmra.mrb[0].mxu0 %v4044
      %v4207 = vpop.f32.mrb[0].mxu0
      %v4208 = vadd.f32 0.0, %v4207
      %v4209 = vpop.f32.mrb[0].mxu0
      %v4210 = vpop.f32.mrb[0].mxu0
      %v4211 = vadd.f32 0.0, %v4210
      %v4212 = vpop.f32.mrb[0].mxu0
      %4213 = vmatprep.mubr.bf16.mxu0 0
      %4214 = vmatmul.mubr.bf16.gmra.mrb[0].mxu0 %v4045
      %v4215 = vpop.f32.mrb[0].mxu0
      %v4216 = vadd.f32 0.0, %v4215
      %v4217 = vpop.f32.mrb[0].mxu0
      %v4218 = vpop.f32.mrb[0].mxu0
      %v4219 = vadd.f32 0.0, %v4218
      %v4220 = vpop.f32.mrb[0].mxu0
      %4221 = vmatprep.mubr.bf16.mxu0 0
      %4222 = vmatmul.mubr.bf16.gmra.mrb[0].mxu0 %v4046
      %v4223 = vpop.f32.mrb[0].mxu0
      %v4224 = vadd.f32 0.0, %v4223
      %v4225 = vpop.f32.mrb[0].mxu0
      %v4226 = vpop.f32.mrb[0].mxu0
      %v4227 = vadd.f32 0.0, %v4226
      %v4228 = vpop.f32.mrb[0].mxu0
      %4229 = vmatprep.mubr.bf16.mxu0 0
      %4230 = vmatmul.mubr.bf16.gmra.mrb[0].mxu0 %v4047
      %v4231 = vpop.f32.mrb[0].mxu0
      %v4232 = vadd.f32 0.0, %v4231
      %v4233 = vpop.f32.mrb[0].mxu0
      %v4234 = vpop.f32.mrb[0].mxu0
      %v4235 = vadd.f32 0.0, %v4234
      %v4236 = vpop.f32.mrb[0].mxu0
      %4237 = vmatprep.mubr.bf16.mxu0 0
      %4238 = vmatmul.mubr.bf16.gmra.mrb[0].mxu0 %v4048
      %v4239 = vpop.f32.mrb[0].mxu0
      %v4240 = vadd.f32 0.0, %v4239
      %v4241 = vpop.f32.mrb[0].mxu0
      %v4242 = vpop.f32.mrb[0].mxu0
      %v4243 = vadd.f32 0.0, %v4242
      %v4244 = vpop.f32.mrb[0].mxu0
      %4245 = vmatprep.mubr.bf16.mxu0 0
      %4246 = vmatmul.mubr.bf16.gmra.mrb[0].mxu0 %v4049
      %v4247 = vpop.f32.mrb[0].mxu0
      %v4248 = vadd.f32 0.0, %v4247
      %v4249 = vpop.f32.mrb[0].mxu0
      %v4250 = vpop.f32.mrb[0].mxu0
      %v4251 = vadd.f32 0.0, %v4250
      %v4252 = vpop.f32.mrb[0].mxu0
      %4253 = vmatprep.mubr.bf16.mxu0 0
      %4254 = vmatmul.mubr.bf16.gmra.mrb[0].mxu0 %v4050
      %v4255 = vpop.f32.mrb[0].mxu0
      %v4256 = vadd.f32 0.0, %v4255
      %v4257 = vpop.f32.mrb[0].mxu0
      %v4258 = vpop.f32.mrb[0].mxu0
      %v4259 = vadd.f32 0.0, %v4258
      %v4260 = vpop.f32.mrb[0].mxu0
      %4261 = vmatprep.mubr.bf16.mxu0 0
      %4262 = vmatmul.mubr.bf16.gmra.mrb[0].mxu0 %v4051
      %v4263 = vpop.f32.mrb[0].mxu0
      %v4264 = vadd.f32 0.0, %v4263
      %v4265 = vpop.f32.mrb[0].mxu0
      %v4266 = vpop.f32.mrb[0].mxu0
      %v4267 = vadd.f32 0.0, %v4266
      %v4268 = vpop.f32.mrb[0].mxu0
      %4269 = vmatprep.mubr.bf16.mxu0 0
      %4270 = vmatmul.mubr.bf16.gmra.mrb[0].mxu0 %v4052
      %v4271 = vpop.f32.mrb[0].mxu0
      %v4272 = vadd.f32 0.0, %v4271
      %v4273 = vpop.f32.mrb[0].mxu0
      %v4274 = vpop.f32.mrb[0].mxu0
      %v4275 = vadd.f32 0.0, %v4274
      %v4276 = vpop.f32.mrb[0].mxu0
      %4277 = vdwg.mxu0
      %4278 = vst [vmem:[#allocation4] sm:$0xff] %v4152
      %4279 = vst [vmem:[#allocation4 + $0x8] sm:$0xff] %v4155
      %4280 = vst [vmem:[#allocation4 + $0x10] sm:$0xff] %v4160
      %4281 = vst [vmem:[#allocation4 + $0x18] sm:$0xff] %v4163
      %4282 = vst [vmem:[#allocation4 + $0x20] sm:$0xff] %v4168
      %4283 = vst [vmem:[#allocation4 + $0x28] sm:$0xff] %v4171
      %4284 = vst [vmem:[#allocation4 + $0x30] sm:$0xff] %v4176
      %4285 = vst [vmem:[#allocation4 + $0x38] sm:$0xff] %v4179
      %4286 = vst [vmem:[#allocation4 + $0x40] sm:$0xff] %v4184
      %4287 = vst [vmem:[#allocation4 + $0x48] sm:$0xff] %v4187
      %4288 = vst [vmem:[#allocation4 + $0x50] sm:$0xff] %v4192
      %4289 = vst [vmem:[#allocation4 + $0x58] sm:$0xff] %v4195
      %4290 = vst [vmem:[#allocation4 + $0x60] sm:$0xff] %v4200
      %4291 = vst [vmem:[#allocation4 + $0x68] sm:$0xff] %v4203
      %4292 = vst [vmem:[#allocation4 + $0x70] sm:$0xff] %v4208
      %4293 = vst [vmem:[#allocation4 + $0x78] sm:$0xff] %v4211
      %4294 = vst [vmem:[#allocation4 + $0x80] sm:$0xff] %v4216
      %4295 = vst [vmem:[#allocation4 + $0x88] sm:$0xff] %v4219
      %4296 = vst [vmem:[#allocation4 + $0x90] sm:$0xff] %v4224
      %4297 = vst [vmem:[#allocation4 + $0x98] sm:$0xff] %v4227
      %4298 = vst [vmem:[#allocation4 + $0xa0] sm:$0xff] %v4232
      %4299 = vst [vmem:[#allocation4 + $0xa8] sm:$0xff] %v4235
      %4300 = vst [vmem:[#allocation4 + $0xb0] sm:$0xff] %v4240
      %4301 = vst [vmem:[#allocation4 + $0xb8] sm:$0xff] %v4243
      %4302 = vst [vmem:[#allocation4 + $0xc0] sm:$0xff] %v4248
      %4303 = vst [vmem:[#allocation4 + $0xc8] sm:$0xff] %v4251
      %4304 = vst [vmem:[#allocation4 + $0xd0] sm:$0xff] %v4256
      %4305 = vst [vmem:[#allocation4 + $0xd8] sm:$0xff] %v4259
      %4306 = vst [vmem:[#allocation4 + $0xe0] sm:$0xff] %v4264
      %4307 = vst [vmem:[#allocation4 + $0xe8] sm:$0xff] %v4267
      %4308 = vst [vmem:[#allocation4 + $0xf0] sm:$0xff] %v4272
      %4309 = vst [vmem:[#allocation4 + $0xf8] sm:$0xff] %v4275
      %v4310 = vld [vmem:[#allocation3 + $0x1] sm:$0xff]
      %v4311 = vld [vmem:[#allocation3 + $0x9] sm:$0xff]
      %v4312 = vld [vmem:[#allocation3 + $0x19] sm:$0xff]
      %v4313 = vld [vmem:[#allocation3 + $0x21] sm:$0xff]
      %v4314 = vld [vmem:[#allocation3 + $0x31] sm:$0xff]
      %v4315 = vld [vmem:[#allocation3 + $0x39] sm:$0xff]
      %v4316 = vld [vmem:[#allocation3 + $0x49] sm:$0xff]
      %v4317 = vld [vmem:[#allocation3 + $0x51] sm:$0xff]
      %v4318 = vld [vmem:[#allocation3 + $0x61] sm:$0xff]
      %v4319 = vld [vmem:[#allocation3 + $0x69] sm:$0xff]
      %v4320 = vld [vmem:[#allocation3 + $0x79] sm:$0xff]
      %v4321 = vld [vmem:[#allocation3 + $0x81] sm:$0xff]
      %v4322 = vld [vmem:[#allocation3 + $0x91] sm:$0xff]
      %v4323 = vld [vmem:[#allocation3 + $0x99] sm:$0xff]
      %v4324 = vld [vmem:[#allocation3 + $0xa9] sm:$0xff]
      %v4325 = vld [vmem:[#allocation3 + $0xb1] sm:$0xff]
      %v4326 = vld [vmem:[#allocation3 + $0xc1] sm:$0xff]
      %v4327 = vld [vmem:[#allocation3 + $0xc9] sm:$0xff]
      %v4328 = vld [vmem:[#allocation3 + $0xd9] sm:$0xff]
      %v4329 = vld [vmem:[#allocation3 + $0xe1] sm:$0xff]
      %v4330 = vld [vmem:[#allocation3 + $0xf1] sm:$0xff]
      %v4331 = vld [vmem:[#allocation3 + $0xf9] sm:$0xff]
      %v4332 = vld [vmem:[#allocation3 + $0x109] sm:$0xff]
      %v4333 = vld [vmem:[#allocation3 + $0x111] sm:$0xff]
      %v4334 = vld [vmem:[#allocation3 + $0x121] sm:$0xff]
      %v4335 = vld [vmem:[#allocation3 + $0x129] sm:$0xff]
      %v4336 = vld [vmem:[#allocation3 + $0x139] sm:$0xff]
      %v4337 = vld [vmem:[#allocation3 + $0x141] sm:$0xff]
      %v4338 = vld [vmem:[#allocation3 + $0x151] sm:$0xff]
      %v4339 = vld [vmem:[#allocation3 + $0x159] sm:$0xff]
      %v4340 = vld [vmem:[#allocation3 + $0x169] sm:$0xff]
      %v4341 = vld [vmem:[#allocation3 + $0x171] sm:$0xff]
      %v4342 = vpack.c.bf16 %v4311, %v4310
      %v4343 = vpack.c.bf16 %v4313, %v4312
      %v4344 = vpack.c.bf16 %v4315, %v4314
      %v4345 = vpack.c.bf16 %v4317, %v4316
      %v4346 = vpack.c.bf16 %v4319, %v4318
      %v4347 = vpack.c.bf16 %v4321, %v4320
      %v4348 = vpack.c.bf16 %v4323, %v4322
      %v4349 = vpack.c.bf16 %v4325, %v4324
      %v4350 = vpack.c.bf16 %v4327, %v4326
      %v4351 = vpack.c.bf16 %v4329, %v4328
      %v4352 = vpack.c.bf16 %v4331, %v4330
      %v4353 = vpack.c.bf16 %v4333, %v4332
      %v4354 = vpack.c.bf16 %v4335, %v4334
      %v4355 = vpack.c.bf16 %v4337, %v4336
      %v4356 = vpack.c.bf16 %v4339, %v4338
      %v4357 = vpack.c.bf16 %v4341, %v4340
      %s4358 = scalar_lea.vmem %s3, 64
      %v4359 = vld [vmem:[%s4358] sm:$0xf]
      %v4360 = vld [vmem:[%s4358 + $0x4] sm:$0xf]
      %v4361 = vld [vmem:[%s4358 + $0x8] sm:$0xf]
      %v4362 = vld [vmem:[%s4358 + $0xc] sm:$0xf]
      %v4363 = vld [vmem:[%s4358 + $0x10] sm:$0xf]
      %v4364 = vld [vmem:[%s4358 + $0x14] sm:$0xf]
      %v4365 = vld [vmem:[%s4358 + $0x18] sm:$0xf]
      %v4366 = vld [vmem:[%s4358 + $0x1c] sm:$0xf]
      %v4367 = vld [vmem:[%s4358 + $0x20] sm:$0xf]
      %v4368 = vld [vmem:[%s4358 + $0x24] sm:$0xf]
      %v4369 = vld [vmem:[%s4358 + $0x28] sm:$0xf]
      %v4370 = vld [vmem:[%s4358 + $0x2c] sm:$0xf]
      %v4371 = vld [vmem:[%s4358 + $0x30] sm:$0xf]
      %v4372 = vld [vmem:[%s4358 + $0x34] sm:$0xf]
      %v4373 = vld [vmem:[%s4358 + $0x38] sm:$0xf]
      %v4374 = vld [vmem:[%s4358 + $0x3c] sm:$0xf]
      %v4391 = vunpack.c.l.b16 %v4359
      %v4392 = vunpack.c.l.b16 %v4360
      %v4393 = vunpack.c.l.b16 %v4361
      %v4394 = vunpack.c.l.b16 %v4362
      %v4395 = vunpack.c.l.b16 %v4363
      %v4396 = vunpack.c.l.b16 %v4364
      %v4397 = vunpack.c.l.b16 %v4365
      %v4398 = vunpack.c.l.b16 %v4366
      %v4399 = vunpack.c.l.b16 %v4367
      %v4400 = vunpack.c.l.b16 %v4368
      %v4401 = vunpack.c.l.b16 %v4369
      %v4402 = vunpack.c.l.b16 %v4370
      %v4403 = vunpack.c.l.b16 %v4371
      %v4404 = vunpack.c.l.b16 %v4372
      %v4405 = vunpack.c.l.b16 %v4373
      %v4406 = vunpack.c.l.b16 %v4374
      %v4407 = vpack.c.b16 %v4392, %v4391
      %v4408 = vpack.c.b16 %v4394, %v4393
      %v4409 = vpack.c.b16 %v4396, %v4395
      %v4410 = vpack.c.b16 %v4398, %v4397
      %v4411 = vpack.c.b16 %v4400, %v4399
      %v4412 = vpack.c.b16 %v4402, %v4401
      %v4413 = vpack.c.b16 %v4404, %v4403
      %v4414 = vpack.c.b16 %v4406, %v4405
      %4423 = vmatprep.subr.bf16.mxu0 0
      %4424 = vmatpush1.bf16.msra.mxu0 %v4407
      %4425 = vmatprep.subr.bf16.mxu0 0
      %4426 = vmatpush1.bf16.msra.mxu0 %v4408
      %4427 = vmatprep.subr.bf16.mxu0 0
      %4428 = vmatpush1.bf16.msra.mxu0 %v4409
      %4429 = vmatprep.subr.bf16.mxu0 0
      %4430 = vmatpush1.bf16.msra.mxu0 %v4410
      %4431 = vmatprep.subr.bf16.mxu0 0
      %4432 = vmatpush1.bf16.msra.mxu0 %v4411
      %4433 = vmatprep.subr.bf16.mxu0 0
      %4434 = vmatpush1.bf16.msra.mxu0 %v4412
      %4435 = vmatprep.subr.bf16.mxu0 0
      %4436 = vmatpush1.bf16.msra.mxu0 %v4413
      %4437 = vmatprep.subr.bf16.mxu0 0
      %4438 = vmatpush1.bf16.msra.mxu0 %v4414
      %4439 = vmatprep.subr.bf16.mxu0 0
      %4440 = vmatpush1.bf16.msra.mxu0 0
      %4441 = vmatprep.subr.bf16.mxu0 0
      %4442 = vmatpush1.bf16.msra.mxu0 0
      %4443 = vmatprep.subr.bf16.mxu0 0
      %4444 = vmatpush1.bf16.msra.mxu0 0
      %4445 = vmatprep.subr.bf16.mxu0 0
      %4446 = vmatpush1.bf16.msra.mxu0 0
      %4447 = vmatprep.subr.bf16.mxu0 0
      %4448 = vmatpush1.bf16.msra.mxu0 0
      %4449 = vmatprep.subr.bf16.mxu0 0
      %4450 = vmatpush1.bf16.msra.mxu0 0
      %4451 = vmatprep.subr.bf16.mxu0 0
      %4452 = vmatpush1.bf16.msra.mxu0 0
      %4453 = vmatprep.subr.bf16.mxu0 0
      %4454 = vmatpush1.bf16.msra.mxu0 0
      %4455 = vmatprep.mubr.bf16.mxu0 0
      %4456 = vmatmul.mubr.bf16.gmra.mrb[0].mxu0 %v4342
      %v4457 = vpop.f32.mrb[0].mxu0
      %v4458 = vadd.f32 0.0, %v4457
      %v4459 = vpop.f32.mrb[0].mxu0
      %v4460 = vpop.f32.mrb[0].mxu0
      %v4461 = vadd.f32 0.0, %v4460
      %v4462 = vpop.f32.mrb[0].mxu0
      %4463 = vmatprep.mubr.bf16.mxu0 0
      %4464 = vmatmul.mubr.bf16.gmra.mrb[0].mxu0 %v4343
      %v4465 = vpop.f32.mrb[0].mxu0
      %v4466 = vadd.f32 0.0, %v4465
      %v4467 = vpop.f32.mrb[0].mxu0
      %v4468 = vpop.f32.mrb[0].mxu0
      %v4469 = vadd.f32 0.0, %v4468
      %v4470 = vpop.f32.mrb[0].mxu0
      %4471 = vmatprep.mubr.bf16.mxu0 0
      %4472 = vmatmul.mubr.bf16.gmra.mrb[0].mxu0 %v4344
      %v4473 = vpop.f32.mrb[0].mxu0
      %v4474 = vadd.f32 0.0, %v4473
      %v4475 = vpop.f32.mrb[0].mxu0
      %v4476 = vpop.f32.mrb[0].mxu0
      %v4477 = vadd.f32 0.0, %v4476
      %v4478 = vpop.f32.mrb[0].mxu0
      %4479 = vmatprep.mubr.bf16.mxu0 0
      %4480 = vmatmul.mubr.bf16.gmra.mrb[0].mxu0 %v4345
      %v4481 = vpop.f32.mrb[0].mxu0
      %v4482 = vadd.f32 0.0, %v4481
      %v4483 = vpop.f32.mrb[0].mxu0
      %v4484 = vpop.f32.mrb[0].mxu0
      %v4485 = vadd.f32 0.0, %v4484
      %v4486 = vpop.f32.mrb[0].mxu0
      %4487 = vmatprep.mubr.bf16.mxu0 0
      %4488 = vmatmul.mubr.bf16.gmra.mrb[0].mxu0 %v4346
      %v4489 = vpop.f32.mrb[0].mxu0
      %v4490 = vadd.f32 0.0, %v4489
      %v4491 = vpop.f32.mrb[0].mxu0
      %v4492 = vpop.f32.mrb[0].mxu0
      %v4493 = vadd.f32 0.0, %v4492
      %v4494 = vpop.f32.mrb[0].mxu0
      %4495 = vmatprep.mubr.bf16.mxu0 0
      %4496 = vmatmul.mubr.bf16.gmra.mrb[0].mxu0 %v4347
      %v4497 = vpop.f32.mrb[0].mxu0
      %v4498 = vadd.f32 0.0, %v4497
      %v4499 = vpop.f32.mrb[0].mxu0
      %v4500 = vpop.f32.mrb[0].mxu0
      %v4501 = vadd.f32 0.0, %v4500
      %v4502 = vpop.f32.mrb[0].mxu0
      %4503 = vmatprep.mubr.bf16.mxu0 0
      %4504 = vmatmul.mubr.bf16.gmra.mrb[0].mxu0 %v4348
      %v4505 = vpop.f32.mrb[0].mxu0
      %v4506 = vadd.f32 0.0, %v4505
      %v4507 = vpop.f32.mrb[0].mxu0
      %v4508 = vpop.f32.mrb[0].mxu0
      %v4509 = vadd.f32 0.0, %v4508
      %v4510 = vpop.f32.mrb[0].mxu0
      %4511 = vmatprep.mubr.bf16.mxu0 0
      %4512 = vmatmul.mubr.bf16.gmra.mrb[0].mxu0 %v4349
      %v4513 = vpop.f32.mrb[0].mxu0
      %v4514 = vadd.f32 0.0, %v4513
      %v4515 = vpop.f32.mrb[0].mxu0
      %v4516 = vpop.f32.mrb[0].mxu0
      %v4517 = vadd.f32 0.0, %v4516
      %v4518 = vpop.f32.mrb[0].mxu0
      %4519 = vmatprep.mubr.bf16.mxu0 0
      %4520 = vmatmul.mubr.bf16.gmra.mrb[0].mxu0 %v4350
      %v4521 = vpop.f32.mrb[0].mxu0
      %v4522 = vadd.f32 0.0, %v4521
      %v4523 = vpop.f32.mrb[0].mxu0
      %v4524 = vpop.f32.mrb[0].mxu0
      %v4525 = vadd.f32 0.0, %v4524
      %v4526 = vpop.f32.mrb[0].mxu0
      %4527 = vmatprep.mubr.bf16.mxu0 0
      %4528 = vmatmul.mubr.bf16.gmra.mrb[0].mxu0 %v4351
      %v4529 = vpop.f32.mrb[0].mxu0
      %v4530 = vadd.f32 0.0, %v4529
      %v4531 = vpop.f32.mrb[0].mxu0
      %v4532 = vpop.f32.mrb[0].mxu0
      %v4533 = vadd.f32 0.0, %v4532
      %v4534 = vpop.f32.mrb[0].mxu0
      %4535 = vmatprep.mubr.bf16.mxu0 0
      %4536 = vmatmul.mubr.bf16.gmra.mrb[0].mxu0 %v4352
      %v4537 = vpop.f32.mrb[0].mxu0
      %v4538 = vadd.f32 0.0, %v4537
      %v4539 = vpop.f32.mrb[0].mxu0
      %v4540 = vpop.f32.mrb[0].mxu0
      %v4541 = vadd.f32 0.0, %v4540
      %v4542 = vpop.f32.mrb[0].mxu0
      %4543 = vmatprep.mubr.bf16.mxu0 0
      %4544 = vmatmul.mubr.bf16.gmra.mrb[0].mxu0 %v4353
      %v4545 = vpop.f32.mrb[0].mxu0
      %v4546 = vadd.f32 0.0, %v4545
      %v4547 = vpop.f32.mrb[0].mxu0
      %v4548 = vpop.f32.mrb[0].mxu0
      %v4549 = vadd.f32 0.0, %v4548
      %v4550 = vpop.f32.mrb[0].mxu0
      %4551 = vmatprep.mubr.bf16.mxu0 0
      %4552 = vmatmul.mubr.bf16.gmra.mrb[0].mxu0 %v4354
      %v4553 = vpop.f32.mrb[0].mxu0
      %v4554 = vadd.f32 0.0, %v4553
      %v4555 = vpop.f32.mrb[0].mxu0
      %v4556 = vpop.f32.mrb[0].mxu0
      %v4557 = vadd.f32 0.0, %v4556
      %v4558 = vpop.f32.mrb[0].mxu0
      %4559 = vmatprep.mubr.bf16.mxu0 0
      %4560 = vmatmul.mubr.bf16.gmra.mrb[0].mxu0 %v4355
      %v4561 = vpop.f32.mrb[0].mxu0
      %v4562 = vadd.f32 0.0, %v4561
      %v4563 = vpop.f32.mrb[0].mxu0
      %v4564 = vpop.f32.mrb[0].mxu0
      %v4565 = vadd.f32 0.0, %v4564
      %v4566 = vpop.f32.mrb[0].mxu0
      %4567 = vmatprep.mubr.bf16.mxu0 0
      %4568 = vmatmul.mubr.bf16.gmra.mrb[0].mxu0 %v4356
      %v4569 = vpop.f32.mrb[0].mxu0
      %v4570 = vadd.f32 0.0, %v4569
      %v4571 = vpop.f32.mrb[0].mxu0
      %v4572 = vpop.f32.mrb[0].mxu0
      %v4573 = vadd.f32 0.0, %v4572
      %v4574 = vpop.f32.mrb[0].mxu0
      %4575 = vmatprep.mubr.bf16.mxu0 0
      %4576 = vmatmul.mubr.bf16.gmra.mrb[0].mxu0 %v4357
      %v4577 = vpop.f32.mrb[0].mxu0
      %v4578 = vadd.f32 0.0, %v4577
      %v4579 = vpop.f32.mrb[0].mxu0
      %v4580 = vpop.f32.mrb[0].mxu0
      %v4581 = vadd.f32 0.0, %v4580
      %v4582 = vpop.f32.mrb[0].mxu0
      %4583 = vdwg.mxu0
      %v4584 = vld [vmem:[#allocation4] sm:$0xff]
      %v4585 = vld [vmem:[#allocation4 + $0x8] sm:$0xff]
      %v4586 = vld [vmem:[#allocation4 + $0x10] sm:$0xff]
      %v4587 = vld [vmem:[#allocation4 + $0x18] sm:$0xff]
      %v4588 = vld [vmem:[#allocation4 + $0x20] sm:$0xff]
      %v4589 = vld [vmem:[#allocation4 + $0x28] sm:$0xff]
      %v4590 = vld [vmem:[#allocation4 + $0x30] sm:$0xff]
      %v4591 = vld [vmem:[#allocation4 + $0x38] sm:$0xff]
      %v4592 = vld [vmem:[#allocation4 + $0x40] sm:$0xff]
      %v4593 = vld [vmem:[#allocation4 + $0x48] sm:$0xff]
      %v4594 = vld [vmem:[#allocation4 + $0x50] sm:$0xff]
      %v4595 = vld [vmem:[#allocation4 + $0x58] sm:$0xff]
      %v4596 = vld [vmem:[#allocation4 + $0x60] sm:$0xff]
      %v4597 = vld [vmem:[#allocation4 + $0x68] sm:$0xff]
      %v4598 = vld [vmem:[#allocation4 + $0x70] sm:$0xff]
      %v4599 = vld [vmem:[#allocation4 + $0x78] sm:$0xff]
      %v4600 = vld [vmem:[#allocation4 + $0x80] sm:$0xff]
      %v4601 = vld [vmem:[#allocation4 + $0x88] sm:$0xff]
      %v4602 = vld [vmem:[#allocation4 + $0x90] sm:$0xff]
      %v4603 = vld [vmem:[#allocation4 + $0x98] sm:$0xff]
      %v4604 = vld [vmem:[#allocation4 + $0xa0] sm:$0xff]
      %v4605 = vld [vmem:[#allocation4 + $0xa8] sm:$0xff]
      %v4606 = vld [vmem:[#allocation4 + $0xb0] sm:$0xff]
      %v4607 = vld [vmem:[#allocation4 + $0xb8] sm:$0xff]
      %v4608 = vld [vmem:[#allocation4 + $0xc0] sm:$0xff]
      %v4609 = vld [vmem:[#allocation4 + $0xc8] sm:$0xff]
      %v4610 = vld [vmem:[#allocation4 + $0xd0] sm:$0xff]
      %v4611 = vld [vmem:[#allocation4 + $0xd8] sm:$0xff]
      %v4612 = vld [vmem:[#allocation4 + $0xe0] sm:$0xff]
      %v4613 = vld [vmem:[#allocation4 + $0xe8] sm:$0xff]
      %v4614 = vld [vmem:[#allocation4 + $0xf0] sm:$0xff]
      %v4615 = vld [vmem:[#allocation4 + $0xf8] sm:$0xff]
      %v4616 = vadd.f32 %v4584, %v4458
      %v4617 = vadd.f32 %v4585, %v4461
      %v4618 = vadd.f32 %v4586, %v4466
      %v4619 = vadd.f32 %v4587, %v4469
      %v4620 = vadd.f32 %v4588, %v4474
      %v4621 = vadd.f32 %v4589, %v4477
      %v4622 = vadd.f32 %v4590, %v4482
      %v4623 = vadd.f32 %v4591, %v4485
      %v4624 = vadd.f32 %v4592, %v4490
      %v4625 = vadd.f32 %v4593, %v4493
      %v4626 = vadd.f32 %v4594, %v4498
      %v4627 = vadd.f32 %v4595, %v4501
      %v4628 = vadd.f32 %v4596, %v4506
      %v4629 = vadd.f32 %v4597, %v4509
      %v4630 = vadd.f32 %v4598, %v4514
      %v4631 = vadd.f32 %v4599, %v4517
      %v4632 = vadd.f32 %v4600, %v4522
      %v4633 = vadd.f32 %v4601, %v4525
      %v4634 = vadd.f32 %v4602, %v4530
      %v4635 = vadd.f32 %v4603, %v4533
      %v4636 = vadd.f32 %v4604, %v4538
      %v4637 = vadd.f32 %v4605, %v4541
      %v4638 = vadd.f32 %v4606, %v4546
      %v4639 = vadd.f32 %v4607, %v4549
      %v4640 = vadd.f32 %v4608, %v4554
      %v4641 = vadd.f32 %v4609, %v4557
      %v4642 = vadd.f32 %v4610, %v4562
      %v4643 = vadd.f32 %v4611, %v4565
      %v4644 = vadd.f32 %v4612, %v4570
      %v4645 = vadd.f32 %v4613, %v4573
      %v4646 = vadd.f32 %v4614, %v4578
      %v4647 = vadd.f32 %v4615, %v4581
      %4648 = vst [vmem:[#allocation4] sm:$0xff] %v4616
      %4649 = vst [vmem:[#allocation4 + $0x8] sm:$0xff] %v4617
      %4650 = vst [vmem:[#allocation4 + $0x10] sm:$0xff] %v4618
      %4651 = vst [vmem:[#allocation4 + $0x18] sm:$0xff] %v4619
      %4652 = vst [vmem:[#allocation4 + $0x20] sm:$0xff] %v4620
      %4653 = vst [vmem:[#allocation4 + $0x28] sm:$0xff] %v4621
      %4654 = vst [vmem:[#allocation4 + $0x30] sm:$0xff] %v4622
      %4655 = vst [vmem:[#allocation4 + $0x38] sm:$0xff] %v4623
      %4656 = vst [vmem:[#allocation4 + $0x40] sm:$0xff] %v4624
      %4657 = vst [vmem:[#allocation4 + $0x48] sm:$0xff] %v4625
      %4658 = vst [vmem:[#allocation4 + $0x50] sm:$0xff] %v4626
      %4659 = vst [vmem:[#allocation4 + $0x58] sm:$0xff] %v4627
      %4660 = vst [vmem:[#allocation4 + $0x60] sm:$0xff] %v4628
      %4661 = vst [vmem:[#allocation4 + $0x68] sm:$0xff] %v4629
      %4662 = vst [vmem:[#allocation4 + $0x70] sm:$0xff] %v4630
      %4663 = vst [vmem:[#allocation4 + $0x78] sm:$0xff] %v4631
      %4664 = vst [vmem:[#allocation4 + $0x80] sm:$0xff] %v4632
      %4665 = vst [vmem:[#allocation4 + $0x88] sm:$0xff] %v4633
      %4666 = vst [vmem:[#allocation4 + $0x90] sm:$0xff] %v4634
      %4667 = vst [vmem:[#allocation4 + $0x98] sm:$0xff] %v4635
      %4668 = vst [vmem:[#allocation4 + $0xa0] sm:$0xff] %v4636
      %4669 = vst [vmem:[#allocation4 + $0xa8] sm:$0xff] %v4637
      %4670 = vst [vmem:[#allocation4 + $0xb0] sm:$0xff] %v4638
      %4671 = vst [vmem:[#allocation4 + $0xb8] sm:$0xff] %v4639
      %4672 = vst [vmem:[#allocation4 + $0xc0] sm:$0xff] %v4640
      %4673 = vst [vmem:[#allocation4 + $0xc8] sm:$0xff] %v4641
      %4674 = vst [vmem:[#allocation4 + $0xd0] sm:$0xff] %v4642
      %4675 = vst [vmem:[#allocation4 + $0xd8] sm:$0xff] %v4643
      %4676 = vst [vmem:[#allocation4 + $0xe0] sm:$0xff] %v4644
      %4677 = vst [vmem:[#allocation4 + $0xe8] sm:$0xff] %v4645
      %4678 = vst [vmem:[#allocation4 + $0xf0] sm:$0xff] %v4646
      %4679 = vst [vmem:[#allocation4 + $0xf8] sm:$0xff] %v4647
      %v4680 = vld [vmem:[#allocation3 + $0x2] sm:$0xff]
      %v4681 = vld [vmem:[#allocation3 + $0xa] sm:$0xff]
      %v4682 = vld [vmem:[#allocation3 + $0x1a] sm:$0xff]
      %v4683 = vld [vmem:[#allocation3 + $0x22] sm:$0xff]
      %v4684 = vld [vmem:[#allocation3 + $0x32] sm:$0xff]
      %v4685 = vld [vmem:[#allocation3 + $0x3a] sm:$0xff]
      %v4686 = vld [vmem:[#allocation3 + $0x4a] sm:$0xff]
      %v4687 = vld [vmem:[#allocation3 + $0x52] sm:$0xff]
      %v4688 = vld [vmem:[#allocation3 + $0x62] sm:$0xff]
      %v4689 = vld [vmem:[#allocation3 + $0x6a] sm:$0xff]
      %v4690 = vld [vmem:[#allocation3 + $0x7a] sm:$0xff]
      %v4691 = vld [vmem:[#allocation3 + $0x82] sm:$0xff]
      %v4692 = vld [vmem:[#allocation3 + $0x92] sm:$0xff]
      %v4693 = vld [vmem:[#allocation3 + $0x9a] sm:$0xff]
      %v4694 = vld [vmem:[#allocation3 + $0xaa] sm:$0xff]
      %v4695 = vld [vmem:[#allocation3 + $0xb2] sm:$0xff]
      %v4696 = vld [vmem:[#allocation3 + $0xc2] sm:$0xff]
      %v4697 = vld [vmem:[#allocation3 + $0xca] sm:$0xff]
      %v4698 = vld [vmem:[#allocation3 + $0xda] sm:$0xff]
      %v4699 = vld [vmem:[#allocation3 + $0xe2] sm:$0xff]
      %v4700 = vld [vmem:[#allocation3 + $0xf2] sm:$0xff]
      %v4701 = vld [vmem:[#allocation3 + $0xfa] sm:$0xff]
      %v4702 = vld [vmem:[#allocation3 + $0x10a] sm:$0xff]
      %v4703 = vld [vmem:[#allocation3 + $0x112] sm:$0xff]
      %v4704 = vld [vmem:[#allocation3 + $0x122] sm:$0xff]
      %v4705 = vld [vmem:[#allocation3 + $0x12a] sm:$0xff]
      %v4706 = vld [vmem:[#allocation3 + $0x13a] sm:$0xff]
      %v4707 = vld [vmem:[#allocation3 + $0x142] sm:$0xff]
      %v4708 = vld [vmem:[#allocation3 + $0x152] sm:$0xff]
      %v4709 = vld [vmem:[#allocation3 + $0x15a] sm:$0xff]
      %v4710 = vld [vmem:[#allocation3 + $0x16a] sm:$0xff]
      %v4711 = vld [vmem:[#allocation3 + $0x172] sm:$0xff]
      %v4712 = vpack.c.bf16 %v4681, %v4680
      %v4713 = vpack.c.bf16 %v4683, %v4682
      %v4714 = vpack.c.bf16 %v4685, %v4684
      %v4715 = vpack.c.bf16 %v4687, %v4686
      %v4716 = vpack.c.bf16 %v4689, %v4688
      %v4717 = vpack.c.bf16 %v4691, %v4690
      %v4718 = vpack.c.bf16 %v4693, %v4692
      %v4719 = vpack.c.bf16 %v4695, %v4694
      %v4720 = vpack.c.bf16 %v4697, %v4696
      %v4721 = vpack.c.bf16 %v4699, %v4698
      %v4722 = vpack.c.bf16 %v4701, %v4700
      %v4723 = vpack.c.bf16 %v4703, %v4702
      %v4724 = vpack.c.bf16 %v4705, %v4704
      %v4725 = vpack.c.bf16 %v4707, %v4706
      %v4726 = vpack.c.bf16 %v4709, %v4708
      %v4727 = vpack.c.bf16 %v4711, %v4710
      %s4728 = scalar_lea.vmem %s3, 128
      %v4729 = vld [vmem:[%s4728] sm:$0xf]
      %v4730 = vld [vmem:[%s4728 + $0x4] sm:$0xf]
      %v4731 = vld [vmem:[%s4728 + $0x8] sm:$0xf]
      %v4732 = vld [vmem:[%s4728 + $0xc] sm:$0xf]
      %v4733 = vld [vmem:[%s4728 + $0x10] sm:$0xf]
      %v4734 = vld [vmem:[%s4728 + $0x14] sm:$0xf]
      %v4735 = vld [vmem:[%s4728 + $0x18] sm:$0xf]
      %v4736 = vld [vmem:[%s4728 + $0x1c] sm:$0xf]
      %v4737 = vld [vmem:[%s4728 + $0x20] sm:$0xf]
      %v4738 = vld [vmem:[%s4728 + $0x24] sm:$0xf]
      %v4739 = vld [vmem:[%s4728 + $0x28] sm:$0xf]
      %v4740 = vld [vmem:[%s4728 + $0x2c] sm:$0xf]
      %v4741 = vld [vmem:[%s4728 + $0x30] sm:$0xf]
      %v4742 = vld [vmem:[%s4728 + $0x34] sm:$0xf]
      %v4743 = vld [vmem:[%s4728 + $0x38] sm:$0xf]
      %v4744 = vld [vmem:[%s4728 + $0x3c] sm:$0xf]
      %v4761 = vunpack.c.l.b16 %v4729
      %v4762 = vunpack.c.l.b16 %v4730
      %v4763 = vunpack.c.l.b16 %v4731
      %v4764 = vunpack.c.l.b16 %v4732
      %v4765 = vunpack.c.l.b16 %v4733
      %v4766 = vunpack.c.l.b16 %v4734
      %v4767 = vunpack.c.l.b16 %v4735
      %v4768 = vunpack.c.l.b16 %v4736
      %v4769 = vunpack.c.l.b16 %v4737
      %v4770 = vunpack.c.l.b16 %v4738
      %v4771 = vunpack.c.l.b16 %v4739
      %v4772 = vunpack.c.l.b16 %v4740
      %v4773 = vunpack.c.l.b16 %v4741
      %v4774 = vunpack.c.l.b16 %v4742
      %v4775 = vunpack.c.l.b16 %v4743
      %v4776 = vunpack.c.l.b16 %v4744
      %v4777 = vpack.c.b16 %v4762, %v4761
      %v4778 = vpack.c.b16 %v4764, %v4763
      %v4779 = vpack.c.b16 %v4766, %v4765
      %v4780 = vpack.c.b16 %v4768, %v4767
      %v4781 = vpack.c.b16 %v4770, %v4769
      %v4782 = vpack.c.b16 %v4772, %v4771
      %v4783 = vpack.c.b16 %v4774, %v4773
      %v4784 = vpack.c.b16 %v4776, %v4775
      %4793 = vmatprep.subr.bf16.mxu0 0
      %4794 = vmatpush1.bf16.msra.mxu0 %v4777
      %4795 = vmatprep.subr.bf16.mxu0 0
      %4796 = vmatpush1.bf16.msra.mxu0 %v4778
      %4797 = vmatprep.subr.bf16.mxu0 0
      %4798 = vmatpush1.bf16.msra.mxu0 %v4779
      %4799 = vmatprep.subr.bf16.mxu0 0
      %4800 = vmatpush1.bf16.msra.mxu0 %v4780
      %4801 = vmatprep.subr.bf16.mxu0 0
      %4802 = vmatpush1.bf16.msra.mxu0 %v4781
      %4803 = vmatprep.subr.bf16.mxu0 0
      %4804 = vmatpush1.bf16.msra.mxu0 %v4782
      %4805 = vmatprep.subr.bf16.mxu0 0
      %4806 = vmatpush1.bf16.msra.mxu0 %v4783
      %4807 = vmatprep.subr.bf16.mxu0 0
      %4808 = vmatpush1.bf16.msra.mxu0 %v4784
      %4809 = vmatprep.subr.bf16.mxu0 0
      %4810 = vmatpush1.bf16.msra.mxu0 0
      %4811 = vmatprep.subr.bf16.mxu0 0
      %4812 = vmatpush1.bf16.msra.mxu0 0
      %4813 = vmatprep.subr.bf16.mxu0 0
      %4814 = vmatpush1.bf16.msra.mxu0 0
      %4815 = vmatprep.subr.bf16.mxu0 0
      %4816 = vmatpush1.bf16.msra.mxu0 0
      %4817 = vmatprep.subr.bf16.mxu0 0
      %4818 = vmatpush1.bf16.msra.mxu0 0
      %4819 = vmatprep.subr.bf16.mxu0 0
      %4820 = vmatpush1.bf16.msra.mxu0 0
      %4821 = vmatprep.subr.bf16.mxu0 0
      %4822 = vmatpush1.bf16.msra.mxu0 0
      %4823 = vmatprep.subr.bf16.mxu0 0
      %4824 = vmatpush1.bf16.msra.mxu0 0
      %4825 = vmatprep.mubr.bf16.mxu0 0
      %4826 = vmatmul.mubr.bf16.gmra.mrb[0].mxu0 %v4712
      %v4827 = vpop.f32.mrb[0].mxu0
      %v4828 = vadd.f32 0.0, %v4827
      %v4829 = vpop.f32.mrb[0].mxu0
      %v4830 = vpop.f32.mrb[0].mxu0
      %v4831 = vadd.f32 0.0, %v4830
      %v4832 = vpop.f32.mrb[0].mxu0
      %4833 = vmatprep.mubr.bf16.mxu0 0
      %4834 = vmatmul.mubr.bf16.gmra.mrb[0].mxu0 %v4713
      %v4835 = vpop.f32.mrb[0].mxu0
      %v4836 = vadd.f32 0.0, %v4835
      %v4837 = vpop.f32.mrb[0].mxu0
      %v4838 = vpop.f32.mrb[0].mxu0
      %v4839 = vadd.f32 0.0, %v4838
      %v4840 = vpop.f32.mrb[0].mxu0
      %4841 = vmatprep.mubr.bf16.mxu0 0
      %4842 = vmatmul.mubr.bf16.gmra.mrb[0].mxu0 %v4714
      %v4843 = vpop.f32.mrb[0].mxu0
      %v4844 = vadd.f32 0.0, %v4843
      %v4845 = vpop.f32.mrb[0].mxu0
      %v4846 = vpop.f32.mrb[0].mxu0
      %v4847 = vadd.f32 0.0, %v4846
      %v4848 = vpop.f32.mrb[0].mxu0
      %4849 = vmatprep.mubr.bf16.mxu0 0
      %4850 = vmatmul.mubr.bf16.gmra.mrb[0].mxu0 %v4715
      %v4851 = vpop.f32.mrb[0].mxu0
      %v4852 = vadd.f32 0.0, %v4851
      %v4853 = vpop.f32.mrb[0].mxu0
      %v4854 = vpop.f32.mrb[0].mxu0
      %v4855 = vadd.f32 0.0, %v4854
      %v4856 = vpop.f32.mrb[0].mxu0
      %4857 = vmatprep.mubr.bf16.mxu0 0
      %4858 = vmatmul.mubr.bf16.gmra.mrb[0].mxu0 %v4716
      %v4859 = vpop.f32.mrb[0].mxu0
      %v4860 = vadd.f32 0.0, %v4859
      %v4861 = vpop.f32.mrb[0].mxu0
      %v4862 = vpop.f32.mrb[0].mxu0
      %v4863 = vadd.f32 0.0, %v4862
      %v4864 = vpop.f32.mrb[0].mxu0
      %4865 = vmatprep.mubr.bf16.mxu0 0
      %4866 = vmatmul.mubr.bf16.gmra.mrb[0].mxu0 %v4717
      %v4867 = vpop.f32.mrb[0].mxu0
      %v4868 = vadd.f32 0.0, %v4867
      %v4869 = vpop.f32.mrb[0].mxu0
      %v4870 = vpop.f32.mrb[0].mxu0
      %v4871 = vadd.f32 0.0, %v4870
      %v4872 = vpop.f32.mrb[0].mxu0
      %4873 = vmatprep.mubr.bf16.mxu0 0
      %4874 = vmatmul.mubr.bf16.gmra.mrb[0].mxu0 %v4718
      %v4875 = vpop.f32.mrb[0].mxu0
      %v4876 = vadd.f32 0.0, %v4875
      %v4877 = vpop.f32.mrb[0].mxu0
      %v4878 = vpop.f32.mrb[0].mxu0
      %v4879 = vadd.f32 0.0, %v4878
      %v4880 = vpop.f32.mrb[0].mxu0
      %4881 = vmatprep.mubr.bf16.mxu0 0
      %4882 = vmatmul.mubr.bf16.gmra.mrb[0].mxu0 %v4719
      %v4883 = vpop.f32.mrb[0].mxu0
      %v4884 = vadd.f32 0.0, %v4883
      %v4885 = vpop.f32.mrb[0].mxu0
      %v4886 = vpop.f32.mrb[0].mxu0
      %v4887 = vadd.f32 0.0, %v4886
      %v4888 = vpop.f32.mrb[0].mxu0
      %4889 = vmatprep.mubr.bf16.mxu0 0
      %4890 = vmatmul.mubr.bf16.gmra.mrb[0].mxu0 %v4720
      %v4891 = vpop.f32.mrb[0].mxu0
      %v4892 = vadd.f32 0.0, %v4891
      %v4893 = vpop.f32.mrb[0].mxu0
      %v4894 = vpop.f32.mrb[0].mxu0
      %v4895 = vadd.f32 0.0, %v4894
      %v4896 = vpop.f32.mrb[0].mxu0
      %4897 = vmatprep.mubr.bf16.mxu0 0
      %4898 = vmatmul.mubr.bf16.gmra.mrb[0].mxu0 %v4721
      %v4899 = vpop.f32.mrb[0].mxu0
      %v4900 = vadd.f32 0.0, %v4899
      %v4901 = vpop.f32.mrb[0].mxu0
      %v4902 = vpop.f32.mrb[0].mxu0
      %v4903 = vadd.f32 0.0, %v4902
      %v4904 = vpop.f32.mrb[0].mxu0
      %4905 = vmatprep.mubr.bf16.mxu0 0
      %4906 = vmatmul.mubr.bf16.gmra.mrb[0].mxu0 %v4722
      %v4907 = vpop.f32.mrb[0].mxu0
      %v4908 = vadd.f32 0.0, %v4907
      %v4909 = vpop.f32.mrb[0].mxu0
      %v4910 = vpop.f32.mrb[0].mxu0
      %v4911 = vadd.f32 0.0, %v4910
      %v4912 = vpop.f32.mrb[0].mxu0
      %4913 = vmatprep.mubr.bf16.mxu0 0
      %4914 = vmatmul.mubr.bf16.gmra.mrb[0].mxu0 %v4723
      %v4915 = vpop.f32.mrb[0].mxu0
      %v4916 = vadd.f32 0.0, %v4915
      %v4917 = vpop.f32.mrb[0].mxu0
      %v4918 = vpop.f32.mrb[0].mxu0
      %v4919 = vadd.f32 0.0, %v4918
      %v4920 = vpop.f32.mrb[0].mxu0
      %4921 = vmatprep.mubr.bf16.mxu0 0
      %4922 = vmatmul.mubr.bf16.gmra.mrb[0].mxu0 %v4724
      %v4923 = vpop.f32.mrb[0].mxu0
      %v4924 = vadd.f32 0.0, %v4923
      %v4925 = vpop.f32.mrb[0].mxu0
      %v4926 = vpop.f32.mrb[0].mxu0
      %v4927 = vadd.f32 0.0, %v4926
      %v4928 = vpop.f32.mrb[0].mxu0
      %4929 = vmatprep.mubr.bf16.mxu0 0
      %4930 = vmatmul.mubr.bf16.gmra.mrb[0].mxu0 %v4725
      %v4931 = vpop.f32.mrb[0].mxu0
      %v4932 = vadd.f32 0.0, %v4931
      %v4933 = vpop.f32.mrb[0].mxu0
      %v4934 = vpop.f32.mrb[0].mxu0
      %v4935 = vadd.f32 0.0, %v4934
      %v4936 = vpop.f32.mrb[0].mxu0
      %4937 = vmatprep.mubr.bf16.mxu0 0
      %4938 = vmatmul.mubr.bf16.gmra.mrb[0].mxu0 %v4726
      %v4939 = vpop.f32.mrb[0].mxu0
      %v4940 = vadd.f32 0.0, %v4939
      %v4941 = vpop.f32.mrb[0].mxu0
      %v4942 = vpop.f32.mrb[0].mxu0
      %v4943 = vadd.f32 0.0, %v4942
      %v4944 = vpop.f32.mrb[0].mxu0
      %4945 = vmatprep.mubr.bf16.mxu0 0
      %4946 = vmatmul.mubr.bf16.gmra.mrb[0].mxu0 %v4727
      %v4947 = vpop.f32.mrb[0].mxu0
      %v4948 = vadd.f32 0.0, %v4947
      %v4949 = vpop.f32.mrb[0].mxu0
      %v4950 = vpop.f32.mrb[0].mxu0
      %v4951 = vadd.f32 0.0, %v4950
      %v4952 = vpop.f32.mrb[0].mxu0
      %4953 = vdwg.mxu0
      %v4954 = vld [vmem:[#allocation4] sm:$0xff]
      %v4955 = vld [vmem:[#allocation4 + $0x8] sm:$0xff]
      %v4956 = vld [vmem:[#allocation4 + $0x10] sm:$0xff]
      %v4957 = vld [vmem:[#allocation4 + $0x18] sm:$0xff]
      %v4958 = vld [vmem:[#allocation4 + $0x20] sm:$0xff]
      %v4959 = vld [vmem:[#allocation4 + $0x28] sm:$0xff]
      %v4960 = vld [vmem:[#allocation4 + $0x30] sm:$0xff]
      %v4961 = vld [vmem:[#allocation4 + $0x38] sm:$0xff]
      %v4962 = vld [vmem:[#allocation4 + $0x40] sm:$0xff]
      %v4963 = vld [vmem:[#allocation4 + $0x48] sm:$0xff]
      %v4964 = vld [vmem:[#allocation4 + $0x50] sm:$0xff]
      %v4965 = vld [vmem:[#allocation4 + $0x58] sm:$0xff]
      %v4966 = vld [vmem:[#allocation4 + $0x60] sm:$0xff]
      %v4967 = vld [vmem:[#allocation4 + $0x68] sm:$0xff]
      %v4968 = vld [vmem:[#allocation4 + $0x70] sm:$0xff]
      %v4969 = vld [vmem:[#allocation4 + $0x78] sm:$0xff]
      %v4970 = vld [vmem:[#allocation4 + $0x80] sm:$0xff]
      %v4971 = vld [vmem:[#allocation4 + $0x88] sm:$0xff]
      %v4972 = vld [vmem:[#allocation4 + $0x90] sm:$0xff]
      %v4973 = vld [vmem:[#allocation4 + $0x98] sm:$0xff]
      %v4974 = vld [vmem:[#allocation4 + $0xa0] sm:$0xff]
      %v4975 = vld [vmem:[#allocation4 + $0xa8] sm:$0xff]
      %v4976 = vld [vmem:[#allocation4 + $0xb0] sm:$0xff]
      %v4977 = vld [vmem:[#allocation4 + $0xb8] sm:$0xff]
      %v4978 = vld [vmem:[#allocation4 + $0xc0] sm:$0xff]
      %v4979 = vld [vmem:[#allocation4 + $0xc8] sm:$0xff]
      %v4980 = vld [vmem:[#allocation4 + $0xd0] sm:$0xff]
      %v4981 = vld [vmem:[#allocation4 + $0xd8] sm:$0xff]
      %v4982 = vld [vmem:[#allocation4 + $0xe0] sm:$0xff]
      %v4983 = vld [vmem:[#allocation4 + $0xe8] sm:$0xff]
      %v4984 = vld [vmem:[#allocation4 + $0xf0] sm:$0xff]
      %v4985 = vld [vmem:[#allocation4 + $0xf8] sm:$0xff]
      %v4986 = vadd.f32 %v4954, %v4828
      %v4987 = vadd.f32 %v4955, %v4831
      %v4988 = vadd.f32 %v4956, %v4836
      %v4989 = vadd.f32 %v4957, %v4839
      %v4990 = vadd.f32 %v4958, %v4844
      %v4991 = vadd.f32 %v4959, %v4847
      %v4992 = vadd.f32 %v4960, %v4852
      %v4993 = vadd.f32 %v4961, %v4855
      %v4994 = vadd.f32 %v4962, %v4860
      %v4995 = vadd.f32 %v4963, %v4863
      %v4996 = vadd.f32 %v4964, %v4868
      %v4997 = vadd.f32 %v4965, %v4871
      %v4998 = vadd.f32 %v4966, %v4876
      %v4999 = vadd.f32 %v4967, %v4879
      %v5000 = vadd.f32 %v4968, %v4884
      %v5001 = vadd.f32 %v4969, %v4887
      %v5002 = vadd.f32 %v4970, %v4892
      %v5003 = vadd.f32 %v4971, %v4895
      %v5004 = vadd.f32 %v4972, %v4900
      %v5005 = vadd.f32 %v4973, %v4903
      %v5006 = vadd.f32 %v4974, %v4908
      %v5007 = vadd.f32 %v4975, %v4911
      %v5008 = vadd.f32 %v4976, %v4916
      %v5009 = vadd.f32 %v4977, %v4919
      %v5010 = vadd.f32 %v4978, %v4924
      %v5011 = vadd.f32 %v4979, %v4927
      %v5012 = vadd.f32 %v4980, %v4932
      %v5013 = vadd.f32 %v4981, %v4935
      %v5014 = vadd.f32 %v4982, %v4940
      %v5015 = vadd.f32 %v4983, %v4943
      %v5016 = vadd.f32 %v4984, %v4948
      %v5017 = vadd.f32 %v4985, %v4951
      %5018 = vst [vmem:[#allocation4] sm:$0xff] %v4986
      %5019 = vst [vmem:[#allocation4 + $0x8] sm:$0xff] %v4987
      %5020 = vst [vmem:[#allocation4 + $0x10] sm:$0xff] %v4988
      %5021 = vst [vmem:[#allocation4 + $0x18] sm:$0xff] %v4989
      %5022 = vst [vmem:[#allocation4 + $0x20] sm:$0xff] %v4990
      %5023 = vst [vmem:[#allocation4 + $0x28] sm:$0xff] %v4991
      %5024 = vst [vmem:[#allocation4 + $0x30] sm:$0xff] %v4992
      %5025 = vst [vmem:[#allocation4 + $0x38] sm:$0xff] %v4993
      %5026 = vst [vmem:[#allocation4 + $0x40] sm:$0xff] %v4994
      %5027 = vst [vmem:[#allocation4 + $0x48] sm:$0xff] %v4995
      %5028 = vst [vmem:[#allocation4 + $0x50] sm:$0xff] %v4996
      %5029 = vst [vmem:[#allocation4 + $0x58] sm:$0xff] %v4997
      %5030 = vst [vmem:[#allocation4 + $0x60] sm:$0xff] %v4998
      %5031 = vst [vmem:[#allocation4 + $0x68] sm:$0xff] %v4999
      %5032 = vst [vmem:[#allocation4 + $0x70] sm:$0xff] %v5000
      %5033 = vst [vmem:[#allocation4 + $0x78] sm:$0xff] %v5001
      %5034 = vst [vmem:[#allocation4 + $0x80] sm:$0xff] %v5002
      %5035 = vst [vmem:[#allocation4 + $0x88] sm:$0xff] %v5003
      %5036 = vst [vmem:[#allocation4 + $0x90] sm:$0xff] %v5004
      %5037 = vst [vmem:[#allocation4 + $0x98] sm:$0xff] %v5005
      %5038 = vst [vmem:[#allocation4 + $0xa0] sm:$0xff] %v5006
      %5039 = vst [vmem:[#allocation4 + $0xa8] sm:$0xff] %v5007
      %5040 = vst [vmem:[#allocation4 + $0xb0] sm:$0xff] %v5008
      %5041 = vst [vmem:[#allocation4 + $0xb8] sm:$0xff] %v5009
      %5042 = vst [vmem:[#allocation4 + $0xc0] sm:$0xff] %v5010
      %5043 = vst [vmem:[#allocation4 + $0xc8] sm:$0xff] %v5011
      %5044 = vst [vmem:[#allocation4 + $0xd0] sm:$0xff] %v5012
      %5045 = vst [vmem:[#allocation4 + $0xd8] sm:$0xff] %v5013
      %5046 = vst [vmem:[#allocation4 + $0xe0] sm:$0xff] %v5014
      %5047 = vst [vmem:[#allocation4 + $0xe8] sm:$0xff] %v5015
      %5048 = vst [vmem:[#allocation4 + $0xf0] sm:$0xff] %v5016
      %5049 = vst [vmem:[#allocation4 + $0xf8] sm:$0xff] %v5017
      %v5050 = vld [vmem:[%s3972] sm:$0xff]
      %v5051 = vld [vmem:[%s3972 + $0x8] sm:$0xff]
      %v5052 = vld [vmem:[%s3972 + $0x18] sm:$0xff]
      %v5053 = vld [vmem:[%s3972 + $0x20] sm:$0xff]
      %v5054 = vld [vmem:[%s3972 + $0x30] sm:$0xff]
      %v5055 = vld [vmem:[%s3972 + $0x38] sm:$0xff]
      %v5056 = vld [vmem:[%s3972 + $0x48] sm:$0xff]
      %v5057 = vld [vmem:[%s3972 + $0x50] sm:$0xff]
      %v5058 = vld [vmem:[%s3972 + $0x60] sm:$0xff]
      %v5059 = vld [vmem:[%s3972 + $0x68] sm:$0xff]
      %v5060 = vld [vmem:[%s3972 + $0x78] sm:$0xff]
      %v5061 = vld [vmem:[%s3972 + $0x80] sm:$0xff]
      %v5062 = vld [vmem:[%s3972 + $0x90] sm:$0xff]
      %v5063 = vld [vmem:[%s3972 + $0x98] sm:$0xff]
      %v5064 = vld [vmem:[%s3972 + $0xa8] sm:$0xff]
      %v5065 = vld [vmem:[%s3972 + $0xb0] sm:$0xff]
      %v5066 = vld [vmem:[%s3972 + $0xc0] sm:$0xff]
      %v5067 = vld [vmem:[%s3972 + $0xc8] sm:$0xff]
      %v5068 = vld [vmem:[%s3972 + $0xd8] sm:$0xff]
      %v5069 = vld [vmem:[%s3972 + $0xe0] sm:$0xff]
      %v5070 = vld [vmem:[%s3972 + $0xf0] sm:$0xff]
      %v5071 = vld [vmem:[%s3972 + $0xf8] sm:$0xff]
      %v5072 = vld [vmem:[%s3972 + $0x108] sm:$0xff]
      %v5073 = vld [vmem:[%s3972 + $0x110] sm:$0xff]
      %v5074 = vld [vmem:[%s3972 + $0x120] sm:$0xff]
      %v5075 = vld [vmem:[%s3972 + $0x128] sm:$0xff]
      %v5076 = vld [vmem:[%s3972 + $0x138] sm:$0xff]
      %v5077 = vld [vmem:[%s3972 + $0x140] sm:$0xff]
      %v5078 = vld [vmem:[%s3972 + $0x150] sm:$0xff]
      %v5079 = vld [vmem:[%s3972 + $0x158] sm:$0xff]
      %v5080 = vld [vmem:[%s3972 + $0x168] sm:$0xff]
      %v5081 = vld [vmem:[%s3972 + $0x170] sm:$0xff]
      %v5082 = vpack.c.bf16 %v5051, %v5050
      %v5083 = vpack.c.bf16 %v5053, %v5052
      %v5084 = vpack.c.bf16 %v5055, %v5054
      %v5085 = vpack.c.bf16 %v5057, %v5056
      %v5086 = vpack.c.bf16 %v5059, %v5058
      %v5087 = vpack.c.bf16 %v5061, %v5060
      %v5088 = vpack.c.bf16 %v5063, %v5062
      %v5089 = vpack.c.bf16 %v5065, %v5064
      %v5090 = vpack.c.bf16 %v5067, %v5066
      %v5091 = vpack.c.bf16 %v5069, %v5068
      %v5092 = vpack.c.bf16 %v5071, %v5070
      %v5093 = vpack.c.bf16 %v5073, %v5072
      %v5094 = vpack.c.bf16 %v5075, %v5074
      %v5095 = vpack.c.bf16 %v5077, %v5076
      %v5096 = vpack.c.bf16 %v5079, %v5078
      %v5097 = vpack.c.bf16 %v5081, %v5080
      %s5098 = scalar_lea.vmem %s3, 192
      %v5099 = vld [vmem:[%s5098] sm:$0xf]
      %v5100 = vld [vmem:[%s5098 + $0x4] sm:$0xf]
      %v5101 = vld [vmem:[%s5098 + $0x8] sm:$0xf]
      %v5102 = vld [vmem:[%s5098 + $0xc] sm:$0xf]
      %v5103 = vld [vmem:[%s5098 + $0x10] sm:$0xf]
      %v5104 = vld [vmem:[%s5098 + $0x14] sm:$0xf]
      %v5105 = vld [vmem:[%s5098 + $0x18] sm:$0xf]
      %v5106 = vld [vmem:[%s5098 + $0x1c] sm:$0xf]
      %v5107 = vld [vmem:[%s5098 + $0x20] sm:$0xf]
      %v5108 = vld [vmem:[%s5098 + $0x24] sm:$0xf]
      %v5109 = vld [vmem:[%s5098 + $0x28] sm:$0xf]
      %v5110 = vld [vmem:[%s5098 + $0x2c] sm:$0xf]
      %v5111 = vld [vmem:[%s5098 + $0x30] sm:$0xf]
      %v5112 = vld [vmem:[%s5098 + $0x34] sm:$0xf]
      %v5113 = vld [vmem:[%s5098 + $0x38] sm:$0xf]
      %v5114 = vld [vmem:[%s5098 + $0x3c] sm:$0xf]
      %v5131 = vunpack.c.l.b16 %v5099
      %v5132 = vunpack.c.l.b16 %v5100
      %v5133 = vunpack.c.l.b16 %v5101
      %v5134 = vunpack.c.l.b16 %v5102
      %v5135 = vunpack.c.l.b16 %v5103
      %v5136 = vunpack.c.l.b16 %v5104
      %v5137 = vunpack.c.l.b16 %v5105
      %v5138 = vunpack.c.l.b16 %v5106
      %v5139 = vunpack.c.l.b16 %v5107
      %v5140 = vunpack.c.l.b16 %v5108
      %v5141 = vunpack.c.l.b16 %v5109
      %v5142 = vunpack.c.l.b16 %v5110
      %v5143 = vunpack.c.l.b16 %v5111
      %v5144 = vunpack.c.l.b16 %v5112
      %v5145 = vunpack.c.l.b16 %v5113
      %v5146 = vunpack.c.l.b16 %v5114
      %v5147 = vpack.c.b16 %v5132, %v5131
      %v5148 = vpack.c.b16 %v5134, %v5133
      %v5149 = vpack.c.b16 %v5136, %v5135
      %v5150 = vpack.c.b16 %v5138, %v5137
      %v5151 = vpack.c.b16 %v5140, %v5139
      %v5152 = vpack.c.b16 %v5142, %v5141
      %v5153 = vpack.c.b16 %v5144, %v5143
      %v5154 = vpack.c.b16 %v5146, %v5145
      %5163 = vmatprep.subr.bf16.mxu0 0
      %5164 = vmatpush1.bf16.msra.mxu0 %v5147
      %5165 = vmatprep.subr.bf16.mxu0 0
      %5166 = vmatpush1.bf16.msra.mxu0 %v5148
      %5167 = vmatprep.subr.bf16.mxu0 0
      %5168 = vmatpush1.bf16.msra.mxu0 %v5149
      %5169 = vmatprep.subr.bf16.mxu0 0
      %5170 = vmatpush1.bf16.msra.mxu0 %v5150
      %5171 = vmatprep.subr.bf16.mxu0 0
      %5172 = vmatpush1.bf16.msra.mxu0 %v5151
      %5173 = vmatprep.subr.bf16.mxu0 0
      %5174 = vmatpush1.bf16.msra.mxu0 %v5152
      %5175 = vmatprep.subr.bf16.mxu0 0
      %5176 = vmatpush1.bf16.msra.mxu0 %v5153
      %5177 = vmatprep.subr.bf16.mxu0 0
      %5178 = vmatpush1.bf16.msra.mxu0 %v5154
      %5179 = vmatprep.subr.bf16.mxu0 0
      %5180 = vmatpush1.bf16.msra.mxu0 0
      %5181 = vmatprep.subr.bf16.mxu0 0
      %5182 = vmatpush1.bf16.msra.mxu0 0
      %5183 = vmatprep.subr.bf16.mxu0 0
      %5184 = vmatpush1.bf16.msra.mxu0 0
      %5185 = vmatprep.subr.bf16.mxu0 0
      %5186 = vmatpush1.bf16.msra.mxu0 0
      %5187 = vmatprep.subr.bf16.mxu0 0
      %5188 = vmatpush1.bf16.msra.mxu0 0
      %5189 = vmatprep.subr.bf16.mxu0 0
      %5190 = vmatpush1.bf16.msra.mxu0 0
      %5191 = vmatprep.subr.bf16.mxu0 0
      %5192 = vmatpush1.bf16.msra.mxu0 0
      %5193 = vmatprep.subr.bf16.mxu0 0
      %5194 = vmatpush1.bf16.msra.mxu0 0
      %5195 = vmatprep.mubr.bf16.mxu0 0
      %5196 = vmatmul.mubr.bf16.gmra.mrb[0].mxu0 %v5082
      %v5197 = vpop.f32.mrb[0].mxu0
      %v5198 = vadd.f32 0.0, %v5197
      %v5199 = vpop.f32.mrb[0].mxu0
      %v5200 = vpop.f32.mrb[0].mxu0
      %v5201 = vadd.f32 0.0, %v5200
      %v5202 = vpop.f32.mrb[0].mxu0
      %5203 = vmatprep.mubr.bf16.mxu0 0
      %5204 = vmatmul.mubr.bf16.gmra.mrb[0].mxu0 %v5083
      %v5205 = vpop.f32.mrb[0].mxu0
      %v5206 = vadd.f32 0.0, %v5205
      %v5207 = vpop.f32.mrb[0].mxu0
      %v5208 = vpop.f32.mrb[0].mxu0
      %v5209 = vadd.f32 0.0, %v5208
      %v5210 = vpop.f32.mrb[0].mxu0
      %5211 = vmatprep.mubr.bf16.mxu0 0
      %5212 = vmatmul.mubr.bf16.gmra.mrb[0].mxu0 %v5084
      %v5213 = vpop.f32.mrb[0].mxu0
      %v5214 = vadd.f32 0.0, %v5213
      %v5215 = vpop.f32.mrb[0].mxu0
      %v5216 = vpop.f32.mrb[0].mxu0
      %v5217 = vadd.f32 0.0, %v5216
      %v5218 = vpop.f32.mrb[0].mxu0
      %5219 = vmatprep.mubr.bf16.mxu0 0
      %5220 = vmatmul.mubr.bf16.gmra.mrb[0].mxu0 %v5085
      %v5221 = vpop.f32.mrb[0].mxu0
      %v5222 = vadd.f32 0.0, %v5221
      %v5223 = vpop.f32.mrb[0].mxu0
      %v5224 = vpop.f32.mrb[0].mxu0
      %v5225 = vadd.f32 0.0, %v5224
      %v5226 = vpop.f32.mrb[0].mxu0
      %5227 = vmatprep.mubr.bf16.mxu0 0
      %5228 = vmatmul.mubr.bf16.gmra.mrb[0].mxu0 %v5086
      %v5229 = vpop.f32.mrb[0].mxu0
      %v5230 = vadd.f32 0.0, %v5229
      %v5231 = vpop.f32.mrb[0].mxu0
      %v5232 = vpop.f32.mrb[0].mxu0
      %v5233 = vadd.f32 0.0, %v5232
      %v5234 = vpop.f32.mrb[0].mxu0
      %5235 = vmatprep.mubr.bf16.mxu0 0
      %5236 = vmatmul.mubr.bf16.gmra.mrb[0].mxu0 %v5087
      %v5237 = vpop.f32.mrb[0].mxu0
      %v5238 = vadd.f32 0.0, %v5237
      %v5239 = vpop.f32.mrb[0].mxu0
      %v5240 = vpop.f32.mrb[0].mxu0
      %v5241 = vadd.f32 0.0, %v5240
      %v5242 = vpop.f32.mrb[0].mxu0
      %5243 = vmatprep.mubr.bf16.mxu0 0
      %5244 = vmatmul.mubr.bf16.gmra.mrb[0].mxu0 %v5088
      %v5245 = vpop.f32.mrb[0].mxu0
      %v5246 = vadd.f32 0.0, %v5245
      %v5247 = vpop.f32.mrb[0].mxu0
      %v5248 = vpop.f32.mrb[0].mxu0
      %v5249 = vadd.f32 0.0, %v5248
      %v5250 = vpop.f32.mrb[0].mxu0
      %5251 = vmatprep.mubr.bf16.mxu0 0
      %5252 = vmatmul.mubr.bf16.gmra.mrb[0].mxu0 %v5089
      %v5253 = vpop.f32.mrb[0].mxu0
      %v5254 = vadd.f32 0.0, %v5253
      %v5255 = vpop.f32.mrb[0].mxu0
      %v5256 = vpop.f32.mrb[0].mxu0
      %v5257 = vadd.f32 0.0, %v5256
      %v5258 = vpop.f32.mrb[0].mxu0
      %5259 = vmatprep.mubr.bf16.mxu0 0
      %5260 = vmatmul.mubr.bf16.gmra.mrb[0].mxu0 %v5090
      %v5261 = vpop.f32.mrb[0].mxu0
      %v5262 = vadd.f32 0.0, %v5261
      %v5263 = vpop.f32.mrb[0].mxu0
      %v5264 = vpop.f32.mrb[0].mxu0
      %v5265 = vadd.f32 0.0, %v5264
      %v5266 = vpop.f32.mrb[0].mxu0
      %5267 = vmatprep.mubr.bf16.mxu0 0
      %5268 = vmatmul.mubr.bf16.gmra.mrb[0].mxu0 %v5091
      %v5269 = vpop.f32.mrb[0].mxu0
      %v5270 = vadd.f32 0.0, %v5269
      %v5271 = vpop.f32.mrb[0].mxu0
      %v5272 = vpop.f32.mrb[0].mxu0
      %v5273 = vadd.f32 0.0, %v5272
      %v5274 = vpop.f32.mrb[0].mxu0
      %5275 = vmatprep.mubr.bf16.mxu0 0
      %5276 = vmatmul.mubr.bf16.gmra.mrb[0].mxu0 %v5092
      %v5277 = vpop.f32.mrb[0].mxu0
      %v5278 = vadd.f32 0.0, %v5277
      %v5279 = vpop.f32.mrb[0].mxu0
      %v5280 = vpop.f32.mrb[0].mxu0
      %v5281 = vadd.f32 0.0, %v5280
      %v5282 = vpop.f32.mrb[0].mxu0
      %5283 = vmatprep.mubr.bf16.mxu0 0
      %5284 = vmatmul.mubr.bf16.gmra.mrb[0].mxu0 %v5093
      %v5285 = vpop.f32.mrb[0].mxu0
      %v5286 = vadd.f32 0.0, %v5285
      %v5287 = vpop.f32.mrb[0].mxu0
      %v5288 = vpop.f32.mrb[0].mxu0
      %v5289 = vadd.f32 0.0, %v5288
      %v5290 = vpop.f32.mrb[0].mxu0
      %5291 = vmatprep.mubr.bf16.mxu0 0
      %5292 = vmatmul.mubr.bf16.gmra.mrb[0].mxu0 %v5094
      %v5293 = vpop.f32.mrb[0].mxu0
      %v5294 = vadd.f32 0.0, %v5293
      %v5295 = vpop.f32.mrb[0].mxu0
      %v5296 = vpop.f32.mrb[0].mxu0
      %v5297 = vadd.f32 0.0, %v5296
      %v5298 = vpop.f32.mrb[0].mxu0
      %5299 = vmatprep.mubr.bf16.mxu0 0
      %5300 = vmatmul.mubr.bf16.gmra.mrb[0].mxu0 %v5095
      %v5301 = vpop.f32.mrb[0].mxu0
      %v5302 = vadd.f32 0.0, %v5301
      %v5303 = vpop.f32.mrb[0].mxu0
      %v5304 = vpop.f32.mrb[0].mxu0
      %v5305 = vadd.f32 0.0, %v5304
      %v5306 = vpop.f32.mrb[0].mxu0
      %5307 = vmatprep.mubr.bf16.mxu0 0
      %5308 = vmatmul.mubr.bf16.gmra.mrb[0].mxu0 %v5096
      %v5309 = vpop.f32.mrb[0].mxu0
      %v5310 = vadd.f32 0.0, %v5309
      %v5311 = vpop.f32.mrb[0].mxu0
      %v5312 = vpop.f32.mrb[0].mxu0
      %v5313 = vadd.f32 0.0, %v5312
      %v5314 = vpop.f32.mrb[0].mxu0
      %5315 = vmatprep.mubr.bf16.mxu0 0
      %5316 = vmatmul.mubr.bf16.gmra.mrb[0].mxu0 %v5097
      %v5317 = vpop.f32.mrb[0].mxu0
      %v5318 = vadd.f32 0.0, %v5317
      %v5319 = vpop.f32.mrb[0].mxu0
      %v5320 = vpop.f32.mrb[0].mxu0
      %v5321 = vadd.f32 0.0, %v5320
      %v5322 = vpop.f32.mrb[0].mxu0
      %5323 = vdwg.mxu0
      %v5324 = vld [vmem:[#allocation4] sm:$0xff]
      %v5325 = vld [vmem:[#allocation4 + $0x8] sm:$0xff]
      %v5326 = vld [vmem:[#allocation4 + $0x10] sm:$0xff]
      %v5327 = vld [vmem:[#allocation4 + $0x18] sm:$0xff]
      %v5328 = vld [vmem:[#allocation4 + $0x20] sm:$0xff]
      %v5329 = vld [vmem:[#allocation4 + $0x28] sm:$0xff]
      %v5330 = vld [vmem:[#allocation4 + $0x30] sm:$0xff]
      %v5331 = vld [vmem:[#allocation4 + $0x38] sm:$0xff]
      %v5332 = vld [vmem:[#allocation4 + $0x40] sm:$0xff]
      %v5333 = vld [vmem:[#allocation4 + $0x48] sm:$0xff]
      %v5334 = vld [vmem:[#allocation4 + $0x50] sm:$0xff]
      %v5335 = vld [vmem:[#allocation4 + $0x58] sm:$0xff]
      %v5336 = vld [vmem:[#allocation4 + $0x60] sm:$0xff]
      %v5337 = vld [vmem:[#allocation4 + $0x68] sm:$0xff]
      %v5338 = vld [vmem:[#allocation4 + $0x70] sm:$0xff]
      %v5339 = vld [vmem:[#allocation4 + $0x78] sm:$0xff]
      %v5340 = vld [vmem:[#allocation4 + $0x80] sm:$0xff]
      %v5341 = vld [vmem:[#allocation4 + $0x88] sm:$0xff]
      %v5342 = vld [vmem:[#allocation4 + $0x90] sm:$0xff]
      %v5343 = vld [vmem:[#allocation4 + $0x98] sm:$0xff]
      %v5344 = vld [vmem:[#allocation4 + $0xa0] sm:$0xff]
      %v5345 = vld [vmem:[#allocation4 + $0xa8] sm:$0xff]
      %v5346 = vld [vmem:[#allocation4 + $0xb0] sm:$0xff]
      %v5347 = vld [vmem:[#allocation4 + $0xb8] sm:$0xff]
      %v5348 = vld [vmem:[#allocation4 + $0xc0] sm:$0xff]
      %v5349 = vld [vmem:[#allocation4 + $0xc8] sm:$0xff]
      %v5350 = vld [vmem:[#allocation4 + $0xd0] sm:$0xff]
      %v5351 = vld [vmem:[#allocation4 + $0xd8] sm:$0xff]
      %v5352 = vld [vmem:[#allocation4 + $0xe0] sm:$0xff]
      %v5353 = vld [vmem:[#allocation4 + $0xe8] sm:$0xff]
      %v5354 = vld [vmem:[#allocation4 + $0xf0] sm:$0xff]
      %v5355 = vld [vmem:[#allocation4 + $0xf8] sm:$0xff]
      %v5356 = vadd.f32 %v5324, %v5198
      %v5357 = vadd.f32 %v5325, %v5201
      %v5358 = vadd.f32 %v5326, %v5206
      %v5359 = vadd.f32 %v5327, %v5209
      %v5360 = vadd.f32 %v5328, %v5214
      %v5361 = vadd.f32 %v5329, %v5217
      %v5362 = vadd.f32 %v5330, %v5222
      %v5363 = vadd.f32 %v5331, %v5225
      %v5364 = vadd.f32 %v5332, %v5230
      %v5365 = vadd.f32 %v5333, %v5233
      %v5366 = vadd.f32 %v5334, %v5238
      %v5367 = vadd.f32 %v5335, %v5241
      %v5368 = vadd.f32 %v5336, %v5246
      %v5369 = vadd.f32 %v5337, %v5249
      %v5370 = vadd.f32 %v5338, %v5254
      %v5371 = vadd.f32 %v5339, %v5257
      %v5372 = vadd.f32 %v5340, %v5262
      %v5373 = vadd.f32 %v5341, %v5265
      %v5374 = vadd.f32 %v5342, %v5270
      %v5375 = vadd.f32 %v5343, %v5273
      %v5376 = vadd.f32 %v5344, %v5278
      %v5377 = vadd.f32 %v5345, %v5281
      %v5378 = vadd.f32 %v5346, %v5286
      %v5379 = vadd.f32 %v5347, %v5289
      %v5380 = vadd.f32 %v5348, %v5294
      %v5381 = vadd.f32 %v5349, %v5297
      %v5382 = vadd.f32 %v5350, %v5302
      %v5383 = vadd.f32 %v5351, %v5305
      %v5384 = vadd.f32 %v5352, %v5310
      %v5385 = vadd.f32 %v5353, %v5313
      %v5386 = vadd.f32 %v5354, %v5318
      %v5387 = vadd.f32 %v5355, %v5321
      %5388 = vst [vmem:[#allocation4] sm:$0xff] %v5356
      %5389 = vst [vmem:[#allocation4 + $0x8] sm:$0xff] %v5357
      %5390 = vst [vmem:[#allocation4 + $0x10] sm:$0xff] %v5358
      %5391 = vst [vmem:[#allocation4 + $0x18] sm:$0xff] %v5359
      %5392 = vst [vmem:[#allocation4 + $0x20] sm:$0xff] %v5360
      %5393 = vst [vmem:[#allocation4 + $0x28] sm:$0xff] %v5361
      %5394 = vst [vmem:[#allocation4 + $0x30] sm:$0xff] %v5362
      %5395 = vst [vmem:[#allocation4 + $0x38] sm:$0xff] %v5363
      %5396 = vst [vmem:[#allocation4 + $0x40] sm:$0xff] %v5364
      %5397 = vst [vmem:[#allocation4 + $0x48] sm:$0xff] %v5365
      %5398 = vst [vmem:[#allocation4 + $0x50] sm:$0xff] %v5366
      %5399 = vst [vmem:[#allocation4 + $0x58] sm:$0xff] %v5367
      %5400 = vst [vmem:[#allocation4 + $0x60] sm:$0xff] %v5368
      %5401 = vst [vmem:[#allocation4 + $0x68] sm:$0xff] %v5369
      %5402 = vst [vmem:[#allocation4 + $0x70] sm:$0xff] %v5370
      %5403 = vst [vmem:[#allocation4 + $0x78] sm:$0xff] %v5371
      %5404 = vst [vmem:[#allocation4 + $0x80] sm:$0xff] %v5372
      %5405 = vst [vmem:[#allocation4 + $0x88] sm:$0xff] %v5373
      %5406 = vst [vmem:[#allocation4 + $0x90] sm:$0xff] %v5374
      %5407 = vst [vmem:[#allocation4 + $0x98] sm:$0xff] %v5375
      %5408 = vst [vmem:[#allocation4 + $0xa0] sm:$0xff] %v5376
      %5409 = vst [vmem:[#allocation4 + $0xa8] sm:$0xff] %v5377
      %5410 = vst [vmem:[#allocation4 + $0xb0] sm:$0xff] %v5378
      %5411 = vst [vmem:[#allocation4 + $0xb8] sm:$0xff] %v5379
      %5412 = vst [vmem:[#allocation4 + $0xc0] sm:$0xff] %v5380
      %5413 = vst [vmem:[#allocation4 + $0xc8] sm:$0xff] %v5381
      %5414 = vst [vmem:[#allocation4 + $0xd0] sm:$0xff] %v5382
      %5415 = vst [vmem:[#allocation4 + $0xd8] sm:$0xff] %v5383
      %5416 = vst [vmem:[#allocation4 + $0xe0] sm:$0xff] %v5384
      %5417 = vst [vmem:[#allocation4 + $0xe8] sm:$0xff] %v5385
      %5418 = vst [vmem:[#allocation4 + $0xf0] sm:$0xff] %v5386
      %5419 = vst [vmem:[#allocation4 + $0xf8] sm:$0xff] %v5387
      %v5420 = vld [vmem:[%s3972 + $0x1] sm:$0xff]
      %v5421 = vld [vmem:[%s3972 + $0x9] sm:$0xff]
      %v5422 = vld [vmem:[%s3972 + $0x19] sm:$0xff]
      %v5423 = vld [vmem:[%s3972 + $0x21] sm:$0xff]
      %v5424 = vld [vmem:[%s3972 + $0x31] sm:$0xff]
      %v5425 = vld [vmem:[%s3972 + $0x39] sm:$0xff]
      %v5426 = vld [vmem:[%s3972 + $0x49] sm:$0xff]
      %v5427 = vld [vmem:[%s3972 + $0x51] sm:$0xff]
      %v5428 = vld [vmem:[%s3972 + $0x61] sm:$0xff]
      %v5429 = vld [vmem:[%s3972 + $0x69] sm:$0xff]
      %v5430 = vld [vmem:[%s3972 + $0x79] sm:$0xff]
      %v5431 = vld [vmem:[%s3972 + $0x81] sm:$0xff]
      %v5432 = vld [vmem:[%s3972 + $0x91] sm:$0xff]
      %v5433 = vld [vmem:[%s3972 + $0x99] sm:$0xff]
      %v5434 = vld [vmem:[%s3972 + $0xa9] sm:$0xff]
      %v5435 = vld [vmem:[%s3972 + $0xb1] sm:$0xff]
      %v5436 = vld [vmem:[%s3972 + $0xc1] sm:$0xff]
      %v5437 = vld [vmem:[%s3972 + $0xc9] sm:$0xff]
      %v5438 = vld [vmem:[%s3972 + $0xd9] sm:$0xff]
      %v5439 = vld [vmem:[%s3972 + $0xe1] sm:$0xff]
      %v5440 = vld [vmem:[%s3972 + $0xf1] sm:$0xff]
      %v5441 = vld [vmem:[%s3972 + $0xf9] sm:$0xff]
      %v5442 = vld [vmem:[%s3972 + $0x109] sm:$0xff]
      %v5443 = vld [vmem:[%s3972 + $0x111] sm:$0xff]
      %v5444 = vld [vmem:[%s3972 + $0x121] sm:$0xff]
      %v5445 = vld [vmem:[%s3972 + $0x129] sm:$0xff]
      %v5446 = vld [vmem:[%s3972 + $0x139] sm:$0xff]
      %v5447 = vld [vmem:[%s3972 + $0x141] sm:$0xff]
      %v5448 = vld [vmem:[%s3972 + $0x151] sm:$0xff]
      %v5449 = vld [vmem:[%s3972 + $0x159] sm:$0xff]
      %v5450 = vld [vmem:[%s3972 + $0x169] sm:$0xff]
      %v5451 = vld [vmem:[%s3972 + $0x171] sm:$0xff]
      %v5452 = vpack.c.bf16 %v5421, %v5420
      %v5453 = vpack.c.bf16 %v5423, %v5422
      %v5454 = vpack.c.bf16 %v5425, %v5424
      %v5455 = vpack.c.bf16 %v5427, %v5426
      %v5456 = vpack.c.bf16 %v5429, %v5428
      %v5457 = vpack.c.bf16 %v5431, %v5430
      %v5458 = vpack.c.bf16 %v5433, %v5432
      %v5459 = vpack.c.bf16 %v5435, %v5434
      %v5460 = vpack.c.bf16 %v5437, %v5436
      %v5461 = vpack.c.bf16 %v5439, %v5438
      %v5462 = vpack.c.bf16 %v5441, %v5440
      %v5463 = vpack.c.bf16 %v5443, %v5442
      %v5464 = vpack.c.bf16 %v5445, %v5444
      %v5465 = vpack.c.bf16 %v5447, %v5446
      %v5466 = vpack.c.bf16 %v5449, %v5448
      %v5467 = vpack.c.bf16 %v5451, %v5450
      %s5468 = scalar_lea.vmem %s3, 256
      %v5469 = vld [vmem:[%s5468] sm:$0xf]
      %v5470 = vld [vmem:[%s5468 + $0x4] sm:$0xf]
      %v5471 = vld [vmem:[%s5468 + $0x8] sm:$0xf]
      %v5472 = vld [vmem:[%s5468 + $0xc] sm:$0xf]
      %v5473 = vld [vmem:[%s5468 + $0x10] sm:$0xf]
      %v5474 = vld [vmem:[%s5468 + $0x14] sm:$0xf]
      %v5475 = vld [vmem:[%s5468 + $0x18] sm:$0xf]
      %v5476 = vld [vmem:[%s5468 + $0x1c] sm:$0xf]
      %v5477 = vld [vmem:[%s5468 + $0x20] sm:$0xf]
      %v5478 = vld [vmem:[%s5468 + $0x24] sm:$0xf]
      %v5479 = vld [vmem:[%s5468 + $0x28] sm:$0xf]
      %v5480 = vld [vmem:[%s5468 + $0x2c] sm:$0xf]
      %v5481 = vld [vmem:[%s5468 + $0x30] sm:$0xf]
      %v5482 = vld [vmem:[%s5468 + $0x34] sm:$0xf]
      %v5483 = vld [vmem:[%s5468 + $0x38] sm:$0xf]
      %v5484 = vld [vmem:[%s5468 + $0x3c] sm:$0xf]
      %v5501 = vunpack.c.l.b16 %v5469
      %v5502 = vunpack.c.l.b16 %v5470
      %v5503 = vunpack.c.l.b16 %v5471
      %v5504 = vunpack.c.l.b16 %v5472
      %v5505 = vunpack.c.l.b16 %v5473
      %v5506 = vunpack.c.l.b16 %v5474
      %v5507 = vunpack.c.l.b16 %v5475
      %v5508 = vunpack.c.l.b16 %v5476
      %v5509 = vunpack.c.l.b16 %v5477
      %v5510 = vunpack.c.l.b16 %v5478
      %v5511 = vunpack.c.l.b16 %v5479
      %v5512 = vunpack.c.l.b16 %v5480
      %v5513 = vunpack.c.l.b16 %v5481
      %v5514 = vunpack.c.l.b16 %v5482
      %v5515 = vunpack.c.l.b16 %v5483
      %v5516 = vunpack.c.l.b16 %v5484
      %v5517 = vpack.c.b16 %v5502, %v5501
      %v5518 = vpack.c.b16 %v5504, %v5503
      %v5519 = vpack.c.b16 %v5506, %v5505
      %v5520 = vpack.c.b16 %v5508, %v5507
      %v5521 = vpack.c.b16 %v5510, %v5509
      %v5522 = vpack.c.b16 %v5512, %v5511
      %v5523 = vpack.c.b16 %v5514, %v5513
      %v5524 = vpack.c.b16 %v5516, %v5515
      %5533 = vmatprep.subr.bf16.mxu0 0
      %5534 = vmatpush1.bf16.msra.mxu0 %v5517
      %5535 = vmatprep.subr.bf16.mxu0 0
      %5536 = vmatpush1.bf16.msra.mxu0 %v5518
      %5537 = vmatprep.subr.bf16.mxu0 0
      %5538 = vmatpush1.bf16.msra.mxu0 %v5519
      %5539 = vmatprep.subr.bf16.mxu0 0
      %5540 = vmatpush1.bf16.msra.mxu0 %v5520
      %5541 = vmatprep.subr.bf16.mxu0 0
      %5542 = vmatpush1.bf16.msra.mxu0 %v5521
      %5543 = vmatprep.subr.bf16.mxu0 0
      %5544 = vmatpush1.bf16.msra.mxu0 %v5522
      %5545 = vmatprep.subr.bf16.mxu0 0
      %5546 = vmatpush1.bf16.msra.mxu0 %v5523
      %5547 = vmatprep.subr.bf16.mxu0 0
      %5548 = vmatpush1.bf16.msra.mxu0 %v5524
      %5549 = vmatprep.subr.bf16.mxu0 0
      %5550 = vmatpush1.bf16.msra.mxu0 0
      %5551 = vmatprep.subr.bf16.mxu0 0
      %5552 = vmatpush1.bf16.msra.mxu0 0
      %5553 = vmatprep.subr.bf16.mxu0 0
      %5554 = vmatpush1.bf16.msra.mxu0 0
      %5555 = vmatprep.subr.bf16.mxu0 0
      %5556 = vmatpush1.bf16.msra.mxu0 0
      %5557 = vmatprep.subr.bf16.mxu0 0
      %5558 = vmatpush1.bf16.msra.mxu0 0
      %5559 = vmatprep.subr.bf16.mxu0 0
      %5560 = vmatpush1.bf16.msra.mxu0 0
      %5561 = vmatprep.subr.bf16.mxu0 0
      %5562 = vmatpush1.bf16.msra.mxu0 0
      %5563 = vmatprep.subr.bf16.mxu0 0
      %5564 = vmatpush1.bf16.msra.mxu0 0
      %5565 = vmatprep.mubr.bf16.mxu0 0
      %5566 = vmatmul.mubr.bf16.gmra.mrb[0].mxu0 %v5452
      %v5567 = vpop.f32.mrb[0].mxu0
      %v5568 = vadd.f32 0.0, %v5567
      %v5569 = vpop.f32.mrb[0].mxu0
      %v5570 = vpop.f32.mrb[0].mxu0
      %v5571 = vadd.f32 0.0, %v5570
      %v5572 = vpop.f32.mrb[0].mxu0
      %5573 = vmatprep.mubr.bf16.mxu0 0
      %5574 = vmatmul.mubr.bf16.gmra.mrb[0].mxu0 %v5453
      %v5575 = vpop.f32.mrb[0].mxu0
      %v5576 = vadd.f32 0.0, %v5575
      %v5577 = vpop.f32.mrb[0].mxu0
      %v5578 = vpop.f32.mrb[0].mxu0
      %v5579 = vadd.f32 0.0, %v5578
      %v5580 = vpop.f32.mrb[0].mxu0
      %5581 = vmatprep.mubr.bf16.mxu0 0
      %5582 = vmatmul.mubr.bf16.gmra.mrb[0].mxu0 %v5454
      %v5583 = vpop.f32.mrb[0].mxu0
      %v5584 = vadd.f32 0.0, %v5583
      %v5585 = vpop.f32.mrb[0].mxu0
      %v5586 = vpop.f32.mrb[0].mxu0
      %v5587 = vadd.f32 0.0, %v5586
      %v5588 = vpop.f32.mrb[0].mxu0
      %5589 = vmatprep.mubr.bf16.mxu0 0
      %5590 = vmatmul.mubr.bf16.gmra.mrb[0].mxu0 %v5455
      %v5591 = vpop.f32.mrb[0].mxu0
      %v5592 = vadd.f32 0.0, %v5591
      %v5593 = vpop.f32.mrb[0].mxu0
      %v5594 = vpop.f32.mrb[0].mxu0
      %v5595 = vadd.f32 0.0, %v5594
      %v5596 = vpop.f32.mrb[0].mxu0
      %5597 = vmatprep.mubr.bf16.mxu0 0
      %5598 = vmatmul.mubr.bf16.gmra.mrb[0].mxu0 %v5456
      %v5599 = vpop.f32.mrb[0].mxu0
      %v5600 = vadd.f32 0.0, %v5599
      %v5601 = vpop.f32.mrb[0].mxu0
      %v5602 = vpop.f32.mrb[0].mxu0
      %v5603 = vadd.f32 0.0, %v5602
      %v5604 = vpop.f32.mrb[0].mxu0
      %5605 = vmatprep.mubr.bf16.mxu0 0
      %5606 = vmatmul.mubr.bf16.gmra.mrb[0].mxu0 %v5457
      %v5607 = vpop.f32.mrb[0].mxu0
      %v5608 = vadd.f32 0.0, %v5607
      %v5609 = vpop.f32.mrb[0].mxu0
      %v5610 = vpop.f32.mrb[0].mxu0
      %v5611 = vadd.f32 0.0, %v5610
      %v5612 = vpop.f32.mrb[0].mxu0
      %5613 = vmatprep.mubr.bf16.mxu0 0
      %5614 = vmatmul.mubr.bf16.gmra.mrb[0].mxu0 %v5458
      %v5615 = vpop.f32.mrb[0].mxu0
      %v5616 = vadd.f32 0.0, %v5615
      %v5617 = vpop.f32.mrb[0].mxu0
      %v5618 = vpop.f32.mrb[0].mxu0
      %v5619 = vadd.f32 0.0, %v5618
      %v5620 = vpop.f32.mrb[0].mxu0
      %5621 = vmatprep.mubr.bf16.mxu0 0
      %5622 = vmatmul.mubr.bf16.gmra.mrb[0].mxu0 %v5459
      %v5623 = vpop.f32.mrb[0].mxu0
      %v5624 = vadd.f32 0.0, %v5623
      %v5625 = vpop.f32.mrb[0].mxu0
      %v5626 = vpop.f32.mrb[0].mxu0
      %v5627 = vadd.f32 0.0, %v5626
      %v5628 = vpop.f32.mrb[0].mxu0
      %5629 = vmatprep.mubr.bf16.mxu0 0
      %5630 = vmatmul.mubr.bf16.gmra.mrb[0].mxu0 %v5460
      %v5631 = vpop.f32.mrb[0].mxu0
      %v5632 = vadd.f32 0.0, %v5631
      %v5633 = vpop.f32.mrb[0].mxu0
      %v5634 = vpop.f32.mrb[0].mxu0
      %v5635 = vadd.f32 0.0, %v5634
      %v5636 = vpop.f32.mrb[0].mxu0
      %5637 = vmatprep.mubr.bf16.mxu0 0
      %5638 = vmatmul.mubr.bf16.gmra.mrb[0].mxu0 %v5461
      %v5639 = vpop.f32.mrb[0].mxu0
      %v5640 = vadd.f32 0.0, %v5639
      %v5641 = vpop.f32.mrb[0].mxu0
      %v5642 = vpop.f32.mrb[0].mxu0
      %v5643 = vadd.f32 0.0, %v5642
      %v5644 = vpop.f32.mrb[0].mxu0
      %5645 = vmatprep.mubr.bf16.mxu0 0
      %5646 = vmatmul.mubr.bf16.gmra.mrb[0].mxu0 %v5462
      %v5647 = vpop.f32.mrb[0].mxu0
      %v5648 = vadd.f32 0.0, %v5647
      %v5649 = vpop.f32.mrb[0].mxu0
      %v5650 = vpop.f32.mrb[0].mxu0
      %v5651 = vadd.f32 0.0, %v5650
      %v5652 = vpop.f32.mrb[0].mxu0
      %5653 = vmatprep.mubr.bf16.mxu0 0
      %5654 = vmatmul.mubr.bf16.gmra.mrb[0].mxu0 %v5463
      %v5655 = vpop.f32.mrb[0].mxu0
      %v5656 = vadd.f32 0.0, %v5655
      %v5657 = vpop.f32.mrb[0].mxu0
      %v5658 = vpop.f32.mrb[0].mxu0
      %v5659 = vadd.f32 0.0, %v5658
      %v5660 = vpop.f32.mrb[0].mxu0
      %5661 = vmatprep.mubr.bf16.mxu0 0
      %5662 = vmatmul.mubr.bf16.gmra.mrb[0].mxu0 %v5464
      %v5663 = vpop.f32.mrb[0].mxu0
      %v5664 = vadd.f32 0.0, %v5663
      %v5665 = vpop.f32.mrb[0].mxu0
      %v5666 = vpop.f32.mrb[0].mxu0
      %v5667 = vadd.f32 0.0, %v5666
      %v5668 = vpop.f32.mrb[0].mxu0
      %5669 = vmatprep.mubr.bf16.mxu0 0
      %5670 = vmatmul.mubr.bf16.gmra.mrb[0].mxu0 %v5465
      %v5671 = vpop.f32.mrb[0].mxu0
      %v5672 = vadd.f32 0.0, %v5671
      %v5673 = vpop.f32.mrb[0].mxu0
      %v5674 = vpop.f32.mrb[0].mxu0
      %v5675 = vadd.f32 0.0, %v5674
      %v5676 = vpop.f32.mrb[0].mxu0
      %5677 = vmatprep.mubr.bf16.mxu0 0
      %5678 = vmatmul.mubr.bf16.gmra.mrb[0].mxu0 %v5466
      %v5679 = vpop.f32.mrb[0].mxu0
      %v5680 = vadd.f32 0.0, %v5679
      %v5681 = vpop.f32.mrb[0].mxu0
      %v5682 = vpop.f32.mrb[0].mxu0
      %v5683 = vadd.f32 0.0, %v5682
      %v5684 = vpop.f32.mrb[0].mxu0
      %5685 = vmatprep.mubr.bf16.mxu0 0
      %5686 = vmatmul.mubr.bf16.gmra.mrb[0].mxu0 %v5467
      %v5687 = vpop.f32.mrb[0].mxu0
      %v5688 = vadd.f32 0.0, %v5687
      %v5689 = vpop.f32.mrb[0].mxu0
      %v5690 = vpop.f32.mrb[0].mxu0
      %v5691 = vadd.f32 0.0, %v5690
      %v5692 = vpop.f32.mrb[0].mxu0
      %5693 = vdwg.mxu0
      %v5694 = vld [vmem:[#allocation4] sm:$0xff]
      %v5695 = vld [vmem:[#allocation4 + $0x8] sm:$0xff]
      %v5696 = vld [vmem:[#allocation4 + $0x10] sm:$0xff]
      %v5697 = vld [vmem:[#allocation4 + $0x18] sm:$0xff]
      %v5698 = vld [vmem:[#allocation4 + $0x20] sm:$0xff]
      %v5699 = vld [vmem:[#allocation4 + $0x28] sm:$0xff]
      %v5700 = vld [vmem:[#allocation4 + $0x30] sm:$0xff]
      %v5701 = vld [vmem:[#allocation4 + $0x38] sm:$0xff]
      %v5702 = vld [vmem:[#allocation4 + $0x40] sm:$0xff]
      %v5703 = vld [vmem:[#allocation4 + $0x48] sm:$0xff]
      %v5704 = vld [vmem:[#allocation4 + $0x50] sm:$0xff]
      %v5705 = vld [vmem:[#allocation4 + $0x58] sm:$0xff]
      %v5706 = vld [vmem:[#allocation4 + $0x60] sm:$0xff]
      %v5707 = vld [vmem:[#allocation4 + $0x68] sm:$0xff]
      %v5708 = vld [vmem:[#allocation4 + $0x70] sm:$0xff]
      %v5709 = vld [vmem:[#allocation4 + $0x78] sm:$0xff]
      %v5710 = vld [vmem:[#allocation4 + $0x80] sm:$0xff]
      %v5711 = vld [vmem:[#allocation4 + $0x88] sm:$0xff]
      %v5712 = vld [vmem:[#allocation4 + $0x90] sm:$0xff]
      %v5713 = vld [vmem:[#allocation4 + $0x98] sm:$0xff]
      %v5714 = vld [vmem:[#allocation4 + $0xa0] sm:$0xff]
      %v5715 = vld [vmem:[#allocation4 + $0xa8] sm:$0xff]
      %v5716 = vld [vmem:[#allocation4 + $0xb0] sm:$0xff]
      %v5717 = vld [vmem:[#allocation4 + $0xb8] sm:$0xff]
      %v5718 = vld [vmem:[#allocation4 + $0xc0] sm:$0xff]
      %v5719 = vld [vmem:[#allocation4 + $0xc8] sm:$0xff]
      %v5720 = vld [vmem:[#allocation4 + $0xd0] sm:$0xff]
      %v5721 = vld [vmem:[#allocation4 + $0xd8] sm:$0xff]
      %v5722 = vld [vmem:[#allocation4 + $0xe0] sm:$0xff]
      %v5723 = vld [vmem:[#allocation4 + $0xe8] sm:$0xff]
      %v5724 = vld [vmem:[#allocation4 + $0xf0] sm:$0xff]
      %v5725 = vld [vmem:[#allocation4 + $0xf8] sm:$0xff]
      %v5726 = vadd.f32 %v5694, %v5568
      %v5727 = vadd.f32 %v5695, %v5571
      %v5728 = vadd.f32 %v5696, %v5576
      %v5729 = vadd.f32 %v5697, %v5579
      %v5730 = vadd.f32 %v5698, %v5584
      %v5731 = vadd.f32 %v5699, %v5587
      %v5732 = vadd.f32 %v5700, %v5592
      %v5733 = vadd.f32 %v5701, %v5595
      %v5734 = vadd.f32 %v5702, %v5600
      %v5735 = vadd.f32 %v5703, %v5603
      %v5736 = vadd.f32 %v5704, %v5608
      %v5737 = vadd.f32 %v5705, %v5611
      %v5738 = vadd.f32 %v5706, %v5616
      %v5739 = vadd.f32 %v5707, %v5619
      %v5740 = vadd.f32 %v5708, %v5624
      %v5741 = vadd.f32 %v5709, %v5627
      %v5742 = vadd.f32 %v5710, %v5632
      %v5743 = vadd.f32 %v5711, %v5635
      %v5744 = vadd.f32 %v5712, %v5640
      %v5745 = vadd.f32 %v5713, %v5643
      %v5746 = vadd.f32 %v5714, %v5648
      %v5747 = vadd.f32 %v5715, %v5651
      %v5748 = vadd.f32 %v5716, %v5656
      %v5749 = vadd.f32 %v5717, %v5659
      %v5750 = vadd.f32 %v5718, %v5664
      %v5751 = vadd.f32 %v5719, %v5667
      %v5752 = vadd.f32 %v5720, %v5672
      %v5753 = vadd.f32 %v5721, %v5675
      %v5754 = vadd.f32 %v5722, %v5680
      %v5755 = vadd.f32 %v5723, %v5683
      %v5756 = vadd.f32 %v5724, %v5688
      %v5757 = vadd.f32 %v5725, %v5691
      %5758 = vst [vmem:[#allocation4] sm:$0xff] %v5726
      %5759 = vst [vmem:[#allocation4 + $0x8] sm:$0xff] %v5727
      %5760 = vst [vmem:[#allocation4 + $0x10] sm:$0xff] %v5728
      %5761 = vst [vmem:[#allocation4 + $0x18] sm:$0xff] %v5729
      %5762 = vst [vmem:[#allocation4 + $0x20] sm:$0xff] %v5730
      %5763 = vst [vmem:[#allocation4 + $0x28] sm:$0xff] %v5731
      %5764 = vst [vmem:[#allocation4 + $0x30] sm:$0xff] %v5732
      %5765 = vst [vmem:[#allocation4 + $0x38] sm:$0xff] %v5733
      %5766 = vst [vmem:[#allocation4 + $0x40] sm:$0xff] %v5734
      %5767 = vst [vmem:[#allocation4 + $0x48] sm:$0xff] %v5735
      %5768 = vst [vmem:[#allocation4 + $0x50] sm:$0xff] %v5736
      %5769 = vst [vmem:[#allocation4 + $0x58] sm:$0xff] %v5737
      %5770 = vst [vmem:[#allocation4 + $0x60] sm:$0xff] %v5738
      %5771 = vst [vmem:[#allocation4 + $0x68] sm:$0xff] %v5739
      %5772 = vst [vmem:[#allocation4 + $0x70] sm:$0xff] %v5740
      %5773 = vst [vmem:[#allocation4 + $0x78] sm:$0xff] %v5741
      %5774 = vst [vmem:[#allocation4 + $0x80] sm:$0xff] %v5742
      %5775 = vst [vmem:[#allocation4 + $0x88] sm:$0xff] %v5743
      %5776 = vst [vmem:[#allocation4 + $0x90] sm:$0xff] %v5744
      %5777 = vst [vmem:[#allocation4 + $0x98] sm:$0xff] %v5745
      %5778 = vst [vmem:[#allocation4 + $0xa0] sm:$0xff] %v5746
      %5779 = vst [vmem:[#allocation4 + $0xa8] sm:$0xff] %v5747
      %5780 = vst [vmem:[#allocation4 + $0xb0] sm:$0xff] %v5748
      %5781 = vst [vmem:[#allocation4 + $0xb8] sm:$0xff] %v5749
      %5782 = vst [vmem:[#allocation4 + $0xc0] sm:$0xff] %v5750
      %5783 = vst [vmem:[#allocation4 + $0xc8] sm:$0xff] %v5751
      %5784 = vst [vmem:[#allocation4 + $0xd0] sm:$0xff] %v5752
      %5785 = vst [vmem:[#allocation4 + $0xd8] sm:$0xff] %v5753
      %5786 = vst [vmem:[#allocation4 + $0xe0] sm:$0xff] %v5754
      %5787 = vst [vmem:[#allocation4 + $0xe8] sm:$0xff] %v5755
      %5788 = vst [vmem:[#allocation4 + $0xf0] sm:$0xff] %v5756
      %5789 = vst [vmem:[#allocation4 + $0xf8] sm:$0xff] %v5757
      %v5790 = vld [vmem:[%s3972 + $0x2] sm:$0xff]
      %v5791 = vld [vmem:[%s3972 + $0xa] sm:$0xff]
      %v5792 = vld [vmem:[%s3972 + $0x1a] sm:$0xff]
      %v5793 = vld [vmem:[%s3972 + $0x22] sm:$0xff]
      %v5794 = vld [vmem:[%s3972 + $0x32] sm:$0xff]
      %v5795 = vld [vmem:[%s3972 + $0x3a] sm:$0xff]
      %v5796 = vld [vmem:[%s3972 + $0x4a] sm:$0xff]
      %v5797 = vld [vmem:[%s3972 + $0x52] sm:$0xff]
      %v5798 = vld [vmem:[%s3972 + $0x62] sm:$0xff]
      %v5799 = vld [vmem:[%s3972 + $0x6a] sm:$0xff]
      %v5800 = vld [vmem:[%s3972 + $0x7a] sm:$0xff]
      %v5801 = vld [vmem:[%s3972 + $0x82] sm:$0xff]
      %v5802 = vld [vmem:[%s3972 + $0x92] sm:$0xff]
      %v5803 = vld [vmem:[%s3972 + $0x9a] sm:$0xff]
      %v5804 = vld [vmem:[%s3972 + $0xaa] sm:$0xff]
      %v5805 = vld [vmem:[%s3972 + $0xb2] sm:$0xff]
      %v5806 = vld [vmem:[%s3972 + $0xc2] sm:$0xff]
      %v5807 = vld [vmem:[%s3972 + $0xca] sm:$0xff]
      %v5808 = vld [vmem:[%s3972 + $0xda] sm:$0xff]
      %v5809 = vld [vmem:[%s3972 + $0xe2] sm:$0xff]
      %v5810 = vld [vmem:[%s3972 + $0xf2] sm:$0xff]
      %v5811 = vld [vmem:[%s3972 + $0xfa] sm:$0xff]
      %v5812 = vld [vmem:[%s3972 + $0x10a] sm:$0xff]
      %v5813 = vld [vmem:[%s3972 + $0x112] sm:$0xff]
      %v5814 = vld [vmem:[%s3972 + $0x122] sm:$0xff]
      %v5815 = vld [vmem:[%s3972 + $0x12a] sm:$0xff]
      %v5816 = vld [vmem:[%s3972 + $0x13a] sm:$0xff]
      %v5817 = vld [vmem:[%s3972 + $0x142] sm:$0xff]
      %v5818 = vld [vmem:[%s3972 + $0x152] sm:$0xff]
      %v5819 = vld [vmem:[%s3972 + $0x15a] sm:$0xff]
      %v5820 = vld [vmem:[%s3972 + $0x16a] sm:$0xff]
      %v5821 = vld [vmem:[%s3972 + $0x172] sm:$0xff]
      %v5822 = vpack.c.bf16 %v5791, %v5790
      %v5823 = vpack.c.bf16 %v5793, %v5792
      %v5824 = vpack.c.bf16 %v5795, %v5794
      %v5825 = vpack.c.bf16 %v5797, %v5796
      %v5826 = vpack.c.bf16 %v5799, %v5798
      %v5827 = vpack.c.bf16 %v5801, %v5800
      %v5828 = vpack.c.bf16 %v5803, %v5802
      %v5829 = vpack.c.bf16 %v5805, %v5804
      %v5830 = vpack.c.bf16 %v5807, %v5806
      %v5831 = vpack.c.bf16 %v5809, %v5808
      %v5832 = vpack.c.bf16 %v5811, %v5810
      %v5833 = vpack.c.bf16 %v5813, %v5812
      %v5834 = vpack.c.bf16 %v5815, %v5814
      %v5835 = vpack.c.bf16 %v5817, %v5816
      %v5836 = vpack.c.bf16 %v5819, %v5818
      %v5837 = vpack.c.bf16 %v5821, %v5820
      %s5838 = scalar_lea.vmem %s3, 320
      %v5839 = vld [vmem:[%s5838] sm:$0xf]
      %v5840 = vld [vmem:[%s5838 + $0x4] sm:$0xf]
      %v5841 = vld [vmem:[%s5838 + $0x8] sm:$0xf]
      %v5842 = vld [vmem:[%s5838 + $0xc] sm:$0xf]
      %v5843 = vld [vmem:[%s5838 + $0x10] sm:$0xf]
      %v5844 = vld [vmem:[%s5838 + $0x14] sm:$0xf]
      %v5845 = vld [vmem:[%s5838 + $0x18] sm:$0xf]
      %v5846 = vld [vmem:[%s5838 + $0x1c] sm:$0xf]
      %v5847 = vld [vmem:[%s5838 + $0x20] sm:$0xf]
      %v5848 = vld [vmem:[%s5838 + $0x24] sm:$0xf]
      %v5849 = vld [vmem:[%s5838 + $0x28] sm:$0xf]
      %v5850 = vld [vmem:[%s5838 + $0x2c] sm:$0xf]
      %v5851 = vld [vmem:[%s5838 + $0x30] sm:$0xf]
      %v5852 = vld [vmem:[%s5838 + $0x34] sm:$0xf]
      %v5853 = vld [vmem:[%s5838 + $0x38] sm:$0xf]
      %v5854 = vld [vmem:[%s5838 + $0x3c] sm:$0xf]
      %v5871 = vunpack.c.l.b16 %v5839
      %v5872 = vunpack.c.l.b16 %v5840
      %v5873 = vunpack.c.l.b16 %v5841
      %v5874 = vunpack.c.l.b16 %v5842
      %v5875 = vunpack.c.l.b16 %v5843
      %v5876 = vunpack.c.l.b16 %v5844
      %v5877 = vunpack.c.l.b16 %v5845
      %v5878 = vunpack.c.l.b16 %v5846
      %v5879 = vunpack.c.l.b16 %v5847
      %v5880 = vunpack.c.l.b16 %v5848
      %v5881 = vunpack.c.l.b16 %v5849
      %v5882 = vunpack.c.l.b16 %v5850
      %v5883 = vunpack.c.l.b16 %v5851
      %v5884 = vunpack.c.l.b16 %v5852
      %v5885 = vunpack.c.l.b16 %v5853
      %v5886 = vunpack.c.l.b16 %v5854
      %v5887 = vpack.c.b16 %v5872, %v5871
      %v5888 = vpack.c.b16 %v5874, %v5873
      %v5889 = vpack.c.b16 %v5876, %v5875
      %v5890 = vpack.c.b16 %v5878, %v5877
      %v5891 = vpack.c.b16 %v5880, %v5879
      %v5892 = vpack.c.b16 %v5882, %v5881
      %v5893 = vpack.c.b16 %v5884, %v5883
      %v5894 = vpack.c.b16 %v5886, %v5885
      %5903 = vmatprep.subr.bf16.mxu0 0
      %5904 = vmatpush1.bf16.msra.mxu0 %v5887
      %5905 = vmatprep.subr.bf16.mxu0 0
      %5906 = vmatpush1.bf16.msra.mxu0 %v5888
      %5907 = vmatprep.subr.bf16.mxu0 0
      %5908 = vmatpush1.bf16.msra.mxu0 %v5889
      %5909 = vmatprep.subr.bf16.mxu0 0
      %5910 = vmatpush1.bf16.msra.mxu0 %v5890
      %5911 = vmatprep.subr.bf16.mxu0 0
      %5912 = vmatpush1.bf16.msra.mxu0 %v5891
      %5913 = vmatprep.subr.bf16.mxu0 0
      %5914 = vmatpush1.bf16.msra.mxu0 %v5892
      %5915 = vmatprep.subr.bf16.mxu0 0
      %5916 = vmatpush1.bf16.msra.mxu0 %v5893
      %5917 = vmatprep.subr.bf16.mxu0 0
      %5918 = vmatpush1.bf16.msra.mxu0 %v5894
      %5919 = vmatprep.subr.bf16.mxu0 0
      %5920 = vmatpush1.bf16.msra.mxu0 0
      %5921 = vmatprep.subr.bf16.mxu0 0
      %5922 = vmatpush1.bf16.msra.mxu0 0
      %5923 = vmatprep.subr.bf16.mxu0 0
      %5924 = vmatpush1.bf16.msra.mxu0 0
      %5925 = vmatprep.subr.bf16.mxu0 0
      %5926 = vmatpush1.bf16.msra.mxu0 0
      %5927 = vmatprep.subr.bf16.mxu0 0
      %5928 = vmatpush1.bf16.msra.mxu0 0
      %5929 = vmatprep.subr.bf16.mxu0 0
      %5930 = vmatpush1.bf16.msra.mxu0 0
      %5931 = vmatprep.subr.bf16.mxu0 0
      %5932 = vmatpush1.bf16.msra.mxu0 0
      %5933 = vmatprep.subr.bf16.mxu0 0
      %5934 = vmatpush1.bf16.msra.mxu0 0
      %5935 = vmatprep.mubr.bf16.mxu0 0
      %5936 = vmatmul.mubr.bf16.gmra.mrb[0].mxu0 %v5822
      %v5937 = vpop.f32.mrb[0].mxu0
      %v5938 = vadd.f32 0.0, %v5937
      %v5939 = vpop.f32.mrb[0].mxu0
      %v5940 = vpop.f32.mrb[0].mxu0
      %v5941 = vadd.f32 0.0, %v5940
      %v5942 = vpop.f32.mrb[0].mxu0
      %5943 = vmatprep.mubr.bf16.mxu0 0
      %5944 = vmatmul.mubr.bf16.gmra.mrb[0].mxu0 %v5823
      %v5945 = vpop.f32.mrb[0].mxu0
      %v5946 = vadd.f32 0.0, %v5945
      %v5947 = vpop.f32.mrb[0].mxu0
      %v5948 = vpop.f32.mrb[0].mxu0
      %v5949 = vadd.f32 0.0, %v5948
      %v5950 = vpop.f32.mrb[0].mxu0
      %5951 = vmatprep.mubr.bf16.mxu0 0
      %5952 = vmatmul.mubr.bf16.gmra.mrb[0].mxu0 %v5824
      %v5953 = vpop.f32.mrb[0].mxu0
      %v5954 = vadd.f32 0.0, %v5953
      %v5955 = vpop.f32.mrb[0].mxu0
      %v5956 = vpop.f32.mrb[0].mxu0
      %v5957 = vadd.f32 0.0, %v5956
      %v5958 = vpop.f32.mrb[0].mxu0
      %5959 = vmatprep.mubr.bf16.mxu0 0
      %5960 = vmatmul.mubr.bf16.gmra.mrb[0].mxu0 %v5825
      %v5961 = vpop.f32.mrb[0].mxu0
      %v5962 = vadd.f32 0.0, %v5961
      %v5963 = vpop.f32.mrb[0].mxu0
      %v5964 = vpop.f32.mrb[0].mxu0
      %v5965 = vadd.f32 0.0, %v5964
      %v5966 = vpop.f32.mrb[0].mxu0
      %5967 = vmatprep.mubr.bf16.mxu0 0
      %5968 = vmatmul.mubr.bf16.gmra.mrb[0].mxu0 %v5826
      %v5969 = vpop.f32.mrb[0].mxu0
      %v5970 = vadd.f32 0.0, %v5969
      %v5971 = vpop.f32.mrb[0].mxu0
      %v5972 = vpop.f32.mrb[0].mxu0
      %v5973 = vadd.f32 0.0, %v5972
      %v5974 = vpop.f32.mrb[0].mxu0
      %5975 = vmatprep.mubr.bf16.mxu0 0
      %5976 = vmatmul.mubr.bf16.gmra.mrb[0].mxu0 %v5827
      %v5977 = vpop.f32.mrb[0].mxu0
      %v5978 = vadd.f32 0.0, %v5977
      %v5979 = vpop.f32.mrb[0].mxu0
      %v5980 = vpop.f32.mrb[0].mxu0
      %v5981 = vadd.f32 0.0, %v5980
      %v5982 = vpop.f32.mrb[0].mxu0
      %5983 = vmatprep.mubr.bf16.mxu0 0
      %5984 = vmatmul.mubr.bf16.gmra.mrb[0].mxu0 %v5828
      %v5985 = vpop.f32.mrb[0].mxu0
      %v5986 = vadd.f32 0.0, %v5985
      %v5987 = vpop.f32.mrb[0].mxu0
      %v5988 = vpop.f32.mrb[0].mxu0
      %v5989 = vadd.f32 0.0, %v5988
      %v5990 = vpop.f32.mrb[0].mxu0
      %5991 = vmatprep.mubr.bf16.mxu0 0
      %5992 = vmatmul.mubr.bf16.gmra.mrb[0].mxu0 %v5829
      %v5993 = vpop.f32.mrb[0].mxu0
      %v5994 = vadd.f32 0.0, %v5993
      %v5995 = vpop.f32.mrb[0].mxu0
      %v5996 = vpop.f32.mrb[0].mxu0
      %v5997 = vadd.f32 0.0, %v5996
      %v5998 = vpop.f32.mrb[0].mxu0
      %5999 = vmatprep.mubr.bf16.mxu0 0
      %6000 = vmatmul.mubr.bf16.gmra.mrb[0].mxu0 %v5830
      %v6001 = vpop.f32.mrb[0].mxu0
      %v6002 = vadd.f32 0.0, %v6001
      %v6003 = vpop.f32.mrb[0].mxu0
      %v6004 = vpop.f32.mrb[0].mxu0
      %v6005 = vadd.f32 0.0, %v6004
      %v6006 = vpop.f32.mrb[0].mxu0
      %6007 = vmatprep.mubr.bf16.mxu0 0
      %6008 = vmatmul.mubr.bf16.gmra.mrb[0].mxu0 %v5831
      %v6009 = vpop.f32.mrb[0].mxu0
      %v6010 = vadd.f32 0.0, %v6009
      %v6011 = vpop.f32.mrb[0].mxu0
      %v6012 = vpop.f32.mrb[0].mxu0
      %v6013 = vadd.f32 0.0, %v6012
      %v6014 = vpop.f32.mrb[0].mxu0
      %6015 = vmatprep.mubr.bf16.mxu0 0
      %6016 = vmatmul.mubr.bf16.gmra.mrb[0].mxu0 %v5832
      %v6017 = vpop.f32.mrb[0].mxu0
      %v6018 = vadd.f32 0.0, %v6017
      %v6019 = vpop.f32.mrb[0].mxu0
      %v6020 = vpop.f32.mrb[0].mxu0
      %v6021 = vadd.f32 0.0, %v6020
      %v6022 = vpop.f32.mrb[0].mxu0
      %6023 = vmatprep.mubr.bf16.mxu0 0
      %6024 = vmatmul.mubr.bf16.gmra.mrb[0].mxu0 %v5833
      %v6025 = vpop.f32.mrb[0].mxu0
      %v6026 = vadd.f32 0.0, %v6025
      %v6027 = vpop.f32.mrb[0].mxu0
      %v6028 = vpop.f32.mrb[0].mxu0
      %v6029 = vadd.f32 0.0, %v6028
      %v6030 = vpop.f32.mrb[0].mxu0
      %6031 = vmatprep.mubr.bf16.mxu0 0
      %6032 = vmatmul.mubr.bf16.gmra.mrb[0].mxu0 %v5834
      %v6033 = vpop.f32.mrb[0].mxu0
      %v6034 = vadd.f32 0.0, %v6033
      %v6035 = vpop.f32.mrb[0].mxu0
      %v6036 = vpop.f32.mrb[0].mxu0
      %v6037 = vadd.f32 0.0, %v6036
      %v6038 = vpop.f32.mrb[0].mxu0
      %6039 = vmatprep.mubr.bf16.mxu0 0
      %6040 = vmatmul.mubr.bf16.gmra.mrb[0].mxu0 %v5835
      %v6041 = vpop.f32.mrb[0].mxu0
      %v6042 = vadd.f32 0.0, %v6041
      %v6043 = vpop.f32.mrb[0].mxu0
      %v6044 = vpop.f32.mrb[0].mxu0
      %v6045 = vadd.f32 0.0, %v6044
      %v6046 = vpop.f32.mrb[0].mxu0
      %6047 = vmatprep.mubr.bf16.mxu0 0
      %6048 = vmatmul.mubr.bf16.gmra.mrb[0].mxu0 %v5836
      %v6049 = vpop.f32.mrb[0].mxu0
      %v6050 = vadd.f32 0.0, %v6049
      %v6051 = vpop.f32.mrb[0].mxu0
      %v6052 = vpop.f32.mrb[0].mxu0
      %v6053 = vadd.f32 0.0, %v6052
      %v6054 = vpop.f32.mrb[0].mxu0
      %6055 = vmatprep.mubr.bf16.mxu0 0
      %6056 = vmatmul.mubr.bf16.gmra.mrb[0].mxu0 %v5837
      %v6057 = vpop.f32.mrb[0].mxu0
      %v6058 = vadd.f32 0.0, %v6057
      %v6059 = vpop.f32.mrb[0].mxu0
      %v6060 = vpop.f32.mrb[0].mxu0
      %v6061 = vadd.f32 0.0, %v6060
      %v6062 = vpop.f32.mrb[0].mxu0
      %6063 = vdwg.mxu0
      %v6064 = vld [vmem:[#allocation4] sm:$0xff]
      %v6065 = vld [vmem:[#allocation4 + $0x8] sm:$0xff]
      %v6066 = vld [vmem:[#allocation4 + $0x10] sm:$0xff]
      %v6067 = vld [vmem:[#allocation4 + $0x18] sm:$0xff]
      %v6068 = vld [vmem:[#allocation4 + $0x20] sm:$0xff]
      %v6069 = vld [vmem:[#allocation4 + $0x28] sm:$0xff]
      %v6070 = vld [vmem:[#allocation4 + $0x30] sm:$0xff]
      %v6071 = vld [vmem:[#allocation4 + $0x38] sm:$0xff]
      %v6072 = vld [vmem:[#allocation4 + $0x40] sm:$0xff]
      %v6073 = vld [vmem:[#allocation4 + $0x48] sm:$0xff]
      %v6074 = vld [vmem:[#allocation4 + $0x50] sm:$0xff]
      %v6075 = vld [vmem:[#allocation4 + $0x58] sm:$0xff]
      %v6076 = vld [vmem:[#allocation4 + $0x60] sm:$0xff]
      %v6077 = vld [vmem:[#allocation4 + $0x68] sm:$0xff]
      %v6078 = vld [vmem:[#allocation4 + $0x70] sm:$0xff]
      %v6079 = vld [vmem:[#allocation4 + $0x78] sm:$0xff]
      %v6080 = vld [vmem:[#allocation4 + $0x80] sm:$0xff]
      %v6081 = vld [vmem:[#allocation4 + $0x88] sm:$0xff]
      %v6082 = vld [vmem:[#allocation4 + $0x90] sm:$0xff]
      %v6083 = vld [vmem:[#allocation4 + $0x98] sm:$0xff]
      %v6084 = vld [vmem:[#allocation4 + $0xa0] sm:$0xff]
      %v6085 = vld [vmem:[#allocation4 + $0xa8] sm:$0xff]
      %v6086 = vld [vmem:[#allocation4 + $0xb0] sm:$0xff]
      %v6087 = vld [vmem:[#allocation4 + $0xb8] sm:$0xff]
      %v6088 = vld [vmem:[#allocation4 + $0xc0] sm:$0xff]
      %v6089 = vld [vmem:[#allocation4 + $0xc8] sm:$0xff]
      %v6090 = vld [vmem:[#allocation4 + $0xd0] sm:$0xff]
      %v6091 = vld [vmem:[#allocation4 + $0xd8] sm:$0xff]
      %v6092 = vld [vmem:[#allocation4 + $0xe0] sm:$0xff]
      %v6093 = vld [vmem:[#allocation4 + $0xe8] sm:$0xff]
      %v6094 = vld [vmem:[#allocation4 + $0xf0] sm:$0xff]
      %v6095 = vld [vmem:[#allocation4 + $0xf8] sm:$0xff]
      %v6096 = vadd.f32 %v6064, %v5938
      %v6097 = vadd.f32 %v6065, %v5941
      %v6098 = vadd.f32 %v6066, %v5946
      %v6099 = vadd.f32 %v6067, %v5949
      %v6100 = vadd.f32 %v6068, %v5954
      %v6101 = vadd.f32 %v6069, %v5957
      %v6102 = vadd.f32 %v6070, %v5962
      %v6103 = vadd.f32 %v6071, %v5965
      %v6104 = vadd.f32 %v6072, %v5970
      %v6105 = vadd.f32 %v6073, %v5973
      %v6106 = vadd.f32 %v6074, %v5978
      %v6107 = vadd.f32 %v6075, %v5981
      %v6108 = vadd.f32 %v6076, %v5986
      %v6109 = vadd.f32 %v6077, %v5989
      %v6110 = vadd.f32 %v6078, %v5994
      %v6111 = vadd.f32 %v6079, %v5997
      %v6112 = vadd.f32 %v6080, %v6002
      %v6113 = vadd.f32 %v6081, %v6005
      %v6114 = vadd.f32 %v6082, %v6010
      %v6115 = vadd.f32 %v6083, %v6013
      %v6116 = vadd.f32 %v6084, %v6018
      %v6117 = vadd.f32 %v6085, %v6021
      %v6118 = vadd.f32 %v6086, %v6026
      %v6119 = vadd.f32 %v6087, %v6029
      %v6120 = vadd.f32 %v6088, %v6034
      %v6121 = vadd.f32 %v6089, %v6037
      %v6122 = vadd.f32 %v6090, %v6042
      %v6123 = vadd.f32 %v6091, %v6045
      %v6124 = vadd.f32 %v6092, %v6050
      %v6125 = vadd.f32 %v6093, %v6053
      %v6126 = vadd.f32 %v6094, %v6058
      %v6127 = vadd.f32 %v6095, %v6061
      %6128 = vst [vmem:[#allocation4] sm:$0xff] %v6096
      %6129 = vst [vmem:[#allocation4 + $0x8] sm:$0xff] %v6097
      %6130 = vst [vmem:[#allocation4 + $0x10] sm:$0xff] %v6098
      %6131 = vst [vmem:[#allocation4 + $0x18] sm:$0xff] %v6099
      %6132 = vst [vmem:[#allocation4 + $0x20] sm:$0xff] %v6100
      %6133 = vst [vmem:[#allocation4 + $0x28] sm:$0xff] %v6101
      %6134 = vst [vmem:[#allocation4 + $0x30] sm:$0xff] %v6102
      %6135 = vst [vmem:[#allocation4 + $0x38] sm:$0xff] %v6103
      %6136 = vst [vmem:[#allocation4 + $0x40] sm:$0xff] %v6104
      %6137 = vst [vmem:[#allocation4 + $0x48] sm:$0xff] %v6105
      %6138 = vst [vmem:[#allocation4 + $0x50] sm:$0xff] %v6106
      %6139 = vst [vmem:[#allocation4 + $0x58] sm:$0xff] %v6107
      %6140 = vst [vmem:[#allocation4 + $0x60] sm:$0xff] %v6108
      %6141 = vst [vmem:[#allocation4 + $0x68] sm:$0xff] %v6109
      %6142 = vst [vmem:[#allocation4 + $0x70] sm:$0xff] %v6110
      %6143 = vst [vmem:[#allocation4 + $0x78] sm:$0xff] %v6111
      %6144 = vst [vmem:[#allocation4 + $0x80] sm:$0xff] %v6112
      %6145 = vst [vmem:[#allocation4 + $0x88] sm:$0xff] %v6113
      %6146 = vst [vmem:[#allocation4 + $0x90] sm:$0xff] %v6114
      %6147 = vst [vmem:[#allocation4 + $0x98] sm:$0xff] %v6115
      %6148 = vst [vmem:[#allocation4 + $0xa0] sm:$0xff] %v6116
      %6149 = vst [vmem:[#allocation4 + $0xa8] sm:$0xff] %v6117
      %6150 = vst [vmem:[#allocation4 + $0xb0] sm:$0xff] %v6118
      %6151 = vst [vmem:[#allocation4 + $0xb8] sm:$0xff] %v6119
      %6152 = vst [vmem:[#allocation4 + $0xc0] sm:$0xff] %v6120
      %6153 = vst [vmem:[#allocation4 + $0xc8] sm:$0xff] %v6121
      %6154 = vst [vmem:[#allocation4 + $0xd0] sm:$0xff] %v6122
      %6155 = vst [vmem:[#allocation4 + $0xd8] sm:$0xff] %v6123
      %6156 = vst [vmem:[#allocation4 + $0xe0] sm:$0xff] %v6124
      %6157 = vst [vmem:[#allocation4 + $0xe8] sm:$0xff] %v6125
      %6158 = vst [vmem:[#allocation4 + $0xf0] sm:$0xff] %v6126
      %6159 = vst [vmem:[#allocation4 + $0xf8] sm:$0xff] %v6127
      %s6160 = scalar_lea.vmem [#allocation3], 48
      %v6161 = vld [vmem:[%s6160] sm:$0xff]
      %v6162 = vld [vmem:[%s6160 + $0x8] sm:$0xff]
      %v6163 = vld [vmem:[%s6160 + $0x18] sm:$0xff]
      %v6164 = vld [vmem:[%s6160 + $0x20] sm:$0xff]
      %v6165 = vld [vmem:[%s6160 + $0x30] sm:$0xff]
      %v6166 = vld [vmem:[%s6160 + $0x38] sm:$0xff]
      %v6167 = vld [vmem:[%s6160 + $0x48] sm:$0xff]
      %v6168 = vld [vmem:[%s6160 + $0x50] sm:$0xff]
      %v6169 = vld [vmem:[%s6160 + $0x60] sm:$0xff]
      %v6170 = vld [vmem:[%s6160 + $0x68] sm:$0xff]
      %v6171 = vld [vmem:[%s6160 + $0x78] sm:$0xff]
      %v6172 = vld [vmem:[%s6160 + $0x80] sm:$0xff]
      %v6173 = vld [vmem:[%s6160 + $0x90] sm:$0xff]
      %v6174 = vld [vmem:[%s6160 + $0x98] sm:$0xff]
      %v6175 = vld [vmem:[%s6160 + $0xa8] sm:$0xff]
      %v6176 = vld [vmem:[%s6160 + $0xb0] sm:$0xff]
      %v6177 = vld [vmem:[%s6160 + $0xc0] sm:$0xff]
      %v6178 = vld [vmem:[%s6160 + $0xc8] sm:$0xff]
      %v6179 = vld [vmem:[%s6160 + $0xd8] sm:$0xff]
      %v6180 = vld [vmem:[%s6160 + $0xe0] sm:$0xff]
      %v6181 = vld [vmem:[%s6160 + $0xf0] sm:$0xff]
      %v6182 = vld [vmem:[%s6160 + $0xf8] sm:$0xff]
      %v6183 = vld [vmem:[%s6160 + $0x108] sm:$0xff]
      %v6184 = vld [vmem:[%s6160 + $0x110] sm:$0xff]
      %v6185 = vld [vmem:[%s6160 + $0x120] sm:$0xff]
      %v6186 = vld [vmem:[%s6160 + $0x128] sm:$0xff]
      %v6187 = vld [vmem:[%s6160 + $0x138] sm:$0xff]
      %v6188 = vld [vmem:[%s6160 + $0x140] sm:$0xff]
      %v6189 = vld [vmem:[%s6160 + $0x150] sm:$0xff]
      %v6190 = vld [vmem:[%s6160 + $0x158] sm:$0xff]
      %v6191 = vld [vmem:[%s6160 + $0x168] sm:$0xff]
      %v6192 = vld [vmem:[%s6160 + $0x170] sm:$0xff]
      %v6193 = vpack.c.bf16 %v6162, %v6161
      %v6194 = vpack.c.bf16 %v6164, %v6163
      %v6195 = vpack.c.bf16 %v6166, %v6165
      %v6196 = vpack.c.bf16 %v6168, %v6167
      %v6197 = vpack.c.bf16 %v6170, %v6169
      %v6198 = vpack.c.bf16 %v6172, %v6171
      %v6199 = vpack.c.bf16 %v6174, %v6173
      %v6200 = vpack.c.bf16 %v6176, %v6175
      %v6201 = vpack.c.bf16 %v6178, %v6177
      %v6202 = vpack.c.bf16 %v6180, %v6179
      %v6203 = vpack.c.bf16 %v6182, %v6181
      %v6204 = vpack.c.bf16 %v6184, %v6183
      %v6205 = vpack.c.bf16 %v6186, %v6185
      %v6206 = vpack.c.bf16 %v6188, %v6187
      %v6207 = vpack.c.bf16 %v6190, %v6189
      %v6208 = vpack.c.bf16 %v6192, %v6191
      %s6209 = scalar_lea.vmem %s3, 384
      %v6210 = vld [vmem:[%s6209] sm:$0xf]
      %v6211 = vld [vmem:[%s6209 + $0x4] sm:$0xf]
      %v6212 = vld [vmem:[%s6209 + $0x8] sm:$0xf]
      %v6213 = vld [vmem:[%s6209 + $0xc] sm:$0xf]
      %v6214 = vld [vmem:[%s6209 + $0x10] sm:$0xf]
      %v6215 = vld [vmem:[%s6209 + $0x14] sm:$0xf]
      %v6216 = vld [vmem:[%s6209 + $0x18] sm:$0xf]
      %v6217 = vld [vmem:[%s6209 + $0x1c] sm:$0xf]
      %v6218 = vld [vmem:[%s6209 + $0x20] sm:$0xf]
      %v6219 = vld [vmem:[%s6209 + $0x24] sm:$0xf]
      %v6220 = vld [vmem:[%s6209 + $0x28] sm:$0xf]
      %v6221 = vld [vmem:[%s6209 + $0x2c] sm:$0xf]
      %v6222 = vld [vmem:[%s6209 + $0x30] sm:$0xf]
      %v6223 = vld [vmem:[%s6209 + $0x34] sm:$0xf]
      %v6224 = vld [vmem:[%s6209 + $0x38] sm:$0xf]
      %v6225 = vld [vmem:[%s6209 + $0x3c] sm:$0xf]
      %v6242 = vunpack.c.l.b16 %v6210
      %v6243 = vunpack.c.l.b16 %v6211
      %v6244 = vunpack.c.l.b16 %v6212
      %v6245 = vunpack.c.l.b16 %v6213
      %v6246 = vunpack.c.l.b16 %v6214
      %v6247 = vunpack.c.l.b16 %v6215
      %v6248 = vunpack.c.l.b16 %v6216
      %v6249 = vunpack.c.l.b16 %v6217
      %v6250 = vunpack.c.l.b16 %v6218
      %v6251 = vunpack.c.l.b16 %v6219
      %v6252 = vunpack.c.l.b16 %v6220
      %v6253 = vunpack.c.l.b16 %v6221
      %v6254 = vunpack.c.l.b16 %v6222
      %v6255 = vunpack.c.l.b16 %v6223
      %v6256 = vunpack.c.l.b16 %v6224
      %v6257 = vunpack.c.l.b16 %v6225
      %v6258 = vpack.c.b16 %v6243, %v6242
      %v6259 = vpack.c.b16 %v6245, %v6244
      %v6260 = vpack.c.b16 %v6247, %v6246
      %v6261 = vpack.c.b16 %v6249, %v6248
      %v6262 = vpack.c.b16 %v6251, %v6250
      %v6263 = vpack.c.b16 %v6253, %v6252
      %v6264 = vpack.c.b16 %v6255, %v6254
      %v6265 = vpack.c.b16 %v6257, %v6256
      %6274 = vmatprep.subr.bf16.mxu0 0
      %6275 = vmatpush1.bf16.msra.mxu0 %v6258
      %6276 = vmatprep.subr.bf16.mxu0 0
      %6277 = vmatpush1.bf16.msra.mxu0 %v6259
      %6278 = vmatprep.subr.bf16.mxu0 0
      %6279 = vmatpush1.bf16.msra.mxu0 %v6260
      %6280 = vmatprep.subr.bf16.mxu0 0
      %6281 = vmatpush1.bf16.msra.mxu0 %v6261
      %6282 = vmatprep.subr.bf16.mxu0 0
      %6283 = vmatpush1.bf16.msra.mxu0 %v6262
      %6284 = vmatprep.subr.bf16.mxu0 0
      %6285 = vmatpush1.bf16.msra.mxu0 %v6263
      %6286 = vmatprep.subr.bf16.mxu0 0
      %6287 = vmatpush1.bf16.msra.mxu0 %v6264
      %6288 = vmatprep.subr.bf16.mxu0 0
      %6289 = vmatpush1.bf16.msra.mxu0 %v6265
      %6290 = vmatprep.subr.bf16.mxu0 0
      %6291 = vmatpush1.bf16.msra.mxu0 0
      %6292 = vmatprep.subr.bf16.mxu0 0
      %6293 = vmatpush1.bf16.msra.mxu0 0
      %6294 = vmatprep.subr.bf16.mxu0 0
      %6295 = vmatpush1.bf16.msra.mxu0 0
      %6296 = vmatprep.subr.bf16.mxu0 0
      %6297 = vmatpush1.bf16.msra.mxu0 0
      %6298 = vmatprep.subr.bf16.mxu0 0
      %6299 = vmatpush1.bf16.msra.mxu0 0
      %6300 = vmatprep.subr.bf16.mxu0 0
      %6301 = vmatpush1.bf16.msra.mxu0 0
      %6302 = vmatprep.subr.bf16.mxu0 0
      %6303 = vmatpush1.bf16.msra.mxu0 0
      %6304 = vmatprep.subr.bf16.mxu0 0
      %6305 = vmatpush1.bf16.msra.mxu0 0
      %6306 = vmatprep.mubr.bf16.mxu0 0
      %6307 = vmatmul.mubr.bf16.gmra.mrb[0].mxu0 %v6193
      %v6308 = vpop.f32.mrb[0].mxu0
      %v6309 = vadd.f32 0.0, %v6308
      %v6310 = vpop.f32.mrb[0].mxu0
      %v6311 = vpop.f32.mrb[0].mxu0
      %v6312 = vadd.f32 0.0, %v6311
      %v6313 = vpop.f32.mrb[0].mxu0
      %6314 = vmatprep.mubr.bf16.mxu0 0
      %6315 = vmatmul.mubr.bf16.gmra.mrb[0].mxu0 %v6194
      %v6316 = vpop.f32.mrb[0].mxu0
      %v6317 = vadd.f32 0.0, %v6316
      %v6318 = vpop.f32.mrb[0].mxu0
      %v6319 = vpop.f32.mrb[0].mxu0
      %v6320 = vadd.f32 0.0, %v6319
      %v6321 = vpop.f32.mrb[0].mxu0
      %6322 = vmatprep.mubr.bf16.mxu0 0
      %6323 = vmatmul.mubr.bf16.gmra.mrb[0].mxu0 %v6195
      %v6324 = vpop.f32.mrb[0].mxu0
      %v6325 = vadd.f32 0.0, %v6324
      %v6326 = vpop.f32.mrb[0].mxu0
      %v6327 = vpop.f32.mrb[0].mxu0
      %v6328 = vadd.f32 0.0, %v6327
      %v6329 = vpop.f32.mrb[0].mxu0
      %6330 = vmatprep.mubr.bf16.mxu0 0
      %6331 = vmatmul.mubr.bf16.gmra.mrb[0].mxu0 %v6196
      %v6332 = vpop.f32.mrb[0].mxu0
      %v6333 = vadd.f32 0.0, %v6332
      %v6334 = vpop.f32.mrb[0].mxu0
      %v6335 = vpop.f32.mrb[0].mxu0
      %v6336 = vadd.f32 0.0, %v6335
      %v6337 = vpop.f32.mrb[0].mxu0
      %6338 = vmatprep.mubr.bf16.mxu0 0
      %6339 = vmatmul.mubr.bf16.gmra.mrb[0].mxu0 %v6197
      %v6340 = vpop.f32.mrb[0].mxu0
      %v6341 = vadd.f32 0.0, %v6340
      %v6342 = vpop.f32.mrb[0].mxu0
      %v6343 = vpop.f32.mrb[0].mxu0
      %v6344 = vadd.f32 0.0, %v6343
      %v6345 = vpop.f32.mrb[0].mxu0
      %6346 = vmatprep.mubr.bf16.mxu0 0
      %6347 = vmatmul.mubr.bf16.gmra.mrb[0].mxu0 %v6198
      %v6348 = vpop.f32.mrb[0].mxu0
      %v6349 = vadd.f32 0.0, %v6348
      %v6350 = vpop.f32.mrb[0].mxu0
      %v6351 = vpop.f32.mrb[0].mxu0
      %v6352 = vadd.f32 0.0, %v6351
      %v6353 = vpop.f32.mrb[0].mxu0
      %6354 = vmatprep.mubr.bf16.mxu0 0
      %6355 = vmatmul.mubr.bf16.gmra.mrb[0].mxu0 %v6199
      %v6356 = vpop.f32.mrb[0].mxu0
      %v6357 = vadd.f32 0.0, %v6356
      %v6358 = vpop.f32.mrb[0].mxu0
      %v6359 = vpop.f32.mrb[0].mxu0
      %v6360 = vadd.f32 0.0, %v6359
      %v6361 = vpop.f32.mrb[0].mxu0
      %6362 = vmatprep.mubr.bf16.mxu0 0
      %6363 = vmatmul.mubr.bf16.gmra.mrb[0].mxu0 %v6200
      %v6364 = vpop.f32.mrb[0].mxu0
      %v6365 = vadd.f32 0.0, %v6364
      %v6366 = vpop.f32.mrb[0].mxu0
      %v6367 = vpop.f32.mrb[0].mxu0
      %v6368 = vadd.f32 0.0, %v6367
      %v6369 = vpop.f32.mrb[0].mxu0
      %6370 = vmatprep.mubr.bf16.mxu0 0
      %6371 = vmatmul.mubr.bf16.gmra.mrb[0].mxu0 %v6201
      %v6372 = vpop.f32.mrb[0].mxu0
      %v6373 = vadd.f32 0.0, %v6372
      %v6374 = vpop.f32.mrb[0].mxu0
      %v6375 = vpop.f32.mrb[0].mxu0
      %v6376 = vadd.f32 0.0, %v6375
      %v6377 = vpop.f32.mrb[0].mxu0
      %6378 = vmatprep.mubr.bf16.mxu0 0
      %6379 = vmatmul.mubr.bf16.gmra.mrb[0].mxu0 %v6202
      %v6380 = vpop.f32.mrb[0].mxu0
      %v6381 = vadd.f32 0.0, %v6380
      %v6382 = vpop.f32.mrb[0].mxu0
      %v6383 = vpop.f32.mrb[0].mxu0
      %v6384 = vadd.f32 0.0, %v6383
      %v6385 = vpop.f32.mrb[0].mxu0
      %6386 = vmatprep.mubr.bf16.mxu0 0
      %6387 = vmatmul.mubr.bf16.gmra.mrb[0].mxu0 %v6203
      %v6388 = vpop.f32.mrb[0].mxu0
      %v6389 = vadd.f32 0.0, %v6388
      %v6390 = vpop.f32.mrb[0].mxu0
      %v6391 = vpop.f32.mrb[0].mxu0
      %v6392 = vadd.f32 0.0, %v6391
      %v6393 = vpop.f32.mrb[0].mxu0
      %6394 = vmatprep.mubr.bf16.mxu0 0
      %6395 = vmatmul.mubr.bf16.gmra.mrb[0].mxu0 %v6204
      %v6396 = vpop.f32.mrb[0].mxu0
      %v6397 = vadd.f32 0.0, %v6396
      %v6398 = vpop.f32.mrb[0].mxu0
      %v6399 = vpop.f32.mrb[0].mxu0
      %v6400 = vadd.f32 0.0, %v6399
      %v6401 = vpop.f32.mrb[0].mxu0
      %6402 = vmatprep.mubr.bf16.mxu0 0
      %6403 = vmatmul.mubr.bf16.gmra.mrb[0].mxu0 %v6205
      %v6404 = vpop.f32.mrb[0].mxu0
      %v6405 = vadd.f32 0.0, %v6404
      %v6406 = vpop.f32.mrb[0].mxu0
      %v6407 = vpop.f32.mrb[0].mxu0
      %v6408 = vadd.f32 0.0, %v6407
      %v6409 = vpop.f32.mrb[0].mxu0
      %6410 = vmatprep.mubr.bf16.mxu0 0
      %6411 = vmatmul.mubr.bf16.gmra.mrb[0].mxu0 %v6206
      %v6412 = vpop.f32.mrb[0].mxu0
      %v6413 = vadd.f32 0.0, %v6412
      %v6414 = vpop.f32.mrb[0].mxu0
      %v6415 = vpop.f32.mrb[0].mxu0
      %v6416 = vadd.f32 0.0, %v6415
      %v6417 = vpop.f32.mrb[0].mxu0
      %6418 = vmatprep.mubr.bf16.mxu0 0
      %6419 = vmatmul.mubr.bf16.gmra.mrb[0].mxu0 %v6207
      %v6420 = vpop.f32.mrb[0].mxu0
      %v6421 = vadd.f32 0.0, %v6420
      %v6422 = vpop.f32.mrb[0].mxu0
      %v6423 = vpop.f32.mrb[0].mxu0
      %v6424 = vadd.f32 0.0, %v6423
      %v6425 = vpop.f32.mrb[0].mxu0
      %6426 = vmatprep.mubr.bf16.mxu0 0
      %6427 = vmatmul.mubr.bf16.gmra.mrb[0].mxu0 %v6208
      %v6428 = vpop.f32.mrb[0].mxu0
      %v6429 = vadd.f32 0.0, %v6428
      %v6430 = vpop.f32.mrb[0].mxu0
      %v6431 = vpop.f32.mrb[0].mxu0
      %v6432 = vadd.f32 0.0, %v6431
      %v6433 = vpop.f32.mrb[0].mxu0
      %6434 = vdwg.mxu0
      %v6435 = vld [vmem:[#allocation4] sm:$0xff]
      %v6436 = vld [vmem:[#allocation4 + $0x8] sm:$0xff]
      %v6437 = vld [vmem:[#allocation4 + $0x10] sm:$0xff]
      %v6438 = vld [vmem:[#allocation4 + $0x18] sm:$0xff]
      %v6439 = vld [vmem:[#allocation4 + $0x20] sm:$0xff]
      %v6440 = vld [vmem:[#allocation4 + $0x28] sm:$0xff]
      %v6441 = vld [vmem:[#allocation4 + $0x30] sm:$0xff]
      %v6442 = vld [vmem:[#allocation4 + $0x38] sm:$0xff]
      %v6443 = vld [vmem:[#allocation4 + $0x40] sm:$0xff]
      %v6444 = vld [vmem:[#allocation4 + $0x48] sm:$0xff]
      %v6445 = vld [vmem:[#allocation4 + $0x50] sm:$0xff]
      %v6446 = vld [vmem:[#allocation4 + $0x58] sm:$0xff]
      %v6447 = vld [vmem:[#allocation4 + $0x60] sm:$0xff]
      %v6448 = vld [vmem:[#allocation4 + $0x68] sm:$0xff]
      %v6449 = vld [vmem:[#allocation4 + $0x70] sm:$0xff]
      %v6450 = vld [vmem:[#allocation4 + $0x78] sm:$0xff]
      %v6451 = vld [vmem:[#allocation4 + $0x80] sm:$0xff]
      %v6452 = vld [vmem:[#allocation4 + $0x88] sm:$0xff]
      %v6453 = vld [vmem:[#allocation4 + $0x90] sm:$0xff]
      %v6454 = vld [vmem:[#allocation4 + $0x98] sm:$0xff]
      %v6455 = vld [vmem:[#allocation4 + $0xa0] sm:$0xff]
      %v6456 = vld [vmem:[#allocation4 + $0xa8] sm:$0xff]
      %v6457 = vld [vmem:[#allocation4 + $0xb0] sm:$0xff]
      %v6458 = vld [vmem:[#allocation4 + $0xb8] sm:$0xff]
      %v6459 = vld [vmem:[#allocation4 + $0xc0] sm:$0xff]
      %v6460 = vld [vmem:[#allocation4 + $0xc8] sm:$0xff]
      %v6461 = vld [vmem:[#allocation4 + $0xd0] sm:$0xff]
      %v6462 = vld [vmem:[#allocation4 + $0xd8] sm:$0xff]
      %v6463 = vld [vmem:[#allocation4 + $0xe0] sm:$0xff]
      %v6464 = vld [vmem:[#allocation4 + $0xe8] sm:$0xff]
      %v6465 = vld [vmem:[#allocation4 + $0xf0] sm:$0xff]
      %v6466 = vld [vmem:[#allocation4 + $0xf8] sm:$0xff]
      %v6467 = vadd.f32 %v6435, %v6309
      %v6468 = vadd.f32 %v6436, %v6312
      %v6469 = vadd.f32 %v6437, %v6317
      %v6470 = vadd.f32 %v6438, %v6320
      %v6471 = vadd.f32 %v6439, %v6325
      %v6472 = vadd.f32 %v6440, %v6328
      %v6473 = vadd.f32 %v6441, %v6333
      %v6474 = vadd.f32 %v6442, %v6336
      %v6475 = vadd.f32 %v6443, %v6341
      %v6476 = vadd.f32 %v6444, %v6344
      %v6477 = vadd.f32 %v6445, %v6349
      %v6478 = vadd.f32 %v6446, %v6352
      %v6479 = vadd.f32 %v6447, %v6357
      %v6480 = vadd.f32 %v6448, %v6360
      %v6481 = vadd.f32 %v6449, %v6365
      %v6482 = vadd.f32 %v6450, %v6368
      %v6483 = vadd.f32 %v6451, %v6373
      %v6484 = vadd.f32 %v6452, %v6376
      %v6485 = vadd.f32 %v6453, %v6381
      %v6486 = vadd.f32 %v6454, %v6384
      %v6487 = vadd.f32 %v6455, %v6389
      %v6488 = vadd.f32 %v6456, %v6392
      %v6489 = vadd.f32 %v6457, %v6397
      %v6490 = vadd.f32 %v6458, %v6400
      %v6491 = vadd.f32 %v6459, %v6405
      %v6492 = vadd.f32 %v6460, %v6408
      %v6493 = vadd.f32 %v6461, %v6413
      %v6494 = vadd.f32 %v6462, %v6416
      %v6495 = vadd.f32 %v6463, %v6421
      %v6496 = vadd.f32 %v6464, %v6424
      %v6497 = vadd.f32 %v6465, %v6429
      %v6498 = vadd.f32 %v6466, %v6432
      %6499 = vst [vmem:[#allocation4] sm:$0xff] %v6467
      %6500 = vst [vmem:[#allocation4 + $0x8] sm:$0xff] %v6468
      %6501 = vst [vmem:[#allocation4 + $0x10] sm:$0xff] %v6469
      %6502 = vst [vmem:[#allocation4 + $0x18] sm:$0xff] %v6470
      %6503 = vst [vmem:[#allocation4 + $0x20] sm:$0xff] %v6471
      %6504 = vst [vmem:[#allocation4 + $0x28] sm:$0xff] %v6472
      %6505 = vst [vmem:[#allocation4 + $0x30] sm:$0xff] %v6473
      %6506 = vst [vmem:[#allocation4 + $0x38] sm:$0xff] %v6474
      %6507 = vst [vmem:[#allocation4 + $0x40] sm:$0xff] %v6475
      %6508 = vst [vmem:[#allocation4 + $0x48] sm:$0xff] %v6476
      %6509 = vst [vmem:[#allocation4 + $0x50] sm:$0xff] %v6477
      %6510 = vst [vmem:[#allocation4 + $0x58] sm:$0xff] %v6478
      %6511 = vst [vmem:[#allocation4 + $0x60] sm:$0xff] %v6479
      %6512 = vst [vmem:[#allocation4 + $0x68] sm:$0xff] %v6480
      %6513 = vst [vmem:[#allocation4 + $0x70] sm:$0xff] %v6481
      %6514 = vst [vmem:[#allocation4 + $0x78] sm:$0xff] %v6482
      %6515 = vst [vmem:[#allocation4 + $0x80] sm:$0xff] %v6483
      %6516 = vst [vmem:[#allocation4 + $0x88] sm:$0xff] %v6484
      %6517 = vst [vmem:[#allocation4 + $0x90] sm:$0xff] %v6485
      %6518 = vst [vmem:[#allocation4 + $0x98] sm:$0xff] %v6486
      %6519 = vst [vmem:[#allocation4 + $0xa0] sm:$0xff] %v6487
      %6520 = vst [vmem:[#allocation4 + $0xa8] sm:$0xff] %v6488
      %6521 = vst [vmem:[#allocation4 + $0xb0] sm:$0xff] %v6489
      %6522 = vst [vmem:[#allocation4 + $0xb8] sm:$0xff] %v6490
      %6523 = vst [vmem:[#allocation4 + $0xc0] sm:$0xff] %v6491
      %6524 = vst [vmem:[#allocation4 + $0xc8] sm:$0xff] %v6492
      %6525 = vst [vmem:[#allocation4 + $0xd0] sm:$0xff] %v6493
      %6526 = vst [vmem:[#allocation4 + $0xd8] sm:$0xff] %v6494
      %6527 = vst [vmem:[#allocation4 + $0xe0] sm:$0xff] %v6495
      %6528 = vst [vmem:[#allocation4 + $0xe8] sm:$0xff] %v6496
      %6529 = vst [vmem:[#allocation4 + $0xf0] sm:$0xff] %v6497
      %6530 = vst [vmem:[#allocation4 + $0xf8] sm:$0xff] %v6498
      %v6531 = vld [vmem:[%s6160 + $0x1] sm:$0xff]
      %v6532 = vld [vmem:[%s6160 + $0x9] sm:$0xff]
      %v6533 = vld [vmem:[%s6160 + $0x19] sm:$0xff]
      %v6534 = vld [vmem:[%s6160 + $0x21] sm:$0xff]
      %v6535 = vld [vmem:[%s6160 + $0x31] sm:$0xff]
      %v6536 = vld [vmem:[%s6160 + $0x39] sm:$0xff]
      %v6537 = vld [vmem:[%s6160 + $0x49] sm:$0xff]
      %v6538 = vld [vmem:[%s6160 + $0x51] sm:$0xff]
      %v6539 = vld [vmem:[%s6160 + $0x61] sm:$0xff]
      %v6540 = vld [vmem:[%s6160 + $0x69] sm:$0xff]
      %v6541 = vld [vmem:[%s6160 + $0x79] sm:$0xff]
      %v6542 = vld [vmem:[%s6160 + $0x81] sm:$0xff]
      %v6543 = vld [vmem:[%s6160 + $0x91] sm:$0xff]
      %v6544 = vld [vmem:[%s6160 + $0x99] sm:$0xff]
      %v6545 = vld [vmem:[%s6160 + $0xa9] sm:$0xff]
      %v6546 = vld [vmem:[%s6160 + $0xb1] sm:$0xff]
      %v6547 = vld [vmem:[%s6160 + $0xc1] sm:$0xff]
      %v6548 = vld [vmem:[%s6160 + $0xc9] sm:$0xff]
      %v6549 = vld [vmem:[%s6160 + $0xd9] sm:$0xff]
      %v6550 = vld [vmem:[%s6160 + $0xe1] sm:$0xff]
      %v6551 = vld [vmem:[%s6160 + $0xf1] sm:$0xff]
      %v6552 = vld [vmem:[%s6160 + $0xf9] sm:$0xff]
      %v6553 = vld [vmem:[%s6160 + $0x109] sm:$0xff]
      %v6554 = vld [vmem:[%s6160 + $0x111] sm:$0xff]
      %v6555 = vld [vmem:[%s6160 + $0x121] sm:$0xff]
      %v6556 = vld [vmem:[%s6160 + $0x129] sm:$0xff]
      %v6557 = vld [vmem:[%s6160 + $0x139] sm:$0xff]
      %v6558 = vld [vmem:[%s6160 + $0x141] sm:$0xff]
      %v6559 = vld [vmem:[%s6160 + $0x151] sm:$0xff]
      %v6560 = vld [vmem:[%s6160 + $0x159] sm:$0xff]
      %v6561 = vld [vmem:[%s6160 + $0x169] sm:$0xff]
      %v6562 = vld [vmem:[%s6160 + $0x171] sm:$0xff]
      %v6563 = vpack.c.bf16 %v6532, %v6531
      %v6564 = vpack.c.bf16 %v6534, %v6533
      %v6565 = vpack.c.bf16 %v6536, %v6535
      %v6566 = vpack.c.bf16 %v6538, %v6537
      %v6567 = vpack.c.bf16 %v6540, %v6539
      %v6568 = vpack.c.bf16 %v6542, %v6541
      %v6569 = vpack.c.bf16 %v6544, %v6543
      %v6570 = vpack.c.bf16 %v6546, %v6545
      %v6571 = vpack.c.bf16 %v6548, %v6547
      %v6572 = vpack.c.bf16 %v6550, %v6549
      %v6573 = vpack.c.bf16 %v6552, %v6551
      %v6574 = vpack.c.bf16 %v6554, %v6553
      %v6575 = vpack.c.bf16 %v6556, %v6555
      %v6576 = vpack.c.bf16 %v6558, %v6557
      %v6577 = vpack.c.bf16 %v6560, %v6559
      %v6578 = vpack.c.bf16 %v6562, %v6561
      %s6579 = scalar_lea.vmem %s3, 448
      %v6580 = vld [vmem:[%s6579] sm:$0xf]
      %v6581 = vld [vmem:[%s6579 + $0x4] sm:$0xf]
      %v6582 = vld [vmem:[%s6579 + $0x8] sm:$0xf]
      %v6583 = vld [vmem:[%s6579 + $0xc] sm:$0xf]
      %v6584 = vld [vmem:[%s6579 + $0x10] sm:$0xf]
      %v6585 = vld [vmem:[%s6579 + $0x14] sm:$0xf]
      %v6586 = vld [vmem:[%s6579 + $0x18] sm:$0xf]
      %v6587 = vld [vmem:[%s6579 + $0x1c] sm:$0xf]
      %v6588 = vld [vmem:[%s6579 + $0x20] sm:$0xf]
      %v6589 = vld [vmem:[%s6579 + $0x24] sm:$0xf]
      %v6590 = vld [vmem:[%s6579 + $0x28] sm:$0xf]
      %v6591 = vld [vmem:[%s6579 + $0x2c] sm:$0xf]
      %v6592 = vld [vmem:[%s6579 + $0x30] sm:$0xf]
      %v6593 = vld [vmem:[%s6579 + $0x34] sm:$0xf]
      %v6594 = vld [vmem:[%s6579 + $0x38] sm:$0xf]
      %v6595 = vld [vmem:[%s6579 + $0x3c] sm:$0xf]
      %v6612 = vunpack.c.l.b16 %v6580
      %v6613 = vunpack.c.l.b16 %v6581
      %v6614 = vunpack.c.l.b16 %v6582
      %v6615 = vunpack.c.l.b16 %v6583
      %v6616 = vunpack.c.l.b16 %v6584
      %v6617 = vunpack.c.l.b16 %v6585
      %v6618 = vunpack.c.l.b16 %v6586
      %v6619 = vunpack.c.l.b16 %v6587
      %v6620 = vunpack.c.l.b16 %v6588
      %v6621 = vunpack.c.l.b16 %v6589
      %v6622 = vunpack.c.l.b16 %v6590
      %v6623 = vunpack.c.l.b16 %v6591
      %v6624 = vunpack.c.l.b16 %v6592
      %v6625 = vunpack.c.l.b16 %v6593
      %v6626 = vunpack.c.l.b16 %v6594
      %v6627 = vunpack.c.l.b16 %v6595
      %v6628 = vpack.c.b16 %v6613, %v6612
      %v6629 = vpack.c.b16 %v6615, %v6614
      %v6630 = vpack.c.b16 %v6617, %v6616
      %v6631 = vpack.c.b16 %v6619, %v6618
      %v6632 = vpack.c.b16 %v6621, %v6620
      %v6633 = vpack.c.b16 %v6623, %v6622
      %v6634 = vpack.c.b16 %v6625, %v6624
      %v6635 = vpack.c.b16 %v6627, %v6626
      %6644 = vmatprep.subr.bf16.mxu0 0
      %6645 = vmatpush1.bf16.msra.mxu0 %v6628
      %6646 = vmatprep.subr.bf16.mxu0 0
      %6647 = vmatpush1.bf16.msra.mxu0 %v6629
      %6648 = vmatprep.subr.bf16.mxu0 0
      %6649 = vmatpush1.bf16.msra.mxu0 %v6630
      %6650 = vmatprep.subr.bf16.mxu0 0
      %6651 = vmatpush1.bf16.msra.mxu0 %v6631
      %6652 = vmatprep.subr.bf16.mxu0 0
      %6653 = vmatpush1.bf16.msra.mxu0 %v6632
      %6654 = vmatprep.subr.bf16.mxu0 0
      %6655 = vmatpush1.bf16.msra.mxu0 %v6633
      %6656 = vmatprep.subr.bf16.mxu0 0
      %6657 = vmatpush1.bf16.msra.mxu0 %v6634
      %6658 = vmatprep.subr.bf16.mxu0 0
      %6659 = vmatpush1.bf16.msra.mxu0 %v6635
      %6660 = vmatprep.subr.bf16.mxu0 0
      %6661 = vmatpush1.bf16.msra.mxu0 0
      %6662 = vmatprep.subr.bf16.mxu0 0
      %6663 = vmatpush1.bf16.msra.mxu0 0
      %6664 = vmatprep.subr.bf16.mxu0 0
      %6665 = vmatpush1.bf16.msra.mxu0 0
      %6666 = vmatprep.subr.bf16.mxu0 0
      %6667 = vmatpush1.bf16.msra.mxu0 0
      %6668 = vmatprep.subr.bf16.mxu0 0
      %6669 = vmatpush1.bf16.msra.mxu0 0
      %6670 = vmatprep.subr.bf16.mxu0 0
      %6671 = vmatpush1.bf16.msra.mxu0 0
      %6672 = vmatprep.subr.bf16.mxu0 0
      %6673 = vmatpush1.bf16.msra.mxu0 0
      %6674 = vmatprep.subr.bf16.mxu0 0
      %6675 = vmatpush1.bf16.msra.mxu0 0
      %6676 = vmatprep.mubr.bf16.mxu0 0
      %6677 = vmatmul.mubr.bf16.gmra.mrb[0].mxu0 %v6563
      %v6678 = vpop.f32.mrb[0].mxu0
      %v6679 = vadd.f32 0.0, %v6678
      %v6680 = vpop.f32.mrb[0].mxu0
      %v6681 = vpop.f32.mrb[0].mxu0
      %v6682 = vadd.f32 0.0, %v6681
      %v6683 = vpop.f32.mrb[0].mxu0
      %6684 = vmatprep.mubr.bf16.mxu0 0
      %6685 = vmatmul.mubr.bf16.gmra.mrb[0].mxu0 %v6564
      %v6686 = vpop.f32.mrb[0].mxu0
      %v6687 = vadd.f32 0.0, %v6686
      %v6688 = vpop.f32.mrb[0].mxu0
      %v6689 = vpop.f32.mrb[0].mxu0
      %v6690 = vadd.f32 0.0, %v6689
      %v6691 = vpop.f32.mrb[0].mxu0
      %6692 = vmatprep.mubr.bf16.mxu0 0
      %6693 = vmatmul.mubr.bf16.gmra.mrb[0].mxu0 %v6565
      %v6694 = vpop.f32.mrb[0].mxu0
      %v6695 = vadd.f32 0.0, %v6694
      %v6696 = vpop.f32.mrb[0].mxu0
      %v6697 = vpop.f32.mrb[0].mxu0
      %v6698 = vadd.f32 0.0, %v6697
      %v6699 = vpop.f32.mrb[0].mxu0
      %6700 = vmatprep.mubr.bf16.mxu0 0
      %6701 = vmatmul.mubr.bf16.gmra.mrb[0].mxu0 %v6566
      %v6702 = vpop.f32.mrb[0].mxu0
      %v6703 = vadd.f32 0.0, %v6702
      %v6704 = vpop.f32.mrb[0].mxu0
      %v6705 = vpop.f32.mrb[0].mxu0
      %v6706 = vadd.f32 0.0, %v6705
      %v6707 = vpop.f32.mrb[0].mxu0
      %6708 = vmatprep.mubr.bf16.mxu0 0
      %6709 = vmatmul.mubr.bf16.gmra.mrb[0].mxu0 %v6567
      %v6710 = vpop.f32.mrb[0].mxu0
      %v6711 = vadd.f32 0.0, %v6710
      %v6712 = vpop.f32.mrb[0].mxu0
      %v6713 = vpop.f32.mrb[0].mxu0
      %v6714 = vadd.f32 0.0, %v6713
      %v6715 = vpop.f32.mrb[0].mxu0
      %6716 = vmatprep.mubr.bf16.mxu0 0
      %6717 = vmatmul.mubr.bf16.gmra.mrb[0].mxu0 %v6568
      %v6718 = vpop.f32.mrb[0].mxu0
      %v6719 = vadd.f32 0.0, %v6718
      %v6720 = vpop.f32.mrb[0].mxu0
      %v6721 = vpop.f32.mrb[0].mxu0
      %v6722 = vadd.f32 0.0, %v6721
      %v6723 = vpop.f32.mrb[0].mxu0
      %6724 = vmatprep.mubr.bf16.mxu0 0
      %6725 = vmatmul.mubr.bf16.gmra.mrb[0].mxu0 %v6569
      %v6726 = vpop.f32.mrb[0].mxu0
      %v6727 = vadd.f32 0.0, %v6726
      %v6728 = vpop.f32.mrb[0].mxu0
      %v6729 = vpop.f32.mrb[0].mxu0
      %v6730 = vadd.f32 0.0, %v6729
      %v6731 = vpop.f32.mrb[0].mxu0
      %6732 = vmatprep.mubr.bf16.mxu0 0
      %6733 = vmatmul.mubr.bf16.gmra.mrb[0].mxu0 %v6570
      %v6734 = vpop.f32.mrb[0].mxu0
      %v6735 = vadd.f32 0.0, %v6734
      %v6736 = vpop.f32.mrb[0].mxu0
      %v6737 = vpop.f32.mrb[0].mxu0
      %v6738 = vadd.f32 0.0, %v6737
      %v6739 = vpop.f32.mrb[0].mxu0
      %6740 = vmatprep.mubr.bf16.mxu0 0
      %6741 = vmatmul.mubr.bf16.gmra.mrb[0].mxu0 %v6571
      %v6742 = vpop.f32.mrb[0].mxu0
      %v6743 = vadd.f32 0.0, %v6742
      %v6744 = vpop.f32.mrb[0].mxu0
      %v6745 = vpop.f32.mrb[0].mxu0
      %v6746 = vadd.f32 0.0, %v6745
      %v6747 = vpop.f32.mrb[0].mxu0
      %6748 = vmatprep.mubr.bf16.mxu0 0
      %6749 = vmatmul.mubr.bf16.gmra.mrb[0].mxu0 %v6572
      %v6750 = vpop.f32.mrb[0].mxu0
      %v6751 = vadd.f32 0.0, %v6750
      %v6752 = vpop.f32.mrb[0].mxu0
      %v6753 = vpop.f32.mrb[0].mxu0
      %v6754 = vadd.f32 0.0, %v6753
      %v6755 = vpop.f32.mrb[0].mxu0
      %6756 = vmatprep.mubr.bf16.mxu0 0
      %6757 = vmatmul.mubr.bf16.gmra.mrb[0].mxu0 %v6573
      %v6758 = vpop.f32.mrb[0].mxu0
      %v6759 = vadd.f32 0.0, %v6758
      %v6760 = vpop.f32.mrb[0].mxu0
      %v6761 = vpop.f32.mrb[0].mxu0
      %v6762 = vadd.f32 0.0, %v6761
      %v6763 = vpop.f32.mrb[0].mxu0
      %6764 = vmatprep.mubr.bf16.mxu0 0
      %6765 = vmatmul.mubr.bf16.gmra.mrb[0].mxu0 %v6574
      %v6766 = vpop.f32.mrb[0].mxu0
      %v6767 = vadd.f32 0.0, %v6766
      %v6768 = vpop.f32.mrb[0].mxu0
      %v6769 = vpop.f32.mrb[0].mxu0
      %v6770 = vadd.f32 0.0, %v6769
      %v6771 = vpop.f32.mrb[0].mxu0
      %6772 = vmatprep.mubr.bf16.mxu0 0
      %6773 = vmatmul.mubr.bf16.gmra.mrb[0].mxu0 %v6575
      %v6774 = vpop.f32.mrb[0].mxu0
      %v6775 = vadd.f32 0.0, %v6774
      %v6776 = vpop.f32.mrb[0].mxu0
      %v6777 = vpop.f32.mrb[0].mxu0
      %v6778 = vadd.f32 0.0, %v6777
      %v6779 = vpop.f32.mrb[0].mxu0
      %6780 = vmatprep.mubr.bf16.mxu0 0
      %6781 = vmatmul.mubr.bf16.gmra.mrb[0].mxu0 %v6576
      %v6782 = vpop.f32.mrb[0].mxu0
      %v6783 = vadd.f32 0.0, %v6782
      %v6784 = vpop.f32.mrb[0].mxu0
      %v6785 = vpop.f32.mrb[0].mxu0
      %v6786 = vadd.f32 0.0, %v6785
      %v6787 = vpop.f32.mrb[0].mxu0
      %6788 = vmatprep.mubr.bf16.mxu0 0
      %6789 = vmatmul.mubr.bf16.gmra.mrb[0].mxu0 %v6577
      %v6790 = vpop.f32.mrb[0].mxu0
      %v6791 = vadd.f32 0.0, %v6790
      %v6792 = vpop.f32.mrb[0].mxu0
      %v6793 = vpop.f32.mrb[0].mxu0
      %v6794 = vadd.f32 0.0, %v6793
      %v6795 = vpop.f32.mrb[0].mxu0
      %6796 = vmatprep.mubr.bf16.mxu0 0
      %6797 = vmatmul.mubr.bf16.gmra.mrb[0].mxu0 %v6578
      %v6798 = vpop.f32.mrb[0].mxu0
      %v6799 = vadd.f32 0.0, %v6798
      %v6800 = vpop.f32.mrb[0].mxu0
      %v6801 = vpop.f32.mrb[0].mxu0
      %v6802 = vadd.f32 0.0, %v6801
      %v6803 = vpop.f32.mrb[0].mxu0
      %6804 = vdwg.mxu0
      %v6805 = vld [vmem:[#allocation4] sm:$0xff]
      %v6806 = vld [vmem:[#allocation4 + $0x8] sm:$0xff]
      %v6807 = vld [vmem:[#allocation4 + $0x10] sm:$0xff]
      %v6808 = vld [vmem:[#allocation4 + $0x18] sm:$0xff]
      %v6809 = vld [vmem:[#allocation4 + $0x20] sm:$0xff]
      %v6810 = vld [vmem:[#allocation4 + $0x28] sm:$0xff]
      %v6811 = vld [vmem:[#allocation4 + $0x30] sm:$0xff]
      %v6812 = vld [vmem:[#allocation4 + $0x38] sm:$0xff]
      %v6813 = vld [vmem:[#allocation4 + $0x40] sm:$0xff]
      %v6814 = vld [vmem:[#allocation4 + $0x48] sm:$0xff]
      %v6815 = vld [vmem:[#allocation4 + $0x50] sm:$0xff]
      %v6816 = vld [vmem:[#allocation4 + $0x58] sm:$0xff]
      %v6817 = vld [vmem:[#allocation4 + $0x60] sm:$0xff]
      %v6818 = vld [vmem:[#allocation4 + $0x68] sm:$0xff]
      %v6819 = vld [vmem:[#allocation4 + $0x70] sm:$0xff]
      %v6820 = vld [vmem:[#allocation4 + $0x78] sm:$0xff]
      %v6821 = vld [vmem:[#allocation4 + $0x80] sm:$0xff]
      %v6822 = vld [vmem:[#allocation4 + $0x88] sm:$0xff]
      %v6823 = vld [vmem:[#allocation4 + $0x90] sm:$0xff]
      %v6824 = vld [vmem:[#allocation4 + $0x98] sm:$0xff]
      %v6825 = vld [vmem:[#allocation4 + $0xa0] sm:$0xff]
      %v6826 = vld [vmem:[#allocation4 + $0xa8] sm:$0xff]
      %v6827 = vld [vmem:[#allocation4 + $0xb0] sm:$0xff]
      %v6828 = vld [vmem:[#allocation4 + $0xb8] sm:$0xff]
      %v6829 = vld [vmem:[#allocation4 + $0xc0] sm:$0xff]
      %v6830 = vld [vmem:[#allocation4 + $0xc8] sm:$0xff]
      %v6831 = vld [vmem:[#allocation4 + $0xd0] sm:$0xff]
      %v6832 = vld [vmem:[#allocation4 + $0xd8] sm:$0xff]
      %v6833 = vld [vmem:[#allocation4 + $0xe0] sm:$0xff]
      %v6834 = vld [vmem:[#allocation4 + $0xe8] sm:$0xff]
      %v6835 = vld [vmem:[#allocation4 + $0xf0] sm:$0xff]
      %v6836 = vld [vmem:[#allocation4 + $0xf8] sm:$0xff]
      %v6837 = vadd.f32 %v6805, %v6679
      %v6838 = vadd.f32 %v6806, %v6682
      %v6839 = vadd.f32 %v6807, %v6687
      %v6840 = vadd.f32 %v6808, %v6690
      %v6841 = vadd.f32 %v6809, %v6695
      %v6842 = vadd.f32 %v6810, %v6698
      %v6843 = vadd.f32 %v6811, %v6703
      %v6844 = vadd.f32 %v6812, %v6706
      %v6845 = vadd.f32 %v6813, %v6711
      %v6846 = vadd.f32 %v6814, %v6714
      %v6847 = vadd.f32 %v6815, %v6719
      %v6848 = vadd.f32 %v6816, %v6722
      %v6849 = vadd.f32 %v6817, %v6727
      %v6850 = vadd.f32 %v6818, %v6730
      %v6851 = vadd.f32 %v6819, %v6735
      %v6852 = vadd.f32 %v6820, %v6738
      %v6853 = vadd.f32 %v6821, %v6743
      %v6854 = vadd.f32 %v6822, %v6746
      %v6855 = vadd.f32 %v6823, %v6751
      %v6856 = vadd.f32 %v6824, %v6754
      %v6857 = vadd.f32 %v6825, %v6759
      %v6858 = vadd.f32 %v6826, %v6762
      %v6859 = vadd.f32 %v6827, %v6767
      %v6860 = vadd.f32 %v6828, %v6770
      %v6861 = vadd.f32 %v6829, %v6775
      %v6862 = vadd.f32 %v6830, %v6778
      %v6863 = vadd.f32 %v6831, %v6783
      %v6864 = vadd.f32 %v6832, %v6786
      %v6865 = vadd.f32 %v6833, %v6791
      %v6866 = vadd.f32 %v6834, %v6794
      %v6867 = vadd.f32 %v6835, %v6799
      %v6868 = vadd.f32 %v6836, %v6802
      %6869 = vst [vmem:[#allocation4] sm:$0xff] %v6837
      %6870 = vst [vmem:[#allocation4 + $0x8] sm:$0xff] %v6838
      %6871 = vst [vmem:[#allocation4 + $0x10] sm:$0xff] %v6839
      %6872 = vst [vmem:[#allocation4 + $0x18] sm:$0xff] %v6840
      %6873 = vst [vmem:[#allocation4 + $0x20] sm:$0xff] %v6841
      %6874 = vst [vmem:[#allocation4 + $0x28] sm:$0xff] %v6842
      %6875 = vst [vmem:[#allocation4 + $0x30] sm:$0xff] %v6843
      %6876 = vst [vmem:[#allocation4 + $0x38] sm:$0xff] %v6844
      %6877 = vst [vmem:[#allocation4 + $0x40] sm:$0xff] %v6845
      %6878 = vst [vmem:[#allocation4 + $0x48] sm:$0xff] %v6846
      %6879 = vst [vmem:[#allocation4 + $0x50] sm:$0xff] %v6847
      %6880 = vst [vmem:[#allocation4 + $0x58] sm:$0xff] %v6848
      %6881 = vst [vmem:[#allocation4 + $0x60] sm:$0xff] %v6849
      %6882 = vst [vmem:[#allocation4 + $0x68] sm:$0xff] %v6850
      %6883 = vst [vmem:[#allocation4 + $0x70] sm:$0xff] %v6851
      %6884 = vst [vmem:[#allocation4 + $0x78] sm:$0xff] %v6852
      %6885 = vst [vmem:[#allocation4 + $0x80] sm:$0xff] %v6853
      %6886 = vst [vmem:[#allocation4 + $0x88] sm:$0xff] %v6854
      %6887 = vst [vmem:[#allocation4 + $0x90] sm:$0xff] %v6855
      %6888 = vst [vmem:[#allocation4 + $0x98] sm:$0xff] %v6856
      %6889 = vst [vmem:[#allocation4 + $0xa0] sm:$0xff] %v6857
      %6890 = vst [vmem:[#allocation4 + $0xa8] sm:$0xff] %v6858
      %6891 = vst [vmem:[#allocation4 + $0xb0] sm:$0xff] %v6859
      %6892 = vst [vmem:[#allocation4 + $0xb8] sm:$0xff] %v6860
      %6893 = vst [vmem:[#allocation4 + $0xc0] sm:$0xff] %v6861
      %6894 = vst [vmem:[#allocation4 + $0xc8] sm:$0xff] %v6862
      %6895 = vst [vmem:[#allocation4 + $0xd0] sm:$0xff] %v6863
      %6896 = vst [vmem:[#allocation4 + $0xd8] sm:$0xff] %v6864
      %6897 = vst [vmem:[#allocation4 + $0xe0] sm:$0xff] %v6865
      %6898 = vst [vmem:[#allocation4 + $0xe8] sm:$0xff] %v6866
      %6899 = vst [vmem:[#allocation4 + $0xf0] sm:$0xff] %v6867
      %6900 = vst [vmem:[#allocation4 + $0xf8] sm:$0xff] %v6868
      %v6901 = vld [vmem:[%s6160 + $0x2] sm:$0xff]
      %v6902 = vld [vmem:[%s6160 + $0xa] sm:$0xff]
      %v6903 = vld [vmem:[%s6160 + $0x1a] sm:$0xff]
      %v6904 = vld [vmem:[%s6160 + $0x22] sm:$0xff]
      %v6905 = vld [vmem:[%s6160 + $0x32] sm:$0xff]
      %v6906 = vld [vmem:[%s6160 + $0x3a] sm:$0xff]
      %v6907 = vld [vmem:[%s6160 + $0x4a] sm:$0xff]
      %v6908 = vld [vmem:[%s6160 + $0x52] sm:$0xff]
      %v6909 = vld [vmem:[%s6160 + $0x62] sm:$0xff]
      %v6910 = vld [vmem:[%s6160 + $0x6a] sm:$0xff]
      %v6911 = vld [vmem:[%s6160 + $0x7a] sm:$0xff]
      %v6912 = vld [vmem:[%s6160 + $0x82] sm:$0xff]
      %v6913 = vld [vmem:[%s6160 + $0x92] sm:$0xff]
      %v6914 = vld [vmem:[%s6160 + $0x9a] sm:$0xff]
      %v6915 = vld [vmem:[%s6160 + $0xaa] sm:$0xff]
      %v6916 = vld [vmem:[%s6160 + $0xb2] sm:$0xff]
      %v6917 = vld [vmem:[%s6160 + $0xc2] sm:$0xff]
      %v6918 = vld [vmem:[%s6160 + $0xca] sm:$0xff]
      %v6919 = vld [vmem:[%s6160 + $0xda] sm:$0xff]
      %v6920 = vld [vmem:[%s6160 + $0xe2] sm:$0xff]
      %v6921 = vld [vmem:[%s6160 + $0xf2] sm:$0xff]
      %v6922 = vld [vmem:[%s6160 + $0xfa] sm:$0xff]
      %v6923 = vld [vmem:[%s6160 + $0x10a] sm:$0xff]
      %v6924 = vld [vmem:[%s6160 + $0x112] sm:$0xff]
      %v6925 = vld [vmem:[%s6160 + $0x122] sm:$0xff]
      %v6926 = vld [vmem:[%s6160 + $0x12a] sm:$0xff]
      %v6927 = vld [vmem:[%s6160 + $0x13a] sm:$0xff]
      %v6928 = vld [vmem:[%s6160 + $0x142] sm:$0xff]
      %v6929 = vld [vmem:[%s6160 + $0x152] sm:$0xff]
      %v6930 = vld [vmem:[%s6160 + $0x15a] sm:$0xff]
      %v6931 = vld [vmem:[%s6160 + $0x16a] sm:$0xff]
      %v6932 = vld [vmem:[%s6160 + $0x172] sm:$0xff]
      %v6933 = vpack.c.bf16 %v6902, %v6901
      %v6934 = vpack.c.bf16 %v6904, %v6903
      %v6935 = vpack.c.bf16 %v6906, %v6905
      %v6936 = vpack.c.bf16 %v6908, %v6907
      %v6937 = vpack.c.bf16 %v6910, %v6909
      %v6938 = vpack.c.bf16 %v6912, %v6911
      %v6939 = vpack.c.bf16 %v6914, %v6913
      %v6940 = vpack.c.bf16 %v6916, %v6915
      %v6941 = vpack.c.bf16 %v6918, %v6917
      %v6942 = vpack.c.bf16 %v6920, %v6919
      %v6943 = vpack.c.bf16 %v6922, %v6921
      %v6944 = vpack.c.bf16 %v6924, %v6923
      %v6945 = vpack.c.bf16 %v6926, %v6925
      %v6946 = vpack.c.bf16 %v6928, %v6927
      %v6947 = vpack.c.bf16 %v6930, %v6929
      %v6948 = vpack.c.bf16 %v6932, %v6931
      %s6949 = scalar_lea.vmem %s3, 512
      %v6950 = vld [vmem:[%s6949] sm:$0xf]
      %v6951 = vld [vmem:[%s6949 + $0x4] sm:$0xf]
      %v6952 = vld [vmem:[%s6949 + $0x8] sm:$0xf]
      %v6953 = vld [vmem:[%s6949 + $0xc] sm:$0xf]
      %v6954 = vld [vmem:[%s6949 + $0x10] sm:$0xf]
      %v6955 = vld [vmem:[%s6949 + $0x14] sm:$0xf]
      %v6956 = vld [vmem:[%s6949 + $0x18] sm:$0xf]
      %v6957 = vld [vmem:[%s6949 + $0x1c] sm:$0xf]
      %v6958 = vld [vmem:[%s6949 + $0x20] sm:$0xf]
      %v6959 = vld [vmem:[%s6949 + $0x24] sm:$0xf]
      %v6960 = vld [vmem:[%s6949 + $0x28] sm:$0xf]
      %v6961 = vld [vmem:[%s6949 + $0x2c] sm:$0xf]
      %v6962 = vld [vmem:[%s6949 + $0x30] sm:$0xf]
      %v6963 = vld [vmem:[%s6949 + $0x34] sm:$0xf]
      %v6964 = vld [vmem:[%s6949 + $0x38] sm:$0xf]
      %v6965 = vld [vmem:[%s6949 + $0x3c] sm:$0xf]
      %v6982 = vunpack.c.l.b16 %v6950
      %v6983 = vunpack.c.l.b16 %v6951
      %v6984 = vunpack.c.l.b16 %v6952
      %v6985 = vunpack.c.l.b16 %v6953
      %v6986 = vunpack.c.l.b16 %v6954
      %v6987 = vunpack.c.l.b16 %v6955
      %v6988 = vunpack.c.l.b16 %v6956
      %v6989 = vunpack.c.l.b16 %v6957
      %v6990 = vunpack.c.l.b16 %v6958
      %v6991 = vunpack.c.l.b16 %v6959
      %v6992 = vunpack.c.l.b16 %v6960
      %v6993 = vunpack.c.l.b16 %v6961
      %v6994 = vunpack.c.l.b16 %v6962
      %v6995 = vunpack.c.l.b16 %v6963
      %v6996 = vunpack.c.l.b16 %v6964
      %v6997 = vunpack.c.l.b16 %v6965
      %v6998 = vpack.c.b16 %v6983, %v6982
      %v6999 = vpack.c.b16 %v6985, %v6984
      %v7000 = vpack.c.b16 %v6987, %v6986
      %v7001 = vpack.c.b16 %v6989, %v6988
      %v7002 = vpack.c.b16 %v6991, %v6990
      %v7003 = vpack.c.b16 %v6993, %v6992
      %v7004 = vpack.c.b16 %v6995, %v6994
      %v7005 = vpack.c.b16 %v6997, %v6996
      %7014 = vmatprep.subr.bf16.mxu0 0
      %7015 = vmatpush1.bf16.msra.mxu0 %v6998
      %7016 = vmatprep.subr.bf16.mxu0 0
      %7017 = vmatpush1.bf16.msra.mxu0 %v6999
      %7018 = vmatprep.subr.bf16.mxu0 0
      %7019 = vmatpush1.bf16.msra.mxu0 %v7000
      %7020 = vmatprep.subr.bf16.mxu0 0
      %7021 = vmatpush1.bf16.msra.mxu0 %v7001
      %7022 = vmatprep.subr.bf16.mxu0 0
      %7023 = vmatpush1.bf16.msra.mxu0 %v7002
      %7024 = vmatprep.subr.bf16.mxu0 0
      %7025 = vmatpush1.bf16.msra.mxu0 %v7003
      %7026 = vmatprep.subr.bf16.mxu0 0
      %7027 = vmatpush1.bf16.msra.mxu0 %v7004
      %7028 = vmatprep.subr.bf16.mxu0 0
      %7029 = vmatpush1.bf16.msra.mxu0 %v7005
      %7030 = vmatprep.subr.bf16.mxu0 0
      %7031 = vmatpush1.bf16.msra.mxu0 0
      %7032 = vmatprep.subr.bf16.mxu0 0
      %7033 = vmatpush1.bf16.msra.mxu0 0
      %7034 = vmatprep.subr.bf16.mxu0 0
      %7035 = vmatpush1.bf16.msra.mxu0 0
      %7036 = vmatprep.subr.bf16.mxu0 0
      %7037 = vmatpush1.bf16.msra.mxu0 0
      %7038 = vmatprep.subr.bf16.mxu0 0
      %7039 = vmatpush1.bf16.msra.mxu0 0
      %7040 = vmatprep.subr.bf16.mxu0 0
      %7041 = vmatpush1.bf16.msra.mxu0 0
      %7042 = vmatprep.subr.bf16.mxu0 0
      %7043 = vmatpush1.bf16.msra.mxu0 0
      %7044 = vmatprep.subr.bf16.mxu0 0
      %7045 = vmatpush1.bf16.msra.mxu0 0
      %7046 = vmatprep.mubr.bf16.mxu0 0
      %7047 = vmatmul.mubr.bf16.gmra.mrb[0].mxu0 %v6933
      %v7048 = vpop.f32.mrb[0].mxu0
      %v7049 = vadd.f32 0.0, %v7048
      %v7050 = vpop.f32.mrb[0].mxu0
      %v7051 = vpop.f32.mrb[0].mxu0
      %v7052 = vadd.f32 0.0, %v7051
      %v7053 = vpop.f32.mrb[0].mxu0
      %7054 = vmatprep.mubr.bf16.mxu0 0
      %7055 = vmatmul.mubr.bf16.gmra.mrb[0].mxu0 %v6934
      %v7056 = vpop.f32.mrb[0].mxu0
      %v7057 = vadd.f32 0.0, %v7056
      %v7058 = vpop.f32.mrb[0].mxu0
      %v7059 = vpop.f32.mrb[0].mxu0
      %v7060 = vadd.f32 0.0, %v7059
      %v7061 = vpop.f32.mrb[0].mxu0
      %7062 = vmatprep.mubr.bf16.mxu0 0
      %7063 = vmatmul.mubr.bf16.gmra.mrb[0].mxu0 %v6935
      %v7064 = vpop.f32.mrb[0].mxu0
      %v7065 = vadd.f32 0.0, %v7064
      %v7066 = vpop.f32.mrb[0].mxu0
      %v7067 = vpop.f32.mrb[0].mxu0
      %v7068 = vadd.f32 0.0, %v7067
      %v7069 = vpop.f32.mrb[0].mxu0
      %7070 = vmatprep.mubr.bf16.mxu0 0
      %7071 = vmatmul.mubr.bf16.gmra.mrb[0].mxu0 %v6936
      %v7072 = vpop.f32.mrb[0].mxu0
      %v7073 = vadd.f32 0.0, %v7072
      %v7074 = vpop.f32.mrb[0].mxu0
      %v7075 = vpop.f32.mrb[0].mxu0
      %v7076 = vadd.f32 0.0, %v7075
      %v7077 = vpop.f32.mrb[0].mxu0
      %7078 = vmatprep.mubr.bf16.mxu0 0
      %7079 = vmatmul.mubr.bf16.gmra.mrb[0].mxu0 %v6937
      %v7080 = vpop.f32.mrb[0].mxu0
      %v7081 = vadd.f32 0.0, %v7080
      %v7082 = vpop.f32.mrb[0].mxu0
      %v7083 = vpop.f32.mrb[0].mxu0
      %v7084 = vadd.f32 0.0, %v7083
      %v7085 = vpop.f32.mrb[0].mxu0
      %7086 = vmatprep.mubr.bf16.mxu0 0
      %7087 = vmatmul.mubr.bf16.gmra.mrb[0].mxu0 %v6938
      %v7088 = vpop.f32.mrb[0].mxu0
      %v7089 = vadd.f32 0.0, %v7088
      %v7090 = vpop.f32.mrb[0].mxu0
      %v7091 = vpop.f32.mrb[0].mxu0
      %v7092 = vadd.f32 0.0, %v7091
      %v7093 = vpop.f32.mrb[0].mxu0
      %7094 = vmatprep.mubr.bf16.mxu0 0
      %7095 = vmatmul.mubr.bf16.gmra.mrb[0].mxu0 %v6939
      %v7096 = vpop.f32.mrb[0].mxu0
      %v7097 = vadd.f32 0.0, %v7096
      %v7098 = vpop.f32.mrb[0].mxu0
      %v7099 = vpop.f32.mrb[0].mxu0
      %v7100 = vadd.f32 0.0, %v7099
      %v7101 = vpop.f32.mrb[0].mxu0
      %7102 = vmatprep.mubr.bf16.mxu0 0
      %7103 = vmatmul.mubr.bf16.gmra.mrb[0].mxu0 %v6940
      %v7104 = vpop.f32.mrb[0].mxu0
      %v7105 = vadd.f32 0.0, %v7104
      %v7106 = vpop.f32.mrb[0].mxu0
      %v7107 = vpop.f32.mrb[0].mxu0
      %v7108 = vadd.f32 0.0, %v7107
      %v7109 = vpop.f32.mrb[0].mxu0
      %7110 = vmatprep.mubr.bf16.mxu0 0
      %7111 = vmatmul.mubr.bf16.gmra.mrb[0].mxu0 %v6941
      %v7112 = vpop.f32.mrb[0].mxu0
      %v7113 = vadd.f32 0.0, %v7112
      %v7114 = vpop.f32.mrb[0].mxu0
      %v7115 = vpop.f32.mrb[0].mxu0
      %v7116 = vadd.f32 0.0, %v7115
      %v7117 = vpop.f32.mrb[0].mxu0
      %7118 = vmatprep.mubr.bf16.mxu0 0
      %7119 = vmatmul.mubr.bf16.gmra.mrb[0].mxu0 %v6942
      %v7120 = vpop.f32.mrb[0].mxu0
      %v7121 = vadd.f32 0.0, %v7120
      %v7122 = vpop.f32.mrb[0].mxu0
      %v7123 = vpop.f32.mrb[0].mxu0
      %v7124 = vadd.f32 0.0, %v7123
      %v7125 = vpop.f32.mrb[0].mxu0
      %7126 = vmatprep.mubr.bf16.mxu0 0
      %7127 = vmatmul.mubr.bf16.gmra.mrb[0].mxu0 %v6943
      %v7128 = vpop.f32.mrb[0].mxu0
      %v7129 = vadd.f32 0.0, %v7128
      %v7130 = vpop.f32.mrb[0].mxu0
      %v7131 = vpop.f32.mrb[0].mxu0
      %v7132 = vadd.f32 0.0, %v7131
      %v7133 = vpop.f32.mrb[0].mxu0
      %7134 = vmatprep.mubr.bf16.mxu0 0
      %7135 = vmatmul.mubr.bf16.gmra.mrb[0].mxu0 %v6944
      %v7136 = vpop.f32.mrb[0].mxu0
      %v7137 = vadd.f32 0.0, %v7136
      %v7138 = vpop.f32.mrb[0].mxu0
      %v7139 = vpop.f32.mrb[0].mxu0
      %v7140 = vadd.f32 0.0, %v7139
      %v7141 = vpop.f32.mrb[0].mxu0
      %7142 = vmatprep.mubr.bf16.mxu0 0
      %7143 = vmatmul.mubr.bf16.gmra.mrb[0].mxu0 %v6945
      %v7144 = vpop.f32.mrb[0].mxu0
      %v7145 = vadd.f32 0.0, %v7144
      %v7146 = vpop.f32.mrb[0].mxu0
      %v7147 = vpop.f32.mrb[0].mxu0
      %v7148 = vadd.f32 0.0, %v7147
      %v7149 = vpop.f32.mrb[0].mxu0
      %7150 = vmatprep.mubr.bf16.mxu0 0
      %7151 = vmatmul.mubr.bf16.gmra.mrb[0].mxu0 %v6946
      %v7152 = vpop.f32.mrb[0].mxu0
      %v7153 = vadd.f32 0.0, %v7152
      %v7154 = vpop.f32.mrb[0].mxu0
      %v7155 = vpop.f32.mrb[0].mxu0
      %v7156 = vadd.f32 0.0, %v7155
      %v7157 = vpop.f32.mrb[0].mxu0
      %7158 = vmatprep.mubr.bf16.mxu0 0
      %7159 = vmatmul.mubr.bf16.gmra.mrb[0].mxu0 %v6947
      %v7160 = vpop.f32.mrb[0].mxu0
      %v7161 = vadd.f32 0.0, %v7160
      %v7162 = vpop.f32.mrb[0].mxu0
      %v7163 = vpop.f32.mrb[0].mxu0
      %v7164 = vadd.f32 0.0, %v7163
      %v7165 = vpop.f32.mrb[0].mxu0
      %7166 = vmatprep.mubr.bf16.mxu0 0
      %7167 = vmatmul.mubr.bf16.gmra.mrb[0].mxu0 %v6948
      %v7168 = vpop.f32.mrb[0].mxu0
      %v7169 = vadd.f32 0.0, %v7168
      %v7170 = vpop.f32.mrb[0].mxu0
      %v7171 = vpop.f32.mrb[0].mxu0
      %v7172 = vadd.f32 0.0, %v7171
      %v7173 = vpop.f32.mrb[0].mxu0
      %7174 = vdwg.mxu0
      %v7175 = vld [vmem:[#allocation4] sm:$0xff]
      %v7176 = vld [vmem:[#allocation4 + $0x8] sm:$0xff]
      %v7177 = vld [vmem:[#allocation4 + $0x10] sm:$0xff]
      %v7178 = vld [vmem:[#allocation4 + $0x18] sm:$0xff]
      %v7179 = vld [vmem:[#allocation4 + $0x20] sm:$0xff]
      %v7180 = vld [vmem:[#allocation4 + $0x28] sm:$0xff]
      %v7181 = vld [vmem:[#allocation4 + $0x30] sm:$0xff]
      %v7182 = vld [vmem:[#allocation4 + $0x38] sm:$0xff]
      %v7183 = vld [vmem:[#allocation4 + $0x40] sm:$0xff]
      %v7184 = vld [vmem:[#allocation4 + $0x48] sm:$0xff]
      %v7185 = vld [vmem:[#allocation4 + $0x50] sm:$0xff]
      %v7186 = vld [vmem:[#allocation4 + $0x58] sm:$0xff]
      %v7187 = vld [vmem:[#allocation4 + $0x60] sm:$0xff]
      %v7188 = vld [vmem:[#allocation4 + $0x68] sm:$0xff]
      %v7189 = vld [vmem:[#allocation4 + $0x70] sm:$0xff]
      %v7190 = vld [vmem:[#allocation4 + $0x78] sm:$0xff]
      %v7191 = vld [vmem:[#allocation4 + $0x80] sm:$0xff]
      %v7192 = vld [vmem:[#allocation4 + $0x88] sm:$0xff]
      %v7193 = vld [vmem:[#allocation4 + $0x90] sm:$0xff]
      %v7194 = vld [vmem:[#allocation4 + $0x98] sm:$0xff]
      %v7195 = vld [vmem:[#allocation4 + $0xa0] sm:$0xff]
      %v7196 = vld [vmem:[#allocation4 + $0xa8] sm:$0xff]
      %v7197 = vld [vmem:[#allocation4 + $0xb0] sm:$0xff]
      %v7198 = vld [vmem:[#allocation4 + $0xb8] sm:$0xff]
      %v7199 = vld [vmem:[#allocation4 + $0xc0] sm:$0xff]
      %v7200 = vld [vmem:[#allocation4 + $0xc8] sm:$0xff]
      %v7201 = vld [vmem:[#allocation4 + $0xd0] sm:$0xff]
      %v7202 = vld [vmem:[#allocation4 + $0xd8] sm:$0xff]
      %v7203 = vld [vmem:[#allocation4 + $0xe0] sm:$0xff]
      %v7204 = vld [vmem:[#allocation4 + $0xe8] sm:$0xff]
      %v7205 = vld [vmem:[#allocation4 + $0xf0] sm:$0xff]
      %v7206 = vld [vmem:[#allocation4 + $0xf8] sm:$0xff]
      %v7207 = vadd.f32 %v7175, %v7049
      %v7208 = vadd.f32 %v7176, %v7052
      %v7209 = vadd.f32 %v7177, %v7057
      %v7210 = vadd.f32 %v7178, %v7060
      %v7211 = vadd.f32 %v7179, %v7065
      %v7212 = vadd.f32 %v7180, %v7068
      %v7213 = vadd.f32 %v7181, %v7073
      %v7214 = vadd.f32 %v7182, %v7076
      %v7215 = vadd.f32 %v7183, %v7081
      %v7216 = vadd.f32 %v7184, %v7084
      %v7217 = vadd.f32 %v7185, %v7089
      %v7218 = vadd.f32 %v7186, %v7092
      %v7219 = vadd.f32 %v7187, %v7097
      %v7220 = vadd.f32 %v7188, %v7100
      %v7221 = vadd.f32 %v7189, %v7105
      %v7222 = vadd.f32 %v7190, %v7108
      %v7223 = vadd.f32 %v7191, %v7113
      %v7224 = vadd.f32 %v7192, %v7116
      %v7225 = vadd.f32 %v7193, %v7121
      %v7226 = vadd.f32 %v7194, %v7124
      %v7227 = vadd.f32 %v7195, %v7129
      %v7228 = vadd.f32 %v7196, %v7132
      %v7229 = vadd.f32 %v7197, %v7137
      %v7230 = vadd.f32 %v7198, %v7140
      %v7231 = vadd.f32 %v7199, %v7145
      %v7232 = vadd.f32 %v7200, %v7148
      %v7233 = vadd.f32 %v7201, %v7153
      %v7234 = vadd.f32 %v7202, %v7156
      %v7235 = vadd.f32 %v7203, %v7161
      %v7236 = vadd.f32 %v7204, %v7164
      %v7237 = vadd.f32 %v7205, %v7169
      %v7238 = vadd.f32 %v7206, %v7172
      %7239 = vst [vmem:[#allocation4] sm:$0xff] %v7207
      %7240 = vst [vmem:[#allocation4 + $0x8] sm:$0xff] %v7208
      %7241 = vst [vmem:[#allocation4 + $0x10] sm:$0xff] %v7209
      %7242 = vst [vmem:[#allocation4 + $0x18] sm:$0xff] %v7210
      %7243 = vst [vmem:[#allocation4 + $0x20] sm:$0xff] %v7211
      %7244 = vst [vmem:[#allocation4 + $0x28] sm:$0xff] %v7212
      %7245 = vst [vmem:[#allocation4 + $0x30] sm:$0xff] %v7213
      %7246 = vst [vmem:[#allocation4 + $0x38] sm:$0xff] %v7214
      %7247 = vst [vmem:[#allocation4 + $0x40] sm:$0xff] %v7215
      %7248 = vst [vmem:[#allocation4 + $0x48] sm:$0xff] %v7216
      %7249 = vst [vmem:[#allocation4 + $0x50] sm:$0xff] %v7217
      %7250 = vst [vmem:[#allocation4 + $0x58] sm:$0xff] %v7218
      %7251 = vst [vmem:[#allocation4 + $0x60] sm:$0xff] %v7219
      %7252 = vst [vmem:[#allocation4 + $0x68] sm:$0xff] %v7220
      %7253 = vst [vmem:[#allocation4 + $0x70] sm:$0xff] %v7221
      %7254 = vst [vmem:[#allocation4 + $0x78] sm:$0xff] %v7222
      %7255 = vst [vmem:[#allocation4 + $0x80] sm:$0xff] %v7223
      %7256 = vst [vmem:[#allocation4 + $0x88] sm:$0xff] %v7224
      %7257 = vst [vmem:[#allocation4 + $0x90] sm:$0xff] %v7225
      %7258 = vst [vmem:[#allocation4 + $0x98] sm:$0xff] %v7226
      %7259 = vst [vmem:[#allocation4 + $0xa0] sm:$0xff] %v7227
      %7260 = vst [vmem:[#allocation4 + $0xa8] sm:$0xff] %v7228
      %7261 = vst [vmem:[#allocation4 + $0xb0] sm:$0xff] %v7229
      %7262 = vst [vmem:[#allocation4 + $0xb8] sm:$0xff] %v7230
      %7263 = vst [vmem:[#allocation4 + $0xc0] sm:$0xff] %v7231
      %7264 = vst [vmem:[#allocation4 + $0xc8] sm:$0xff] %v7232
      %7265 = vst [vmem:[#allocation4 + $0xd0] sm:$0xff] %v7233
      %7266 = vst [vmem:[#allocation4 + $0xd8] sm:$0xff] %v7234
      %7267 = vst [vmem:[#allocation4 + $0xe0] sm:$0xff] %v7235
      %7268 = vst [vmem:[#allocation4 + $0xe8] sm:$0xff] %v7236
      %7269 = vst [vmem:[#allocation4 + $0xf0] sm:$0xff] %v7237
      %7270 = vst [vmem:[#allocation4 + $0xf8] sm:$0xff] %v7238
      %v7271 = vld [vmem:[#allocation4] sm:$0xff]
      %v7272 = vld [vmem:[#allocation4 + $0x8] sm:$0xff]
      %v7273 = vld [vmem:[#allocation4 + $0x10] sm:$0xff]
      %v7274 = vld [vmem:[#allocation4 + $0x18] sm:$0xff]
      %v7275 = vld [vmem:[#allocation4 + $0x20] sm:$0xff]
      %v7276 = vld [vmem:[#allocation4 + $0x28] sm:$0xff]
      %v7277 = vld [vmem:[#allocation4 + $0x30] sm:$0xff]
      %v7278 = vld [vmem:[#allocation4 + $0x38] sm:$0xff]
      %v7279 = vld [vmem:[#allocation4 + $0x40] sm:$0xff]
      %v7280 = vld [vmem:[#allocation4 + $0x48] sm:$0xff]
      %v7281 = vld [vmem:[#allocation4 + $0x50] sm:$0xff]
      %v7282 = vld [vmem:[#allocation4 + $0x58] sm:$0xff]
      %v7283 = vld [vmem:[#allocation4 + $0x60] sm:$0xff]
      %v7284 = vld [vmem:[#allocation4 + $0x68] sm:$0xff]
      %v7285 = vld [vmem:[#allocation4 + $0x70] sm:$0xff]
      %v7286 = vld [vmem:[#allocation4 + $0x78] sm:$0xff]
      %v7287 = vld [vmem:[#allocation4 + $0x80] sm:$0xff]
      %v7288 = vld [vmem:[#allocation4 + $0x88] sm:$0xff]
      %v7289 = vld [vmem:[#allocation4 + $0x90] sm:$0xff]
      %v7290 = vld [vmem:[#allocation4 + $0x98] sm:$0xff]
      %v7291 = vld [vmem:[#allocation4 + $0xa0] sm:$0xff]
      %v7292 = vld [vmem:[#allocation4 + $0xa8] sm:$0xff]
      %v7293 = vld [vmem:[#allocation4 + $0xb0] sm:$0xff]
      %v7294 = vld [vmem:[#allocation4 + $0xb8] sm:$0xff]
      %v7295 = vld [vmem:[#allocation4 + $0xc0] sm:$0xff]
      %v7296 = vld [vmem:[#allocation4 + $0xc8] sm:$0xff]
      %v7297 = vld [vmem:[#allocation4 + $0xd0] sm:$0xff]
      %v7298 = vld [vmem:[#allocation4 + $0xd8] sm:$0xff]
      %v7299 = vld [vmem:[#allocation4 + $0xe0] sm:$0xff]
      %v7300 = vld [vmem:[#allocation4 + $0xe8] sm:$0xff]
      %v7301 = vld [vmem:[#allocation4 + $0xf0] sm:$0xff]
      %v7302 = vld [vmem:[#allocation4 + $0xf8] sm:$0xff]
      %v7303 = vld [vmem:[%s4] sm:$0x1]
      %v7305 = vlaneseq
      %v7306 = vshrl.u32 %v7305, 7
      %v7307 = vsub.s32 0, %v7306
      %v7308 = vrot.slane %v7303, %v7307
      %v7310 = vadd.f32 %v7271, %v7308
      %v7311 = vadd.f32 %v7272, %v7308
      %v7312 = vadd.f32 %v7273, %v7308
      %v7313 = vadd.f32 %v7274, %v7308
      %v7314 = vadd.f32 %v7275, %v7308
      %v7315 = vadd.f32 %v7276, %v7308
      %v7316 = vadd.f32 %v7277, %v7308
      %v7317 = vadd.f32 %v7278, %v7308
      %v7318 = vadd.f32 %v7279, %v7308
      %v7319 = vadd.f32 %v7280, %v7308
      %v7320 = vadd.f32 %v7281, %v7308
      %v7321 = vadd.f32 %v7282, %v7308
      %v7322 = vadd.f32 %v7283, %v7308
      %v7323 = vadd.f32 %v7284, %v7308
      %v7324 = vadd.f32 %v7285, %v7308
      %v7325 = vadd.f32 %v7286, %v7308
      %v7326 = vadd.f32 %v7287, %v7308
      %v7327 = vadd.f32 %v7288, %v7308
      %v7328 = vadd.f32 %v7289, %v7308
      %v7329 = vadd.f32 %v7290, %v7308
      %v7330 = vadd.f32 %v7291, %v7308
      %v7331 = vadd.f32 %v7292, %v7308
      %v7332 = vadd.f32 %v7293, %v7308
      %v7333 = vadd.f32 %v7294, %v7308
      %v7334 = vadd.f32 %v7295, %v7308
      %v7335 = vadd.f32 %v7296, %v7308
      %v7336 = vadd.f32 %v7297, %v7308
      %v7337 = vadd.f32 %v7298, %v7308
      %v7338 = vadd.f32 %v7299, %v7308
      %v7339 = vadd.f32 %v7300, %v7308
      %v7340 = vadd.f32 %v7301, %v7308
      %v7341 = vadd.f32 %v7302, %v7308
      %v7342 = vsub.f32 0.0, %v7310
      %v7343 = vsub.f32 0.0, %v7311
      %v7344 = vsub.f32 0.0, %v7312
      %v7345 = vsub.f32 0.0, %v7313
      %v7346 = vsub.f32 0.0, %v7314
      %v7347 = vsub.f32 0.0, %v7315
      %v7348 = vsub.f32 0.0, %v7316
      %v7349 = vsub.f32 0.0, %v7317
      %v7350 = vsub.f32 0.0, %v7318
      %v7351 = vsub.f32 0.0, %v7319
      %v7352 = vsub.f32 0.0, %v7320
      %v7353 = vsub.f32 0.0, %v7321
      %v7354 = vsub.f32 0.0, %v7322
      %v7355 = vsub.f32 0.0, %v7323
      %v7356 = vsub.f32 0.0, %v7324
      %v7357 = vsub.f32 0.0, %v7325
      %v7358 = vsub.f32 0.0, %v7326
      %v7359 = vsub.f32 0.0, %v7327
      %v7360 = vsub.f32 0.0, %v7328
      %v7361 = vsub.f32 0.0, %v7329
      %v7362 = vsub.f32 0.0, %v7330
      %v7363 = vsub.f32 0.0, %v7331
      %v7364 = vsub.f32 0.0, %v7332
      %v7365 = vsub.f32 0.0, %v7333
      %v7366 = vsub.f32 0.0, %v7334
      %v7367 = vsub.f32 0.0, %v7335
      %v7368 = vsub.f32 0.0, %v7336
      %v7369 = vsub.f32 0.0, %v7337
      %v7370 = vsub.f32 0.0, %v7338
      %v7371 = vsub.f32 0.0, %v7339
      %v7372 = vsub.f32 0.0, %v7340
      %v7373 = vsub.f32 0.0, %v7341
      %v7374 = vmul.f32 %v7342, 1.442695
      %v7375 = vpow.pop %v7374
      %v7376 = vmul.f32 %v7343, 1.442695
      %v7377 = vpow.pop %v7376
      %v7378 = vmul.f32 %v7344, 1.442695
      %v7379 = vpow.pop %v7378
      %v7380 = vmul.f32 %v7345, 1.442695
      %v7381 = vpow.pop %v7380
      %v7382 = vmul.f32 %v7346, 1.442695
      %v7383 = vpow.pop %v7382
      %v7384 = vmul.f32 %v7347, 1.442695
      %v7385 = vpow.pop %v7384
      %v7386 = vmul.f32 %v7348, 1.442695
      %v7387 = vpow.pop %v7386
      %v7388 = vmul.f32 %v7349, 1.442695
      %v7389 = vpow.pop %v7388
      %v7390 = vmul.f32 %v7350, 1.442695
      %v7391 = vpow.pop %v7390
      %v7392 = vmul.f32 %v7351, 1.442695
      %v7393 = vpow.pop %v7392
      %v7394 = vmul.f32 %v7352, 1.442695
      %v7395 = vpow.pop %v7394
      %v7396 = vmul.f32 %v7353, 1.442695
      %v7397 = vpow.pop %v7396
      %v7398 = vmul.f32 %v7354, 1.442695
      %v7399 = vpow.pop %v7398
      %v7400 = vmul.f32 %v7355, 1.442695
      %v7401 = vpow.pop %v7400
      %v7402 = vmul.f32 %v7356, 1.442695
      %v7403 = vpow.pop %v7402
      %v7404 = vmul.f32 %v7357, 1.442695
      %v7405 = vpow.pop %v7404
      %v7406 = vmul.f32 %v7358, 1.442695
      %v7407 = vpow.pop %v7406
      %v7408 = vmul.f32 %v7359, 1.442695
      %v7409 = vpow.pop %v7408
      %v7410 = vmul.f32 %v7360, 1.442695
      %v7411 = vpow.pop %v7410
      %v7412 = vmul.f32 %v7361, 1.442695
      %v7413 = vpow.pop %v7412
      %v7414 = vmul.f32 %v7362, 1.442695
      %v7415 = vpow.pop %v7414
      %v7416 = vmul.f32 %v7363, 1.442695
      %v7417 = vpow.pop %v7416
      %v7418 = vmul.f32 %v7364, 1.442695
      %v7419 = vpow.pop %v7418
      %v7420 = vmul.f32 %v7365, 1.442695
      %v7421 = vpow.pop %v7420
      %v7422 = vmul.f32 %v7366, 1.442695
      %v7423 = vpow.pop %v7422
      %v7424 = vmul.f32 %v7367, 1.442695
      %v7425 = vpow.pop %v7424
      %v7426 = vmul.f32 %v7368, 1.442695
      %v7427 = vpow.pop %v7426
      %v7428 = vmul.f32 %v7369, 1.442695
      %v7429 = vpow.pop %v7428
      %v7430 = vmul.f32 %v7370, 1.442695
      %v7431 = vpow.pop %v7430
      %v7432 = vmul.f32 %v7371, 1.442695
      %v7433 = vpow.pop %v7432
      %v7434 = vmul.f32 %v7372, 1.442695
      %v7435 = vpow.pop %v7434
      %v7436 = vmul.f32 %v7373, 1.442695
      %v7437 = vpow.pop %v7436
      %v7438 = vadd.f32 %v7375, 1.0
      %v7439 = vadd.f32 %v7377, 1.0
      %v7440 = vadd.f32 %v7379, 1.0
      %v7441 = vadd.f32 %v7381, 1.0
      %v7442 = vadd.f32 %v7383, 1.0
      %v7443 = vadd.f32 %v7385, 1.0
      %v7444 = vadd.f32 %v7387, 1.0
      %v7445 = vadd.f32 %v7389, 1.0
      %v7446 = vadd.f32 %v7391, 1.0
      %v7447 = vadd.f32 %v7393, 1.0
      %v7448 = vadd.f32 %v7395, 1.0
      %v7449 = vadd.f32 %v7397, 1.0
      %v7450 = vadd.f32 %v7399, 1.0
      %v7451 = vadd.f32 %v7401, 1.0
      %v7452 = vadd.f32 %v7403, 1.0
      %v7453 = vadd.f32 %v7405, 1.0
      %v7454 = vadd.f32 %v7407, 1.0
      %v7455 = vadd.f32 %v7409, 1.0
      %v7456 = vadd.f32 %v7411, 1.0
      %v7457 = vadd.f32 %v7413, 1.0
      %v7458 = vadd.f32 %v7415, 1.0
      %v7459 = vadd.f32 %v7417, 1.0
      %v7460 = vadd.f32 %v7419, 1.0
      %v7461 = vadd.f32 %v7421, 1.0
      %v7462 = vadd.f32 %v7423, 1.0
      %v7463 = vadd.f32 %v7425, 1.0
      %v7464 = vadd.f32 %v7427, 1.0
      %v7465 = vadd.f32 %v7429, 1.0
      %v7466 = vadd.f32 %v7431, 1.0
      %v7467 = vadd.f32 %v7433, 1.0
      %v7468 = vadd.f32 %v7435, 1.0
      %v7469 = vadd.f32 %v7437, 1.0
      %v7470 = vrcp.pop %v7438
      %v7471 = vrcp.pop %v7439
      %v7472 = vrcp.pop %v7440
      %v7473 = vrcp.pop %v7441
      %v7474 = vrcp.pop %v7442
      %v7475 = vrcp.pop %v7443
      %v7476 = vrcp.pop %v7444
      %v7477 = vrcp.pop %v7445
      %v7478 = vrcp.pop %v7446
      %v7479 = vrcp.pop %v7447
      %v7480 = vrcp.pop %v7448
      %v7481 = vrcp.pop %v7449
      %v7482 = vrcp.pop %v7450
      %v7483 = vrcp.pop %v7451
      %v7484 = vrcp.pop %v7452
      %v7485 = vrcp.pop %v7453
      %v7486 = vrcp.pop %v7454
      %v7487 = vrcp.pop %v7455
      %v7488 = vrcp.pop %v7456
      %v7489 = vrcp.pop %v7457
      %v7490 = vrcp.pop %v7458
      %v7491 = vrcp.pop %v7459
      %v7492 = vrcp.pop %v7460
      %v7493 = vrcp.pop %v7461
      %v7494 = vrcp.pop %v7462
      %v7495 = vrcp.pop %v7463
      %v7496 = vrcp.pop %v7464
      %v7497 = vrcp.pop %v7465
      %v7498 = vrcp.pop %v7466
      %v7499 = vrcp.pop %v7467
      %v7500 = vrcp.pop %v7468
      %v7501 = vrcp.pop %v7469
      %v7502 = vmul.f32 %v7310, %v7470
      %v7503 = vmul.f32 %v7311, %v7471
      %v7504 = vmul.f32 %v7312, %v7472
      %v7505 = vmul.f32 %v7313, %v7473
      %v7506 = vmul.f32 %v7314, %v7474
      %v7507 = vmul.f32 %v7315, %v7475
      %v7508 = vmul.f32 %v7316, %v7476
      %v7509 = vmul.f32 %v7317, %v7477
      %v7510 = vmul.f32 %v7318, %v7478
      %v7511 = vmul.f32 %v7319, %v7479
      %v7512 = vmul.f32 %v7320, %v7480
      %v7513 = vmul.f32 %v7321, %v7481
      %v7514 = vmul.f32 %v7322, %v7482
      %v7515 = vmul.f32 %v7323, %v7483
      %v7516 = vmul.f32 %v7324, %v7484
      %v7517 = vmul.f32 %v7325, %v7485
      %v7518 = vmul.f32 %v7326, %v7486
      %v7519 = vmul.f32 %v7327, %v7487
      %v7520 = vmul.f32 %v7328, %v7488
      %v7521 = vmul.f32 %v7329, %v7489
      %v7522 = vmul.f32 %v7330, %v7490
      %v7523 = vmul.f32 %v7331, %v7491
      %v7524 = vmul.f32 %v7332, %v7492
      %v7525 = vmul.f32 %v7333, %v7493
      %v7526 = vmul.f32 %v7334, %v7494
      %v7527 = vmul.f32 %v7335, %v7495
      %v7528 = vmul.f32 %v7336, %v7496
      %v7529 = vmul.f32 %v7337, %v7497
      %v7530 = vmul.f32 %v7338, %v7498
      %v7531 = vmul.f32 %v7339, %v7499
      %v7532 = vmul.f32 %v7340, %v7500
      %v7533 = vmul.f32 %v7341, %v7501
      %v7534 = vld [vmem:[%s1433 + $0x1] sm:$0xff]
      %v7535 = vld [vmem:[%s1433 + $0x9] sm:$0xff]
      %v7536 = vld [vmem:[%s1433 + $0x19] sm:$0xff]
      %v7537 = vld [vmem:[%s1433 + $0x21] sm:$0xff]
      %v7538 = vld [vmem:[%s1433 + $0x31] sm:$0xff]
      %v7539 = vld [vmem:[%s1433 + $0x39] sm:$0xff]
      %v7540 = vld [vmem:[%s1433 + $0x49] sm:$0xff]
      %v7541 = vld [vmem:[%s1433 + $0x51] sm:$0xff]
      %v7542 = vld [vmem:[%s1433 + $0x61] sm:$0xff]
      %v7543 = vld [vmem:[%s1433 + $0x69] sm:$0xff]
      %v7544 = vld [vmem:[%s1433 + $0x79] sm:$0xff]
      %v7545 = vld [vmem:[%s1433 + $0x81] sm:$0xff]
      %v7546 = vld [vmem:[%s1433 + $0x91] sm:$0xff]
      %v7547 = vld [vmem:[%s1433 + $0x99] sm:$0xff]
      %v7548 = vld [vmem:[%s1433 + $0xa9] sm:$0xff]
      %v7549 = vld [vmem:[%s1433 + $0xb1] sm:$0xff]
      %v7550 = vld [vmem:[%s1433 + $0xc1] sm:$0xff]
      %v7551 = vld [vmem:[%s1433 + $0xc9] sm:$0xff]
      %v7552 = vld [vmem:[%s1433 + $0xd9] sm:$0xff]
      %v7553 = vld [vmem:[%s1433 + $0xe1] sm:$0xff]
      %v7554 = vld [vmem:[%s1433 + $0xf1] sm:$0xff]
      %v7555 = vld [vmem:[%s1433 + $0xf9] sm:$0xff]
      %v7556 = vld [vmem:[%s1433 + $0x109] sm:$0xff]
      %v7557 = vld [vmem:[%s1433 + $0x111] sm:$0xff]
      %v7558 = vld [vmem:[%s1433 + $0x121] sm:$0xff]
      %v7559 = vld [vmem:[%s1433 + $0x129] sm:$0xff]
      %v7560 = vld [vmem:[%s1433 + $0x139] sm:$0xff]
      %v7561 = vld [vmem:[%s1433 + $0x141] sm:$0xff]
      %v7562 = vld [vmem:[%s1433 + $0x151] sm:$0xff]
      %v7563 = vld [vmem:[%s1433 + $0x159] sm:$0xff]
      %v7564 = vld [vmem:[%s1433 + $0x169] sm:$0xff]
      %v7565 = vld [vmem:[%s1433 + $0x171] sm:$0xff]
      %v7566 = vadd.f32 %v7502, %v7534
      %v7567 = vadd.f32 %v7503, %v7535
      %v7568 = vadd.f32 %v7504, %v7536
      %v7569 = vadd.f32 %v7505, %v7537
      %v7570 = vadd.f32 %v7506, %v7538
      %v7571 = vadd.f32 %v7507, %v7539
      %v7572 = vadd.f32 %v7508, %v7540
      %v7573 = vadd.f32 %v7509, %v7541
      %v7574 = vadd.f32 %v7510, %v7542
      %v7575 = vadd.f32 %v7511, %v7543
      %v7576 = vadd.f32 %v7512, %v7544
      %v7577 = vadd.f32 %v7513, %v7545
      %v7578 = vadd.f32 %v7514, %v7546
      %v7579 = vadd.f32 %v7515, %v7547
      %v7580 = vadd.f32 %v7516, %v7548
      %v7581 = vadd.f32 %v7517, %v7549
      %v7582 = vadd.f32 %v7518, %v7550
      %v7583 = vadd.f32 %v7519, %v7551
      %v7584 = vadd.f32 %v7520, %v7552
      %v7585 = vadd.f32 %v7521, %v7553
      %v7586 = vadd.f32 %v7522, %v7554
      %v7587 = vadd.f32 %v7523, %v7555
      %v7588 = vadd.f32 %v7524, %v7556
      %v7589 = vadd.f32 %v7525, %v7557
      %v7590 = vadd.f32 %v7526, %v7558
      %v7591 = vadd.f32 %v7527, %v7559
      %v7592 = vadd.f32 %v7528, %v7560
      %v7593 = vadd.f32 %v7529, %v7561
      %v7594 = vadd.f32 %v7530, %v7562
      %v7595 = vadd.f32 %v7531, %v7563
      %v7596 = vadd.f32 %v7532, %v7564
      %v7597 = vadd.f32 %v7533, %v7565
      %7598 = vst [vmem:[%s224] sm:$0xff] %v7566
      %7599 = vst [vmem:[%s224 + $0x8] sm:$0xff] %v7567
      %7600 = vst [vmem:[%s224 + $0x10] sm:$0xff] %v7568
      %7601 = vst [vmem:[%s224 + $0x18] sm:$0xff] %v7569
      %7602 = vst [vmem:[%s224 + $0x20] sm:$0xff] %v7570
      %7603 = vst [vmem:[%s224 + $0x28] sm:$0xff] %v7571
      %7604 = vst [vmem:[%s224 + $0x30] sm:$0xff] %v7572
      %7605 = vst [vmem:[%s224 + $0x38] sm:$0xff] %v7573
      %7606 = vst [vmem:[%s224 + $0x40] sm:$0xff] %v7574
      %7607 = vst [vmem:[%s224 + $0x48] sm:$0xff] %v7575
      %7608 = vst [vmem:[%s224 + $0x50] sm:$0xff] %v7576
      %7609 = vst [vmem:[%s224 + $0x58] sm:$0xff] %v7577
      %7610 = vst [vmem:[%s224 + $0x60] sm:$0xff] %v7578
      %7611 = vst [vmem:[%s224 + $0x68] sm:$0xff] %v7579
      %7612 = vst [vmem:[%s224 + $0x70] sm:$0xff] %v7580
      %7613 = vst [vmem:[%s224 + $0x78] sm:$0xff] %v7581
      %7614 = vst [vmem:[%s224 + $0x80] sm:$0xff] %v7582
      %7615 = vst [vmem:[%s224 + $0x88] sm:$0xff] %v7583
      %7616 = vst [vmem:[%s224 + $0x90] sm:$0xff] %v7584
      %7617 = vst [vmem:[%s224 + $0x98] sm:$0xff] %v7585
      %7618 = vst [vmem:[%s224 + $0xa0] sm:$0xff] %v7586
      %7619 = vst [vmem:[%s224 + $0xa8] sm:$0xff] %v7587
      %7620 = vst [vmem:[%s224 + $0xb0] sm:$0xff] %v7588
      %7621 = vst [vmem:[%s224 + $0xb8] sm:$0xff] %v7589
      %7622 = vst [vmem:[%s224 + $0xc0] sm:$0xff] %v7590
      %7623 = vst [vmem:[%s224 + $0xc8] sm:$0xff] %v7591
      %7624 = vst [vmem:[%s224 + $0xd0] sm:$0xff] %v7592
      %7625 = vst [vmem:[%s224 + $0xd8] sm:$0xff] %v7593
      %7626 = vst [vmem:[%s224 + $0xe0] sm:$0xff] %v7594
      %7627 = vst [vmem:[%s224 + $0xe8] sm:$0xff] %v7595
      %7628 = vst [vmem:[%s224 + $0xf0] sm:$0xff] %v7596
      %7629 = vst [vmem:[%s224 + $0xf8] sm:$0xff] %v7597
      %p7630 = scmp.lt.s32.totalorder %s16, 1
      %s7631 = scalar_select %p7630, %s16, 1
      %s7632 = smul.addr %s7631, 32
      %s7633 = smul.addr %s7632, 8
      %s7634 = scalar_lea.vmem %s5, %s7633
      // Predicated region
      $region41: #{repn_bottleneck_pallas.1} parent=39 // pred_check
        %p7635 = pneg %p144
      $region42: #{repn_bottleneck_pallas.1} parent=39 // pred_check_branch
        %7637 = sbr.rel (%p7635) target = $region44
      $region43: #{repn_bottleneck_pallas.1} parent=39 // pred_region
        _
      $region44: #{repn_bottleneck_pallas.1} parent=39 // pred_fallthru
        _
    $region40: #{repn_bottleneck_pallas.1} parent=5 // pred_fallthru
      _
    %p7638 = scmp.le.s32.totalorder 2, %s11
    // Predicated region
    $region45: #{repn_bottleneck_pallas.1} parent=5 // pred_check
      %p7639 = pneg %p7638
    $region46: #{repn_bottleneck_pallas.1} parent=5 // pred_check_branch
      %7641 = sbr.rel (%p7639) target = $region48
    $region47: #{repn_bottleneck_pallas.1} parent=5 // pred_region
      %s7642 = ssub.s32 %s11, 2
      // Predicated region
      $region49: #{repn_bottleneck_pallas.1} parent=47 // pred_check
        %p7643 = pneg %p150
      $region50: #{repn_bottleneck_pallas.1} parent=47 // pred_check_branch
        %7645 = sbr.rel (%p7643) target = $region52
      $region51: #{repn_bottleneck_pallas.1} parent=47 // pred_region
        %p7646 = scmp.lt.s32.totalorder %s17, 1
        %s7647 = scalar_select %p7646, %s17, 1
        %s7648 = smul.addr %s7647, 32
        %s7649 = smul.addr %s7648, 8
        %s7650 = scalar_lea.vmem %s5, %s7649
      $region52: #{repn_bottleneck_pallas.1} parent=47 // pred_fallthru
        _
    $region48: #{repn_bottleneck_pallas.1} parent=5 // pred_fallthru
      _
  $region6: #{repn_bottleneck_pallas.1} parent=0 // loop_footer
    %s15 = sadd.s32 1, %s11
  $region7: #{repn_bottleneck_pallas.1} parent=0 // loop_footer_branch
    %10 = sbr.rel target = $region3
  $region8: #{repn_bottleneck_pallas.1} parent=0 // loop_exit
    _

</llo_original>
